<compile_context>
chip_gen: v7x
topology: tpu7x:2x2x1
jax: 0.10.0
libtpu: 0.0.40
codegen_flags: <defaults>
</compile_context>

<pallas_src>
import functools

import jax
import jax.numpy as jnp
from jax.experimental import pallas as pl
from jax.experimental.pallas import tpu as pltpu


def _bn_kernel(x_ref, gamma_ref, beta_ref, o_ref, *, eps, inv_r):
    # x_ref: (c_tile, R) f32; gamma_ref/beta_ref: (c_tile, 1)
    x = x_ref[...]
    # Fused single-pass statistics (R is small and static; f32 is plenty).
    s = jnp.sum(x, axis=-1, keepdims=True)            # (c_tile, 1)
    sq = jnp.sum(x * x, axis=-1, keepdims=True)       # (c_tile, 1)
    mean = s * inv_r
    var = sq * inv_r - mean * mean                    # biased variance
    # Fold affine into a single per-channel scale + shift.
    scale = jax.lax.rsqrt(var + eps) * gamma_ref[...]  # EUP rsqrt
    shift = beta_ref[...] - mean * scale
    o_ref[...] = x * scale + shift


def _num_tensorcores():
    """Best-effort TensorCore-per-chip count (v7x has 2, earlier gens 1)."""
    try:
        kind = jax.devices()[0].device_kind.lower()
        if "v7" in kind:
            return 2
    except Exception:
        pass
    return 1


def _pick_c_tile(c, r, n_cores, vmem_budget=16 * 1024 * 1024):
    """Channel tile: one grid step per TensorCore, shrink only if VMEM-bound."""
    r_pad = ((max(r, 1) + 127) // 128) * 128
    tile = c
    if n_cores > 1 and c % n_cores == 0 and (c // n_cores) % 8 == 0:
        tile = c // n_cores
    # in + out blocks, double-buffered, f32 — stay well under the budget.
    while (4 * tile * r_pad * 4 > vmem_budget) and tile % 2 == 0 and (tile // 2) % 8 == 0:
        tile //= 2
    return tile


@functools.partial(jax.jit, static_argnames=("eps", "c_tile"))
def _batchnorm2d_pallas_2d(x2d, g2d, b2d, *, eps, c_tile):
    C, R = x2d.shape
    grid = (C // c_tile,)
    return pl.pallas_call(
        functools.partial(_bn_kernel, eps=eps, inv_r=1.0 / R),
        out_shape=jax.ShapeDtypeStruct((C, R), x2d.dtype),
        grid=grid,
        in_specs=[
            pl.BlockSpec((c_tile, R), lambda i: (i, 0)),
            pl.BlockSpec((c_tile, 1), lambda i: (i, 0)),
            pl.BlockSpec((c_tile, 1), lambda i: (i, 0)),
        ],
        out_specs=pl.BlockSpec((c_tile, R), lambda i: (i, 0)),
        compiler_params=pltpu.CompilerParams(
            dimension_semantics=("parallel",)
        ),
    )(x2d, g2d, b2d)


def batchnorm2d_pallas(x_nchw, gamma, beta, *, eps=1e-3):
    N, C, H, W = x_nchw.shape
    R = N * H * W

    # Channel-major (C, R) view; free reshape for N == 1 (the module's case).
    if N == 1:
        x2d = x_nchw.reshape(C, R)
    else:
        # TODO(synk): for N > 1, reduce over N in-kernel (squeezed grid dim)
        # instead of paying this HBM-round-trip transpose; unused for this module.
        x2d = jnp.transpose(x_nchw, (1, 0, 2, 3)).reshape(C, R)
    g2d = gamma.reshape(C, 1)
    b2d = beta.reshape(C, 1)

    c_tile = _pick_c_tile(C, R, _num_tensorcores())
    out2d = _batchnorm2d_pallas_2d(x2d, g2d, b2d, eps=eps, c_tile=c_tile)

    if N == 1:
        return out2d.reshape(N, C, H, W)
    return jnp.transpose(out2d.reshape(C, N, H, W), (1, 0, 2, 3))


def batchnorm2d_ref(x_nchw, gamma, beta, *, eps=1e-3):
    mean = jnp.mean(x_nchw, axis=(0, 2, 3), keepdims=True)
    var = jnp.mean((x_nchw - mean) ** 2, axis=(0, 2, 3), keepdims=True)
    xhat = (x_nchw - mean) / jnp.sqrt(var + eps)
    return xhat * gamma[None, :, None, None] + beta[None, :, None, None]


if __name__ == "__main__":
    key = jax.random.PRNGKey(0)
    kx, kg, kb = jax.random.split(key, 3)

    N, C, H, W = 1, 2304, 7, 7  # matches BatchNorm2d(2304) on [1, 2304, 7, 7]
    x = jax.random.normal(kx, (N, C, H, W), dtype=jnp.float32)
    gamma = jax.random.normal(kg, (C,), dtype=jnp.float32) * 0.1 + 1.0
    beta = jax.random.normal(kb, (C,), dtype=jnp.float32) * 0.1

    out = batchnorm2d_pallas(x, gamma, beta, eps=1e-3)
    out = jax.block_until_ready(out)

    ref = batchnorm2d_ref(x, gamma, beta, eps=1e-3)
    assert out.shape == (N, C, H, W)
    assert jnp.allclose(out, ref, atol=1e-4, rtol=1e-4), "mismatch vs reference"

    print("KERNEL_OK")
</pallas_src>

<mosaic_0001>
module attributes {stable_mosaic.version = 11 : i64} {
  func.func @_bn_kernel(%arg0: i32, %arg1: memref<2304x49xf32, #tpu.memory_space<vmem>>, %arg2: memref<2304x1xf32, #tpu.memory_space<vmem>>, %arg3: memref<2304x1xf32, #tpu.memory_space<vmem>>, %arg4: memref<2304x49xf32, #tpu.memory_space<vmem>>) attributes {dimension_semantics = [#tpu.dimension_semantics<parallel>], iteration_bounds = array<i64: 1>, scalar_prefetch = 0 : i64, scratch_operands = 0 : i64, tpu.core_type = #tpu.core_type<tc>, window_params = [{transform_indices = @transform_0, window_bounds = array<i64: 2304, 49>}, {transform_indices = @transform_1, window_bounds = array<i64: 2304, 1>}, {transform_indices = @transform_2, window_bounds = array<i64: 2304, 1>}, {transform_indices = @transform_3, window_bounds = array<i64: 2304, 49>}]} {
    %c0 = arith.constant 0 : index
    %c0_0 = arith.constant 0 : index
    %0 = vector.load %arg1[%c0, %c0_0] : memref<2304x49xf32, #tpu.memory_space<vmem>>, vector<2304x49xf32>
    %cst = arith.constant dense<0.000000e+00> : vector<2304xf32>
    %1 = vector.multi_reduction <add>, %0, %cst [1] : vector<2304x49xf32> to vector<2304xf32>
    %2 = vector.shape_cast %1 : vector<2304xf32> to vector<2304x1xf32>
    %3 = arith.mulf %0, %0 : vector<2304x49xf32>
    %cst_1 = arith.constant dense<0.000000e+00> : vector<2304xf32>
    %4 = vector.multi_reduction <add>, %3, %cst_1 [1] : vector<2304x49xf32> to vector<2304xf32>
    %5 = vector.shape_cast %4 : vector<2304xf32> to vector<2304x1xf32>
    %cst_2 = arith.constant 0.0204081628 : f32
    %6 = vector.broadcast %cst_2 : f32 to vector<2304x1xf32>
    %7 = arith.mulf %2, %6 : vector<2304x1xf32>
    %cst_3 = arith.constant 0.0204081628 : f32
    %8 = vector.broadcast %cst_3 : f32 to vector<2304x1xf32>
    %9 = arith.mulf %5, %8 : vector<2304x1xf32>
    %10 = arith.mulf %7, %7 : vector<2304x1xf32>
    %11 = arith.subf %9, %10 : vector<2304x1xf32>
    %cst_4 = arith.constant 1.000000e-03 : f32
    %12 = vector.broadcast %cst_4 : f32 to vector<2304x1xf32>
    %13 = arith.addf %11, %12 : vector<2304x1xf32>
    %14 = math.rsqrt %13 : vector<2304x1xf32>
    %c0_5 = arith.constant 0 : index
    %c0_6 = arith.constant 0 : index
    %15 = vector.load %arg2[%c0_5, %c0_6] : memref<2304x1xf32, #tpu.memory_space<vmem>>, vector<2304x1xf32>
    %16 = arith.mulf %14, %15 : vector<2304x1xf32>
    %c0_7 = arith.constant 0 : index
    %c0_8 = arith.constant 0 : index
    %17 = vector.load %arg3[%c0_7, %c0_8] : memref<2304x1xf32, #tpu.memory_space<vmem>>, vector<2304x1xf32>
    %18 = arith.mulf %7, %16 : vector<2304x1xf32>
    %19 = arith.subf %17, %18 : vector<2304x1xf32>
    %20 = vector.broadcast %16 : vector<2304x1xf32> to vector<2304x49xf32>
    %21 = arith.mulf %0, %20 : vector<2304x49xf32>
    %22 = vector.broadcast %19 : vector<2304x1xf32> to vector<2304x49xf32>
    %23 = arith.addf %21, %22 : vector<2304x49xf32>
    %c0_9 = arith.constant 0 : index
    %c0_10 = arith.constant 0 : index
    %24 = vector.load %arg4[%c0_9, %c0_10] : memref<2304x49xf32, #tpu.memory_space<vmem>>, vector<2304x49xf32>
    tpu.vector_store %arg4[%c0_9, %c0_10], %23 {strides = array<i32>} : memref<2304x49xf32, #tpu.memory_space<vmem>>, vector<2304x49xf32>,
    return
  }
  func.func @transform_0(%arg0: i32) -> (i32, i32) {
    %c0_i32 = arith.constant 0 : i32
    %c0_i32_0 = arith.constant 0 : i32
    return %arg0, %c0_i32 : i32, i32
  }
  func.func @transform_1(%arg0: i32) -> (i32, i32) {
    %c0_i32 = arith.constant 0 : i32
    %c0_i32_0 = arith.constant 0 : i32
    return %arg0, %c0_i32 : i32, i32
  }
  func.func @transform_2(%arg0: i32) -> (i32, i32) {
    %c0_i32 = arith.constant 0 : i32
    %c0_i32_0 = arith.constant 0 : i32
    return %arg0, %c0_i32 : i32, i32
  }
  func.func @transform_3(%arg0: i32) -> (i32, i32) {
    %c0_i32 = arith.constant 0 : i32
    %c0_i32_0 = arith.constant 0 : i32
    return %arg0, %c0_i32 : i32, i32
  }
}

</mosaic_0001>

<llo_original>
// kernel: _batchnorm2d_pallas_2d.1
$region0: #{_batchnorm2d_pallas_2d.1}
  #allocation0 [shape = 'u32[]', space=smem, size = 0x4, offset = 0x4, fixed_abs, tag = 'smem constant byte address 0x4 - core index']
  #allocation1 [shape = 'u32[144,128]{1,0:T(1,128)}', space=vmem, size = 0x12000, scoped, tag = 'internal scratch']
  %s0 = inlined_call_operand.vmem [shape: f32[2304,49], index: 0, kind: input, shape index: {}]
  %s1 = inlined_call_operand.vmem [shape: f32[2304,1], index: 1, kind: input, shape index: {}]
  %s2 = inlined_call_operand.vmem [shape: f32[2304,1], index: 2, kind: input, shape index: {}]
  %s3 = inlined_call_operand.vmem [shape: f32[2304,49], index: 3, kind: output, shape index: {}]
  %s4 = sld [smem:[#allocation0]]
  $region22: #{_batchnorm2d_pallas_2d.1} parent=0
    _
  %s6 = ssub.s32 1, %s4
  %s7 = scalar_select 0, %s6, %s4
  // Predicated region
  $region2: #{_batchnorm2d_pallas_2d.1} parent=0 // pred_check
    _
  $region3: #{_batchnorm2d_pallas_2d.1} parent=0 // pred_check_branch
    %9 = sbr.rel (0) target = $region5
  $region4: #{_batchnorm2d_pallas_2d.1} parent=0 // pred_region
    _
  $region5: #{_batchnorm2d_pallas_2d.1} parent=0 // pred_fallthru
    _
  // Predicated region
  $region6: #{_batchnorm2d_pallas_2d.1} parent=0 // pred_check
    _
  $region7: #{_batchnorm2d_pallas_2d.1} parent=0 // pred_check_branch
    %11 = sbr.rel (0) target = $region9
  $region8: #{_batchnorm2d_pallas_2d.1} parent=0 // pred_region
    _
  $region9: #{_batchnorm2d_pallas_2d.1} parent=0 // pred_fallthru
    _
  // Predicated region
  $region10: #{_batchnorm2d_pallas_2d.1} parent=0 // pred_check
    _
  $region11: #{_batchnorm2d_pallas_2d.1} parent=0 // pred_check_branch
    %13 = sbr.rel (0) target = $region13
  $region12: #{_batchnorm2d_pallas_2d.1} parent=0 // pred_region
    _
  $region13: #{_batchnorm2d_pallas_2d.1} parent=0 // pred_fallthru
    _
  %v14 = vld [vmem:[%s0] sm:$0xff]
  %v15 = vld [vmem:[%s0 + $0x8] sm:$0xff]
  %v16 = vld [vmem:[%s0 + $0x10] sm:$0xff]
  %v17 = vld [vmem:[%s0 + $0x18] sm:$0xff]
  %v18 = vld [vmem:[%s0 + $0x20] sm:$0xff]
  %v19 = vld [vmem:[%s0 + $0x28] sm:$0xff]
  %v20 = vld [vmem:[%s0 + $0x30] sm:$0xff]
  %v21 = vld [vmem:[%s0 + $0x38] sm:$0xff]
  %v22 = vld [vmem:[%s0 + $0x40] sm:$0xff]
  %v23 = vld [vmem:[%s0 + $0x48] sm:$0xff]
  %v24 = vld [vmem:[%s0 + $0x50] sm:$0xff]
  %v25 = vld [vmem:[%s0 + $0x58] sm:$0xff]
  %v26 = vld [vmem:[%s0 + $0x60] sm:$0xff]
  %v27 = vld [vmem:[%s0 + $0x68] sm:$0xff]
  %v28 = vld [vmem:[%s0 + $0x70] sm:$0xff]
  %v29 = vld [vmem:[%s0 + $0x78] sm:$0xff]
  %v30 = vld [vmem:[%s0 + $0x80] sm:$0xff]
  %v31 = vld [vmem:[%s0 + $0x88] sm:$0xff]
  %v32 = vld [vmem:[%s0 + $0x90] sm:$0xff]
  %v33 = vld [vmem:[%s0 + $0x98] sm:$0xff]
  %v34 = vld [vmem:[%s0 + $0xa0] sm:$0xff]
  %v35 = vld [vmem:[%s0 + $0xa8] sm:$0xff]
  %v36 = vld [vmem:[%s0 + $0xb0] sm:$0xff]
  %v37 = vld [vmem:[%s0 + $0xb8] sm:$0xff]
  %v38 = vld [vmem:[%s0 + $0xc0] sm:$0xff]
  %v39 = vld [vmem:[%s0 + $0xc8] sm:$0xff]
  %v40 = vld [vmem:[%s0 + $0xd0] sm:$0xff]
  %v41 = vld [vmem:[%s0 + $0xd8] sm:$0xff]
  %v42 = vld [vmem:[%s0 + $0xe0] sm:$0xff]
  %v43 = vld [vmem:[%s0 + $0xe8] sm:$0xff]
  %v44 = vld [vmem:[%s0 + $0xf0] sm:$0xff]
  %v45 = vld [vmem:[%s0 + $0xf8] sm:$0xff]
  %v46 = vld [vmem:[%s0 + $0x100] sm:$0xff]
  %v47 = vld [vmem:[%s0 + $0x108] sm:$0xff]
  %v48 = vld [vmem:[%s0 + $0x110] sm:$0xff]
  %v49 = vld [vmem:[%s0 + $0x118] sm:$0xff]
  %v50 = vld [vmem:[%s0 + $0x120] sm:$0xff]
  %v51 = vld [vmem:[%s0 + $0x128] sm:$0xff]
  %v52 = vld [vmem:[%s0 + $0x130] sm:$0xff]
  %v53 = vld [vmem:[%s0 + $0x138] sm:$0xff]
  %v54 = vld [vmem:[%s0 + $0x140] sm:$0xff]
  %v55 = vld [vmem:[%s0 + $0x148] sm:$0xff]
  %v56 = vld [vmem:[%s0 + $0x150] sm:$0xff]
  %v57 = vld [vmem:[%s0 + $0x158] sm:$0xff]
  %v58 = vld [vmem:[%s0 + $0x160] sm:$0xff]
  %v59 = vld [vmem:[%s0 + $0x168] sm:$0xff]
  %v60 = vld [vmem:[%s0 + $0x170] sm:$0xff]
  %v61 = vld [vmem:[%s0 + $0x178] sm:$0xff]
  %v62 = vld [vmem:[%s0 + $0x180] sm:$0xff]
  %v63 = vld [vmem:[%s0 + $0x188] sm:$0xff]
  %v64 = vld [vmem:[%s0 + $0x190] sm:$0xff]
  %v65 = vld [vmem:[%s0 + $0x198] sm:$0xff]
  %v66 = vld [vmem:[%s0 + $0x1a0] sm:$0xff]
  %v67 = vld [vmem:[%s0 + $0x1a8] sm:$0xff]
  %v68 = vld [vmem:[%s0 + $0x1b0] sm:$0xff]
  %v69 = vld [vmem:[%s0 + $0x1b8] sm:$0xff]
  %v70 = vld [vmem:[%s0 + $0x1c0] sm:$0xff]
  %v71 = vld [vmem:[%s0 + $0x1c8] sm:$0xff]
  %v72 = vld [vmem:[%s0 + $0x1d0] sm:$0xff]
  %v73 = vld [vmem:[%s0 + $0x1d8] sm:$0xff]
  %v74 = vld [vmem:[%s0 + $0x1e0] sm:$0xff]
  %v75 = vld [vmem:[%s0 + $0x1e8] sm:$0xff]
  %v76 = vld [vmem:[%s0 + $0x1f0] sm:$0xff]
  %v77 = vld [vmem:[%s0 + $0x1f8] sm:$0xff]
  %v78 = vld [vmem:[%s0 + $0x200] sm:$0xff]
  %v79 = vld [vmem:[%s0 + $0x208] sm:$0xff]
  %v80 = vld [vmem:[%s0 + $0x210] sm:$0xff]
  %v81 = vld [vmem:[%s0 + $0x218] sm:$0xff]
  %v82 = vld [vmem:[%s0 + $0x220] sm:$0xff]
  %v83 = vld [vmem:[%s0 + $0x228] sm:$0xff]
  %v84 = vld [vmem:[%s0 + $0x230] sm:$0xff]
  %v85 = vld [vmem:[%s0 + $0x238] sm:$0xff]
  %v86 = vld [vmem:[%s0 + $0x240] sm:$0xff]
  %v87 = vld [vmem:[%s0 + $0x248] sm:$0xff]
  %v88 = vld [vmem:[%s0 + $0x250] sm:$0xff]
  %v89 = vld [vmem:[%s0 + $0x258] sm:$0xff]
  %v90 = vld [vmem:[%s0 + $0x260] sm:$0xff]
  %v91 = vld [vmem:[%s0 + $0x268] sm:$0xff]
  %v92 = vld [vmem:[%s0 + $0x270] sm:$0xff]
  %v93 = vld [vmem:[%s0 + $0x278] sm:$0xff]
  %v94 = vld [vmem:[%s0 + $0x280] sm:$0xff]
  %v95 = vld [vmem:[%s0 + $0x288] sm:$0xff]
  %v96 = vld [vmem:[%s0 + $0x290] sm:$0xff]
  %v97 = vld [vmem:[%s0 + $0x298] sm:$0xff]
  %v98 = vld [vmem:[%s0 + $0x2a0] sm:$0xff]
  %v99 = vld [vmem:[%s0 + $0x2a8] sm:$0xff]
  %v100 = vld [vmem:[%s0 + $0x2b0] sm:$0xff]
  %v101 = vld [vmem:[%s0 + $0x2b8] sm:$0xff]
  %v102 = vld [vmem:[%s0 + $0x2c0] sm:$0xff]
  %v103 = vld [vmem:[%s0 + $0x2c8] sm:$0xff]
  %v104 = vld [vmem:[%s0 + $0x2d0] sm:$0xff]
  %v105 = vld [vmem:[%s0 + $0x2d8] sm:$0xff]
  %v106 = vld [vmem:[%s0 + $0x2e0] sm:$0xff]
  %v107 = vld [vmem:[%s0 + $0x2e8] sm:$0xff]
  %v108 = vld [vmem:[%s0 + $0x2f0] sm:$0xff]
  %v109 = vld [vmem:[%s0 + $0x2f8] sm:$0xff]
  %v110 = vld [vmem:[%s0 + $0x300] sm:$0xff]
  %v111 = vld [vmem:[%s0 + $0x308] sm:$0xff]
  %v112 = vld [vmem:[%s0 + $0x310] sm:$0xff]
  %v113 = vld [vmem:[%s0 + $0x318] sm:$0xff]
  %v114 = vld [vmem:[%s0 + $0x320] sm:$0xff]
  %v115 = vld [vmem:[%s0 + $0x328] sm:$0xff]
  %v116 = vld [vmem:[%s0 + $0x330] sm:$0xff]
  %v117 = vld [vmem:[%s0 + $0x338] sm:$0xff]
  %v118 = vld [vmem:[%s0 + $0x340] sm:$0xff]
  %v119 = vld [vmem:[%s0 + $0x348] sm:$0xff]
  %v120 = vld [vmem:[%s0 + $0x350] sm:$0xff]
  %v121 = vld [vmem:[%s0 + $0x358] sm:$0xff]
  %v122 = vld [vmem:[%s0 + $0x360] sm:$0xff]
  %v123 = vld [vmem:[%s0 + $0x368] sm:$0xff]
  %v124 = vld [vmem:[%s0 + $0x370] sm:$0xff]
  %v125 = vld [vmem:[%s0 + $0x378] sm:$0xff]
  %v126 = vld [vmem:[%s0 + $0x380] sm:$0xff]
  %v127 = vld [vmem:[%s0 + $0x388] sm:$0xff]
  %v128 = vld [vmem:[%s0 + $0x390] sm:$0xff]
  %v129 = vld [vmem:[%s0 + $0x398] sm:$0xff]
  %v130 = vld [vmem:[%s0 + $0x3a0] sm:$0xff]
  %v131 = vld [vmem:[%s0 + $0x3a8] sm:$0xff]
  %v132 = vld [vmem:[%s0 + $0x3b0] sm:$0xff]
  %v133 = vld [vmem:[%s0 + $0x3b8] sm:$0xff]
  %v134 = vld [vmem:[%s0 + $0x3c0] sm:$0xff]
  %v135 = vld [vmem:[%s0 + $0x3c8] sm:$0xff]
  %v136 = vld [vmem:[%s0 + $0x3d0] sm:$0xff]
  %v137 = vld [vmem:[%s0 + $0x3d8] sm:$0xff]
  %v138 = vld [vmem:[%s0 + $0x3e0] sm:$0xff]
  %v139 = vld [vmem:[%s0 + $0x3e8] sm:$0xff]
  %v140 = vld [vmem:[%s0 + $0x3f0] sm:$0xff]
  %v141 = vld [vmem:[%s0 + $0x3f8] sm:$0xff]
  %v142 = vld [vmem:[%s0 + $0x400] sm:$0xff]
  %v143 = vld [vmem:[%s0 + $0x408] sm:$0xff]
  %v144 = vld [vmem:[%s0 + $0x410] sm:$0xff]
  %v145 = vld [vmem:[%s0 + $0x418] sm:$0xff]
  %v146 = vld [vmem:[%s0 + $0x420] sm:$0xff]
  %v147 = vld [vmem:[%s0 + $0x428] sm:$0xff]
  %v148 = vld [vmem:[%s0 + $0x430] sm:$0xff]
  %v149 = vld [vmem:[%s0 + $0x438] sm:$0xff]
  %v150 = vld [vmem:[%s0 + $0x440] sm:$0xff]
  %v151 = vld [vmem:[%s0 + $0x448] sm:$0xff]
  %v152 = vld [vmem:[%s0 + $0x450] sm:$0xff]
  %v153 = vld [vmem:[%s0 + $0x458] sm:$0xff]
  %v154 = vld [vmem:[%s0 + $0x460] sm:$0xff]
  %v155 = vld [vmem:[%s0 + $0x468] sm:$0xff]
  %v156 = vld [vmem:[%s0 + $0x470] sm:$0xff]
  %v157 = vld [vmem:[%s0 + $0x478] sm:$0xff]
  %v158 = vld [vmem:[%s0 + $0x480] sm:$0xff]
  %v159 = vld [vmem:[%s0 + $0x488] sm:$0xff]
  %v160 = vld [vmem:[%s0 + $0x490] sm:$0xff]
  %v161 = vld [vmem:[%s0 + $0x498] sm:$0xff]
  %v162 = vld [vmem:[%s0 + $0x4a0] sm:$0xff]
  %v163 = vld [vmem:[%s0 + $0x4a8] sm:$0xff]
  %v164 = vld [vmem:[%s0 + $0x4b0] sm:$0xff]
  %v165 = vld [vmem:[%s0 + $0x4b8] sm:$0xff]
  %v166 = vld [vmem:[%s0 + $0x4c0] sm:$0xff]
  %v167 = vld [vmem:[%s0 + $0x4c8] sm:$0xff]
  %v168 = vld [vmem:[%s0 + $0x4d0] sm:$0xff]
  %v169 = vld [vmem:[%s0 + $0x4d8] sm:$0xff]
  %v170 = vld [vmem:[%s0 + $0x4e0] sm:$0xff]
  %v171 = vld [vmem:[%s0 + $0x4e8] sm:$0xff]
  %v172 = vld [vmem:[%s0 + $0x4f0] sm:$0xff]
  %v173 = vld [vmem:[%s0 + $0x4f8] sm:$0xff]
  %v174 = vld [vmem:[%s0 + $0x500] sm:$0xff]
  %v175 = vld [vmem:[%s0 + $0x508] sm:$0xff]
  %v176 = vld [vmem:[%s0 + $0x510] sm:$0xff]
  %v177 = vld [vmem:[%s0 + $0x518] sm:$0xff]
  %v178 = vld [vmem:[%s0 + $0x520] sm:$0xff]
  %v179 = vld [vmem:[%s0 + $0x528] sm:$0xff]
  %v180 = vld [vmem:[%s0 + $0x530] sm:$0xff]
  %v181 = vld [vmem:[%s0 + $0x538] sm:$0xff]
  %v182 = vld [vmem:[%s0 + $0x540] sm:$0xff]
  %v183 = vld [vmem:[%s0 + $0x548] sm:$0xff]
  %v184 = vld [vmem:[%s0 + $0x550] sm:$0xff]
  %v185 = vld [vmem:[%s0 + $0x558] sm:$0xff]
  %v186 = vld [vmem:[%s0 + $0x560] sm:$0xff]
  %v187 = vld [vmem:[%s0 + $0x568] sm:$0xff]
  %v188 = vld [vmem:[%s0 + $0x570] sm:$0xff]
  %v189 = vld [vmem:[%s0 + $0x578] sm:$0xff]
  %v190 = vld [vmem:[%s0 + $0x580] sm:$0xff]
  %v191 = vld [vmem:[%s0 + $0x588] sm:$0xff]
  %v192 = vld [vmem:[%s0 + $0x590] sm:$0xff]
  %v193 = vld [vmem:[%s0 + $0x598] sm:$0xff]
  %v194 = vld [vmem:[%s0 + $0x5a0] sm:$0xff]
  %v195 = vld [vmem:[%s0 + $0x5a8] sm:$0xff]
  %v196 = vld [vmem:[%s0 + $0x5b0] sm:$0xff]
  %v197 = vld [vmem:[%s0 + $0x5b8] sm:$0xff]
  %v198 = vld [vmem:[%s0 + $0x5c0] sm:$0xff]
  %v199 = vld [vmem:[%s0 + $0x5c8] sm:$0xff]
  %v200 = vld [vmem:[%s0 + $0x5d0] sm:$0xff]
  %v201 = vld [vmem:[%s0 + $0x5d8] sm:$0xff]
  %v202 = vld [vmem:[%s0 + $0x5e0] sm:$0xff]
  %v203 = vld [vmem:[%s0 + $0x5e8] sm:$0xff]
  %v204 = vld [vmem:[%s0 + $0x5f0] sm:$0xff]
  %v205 = vld [vmem:[%s0 + $0x5f8] sm:$0xff]
  %v206 = vld [vmem:[%s0 + $0x600] sm:$0xff]
  %v207 = vld [vmem:[%s0 + $0x608] sm:$0xff]
  %v208 = vld [vmem:[%s0 + $0x610] sm:$0xff]
  %v209 = vld [vmem:[%s0 + $0x618] sm:$0xff]
  %v210 = vld [vmem:[%s0 + $0x620] sm:$0xff]
  %v211 = vld [vmem:[%s0 + $0x628] sm:$0xff]
  %v212 = vld [vmem:[%s0 + $0x630] sm:$0xff]
  %v213 = vld [vmem:[%s0 + $0x638] sm:$0xff]
  %v214 = vld [vmem:[%s0 + $0x640] sm:$0xff]
  %v215 = vld [vmem:[%s0 + $0x648] sm:$0xff]
  %v216 = vld [vmem:[%s0 + $0x650] sm:$0xff]
  %v217 = vld [vmem:[%s0 + $0x658] sm:$0xff]
  %v218 = vld [vmem:[%s0 + $0x660] sm:$0xff]
  %v219 = vld [vmem:[%s0 + $0x668] sm:$0xff]
  %v220 = vld [vmem:[%s0 + $0x670] sm:$0xff]
  %v221 = vld [vmem:[%s0 + $0x678] sm:$0xff]
  %v222 = vld [vmem:[%s0 + $0x680] sm:$0xff]
  %v223 = vld [vmem:[%s0 + $0x688] sm:$0xff]
  %v224 = vld [vmem:[%s0 + $0x690] sm:$0xff]
  %v225 = vld [vmem:[%s0 + $0x698] sm:$0xff]
  %v226 = vld [vmem:[%s0 + $0x6a0] sm:$0xff]
  %v227 = vld [vmem:[%s0 + $0x6a8] sm:$0xff]
  %v228 = vld [vmem:[%s0 + $0x6b0] sm:$0xff]
  %v229 = vld [vmem:[%s0 + $0x6b8] sm:$0xff]
  %v230 = vld [vmem:[%s0 + $0x6c0] sm:$0xff]
  %v231 = vld [vmem:[%s0 + $0x6c8] sm:$0xff]
  %v232 = vld [vmem:[%s0 + $0x6d0] sm:$0xff]
  %v233 = vld [vmem:[%s0 + $0x6d8] sm:$0xff]
  %v234 = vld [vmem:[%s0 + $0x6e0] sm:$0xff]
  %v235 = vld [vmem:[%s0 + $0x6e8] sm:$0xff]
  %v236 = vld [vmem:[%s0 + $0x6f0] sm:$0xff]
  %v237 = vld [vmem:[%s0 + $0x6f8] sm:$0xff]
  %v238 = vld [vmem:[%s0 + $0x700] sm:$0xff]
  %v239 = vld [vmem:[%s0 + $0x708] sm:$0xff]
  %v240 = vld [vmem:[%s0 + $0x710] sm:$0xff]
  %v241 = vld [vmem:[%s0 + $0x718] sm:$0xff]
  %v242 = vld [vmem:[%s0 + $0x720] sm:$0xff]
  %v243 = vld [vmem:[%s0 + $0x728] sm:$0xff]
  %v244 = vld [vmem:[%s0 + $0x730] sm:$0xff]
  %v245 = vld [vmem:[%s0 + $0x738] sm:$0xff]
  %v246 = vld [vmem:[%s0 + $0x740] sm:$0xff]
  %v247 = vld [vmem:[%s0 + $0x748] sm:$0xff]
  %v248 = vld [vmem:[%s0 + $0x750] sm:$0xff]
  %v249 = vld [vmem:[%s0 + $0x758] sm:$0xff]
  %v250 = vld [vmem:[%s0 + $0x760] sm:$0xff]
  %v251 = vld [vmem:[%s0 + $0x768] sm:$0xff]
  %v252 = vld [vmem:[%s0 + $0x770] sm:$0xff]
  %v253 = vld [vmem:[%s0 + $0x778] sm:$0xff]
  %v254 = vld [vmem:[%s0 + $0x780] sm:$0xff]
  %v255 = vld [vmem:[%s0 + $0x788] sm:$0xff]
  %v256 = vld [vmem:[%s0 + $0x790] sm:$0xff]
  %v257 = vld [vmem:[%s0 + $0x798] sm:$0xff]
  %v258 = vld [vmem:[%s0 + $0x7a0] sm:$0xff]
  %v259 = vld [vmem:[%s0 + $0x7a8] sm:$0xff]
  %v260 = vld [vmem:[%s0 + $0x7b0] sm:$0xff]
  %v261 = vld [vmem:[%s0 + $0x7b8] sm:$0xff]
  %v262 = vld [vmem:[%s0 + $0x7c0] sm:$0xff]
  %v263 = vld [vmem:[%s0 + $0x7c8] sm:$0xff]
  %v264 = vld [vmem:[%s0 + $0x7d0] sm:$0xff]
  %v265 = vld [vmem:[%s0 + $0x7d8] sm:$0xff]
  %v266 = vld [vmem:[%s0 + $0x7e0] sm:$0xff]
  %v267 = vld [vmem:[%s0 + $0x7e8] sm:$0xff]
  %v268 = vld [vmem:[%s0 + $0x7f0] sm:$0xff]
  %v269 = vld [vmem:[%s0 + $0x7f8] sm:$0xff]
  %v270 = vld [vmem:[%s0 + $0x800] sm:$0xff]
  %v271 = vld [vmem:[%s0 + $0x808] sm:$0xff]
  %v272 = vld [vmem:[%s0 + $0x810] sm:$0xff]
  %v273 = vld [vmem:[%s0 + $0x818] sm:$0xff]
  %v274 = vld [vmem:[%s0 + $0x820] sm:$0xff]
  %v275 = vld [vmem:[%s0 + $0x828] sm:$0xff]
  %v276 = vld [vmem:[%s0 + $0x830] sm:$0xff]
  %v277 = vld [vmem:[%s0 + $0x838] sm:$0xff]
  %v278 = vld [vmem:[%s0 + $0x840] sm:$0xff]
  %v279 = vld [vmem:[%s0 + $0x848] sm:$0xff]
  %v280 = vld [vmem:[%s0 + $0x850] sm:$0xff]
  %v281 = vld [vmem:[%s0 + $0x858] sm:$0xff]
  %v282 = vld [vmem:[%s0 + $0x860] sm:$0xff]
  %v283 = vld [vmem:[%s0 + $0x868] sm:$0xff]
  %v284 = vld [vmem:[%s0 + $0x870] sm:$0xff]
  %v285 = vld [vmem:[%s0 + $0x878] sm:$0xff]
  %v286 = vld [vmem:[%s0 + $0x880] sm:$0xff]
  %v287 = vld [vmem:[%s0 + $0x888] sm:$0xff]
  %v288 = vld [vmem:[%s0 + $0x890] sm:$0xff]
  %v289 = vld [vmem:[%s0 + $0x898] sm:$0xff]
  %v290 = vld [vmem:[%s0 + $0x8a0] sm:$0xff]
  %v291 = vld [vmem:[%s0 + $0x8a8] sm:$0xff]
  %v292 = vld [vmem:[%s0 + $0x8b0] sm:$0xff]
  %v293 = vld [vmem:[%s0 + $0x8b8] sm:$0xff]
  %v294 = vld [vmem:[%s0 + $0x8c0] sm:$0xff]
  %v295 = vld [vmem:[%s0 + $0x8c8] sm:$0xff]
  %v296 = vld [vmem:[%s0 + $0x8d0] sm:$0xff]
  %v297 = vld [vmem:[%s0 + $0x8d8] sm:$0xff]
  %v298 = vld [vmem:[%s0 + $0x8e0] sm:$0xff]
  %v299 = vld [vmem:[%s0 + $0x8e8] sm:$0xff]
  %v300 = vld [vmem:[%s0 + $0x8f0] sm:$0xff]
  %v301 = vld [vmem:[%s0 + $0x8f8] sm:$0xff]
  %vm302 = vcmask 400384
  %v303 = vsel %vm302, %v14, 0.0
  %304 = vadd.xlane.f32.xlu0 %v303
  %v305 = vpop.xlane.xlu0 %304
  %v306 = vsel %vm302, %v15, 0.0
  %307 = vadd.xlane.f32.xlu0 %v306
  %v308 = vpop.xlane.xlu0 %307
  %v309 = vsel %vm302, %v16, 0.0
  %310 = vadd.xlane.f32.xlu0 %v309
  %v311 = vpop.xlane.xlu0 %310
  %v312 = vsel %vm302, %v17, 0.0
  %313 = vadd.xlane.f32.xlu0 %v312
  %v314 = vpop.xlane.xlu0 %313
  %v315 = vsel %vm302, %v18, 0.0
  %316 = vadd.xlane.f32.xlu0 %v315
  %v317 = vpop.xlane.xlu0 %316
  %v318 = vsel %vm302, %v19, 0.0
  %319 = vadd.xlane.f32.xlu0 %v318
  %v320 = vpop.xlane.xlu0 %319
  %v321 = vsel %vm302, %v20, 0.0
  %322 = vadd.xlane.f32.xlu0 %v321
  %v323 = vpop.xlane.xlu0 %322
  %v324 = vsel %vm302, %v21, 0.0
  %325 = vadd.xlane.f32.xlu0 %v324
  %v326 = vpop.xlane.xlu0 %325
  %v327 = vsel %vm302, %v22, 0.0
  %328 = vadd.xlane.f32.xlu0 %v327
  %v329 = vpop.xlane.xlu0 %328
  %v330 = vsel %vm302, %v23, 0.0
  %331 = vadd.xlane.f32.xlu0 %v330
  %v332 = vpop.xlane.xlu0 %331
  %v333 = vsel %vm302, %v24, 0.0
  %334 = vadd.xlane.f32.xlu0 %v333
  %v335 = vpop.xlane.xlu0 %334
  %v336 = vsel %vm302, %v25, 0.0
  %337 = vadd.xlane.f32.xlu0 %v336
  %v338 = vpop.xlane.xlu0 %337
  %v339 = vsel %vm302, %v26, 0.0
  %340 = vadd.xlane.f32.xlu0 %v339
  %v341 = vpop.xlane.xlu0 %340
  %v342 = vsel %vm302, %v27, 0.0
  %343 = vadd.xlane.f32.xlu0 %v342
  %v344 = vpop.xlane.xlu0 %343
  %v345 = vsel %vm302, %v28, 0.0
  %346 = vadd.xlane.f32.xlu0 %v345
  %v347 = vpop.xlane.xlu0 %346
  %v348 = vsel %vm302, %v29, 0.0
  %349 = vadd.xlane.f32.xlu0 %v348
  %v350 = vpop.xlane.xlu0 %349
  %v351 = vsel %vm302, %v30, 0.0
  %352 = vadd.xlane.f32.xlu0 %v351
  %v353 = vpop.xlane.xlu0 %352
  %v354 = vsel %vm302, %v31, 0.0
  %355 = vadd.xlane.f32.xlu0 %v354
  %v356 = vpop.xlane.xlu0 %355
  %v357 = vsel %vm302, %v32, 0.0
  %358 = vadd.xlane.f32.xlu0 %v357
  %v359 = vpop.xlane.xlu0 %358
  %v360 = vsel %vm302, %v33, 0.0
  %361 = vadd.xlane.f32.xlu0 %v360
  %v362 = vpop.xlane.xlu0 %361
  %v363 = vsel %vm302, %v34, 0.0
  %364 = vadd.xlane.f32.xlu0 %v363
  %v365 = vpop.xlane.xlu0 %364
  %v366 = vsel %vm302, %v35, 0.0
  %367 = vadd.xlane.f32.xlu0 %v366
  %v368 = vpop.xlane.xlu0 %367
  %v369 = vsel %vm302, %v36, 0.0
  %370 = vadd.xlane.f32.xlu0 %v369
  %v371 = vpop.xlane.xlu0 %370
  %v372 = vsel %vm302, %v37, 0.0
  %373 = vadd.xlane.f32.xlu0 %v372
  %v374 = vpop.xlane.xlu0 %373
  %v375 = vsel %vm302, %v38, 0.0
  %376 = vadd.xlane.f32.xlu0 %v375
  %v377 = vpop.xlane.xlu0 %376
  %v378 = vsel %vm302, %v39, 0.0
  %379 = vadd.xlane.f32.xlu0 %v378
  %v380 = vpop.xlane.xlu0 %379
  %v381 = vsel %vm302, %v40, 0.0
  %382 = vadd.xlane.f32.xlu0 %v381
  %v383 = vpop.xlane.xlu0 %382
  %v384 = vsel %vm302, %v41, 0.0
  %385 = vadd.xlane.f32.xlu0 %v384
  %v386 = vpop.xlane.xlu0 %385
  %v387 = vsel %vm302, %v42, 0.0
  %388 = vadd.xlane.f32.xlu0 %v387
  %v389 = vpop.xlane.xlu0 %388
  %v390 = vsel %vm302, %v43, 0.0
  %391 = vadd.xlane.f32.xlu0 %v390
  %v392 = vpop.xlane.xlu0 %391
  %v393 = vsel %vm302, %v44, 0.0
  %394 = vadd.xlane.f32.xlu0 %v393
  %v395 = vpop.xlane.xlu0 %394
  %v396 = vsel %vm302, %v45, 0.0
  %397 = vadd.xlane.f32.xlu0 %v396
  %v398 = vpop.xlane.xlu0 %397
  %v399 = vsel %vm302, %v46, 0.0
  %400 = vadd.xlane.f32.xlu0 %v399
  %v401 = vpop.xlane.xlu0 %400
  %v402 = vsel %vm302, %v47, 0.0
  %403 = vadd.xlane.f32.xlu0 %v402
  %v404 = vpop.xlane.xlu0 %403
  %v405 = vsel %vm302, %v48, 0.0
  %406 = vadd.xlane.f32.xlu0 %v405
  %v407 = vpop.xlane.xlu0 %406
  %v408 = vsel %vm302, %v49, 0.0
  %409 = vadd.xlane.f32.xlu0 %v408
  %v410 = vpop.xlane.xlu0 %409
  %v411 = vsel %vm302, %v50, 0.0
  %412 = vadd.xlane.f32.xlu0 %v411
  %v413 = vpop.xlane.xlu0 %412
  %v414 = vsel %vm302, %v51, 0.0
  %415 = vadd.xlane.f32.xlu0 %v414
  %v416 = vpop.xlane.xlu0 %415
  %v417 = vsel %vm302, %v52, 0.0
  %418 = vadd.xlane.f32.xlu0 %v417
  %v419 = vpop.xlane.xlu0 %418
  %v420 = vsel %vm302, %v53, 0.0
  %421 = vadd.xlane.f32.xlu0 %v420
  %v422 = vpop.xlane.xlu0 %421
  %v423 = vsel %vm302, %v54, 0.0
  %424 = vadd.xlane.f32.xlu0 %v423
  %v425 = vpop.xlane.xlu0 %424
  %v426 = vsel %vm302, %v55, 0.0
  %427 = vadd.xlane.f32.xlu0 %v426
  %v428 = vpop.xlane.xlu0 %427
  %v429 = vsel %vm302, %v56, 0.0
  %430 = vadd.xlane.f32.xlu0 %v429
  %v431 = vpop.xlane.xlu0 %430
  %v432 = vsel %vm302, %v57, 0.0
  %433 = vadd.xlane.f32.xlu0 %v432
  %v434 = vpop.xlane.xlu0 %433
  %v435 = vsel %vm302, %v58, 0.0
  %436 = vadd.xlane.f32.xlu0 %v435
  %v437 = vpop.xlane.xlu0 %436
  %v438 = vsel %vm302, %v59, 0.0
  %439 = vadd.xlane.f32.xlu0 %v438
  %v440 = vpop.xlane.xlu0 %439
  %v441 = vsel %vm302, %v60, 0.0
  %442 = vadd.xlane.f32.xlu0 %v441
  %v443 = vpop.xlane.xlu0 %442
  %v444 = vsel %vm302, %v61, 0.0
  %445 = vadd.xlane.f32.xlu0 %v444
  %v446 = vpop.xlane.xlu0 %445
  %v447 = vsel %vm302, %v62, 0.0
  %448 = vadd.xlane.f32.xlu0 %v447
  %v449 = vpop.xlane.xlu0 %448
  %v450 = vsel %vm302, %v63, 0.0
  %451 = vadd.xlane.f32.xlu0 %v450
  %v452 = vpop.xlane.xlu0 %451
  %v453 = vsel %vm302, %v64, 0.0
  %454 = vadd.xlane.f32.xlu0 %v453
  %v455 = vpop.xlane.xlu0 %454
  %v456 = vsel %vm302, %v65, 0.0
  %457 = vadd.xlane.f32.xlu0 %v456
  %v458 = vpop.xlane.xlu0 %457
  %v459 = vsel %vm302, %v66, 0.0
  %460 = vadd.xlane.f32.xlu0 %v459
  %v461 = vpop.xlane.xlu0 %460
  %v462 = vsel %vm302, %v67, 0.0
  %463 = vadd.xlane.f32.xlu0 %v462
  %v464 = vpop.xlane.xlu0 %463
  %v465 = vsel %vm302, %v68, 0.0
  %466 = vadd.xlane.f32.xlu0 %v465
  %v467 = vpop.xlane.xlu0 %466
  %v468 = vsel %vm302, %v69, 0.0
  %469 = vadd.xlane.f32.xlu0 %v468
  %v470 = vpop.xlane.xlu0 %469
  %v471 = vsel %vm302, %v70, 0.0
  %472 = vadd.xlane.f32.xlu0 %v471
  %v473 = vpop.xlane.xlu0 %472
  %v474 = vsel %vm302, %v71, 0.0
  %475 = vadd.xlane.f32.xlu0 %v474
  %v476 = vpop.xlane.xlu0 %475
  %v477 = vsel %vm302, %v72, 0.0
  %478 = vadd.xlane.f32.xlu0 %v477
  %v479 = vpop.xlane.xlu0 %478
  %v480 = vsel %vm302, %v73, 0.0
  %481 = vadd.xlane.f32.xlu0 %v480
  %v482 = vpop.xlane.xlu0 %481
  %v483 = vsel %vm302, %v74, 0.0
  %484 = vadd.xlane.f32.xlu0 %v483
  %v485 = vpop.xlane.xlu0 %484
  %v486 = vsel %vm302, %v75, 0.0
  %487 = vadd.xlane.f32.xlu0 %v486
  %v488 = vpop.xlane.xlu0 %487
  %v489 = vsel %vm302, %v76, 0.0
  %490 = vadd.xlane.f32.xlu0 %v489
  %v491 = vpop.xlane.xlu0 %490
  %v492 = vsel %vm302, %v77, 0.0
  %493 = vadd.xlane.f32.xlu0 %v492
  %v494 = vpop.xlane.xlu0 %493
  %v495 = vsel %vm302, %v78, 0.0
  %496 = vadd.xlane.f32.xlu0 %v495
  %v497 = vpop.xlane.xlu0 %496
  %v498 = vsel %vm302, %v79, 0.0
  %499 = vadd.xlane.f32.xlu0 %v498
  %v500 = vpop.xlane.xlu0 %499
  %v501 = vsel %vm302, %v80, 0.0
  %502 = vadd.xlane.f32.xlu0 %v501
  %v503 = vpop.xlane.xlu0 %502
  %v504 = vsel %vm302, %v81, 0.0
  %505 = vadd.xlane.f32.xlu0 %v504
  %v506 = vpop.xlane.xlu0 %505
  %v507 = vsel %vm302, %v82, 0.0
  %508 = vadd.xlane.f32.xlu0 %v507
  %v509 = vpop.xlane.xlu0 %508
  %v510 = vsel %vm302, %v83, 0.0
  %511 = vadd.xlane.f32.xlu0 %v510
  %v512 = vpop.xlane.xlu0 %511
  %v513 = vsel %vm302, %v84, 0.0
  %514 = vadd.xlane.f32.xlu0 %v513
  %v515 = vpop.xlane.xlu0 %514
  %v516 = vsel %vm302, %v85, 0.0
  %517 = vadd.xlane.f32.xlu0 %v516
  %v518 = vpop.xlane.xlu0 %517
  %v519 = vsel %vm302, %v86, 0.0
  %520 = vadd.xlane.f32.xlu0 %v519
  %v521 = vpop.xlane.xlu0 %520
  %v522 = vsel %vm302, %v87, 0.0
  %523 = vadd.xlane.f32.xlu0 %v522
  %v524 = vpop.xlane.xlu0 %523
  %v525 = vsel %vm302, %v88, 0.0
  %526 = vadd.xlane.f32.xlu0 %v525
  %v527 = vpop.xlane.xlu0 %526
  %v528 = vsel %vm302, %v89, 0.0
  %529 = vadd.xlane.f32.xlu0 %v528
  %v530 = vpop.xlane.xlu0 %529
  %v531 = vsel %vm302, %v90, 0.0
  %532 = vadd.xlane.f32.xlu0 %v531
  %v533 = vpop.xlane.xlu0 %532
  %v534 = vsel %vm302, %v91, 0.0
  %535 = vadd.xlane.f32.xlu0 %v534
  %v536 = vpop.xlane.xlu0 %535
  %v537 = vsel %vm302, %v92, 0.0
  %538 = vadd.xlane.f32.xlu0 %v537
  %v539 = vpop.xlane.xlu0 %538
  %v540 = vsel %vm302, %v93, 0.0
  %541 = vadd.xlane.f32.xlu0 %v540
  %v542 = vpop.xlane.xlu0 %541
  %v543 = vsel %vm302, %v94, 0.0
  %544 = vadd.xlane.f32.xlu0 %v543
  %v545 = vpop.xlane.xlu0 %544
  %v546 = vsel %vm302, %v95, 0.0
  %547 = vadd.xlane.f32.xlu0 %v546
  %v548 = vpop.xlane.xlu0 %547
  %v549 = vsel %vm302, %v96, 0.0
  %550 = vadd.xlane.f32.xlu0 %v549
  %v551 = vpop.xlane.xlu0 %550
  %v552 = vsel %vm302, %v97, 0.0
  %553 = vadd.xlane.f32.xlu0 %v552
  %v554 = vpop.xlane.xlu0 %553
  %v555 = vsel %vm302, %v98, 0.0
  %556 = vadd.xlane.f32.xlu0 %v555
  %v557 = vpop.xlane.xlu0 %556
  %v558 = vsel %vm302, %v99, 0.0
  %559 = vadd.xlane.f32.xlu0 %v558
  %v560 = vpop.xlane.xlu0 %559
  %v561 = vsel %vm302, %v100, 0.0
  %562 = vadd.xlane.f32.xlu0 %v561
  %v563 = vpop.xlane.xlu0 %562
  %v564 = vsel %vm302, %v101, 0.0
  %565 = vadd.xlane.f32.xlu0 %v564
  %v566 = vpop.xlane.xlu0 %565
  %v567 = vsel %vm302, %v102, 0.0
  %568 = vadd.xlane.f32.xlu0 %v567
  %v569 = vpop.xlane.xlu0 %568
  %v570 = vsel %vm302, %v103, 0.0
  %571 = vadd.xlane.f32.xlu0 %v570
  %v572 = vpop.xlane.xlu0 %571
  %v573 = vsel %vm302, %v104, 0.0
  %574 = vadd.xlane.f32.xlu0 %v573
  %v575 = vpop.xlane.xlu0 %574
  %v576 = vsel %vm302, %v105, 0.0
  %577 = vadd.xlane.f32.xlu0 %v576
  %v578 = vpop.xlane.xlu0 %577
  %v579 = vsel %vm302, %v106, 0.0
  %580 = vadd.xlane.f32.xlu0 %v579
  %v581 = vpop.xlane.xlu0 %580
  %v582 = vsel %vm302, %v107, 0.0
  %583 = vadd.xlane.f32.xlu0 %v582
  %v584 = vpop.xlane.xlu0 %583
  %v585 = vsel %vm302, %v108, 0.0
  %586 = vadd.xlane.f32.xlu0 %v585
  %v587 = vpop.xlane.xlu0 %586
  %v588 = vsel %vm302, %v109, 0.0
  %589 = vadd.xlane.f32.xlu0 %v588
  %v590 = vpop.xlane.xlu0 %589
  %v591 = vsel %vm302, %v110, 0.0
  %592 = vadd.xlane.f32.xlu0 %v591
  %v593 = vpop.xlane.xlu0 %592
  %v594 = vsel %vm302, %v111, 0.0
  %595 = vadd.xlane.f32.xlu0 %v594
  %v596 = vpop.xlane.xlu0 %595
  %v597 = vsel %vm302, %v112, 0.0
  %598 = vadd.xlane.f32.xlu0 %v597
  %v599 = vpop.xlane.xlu0 %598
  %v600 = vsel %vm302, %v113, 0.0
  %601 = vadd.xlane.f32.xlu0 %v600
  %v602 = vpop.xlane.xlu0 %601
  %v603 = vsel %vm302, %v114, 0.0
  %604 = vadd.xlane.f32.xlu0 %v603
  %v605 = vpop.xlane.xlu0 %604
  %v606 = vsel %vm302, %v115, 0.0
  %607 = vadd.xlane.f32.xlu0 %v606
  %v608 = vpop.xlane.xlu0 %607
  %v609 = vsel %vm302, %v116, 0.0
  %610 = vadd.xlane.f32.xlu0 %v609
  %v611 = vpop.xlane.xlu0 %610
  %v612 = vsel %vm302, %v117, 0.0
  %613 = vadd.xlane.f32.xlu0 %v612
  %v614 = vpop.xlane.xlu0 %613
  %v615 = vsel %vm302, %v118, 0.0
  %616 = vadd.xlane.f32.xlu0 %v615
  %v617 = vpop.xlane.xlu0 %616
  %v618 = vsel %vm302, %v119, 0.0
  %619 = vadd.xlane.f32.xlu0 %v618
  %v620 = vpop.xlane.xlu0 %619
  %v621 = vsel %vm302, %v120, 0.0
  %622 = vadd.xlane.f32.xlu0 %v621
  %v623 = vpop.xlane.xlu0 %622
  %v624 = vsel %vm302, %v121, 0.0
  %625 = vadd.xlane.f32.xlu0 %v624
  %v626 = vpop.xlane.xlu0 %625
  %v627 = vsel %vm302, %v122, 0.0
  %628 = vadd.xlane.f32.xlu0 %v627
  %v629 = vpop.xlane.xlu0 %628
  %v630 = vsel %vm302, %v123, 0.0
  %631 = vadd.xlane.f32.xlu0 %v630
  %v632 = vpop.xlane.xlu0 %631
  %v633 = vsel %vm302, %v124, 0.0
  %634 = vadd.xlane.f32.xlu0 %v633
  %v635 = vpop.xlane.xlu0 %634
  %v636 = vsel %vm302, %v125, 0.0
  %637 = vadd.xlane.f32.xlu0 %v636
  %v638 = vpop.xlane.xlu0 %637
  %v639 = vsel %vm302, %v126, 0.0
  %640 = vadd.xlane.f32.xlu0 %v639
  %v641 = vpop.xlane.xlu0 %640
  %v642 = vsel %vm302, %v127, 0.0
  %643 = vadd.xlane.f32.xlu0 %v642
  %v644 = vpop.xlane.xlu0 %643
  %v645 = vsel %vm302, %v128, 0.0
  %646 = vadd.xlane.f32.xlu0 %v645
  %v647 = vpop.xlane.xlu0 %646
  %v648 = vsel %vm302, %v129, 0.0
  %649 = vadd.xlane.f32.xlu0 %v648
  %v650 = vpop.xlane.xlu0 %649
  %v651 = vsel %vm302, %v130, 0.0
  %652 = vadd.xlane.f32.xlu0 %v651
  %v653 = vpop.xlane.xlu0 %652
  %v654 = vsel %vm302, %v131, 0.0
  %655 = vadd.xlane.f32.xlu0 %v654
  %v656 = vpop.xlane.xlu0 %655
  %v657 = vsel %vm302, %v132, 0.0
  %658 = vadd.xlane.f32.xlu0 %v657
  %v659 = vpop.xlane.xlu0 %658
  %v660 = vsel %vm302, %v133, 0.0
  %661 = vadd.xlane.f32.xlu0 %v660
  %v662 = vpop.xlane.xlu0 %661
  %v663 = vsel %vm302, %v134, 0.0
  %664 = vadd.xlane.f32.xlu0 %v663
  %v665 = vpop.xlane.xlu0 %664
  %v666 = vsel %vm302, %v135, 0.0
  %667 = vadd.xlane.f32.xlu0 %v666
  %v668 = vpop.xlane.xlu0 %667
  %v669 = vsel %vm302, %v136, 0.0
  %670 = vadd.xlane.f32.xlu0 %v669
  %v671 = vpop.xlane.xlu0 %670
  %v672 = vsel %vm302, %v137, 0.0
  %673 = vadd.xlane.f32.xlu0 %v672
  %v674 = vpop.xlane.xlu0 %673
  %v675 = vsel %vm302, %v138, 0.0
  %676 = vadd.xlane.f32.xlu0 %v675
  %v677 = vpop.xlane.xlu0 %676
  %v678 = vsel %vm302, %v139, 0.0
  %679 = vadd.xlane.f32.xlu0 %v678
  %v680 = vpop.xlane.xlu0 %679
  %v681 = vsel %vm302, %v140, 0.0
  %682 = vadd.xlane.f32.xlu0 %v681
  %v683 = vpop.xlane.xlu0 %682
  %v684 = vsel %vm302, %v141, 0.0
  %685 = vadd.xlane.f32.xlu0 %v684
  %v686 = vpop.xlane.xlu0 %685
  %v687 = vsel %vm302, %v142, 0.0
  %688 = vadd.xlane.f32.xlu0 %v687
  %v689 = vpop.xlane.xlu0 %688
  %v690 = vsel %vm302, %v143, 0.0
  %691 = vadd.xlane.f32.xlu0 %v690
  %v692 = vpop.xlane.xlu0 %691
  %v693 = vsel %vm302, %v144, 0.0
  %694 = vadd.xlane.f32.xlu0 %v693
  %v695 = vpop.xlane.xlu0 %694
  %v696 = vsel %vm302, %v145, 0.0
  %697 = vadd.xlane.f32.xlu0 %v696
  %v698 = vpop.xlane.xlu0 %697
  %v699 = vsel %vm302, %v146, 0.0
  %700 = vadd.xlane.f32.xlu0 %v699
  %v701 = vpop.xlane.xlu0 %700
  %v702 = vsel %vm302, %v147, 0.0
  %703 = vadd.xlane.f32.xlu0 %v702
  %v704 = vpop.xlane.xlu0 %703
  %v705 = vsel %vm302, %v148, 0.0
  %706 = vadd.xlane.f32.xlu0 %v705
  %v707 = vpop.xlane.xlu0 %706
  %v708 = vsel %vm302, %v149, 0.0
  %709 = vadd.xlane.f32.xlu0 %v708
  %v710 = vpop.xlane.xlu0 %709
  %v711 = vsel %vm302, %v150, 0.0
  %712 = vadd.xlane.f32.xlu0 %v711
  %v713 = vpop.xlane.xlu0 %712
  %v714 = vsel %vm302, %v151, 0.0
  %715 = vadd.xlane.f32.xlu0 %v714
  %v716 = vpop.xlane.xlu0 %715
  %v717 = vsel %vm302, %v152, 0.0
  %718 = vadd.xlane.f32.xlu0 %v717
  %v719 = vpop.xlane.xlu0 %718
  %v720 = vsel %vm302, %v153, 0.0
  %721 = vadd.xlane.f32.xlu0 %v720
  %v722 = vpop.xlane.xlu0 %721
  %v723 = vsel %vm302, %v154, 0.0
  %724 = vadd.xlane.f32.xlu0 %v723
  %v725 = vpop.xlane.xlu0 %724
  %v726 = vsel %vm302, %v155, 0.0
  %727 = vadd.xlane.f32.xlu0 %v726
  %v728 = vpop.xlane.xlu0 %727
  %v729 = vsel %vm302, %v156, 0.0
  %730 = vadd.xlane.f32.xlu0 %v729
  %v731 = vpop.xlane.xlu0 %730
  %v732 = vsel %vm302, %v157, 0.0
  %733 = vadd.xlane.f32.xlu0 %v732
  %v734 = vpop.xlane.xlu0 %733
  %v735 = vsel %vm302, %v158, 0.0
  %736 = vadd.xlane.f32.xlu0 %v735
  %v737 = vpop.xlane.xlu0 %736
  %v738 = vsel %vm302, %v159, 0.0
  %739 = vadd.xlane.f32.xlu0 %v738
  %v740 = vpop.xlane.xlu0 %739
  %v741 = vsel %vm302, %v160, 0.0
  %742 = vadd.xlane.f32.xlu0 %v741
  %v743 = vpop.xlane.xlu0 %742
  %v744 = vsel %vm302, %v161, 0.0
  %745 = vadd.xlane.f32.xlu0 %v744
  %v746 = vpop.xlane.xlu0 %745
  %v747 = vsel %vm302, %v162, 0.0
  %748 = vadd.xlane.f32.xlu0 %v747
  %v749 = vpop.xlane.xlu0 %748
  %v750 = vsel %vm302, %v163, 0.0
  %751 = vadd.xlane.f32.xlu0 %v750
  %v752 = vpop.xlane.xlu0 %751
  %v753 = vsel %vm302, %v164, 0.0
  %754 = vadd.xlane.f32.xlu0 %v753
  %v755 = vpop.xlane.xlu0 %754
  %v756 = vsel %vm302, %v165, 0.0
  %757 = vadd.xlane.f32.xlu0 %v756
  %v758 = vpop.xlane.xlu0 %757
  %v759 = vsel %vm302, %v166, 0.0
  %760 = vadd.xlane.f32.xlu0 %v759
  %v761 = vpop.xlane.xlu0 %760
  %v762 = vsel %vm302, %v167, 0.0
  %763 = vadd.xlane.f32.xlu0 %v762
  %v764 = vpop.xlane.xlu0 %763
  %v765 = vsel %vm302, %v168, 0.0
  %766 = vadd.xlane.f32.xlu0 %v765
  %v767 = vpop.xlane.xlu0 %766
  %v768 = vsel %vm302, %v169, 0.0
  %769 = vadd.xlane.f32.xlu0 %v768
  %v770 = vpop.xlane.xlu0 %769
  %v771 = vsel %vm302, %v170, 0.0
  %772 = vadd.xlane.f32.xlu0 %v771
  %v773 = vpop.xlane.xlu0 %772
  %v774 = vsel %vm302, %v171, 0.0
  %775 = vadd.xlane.f32.xlu0 %v774
  %v776 = vpop.xlane.xlu0 %775
  %v777 = vsel %vm302, %v172, 0.0
  %778 = vadd.xlane.f32.xlu0 %v777
  %v779 = vpop.xlane.xlu0 %778
  %v780 = vsel %vm302, %v173, 0.0
  %781 = vadd.xlane.f32.xlu0 %v780
  %v782 = vpop.xlane.xlu0 %781
  %v783 = vsel %vm302, %v174, 0.0
  %784 = vadd.xlane.f32.xlu0 %v783
  %v785 = vpop.xlane.xlu0 %784
  %v786 = vsel %vm302, %v175, 0.0
  %787 = vadd.xlane.f32.xlu0 %v786
  %v788 = vpop.xlane.xlu0 %787
  %v789 = vsel %vm302, %v176, 0.0
  %790 = vadd.xlane.f32.xlu0 %v789
  %v791 = vpop.xlane.xlu0 %790
  %v792 = vsel %vm302, %v177, 0.0
  %793 = vadd.xlane.f32.xlu0 %v792
  %v794 = vpop.xlane.xlu0 %793
  %v795 = vsel %vm302, %v178, 0.0
  %796 = vadd.xlane.f32.xlu0 %v795
  %v797 = vpop.xlane.xlu0 %796
  %v798 = vsel %vm302, %v179, 0.0
  %799 = vadd.xlane.f32.xlu0 %v798
  %v800 = vpop.xlane.xlu0 %799
  %v801 = vsel %vm302, %v180, 0.0
  %802 = vadd.xlane.f32.xlu0 %v801
  %v803 = vpop.xlane.xlu0 %802
  %v804 = vsel %vm302, %v181, 0.0
  %805 = vadd.xlane.f32.xlu0 %v804
  %v806 = vpop.xlane.xlu0 %805
  %v807 = vsel %vm302, %v182, 0.0
  %808 = vadd.xlane.f32.xlu0 %v807
  %v809 = vpop.xlane.xlu0 %808
  %v810 = vsel %vm302, %v183, 0.0
  %811 = vadd.xlane.f32.xlu0 %v810
  %v812 = vpop.xlane.xlu0 %811
  %v813 = vsel %vm302, %v184, 0.0
  %814 = vadd.xlane.f32.xlu0 %v813
  %v815 = vpop.xlane.xlu0 %814
  %v816 = vsel %vm302, %v185, 0.0
  %817 = vadd.xlane.f32.xlu0 %v816
  %v818 = vpop.xlane.xlu0 %817
  %v819 = vsel %vm302, %v186, 0.0
  %820 = vadd.xlane.f32.xlu0 %v819
  %v821 = vpop.xlane.xlu0 %820
  %v822 = vsel %vm302, %v187, 0.0
  %823 = vadd.xlane.f32.xlu0 %v822
  %v824 = vpop.xlane.xlu0 %823
  %v825 = vsel %vm302, %v188, 0.0
  %826 = vadd.xlane.f32.xlu0 %v825
  %v827 = vpop.xlane.xlu0 %826
  %v828 = vsel %vm302, %v189, 0.0
  %829 = vadd.xlane.f32.xlu0 %v828
  %v830 = vpop.xlane.xlu0 %829
  %v831 = vsel %vm302, %v190, 0.0
  %832 = vadd.xlane.f32.xlu0 %v831
  %v833 = vpop.xlane.xlu0 %832
  %v834 = vsel %vm302, %v191, 0.0
  %835 = vadd.xlane.f32.xlu0 %v834
  %v836 = vpop.xlane.xlu0 %835
  %v837 = vsel %vm302, %v192, 0.0
  %838 = vadd.xlane.f32.xlu0 %v837
  %v839 = vpop.xlane.xlu0 %838
  %v840 = vsel %vm302, %v193, 0.0
  %841 = vadd.xlane.f32.xlu0 %v840
  %v842 = vpop.xlane.xlu0 %841
  %v843 = vsel %vm302, %v194, 0.0
  %844 = vadd.xlane.f32.xlu0 %v843
  %v845 = vpop.xlane.xlu0 %844
  %v846 = vsel %vm302, %v195, 0.0
  %847 = vadd.xlane.f32.xlu0 %v846
  %v848 = vpop.xlane.xlu0 %847
  %v849 = vsel %vm302, %v196, 0.0
  %850 = vadd.xlane.f32.xlu0 %v849
  %v851 = vpop.xlane.xlu0 %850
  %v852 = vsel %vm302, %v197, 0.0
  %853 = vadd.xlane.f32.xlu0 %v852
  %v854 = vpop.xlane.xlu0 %853
  %v855 = vsel %vm302, %v198, 0.0
  %856 = vadd.xlane.f32.xlu0 %v855
  %v857 = vpop.xlane.xlu0 %856
  %v858 = vsel %vm302, %v199, 0.0
  %859 = vadd.xlane.f32.xlu0 %v858
  %v860 = vpop.xlane.xlu0 %859
  %v861 = vsel %vm302, %v200, 0.0
  %862 = vadd.xlane.f32.xlu0 %v861
  %v863 = vpop.xlane.xlu0 %862
  %v864 = vsel %vm302, %v201, 0.0
  %865 = vadd.xlane.f32.xlu0 %v864
  %v866 = vpop.xlane.xlu0 %865
  %v867 = vsel %vm302, %v202, 0.0
  %868 = vadd.xlane.f32.xlu0 %v867
  %v869 = vpop.xlane.xlu0 %868
  %v870 = vsel %vm302, %v203, 0.0
  %871 = vadd.xlane.f32.xlu0 %v870
  %v872 = vpop.xlane.xlu0 %871
  %v873 = vsel %vm302, %v204, 0.0
  %874 = vadd.xlane.f32.xlu0 %v873
  %v875 = vpop.xlane.xlu0 %874
  %v876 = vsel %vm302, %v205, 0.0
  %877 = vadd.xlane.f32.xlu0 %v876
  %v878 = vpop.xlane.xlu0 %877
  %v879 = vsel %vm302, %v206, 0.0
  %880 = vadd.xlane.f32.xlu0 %v879
  %v881 = vpop.xlane.xlu0 %880
  %v882 = vsel %vm302, %v207, 0.0
  %883 = vadd.xlane.f32.xlu0 %v882
  %v884 = vpop.xlane.xlu0 %883
  %v885 = vsel %vm302, %v208, 0.0
  %886 = vadd.xlane.f32.xlu0 %v885
  %v887 = vpop.xlane.xlu0 %886
  %v888 = vsel %vm302, %v209, 0.0
  %889 = vadd.xlane.f32.xlu0 %v888
  %v890 = vpop.xlane.xlu0 %889
  %v891 = vsel %vm302, %v210, 0.0
  %892 = vadd.xlane.f32.xlu0 %v891
  %v893 = vpop.xlane.xlu0 %892
  %v894 = vsel %vm302, %v211, 0.0
  %895 = vadd.xlane.f32.xlu0 %v894
  %v896 = vpop.xlane.xlu0 %895
  %v897 = vsel %vm302, %v212, 0.0
  %898 = vadd.xlane.f32.xlu0 %v897
  %v899 = vpop.xlane.xlu0 %898
  %v900 = vsel %vm302, %v213, 0.0
  %901 = vadd.xlane.f32.xlu0 %v900
  %v902 = vpop.xlane.xlu0 %901
  %v903 = vsel %vm302, %v214, 0.0
  %904 = vadd.xlane.f32.xlu0 %v903
  %v905 = vpop.xlane.xlu0 %904
  %v906 = vsel %vm302, %v215, 0.0
  %907 = vadd.xlane.f32.xlu0 %v906
  %v908 = vpop.xlane.xlu0 %907
  %v909 = vsel %vm302, %v216, 0.0
  %910 = vadd.xlane.f32.xlu0 %v909
  %v911 = vpop.xlane.xlu0 %910
  %v912 = vsel %vm302, %v217, 0.0
  %913 = vadd.xlane.f32.xlu0 %v912
  %v914 = vpop.xlane.xlu0 %913
  %v915 = vsel %vm302, %v218, 0.0
  %916 = vadd.xlane.f32.xlu0 %v915
  %v917 = vpop.xlane.xlu0 %916
  %v918 = vsel %vm302, %v219, 0.0
  %919 = vadd.xlane.f32.xlu0 %v918
  %v920 = vpop.xlane.xlu0 %919
  %v921 = vsel %vm302, %v220, 0.0
  %922 = vadd.xlane.f32.xlu0 %v921
  %v923 = vpop.xlane.xlu0 %922
  %v924 = vsel %vm302, %v221, 0.0
  %925 = vadd.xlane.f32.xlu0 %v924
  %v926 = vpop.xlane.xlu0 %925
  %v927 = vsel %vm302, %v222, 0.0
  %928 = vadd.xlane.f32.xlu0 %v927
  %v929 = vpop.xlane.xlu0 %928
  %v930 = vsel %vm302, %v223, 0.0
  %931 = vadd.xlane.f32.xlu0 %v930
  %v932 = vpop.xlane.xlu0 %931
  %v933 = vsel %vm302, %v224, 0.0
  %934 = vadd.xlane.f32.xlu0 %v933
  %v935 = vpop.xlane.xlu0 %934
  %v936 = vsel %vm302, %v225, 0.0
  %937 = vadd.xlane.f32.xlu0 %v936
  %v938 = vpop.xlane.xlu0 %937
  %v939 = vsel %vm302, %v226, 0.0
  %940 = vadd.xlane.f32.xlu0 %v939
  %v941 = vpop.xlane.xlu0 %940
  %v942 = vsel %vm302, %v227, 0.0
  %943 = vadd.xlane.f32.xlu0 %v942
  %v944 = vpop.xlane.xlu0 %943
  %v945 = vsel %vm302, %v228, 0.0
  %946 = vadd.xlane.f32.xlu0 %v945
  %v947 = vpop.xlane.xlu0 %946
  %v948 = vsel %vm302, %v229, 0.0
  %949 = vadd.xlane.f32.xlu0 %v948
  %v950 = vpop.xlane.xlu0 %949
  %v951 = vsel %vm302, %v230, 0.0
  %952 = vadd.xlane.f32.xlu0 %v951
  %v953 = vpop.xlane.xlu0 %952
  %v954 = vsel %vm302, %v231, 0.0
  %955 = vadd.xlane.f32.xlu0 %v954
  %v956 = vpop.xlane.xlu0 %955
  %v957 = vsel %vm302, %v232, 0.0
  %958 = vadd.xlane.f32.xlu0 %v957
  %v959 = vpop.xlane.xlu0 %958
  %v960 = vsel %vm302, %v233, 0.0
  %961 = vadd.xlane.f32.xlu0 %v960
  %v962 = vpop.xlane.xlu0 %961
  %v963 = vsel %vm302, %v234, 0.0
  %964 = vadd.xlane.f32.xlu0 %v963
  %v965 = vpop.xlane.xlu0 %964
  %v966 = vsel %vm302, %v235, 0.0
  %967 = vadd.xlane.f32.xlu0 %v966
  %v968 = vpop.xlane.xlu0 %967
  %v969 = vsel %vm302, %v236, 0.0
  %970 = vadd.xlane.f32.xlu0 %v969
  %v971 = vpop.xlane.xlu0 %970
  %v972 = vsel %vm302, %v237, 0.0
  %973 = vadd.xlane.f32.xlu0 %v972
  %v974 = vpop.xlane.xlu0 %973
  %v975 = vsel %vm302, %v238, 0.0
  %976 = vadd.xlane.f32.xlu0 %v975
  %v977 = vpop.xlane.xlu0 %976
  %v978 = vsel %vm302, %v239, 0.0
  %979 = vadd.xlane.f32.xlu0 %v978
  %v980 = vpop.xlane.xlu0 %979
  %v981 = vsel %vm302, %v240, 0.0
  %982 = vadd.xlane.f32.xlu0 %v981
  %v983 = vpop.xlane.xlu0 %982
  %v984 = vsel %vm302, %v241, 0.0
  %985 = vadd.xlane.f32.xlu0 %v984
  %v986 = vpop.xlane.xlu0 %985
  %v987 = vsel %vm302, %v242, 0.0
  %988 = vadd.xlane.f32.xlu0 %v987
  %v989 = vpop.xlane.xlu0 %988
  %v990 = vsel %vm302, %v243, 0.0
  %991 = vadd.xlane.f32.xlu0 %v990
  %v992 = vpop.xlane.xlu0 %991
  %v993 = vsel %vm302, %v244, 0.0
  %994 = vadd.xlane.f32.xlu0 %v993
  %v995 = vpop.xlane.xlu0 %994
  %v996 = vsel %vm302, %v245, 0.0
  %997 = vadd.xlane.f32.xlu0 %v996
  %v998 = vpop.xlane.xlu0 %997
  %v999 = vsel %vm302, %v246, 0.0
  %1000 = vadd.xlane.f32.xlu0 %v999
  %v1001 = vpop.xlane.xlu0 %1000
  %v1002 = vsel %vm302, %v247, 0.0
  %1003 = vadd.xlane.f32.xlu0 %v1002
  %v1004 = vpop.xlane.xlu0 %1003
  %v1005 = vsel %vm302, %v248, 0.0
  %1006 = vadd.xlane.f32.xlu0 %v1005
  %v1007 = vpop.xlane.xlu0 %1006
  %v1008 = vsel %vm302, %v249, 0.0
  %1009 = vadd.xlane.f32.xlu0 %v1008
  %v1010 = vpop.xlane.xlu0 %1009
  %v1011 = vsel %vm302, %v250, 0.0
  %1012 = vadd.xlane.f32.xlu0 %v1011
  %v1013 = vpop.xlane.xlu0 %1012
  %v1014 = vsel %vm302, %v251, 0.0
  %1015 = vadd.xlane.f32.xlu0 %v1014
  %v1016 = vpop.xlane.xlu0 %1015
  %v1017 = vsel %vm302, %v252, 0.0
  %1018 = vadd.xlane.f32.xlu0 %v1017
  %v1019 = vpop.xlane.xlu0 %1018
  %v1020 = vsel %vm302, %v253, 0.0
  %1021 = vadd.xlane.f32.xlu0 %v1020
  %v1022 = vpop.xlane.xlu0 %1021
  %v1023 = vsel %vm302, %v254, 0.0
  %1024 = vadd.xlane.f32.xlu0 %v1023
  %v1025 = vpop.xlane.xlu0 %1024
  %v1026 = vsel %vm302, %v255, 0.0
  %1027 = vadd.xlane.f32.xlu0 %v1026
  %v1028 = vpop.xlane.xlu0 %1027
  %v1029 = vsel %vm302, %v256, 0.0
  %1030 = vadd.xlane.f32.xlu0 %v1029
  %v1031 = vpop.xlane.xlu0 %1030
  %v1032 = vsel %vm302, %v257, 0.0
  %1033 = vadd.xlane.f32.xlu0 %v1032
  %v1034 = vpop.xlane.xlu0 %1033
  %v1035 = vsel %vm302, %v258, 0.0
  %1036 = vadd.xlane.f32.xlu0 %v1035
  %v1037 = vpop.xlane.xlu0 %1036
  %v1038 = vsel %vm302, %v259, 0.0
  %1039 = vadd.xlane.f32.xlu0 %v1038
  %v1040 = vpop.xlane.xlu0 %1039
  %v1041 = vsel %vm302, %v260, 0.0
  %1042 = vadd.xlane.f32.xlu0 %v1041
  %v1043 = vpop.xlane.xlu0 %1042
  %v1044 = vsel %vm302, %v261, 0.0
  %1045 = vadd.xlane.f32.xlu0 %v1044
  %v1046 = vpop.xlane.xlu0 %1045
  %v1047 = vsel %vm302, %v262, 0.0
  %1048 = vadd.xlane.f32.xlu0 %v1047
  %v1049 = vpop.xlane.xlu0 %1048
  %v1050 = vsel %vm302, %v263, 0.0
  %1051 = vadd.xlane.f32.xlu0 %v1050
  %v1052 = vpop.xlane.xlu0 %1051
  %v1053 = vsel %vm302, %v264, 0.0
  %1054 = vadd.xlane.f32.xlu0 %v1053
  %v1055 = vpop.xlane.xlu0 %1054
  %v1056 = vsel %vm302, %v265, 0.0
  %1057 = vadd.xlane.f32.xlu0 %v1056
  %v1058 = vpop.xlane.xlu0 %1057
  %v1059 = vsel %vm302, %v266, 0.0
  %1060 = vadd.xlane.f32.xlu0 %v1059
  %v1061 = vpop.xlane.xlu0 %1060
  %v1062 = vsel %vm302, %v267, 0.0
  %1063 = vadd.xlane.f32.xlu0 %v1062
  %v1064 = vpop.xlane.xlu0 %1063
  %v1065 = vsel %vm302, %v268, 0.0
  %1066 = vadd.xlane.f32.xlu0 %v1065
  %v1067 = vpop.xlane.xlu0 %1066
  %v1068 = vsel %vm302, %v269, 0.0
  %1069 = vadd.xlane.f32.xlu0 %v1068
  %v1070 = vpop.xlane.xlu0 %1069
  %v1071 = vsel %vm302, %v270, 0.0
  %1072 = vadd.xlane.f32.xlu0 %v1071
  %v1073 = vpop.xlane.xlu0 %1072
  %v1074 = vsel %vm302, %v271, 0.0
  %1075 = vadd.xlane.f32.xlu0 %v1074
  %v1076 = vpop.xlane.xlu0 %1075
  %v1077 = vsel %vm302, %v272, 0.0
  %1078 = vadd.xlane.f32.xlu0 %v1077
  %v1079 = vpop.xlane.xlu0 %1078
  %v1080 = vsel %vm302, %v273, 0.0
  %1081 = vadd.xlane.f32.xlu0 %v1080
  %v1082 = vpop.xlane.xlu0 %1081
  %v1083 = vsel %vm302, %v274, 0.0
  %1084 = vadd.xlane.f32.xlu0 %v1083
  %v1085 = vpop.xlane.xlu0 %1084
  %v1086 = vsel %vm302, %v275, 0.0
  %1087 = vadd.xlane.f32.xlu0 %v1086
  %v1088 = vpop.xlane.xlu0 %1087
  %v1089 = vsel %vm302, %v276, 0.0
  %1090 = vadd.xlane.f32.xlu0 %v1089
  %v1091 = vpop.xlane.xlu0 %1090
  %v1092 = vsel %vm302, %v277, 0.0
  %1093 = vadd.xlane.f32.xlu0 %v1092
  %v1094 = vpop.xlane.xlu0 %1093
  %v1095 = vsel %vm302, %v278, 0.0
  %1096 = vadd.xlane.f32.xlu0 %v1095
  %v1097 = vpop.xlane.xlu0 %1096
  %v1098 = vsel %vm302, %v279, 0.0
  %1099 = vadd.xlane.f32.xlu0 %v1098
  %v1100 = vpop.xlane.xlu0 %1099
  %v1101 = vsel %vm302, %v280, 0.0
  %1102 = vadd.xlane.f32.xlu0 %v1101
  %v1103 = vpop.xlane.xlu0 %1102
  %v1104 = vsel %vm302, %v281, 0.0
  %1105 = vadd.xlane.f32.xlu0 %v1104
  %v1106 = vpop.xlane.xlu0 %1105
  %v1107 = vsel %vm302, %v282, 0.0
  %1108 = vadd.xlane.f32.xlu0 %v1107
  %v1109 = vpop.xlane.xlu0 %1108
  %v1110 = vsel %vm302, %v283, 0.0
  %1111 = vadd.xlane.f32.xlu0 %v1110
  %v1112 = vpop.xlane.xlu0 %1111
  %v1113 = vsel %vm302, %v284, 0.0
  %1114 = vadd.xlane.f32.xlu0 %v1113
  %v1115 = vpop.xlane.xlu0 %1114
  %v1116 = vsel %vm302, %v285, 0.0
  %1117 = vadd.xlane.f32.xlu0 %v1116
  %v1118 = vpop.xlane.xlu0 %1117
  %v1119 = vsel %vm302, %v286, 0.0
  %1120 = vadd.xlane.f32.xlu0 %v1119
  %v1121 = vpop.xlane.xlu0 %1120
  %v1122 = vsel %vm302, %v287, 0.0
  %1123 = vadd.xlane.f32.xlu0 %v1122
  %v1124 = vpop.xlane.xlu0 %1123
  %v1125 = vsel %vm302, %v288, 0.0
  %1126 = vadd.xlane.f32.xlu0 %v1125
  %v1127 = vpop.xlane.xlu0 %1126
  %v1128 = vsel %vm302, %v289, 0.0
  %1129 = vadd.xlane.f32.xlu0 %v1128
  %v1130 = vpop.xlane.xlu0 %1129
  %v1131 = vsel %vm302, %v290, 0.0
  %1132 = vadd.xlane.f32.xlu0 %v1131
  %v1133 = vpop.xlane.xlu0 %1132
  %v1134 = vsel %vm302, %v291, 0.0
  %1135 = vadd.xlane.f32.xlu0 %v1134
  %v1136 = vpop.xlane.xlu0 %1135
  %v1137 = vsel %vm302, %v292, 0.0
  %1138 = vadd.xlane.f32.xlu0 %v1137
  %v1139 = vpop.xlane.xlu0 %1138
  %v1140 = vsel %vm302, %v293, 0.0
  %1141 = vadd.xlane.f32.xlu0 %v1140
  %v1142 = vpop.xlane.xlu0 %1141
  %v1143 = vsel %vm302, %v294, 0.0
  %1144 = vadd.xlane.f32.xlu0 %v1143
  %v1145 = vpop.xlane.xlu0 %1144
  %v1146 = vsel %vm302, %v295, 0.0
  %1147 = vadd.xlane.f32.xlu0 %v1146
  %v1148 = vpop.xlane.xlu0 %1147
  %v1149 = vsel %vm302, %v296, 0.0
  %1150 = vadd.xlane.f32.xlu0 %v1149
  %v1151 = vpop.xlane.xlu0 %1150
  %v1152 = vsel %vm302, %v297, 0.0
  %1153 = vadd.xlane.f32.xlu0 %v1152
  %v1154 = vpop.xlane.xlu0 %1153
  %v1155 = vsel %vm302, %v298, 0.0
  %1156 = vadd.xlane.f32.xlu0 %v1155
  %v1157 = vpop.xlane.xlu0 %1156
  %v1158 = vsel %vm302, %v299, 0.0
  %1159 = vadd.xlane.f32.xlu0 %v1158
  %v1160 = vpop.xlane.xlu0 %1159
  %v1161 = vsel %vm302, %v300, 0.0
  %1162 = vadd.xlane.f32.xlu0 %v1161
  %v1163 = vpop.xlane.xlu0 %1162
  %v1164 = vsel %vm302, %v301, 0.0
  %1165 = vadd.xlane.f32.xlu0 %v1164
  %v1166 = vpop.xlane.xlu0 %1165
  %v1167 = vmul.f32 %v14, %v14
  %v1168 = vmul.f32 %v15, %v15
  %v1169 = vmul.f32 %v16, %v16
  %v1170 = vmul.f32 %v17, %v17
  %v1171 = vmul.f32 %v18, %v18
  %v1172 = vmul.f32 %v19, %v19
  %v1173 = vmul.f32 %v20, %v20
  %v1174 = vmul.f32 %v21, %v21
  %v1175 = vmul.f32 %v22, %v22
  %v1176 = vmul.f32 %v23, %v23
  %v1177 = vmul.f32 %v24, %v24
  %v1178 = vmul.f32 %v25, %v25
  %v1179 = vmul.f32 %v26, %v26
  %v1180 = vmul.f32 %v27, %v27
  %v1181 = vmul.f32 %v28, %v28
  %v1182 = vmul.f32 %v29, %v29
  %v1183 = vmul.f32 %v30, %v30
  %v1184 = vmul.f32 %v31, %v31
  %v1185 = vmul.f32 %v32, %v32
  %v1186 = vmul.f32 %v33, %v33
  %v1187 = vmul.f32 %v34, %v34
  %v1188 = vmul.f32 %v35, %v35
  %v1189 = vmul.f32 %v36, %v36
  %v1190 = vmul.f32 %v37, %v37
  %v1191 = vmul.f32 %v38, %v38
  %v1192 = vmul.f32 %v39, %v39
  %v1193 = vmul.f32 %v40, %v40
  %v1194 = vmul.f32 %v41, %v41
  %v1195 = vmul.f32 %v42, %v42
  %v1196 = vmul.f32 %v43, %v43
  %v1197 = vmul.f32 %v44, %v44
  %v1198 = vmul.f32 %v45, %v45
  %v1199 = vmul.f32 %v46, %v46
  %v1200 = vmul.f32 %v47, %v47
  %v1201 = vmul.f32 %v48, %v48
  %v1202 = vmul.f32 %v49, %v49
  %v1203 = vmul.f32 %v50, %v50
  %v1204 = vmul.f32 %v51, %v51
  %v1205 = vmul.f32 %v52, %v52
  %v1206 = vmul.f32 %v53, %v53
  %v1207 = vmul.f32 %v54, %v54
  %v1208 = vmul.f32 %v55, %v55
  %v1209 = vmul.f32 %v56, %v56
  %v1210 = vmul.f32 %v57, %v57
  %v1211 = vmul.f32 %v58, %v58
  %v1212 = vmul.f32 %v59, %v59
  %v1213 = vmul.f32 %v60, %v60
  %v1214 = vmul.f32 %v61, %v61
  %v1215 = vmul.f32 %v62, %v62
  %v1216 = vmul.f32 %v63, %v63
  %v1217 = vmul.f32 %v64, %v64
  %v1218 = vmul.f32 %v65, %v65
  %v1219 = vmul.f32 %v66, %v66
  %v1220 = vmul.f32 %v67, %v67
  %v1221 = vmul.f32 %v68, %v68
  %v1222 = vmul.f32 %v69, %v69
  %v1223 = vmul.f32 %v70, %v70
  %v1224 = vmul.f32 %v71, %v71
  %v1225 = vmul.f32 %v72, %v72
  %v1226 = vmul.f32 %v73, %v73
  %v1227 = vmul.f32 %v74, %v74
  %v1228 = vmul.f32 %v75, %v75
  %v1229 = vmul.f32 %v76, %v76
  %v1230 = vmul.f32 %v77, %v77
  %v1231 = vmul.f32 %v78, %v78
  %v1232 = vmul.f32 %v79, %v79
  %v1233 = vmul.f32 %v80, %v80
  %v1234 = vmul.f32 %v81, %v81
  %v1235 = vmul.f32 %v82, %v82
  %v1236 = vmul.f32 %v83, %v83
  %v1237 = vmul.f32 %v84, %v84
  %v1238 = vmul.f32 %v85, %v85
  %v1239 = vmul.f32 %v86, %v86
  %v1240 = vmul.f32 %v87, %v87
  %v1241 = vmul.f32 %v88, %v88
  %v1242 = vmul.f32 %v89, %v89
  %v1243 = vmul.f32 %v90, %v90
  %v1244 = vmul.f32 %v91, %v91
  %v1245 = vmul.f32 %v92, %v92
  %v1246 = vmul.f32 %v93, %v93
  %v1247 = vmul.f32 %v94, %v94
  %v1248 = vmul.f32 %v95, %v95
  %v1249 = vmul.f32 %v96, %v96
  %v1250 = vmul.f32 %v97, %v97
  %v1251 = vmul.f32 %v98, %v98
  %v1252 = vmul.f32 %v99, %v99
  %v1253 = vmul.f32 %v100, %v100
  %v1254 = vmul.f32 %v101, %v101
  %v1255 = vmul.f32 %v102, %v102
  %v1256 = vmul.f32 %v103, %v103
  %v1257 = vmul.f32 %v104, %v104
  %v1258 = vmul.f32 %v105, %v105
  %v1259 = vmul.f32 %v106, %v106
  %v1260 = vmul.f32 %v107, %v107
  %v1261 = vmul.f32 %v108, %v108
  %v1262 = vmul.f32 %v109, %v109
  %v1263 = vmul.f32 %v110, %v110
  %v1264 = vmul.f32 %v111, %v111
  %v1265 = vmul.f32 %v112, %v112
  %v1266 = vmul.f32 %v113, %v113
  %v1267 = vmul.f32 %v114, %v114
  %v1268 = vmul.f32 %v115, %v115
  %v1269 = vmul.f32 %v116, %v116
  %v1270 = vmul.f32 %v117, %v117
  %v1271 = vmul.f32 %v118, %v118
  %v1272 = vmul.f32 %v119, %v119
  %v1273 = vmul.f32 %v120, %v120
  %v1274 = vmul.f32 %v121, %v121
  %v1275 = vmul.f32 %v122, %v122
  %v1276 = vmul.f32 %v123, %v123
  %v1277 = vmul.f32 %v124, %v124
  %v1278 = vmul.f32 %v125, %v125
  %v1279 = vmul.f32 %v126, %v126
  %v1280 = vmul.f32 %v127, %v127
  %v1281 = vmul.f32 %v128, %v128
  %v1282 = vmul.f32 %v129, %v129
  %v1283 = vmul.f32 %v130, %v130
  %v1284 = vmul.f32 %v131, %v131
  %v1285 = vmul.f32 %v132, %v132
  %v1286 = vmul.f32 %v133, %v133
  %v1287 = vmul.f32 %v134, %v134
  %v1288 = vmul.f32 %v135, %v135
  %v1289 = vmul.f32 %v136, %v136
  %v1290 = vmul.f32 %v137, %v137
  %v1291 = vmul.f32 %v138, %v138
  %v1292 = vmul.f32 %v139, %v139
  %v1293 = vmul.f32 %v140, %v140
  %v1294 = vmul.f32 %v141, %v141
  %v1295 = vmul.f32 %v142, %v142
  %v1296 = vmul.f32 %v143, %v143
  %v1297 = vmul.f32 %v144, %v144
  %v1298 = vmul.f32 %v145, %v145
  %v1299 = vmul.f32 %v146, %v146
  %v1300 = vmul.f32 %v147, %v147
  %v1301 = vmul.f32 %v148, %v148
  %v1302 = vmul.f32 %v149, %v149
  %v1303 = vmul.f32 %v150, %v150
  %v1304 = vmul.f32 %v151, %v151
  %v1305 = vmul.f32 %v152, %v152
  %v1306 = vmul.f32 %v153, %v153
  %v1307 = vmul.f32 %v154, %v154
  %v1308 = vmul.f32 %v155, %v155
  %v1309 = vmul.f32 %v156, %v156
  %v1310 = vmul.f32 %v157, %v157
  %v1311 = vmul.f32 %v158, %v158
  %v1312 = vmul.f32 %v159, %v159
  %v1313 = vmul.f32 %v160, %v160
  %v1314 = vmul.f32 %v161, %v161
  %v1315 = vmul.f32 %v162, %v162
  %v1316 = vmul.f32 %v163, %v163
  %v1317 = vmul.f32 %v164, %v164
  %v1318 = vmul.f32 %v165, %v165
  %v1319 = vmul.f32 %v166, %v166
  %v1320 = vmul.f32 %v167, %v167
  %v1321 = vmul.f32 %v168, %v168
  %v1322 = vmul.f32 %v169, %v169
  %v1323 = vmul.f32 %v170, %v170
  %v1324 = vmul.f32 %v171, %v171
  %v1325 = vmul.f32 %v172, %v172
  %v1326 = vmul.f32 %v173, %v173
  %v1327 = vmul.f32 %v174, %v174
  %v1328 = vmul.f32 %v175, %v175
  %v1329 = vmul.f32 %v176, %v176
  %v1330 = vmul.f32 %v177, %v177
  %v1331 = vmul.f32 %v178, %v178
  %v1332 = vmul.f32 %v179, %v179
  %v1333 = vmul.f32 %v180, %v180
  %v1334 = vmul.f32 %v181, %v181
  %v1335 = vmul.f32 %v182, %v182
  %v1336 = vmul.f32 %v183, %v183
  %v1337 = vmul.f32 %v184, %v184
  %v1338 = vmul.f32 %v185, %v185
  %v1339 = vmul.f32 %v186, %v186
  %v1340 = vmul.f32 %v187, %v187
  %v1341 = vmul.f32 %v188, %v188
  %v1342 = vmul.f32 %v189, %v189
  %v1343 = vmul.f32 %v190, %v190
  %v1344 = vmul.f32 %v191, %v191
  %v1345 = vmul.f32 %v192, %v192
  %v1346 = vmul.f32 %v193, %v193
  %v1347 = vmul.f32 %v194, %v194
  %v1348 = vmul.f32 %v195, %v195
  %v1349 = vmul.f32 %v196, %v196
  %v1350 = vmul.f32 %v197, %v197
  %v1351 = vmul.f32 %v198, %v198
  %v1352 = vmul.f32 %v199, %v199
  %v1353 = vmul.f32 %v200, %v200
  %v1354 = vmul.f32 %v201, %v201
  %v1355 = vmul.f32 %v202, %v202
  %v1356 = vmul.f32 %v203, %v203
  %v1357 = vmul.f32 %v204, %v204
  %v1358 = vmul.f32 %v205, %v205
  %v1359 = vmul.f32 %v206, %v206
  %v1360 = vmul.f32 %v207, %v207
  %v1361 = vmul.f32 %v208, %v208
  %v1362 = vmul.f32 %v209, %v209
  %v1363 = vmul.f32 %v210, %v210
  %v1364 = vmul.f32 %v211, %v211
  %v1365 = vmul.f32 %v212, %v212
  %v1366 = vmul.f32 %v213, %v213
  %v1367 = vmul.f32 %v214, %v214
  %v1368 = vmul.f32 %v215, %v215
  %v1369 = vmul.f32 %v216, %v216
  %v1370 = vmul.f32 %v217, %v217
  %v1371 = vmul.f32 %v218, %v218
  %v1372 = vmul.f32 %v219, %v219
  %v1373 = vmul.f32 %v220, %v220
  %v1374 = vmul.f32 %v221, %v221
  %v1375 = vmul.f32 %v222, %v222
  %v1376 = vmul.f32 %v223, %v223
  %v1377 = vmul.f32 %v224, %v224
  %v1378 = vmul.f32 %v225, %v225
  %v1379 = vmul.f32 %v226, %v226
  %v1380 = vmul.f32 %v227, %v227
  %v1381 = vmul.f32 %v228, %v228
  %v1382 = vmul.f32 %v229, %v229
  %v1383 = vmul.f32 %v230, %v230
  %v1384 = vmul.f32 %v231, %v231
  %v1385 = vmul.f32 %v232, %v232
  %v1386 = vmul.f32 %v233, %v233
  %v1387 = vmul.f32 %v234, %v234
  %v1388 = vmul.f32 %v235, %v235
  %v1389 = vmul.f32 %v236, %v236
  %v1390 = vmul.f32 %v237, %v237
  %v1391 = vmul.f32 %v238, %v238
  %v1392 = vmul.f32 %v239, %v239
  %v1393 = vmul.f32 %v240, %v240
  %v1394 = vmul.f32 %v241, %v241
  %v1395 = vmul.f32 %v242, %v242
  %v1396 = vmul.f32 %v243, %v243
  %v1397 = vmul.f32 %v244, %v244
  %v1398 = vmul.f32 %v245, %v245
  %v1399 = vmul.f32 %v246, %v246
  %v1400 = vmul.f32 %v247, %v247
  %v1401 = vmul.f32 %v248, %v248
  %v1402 = vmul.f32 %v249, %v249
  %v1403 = vmul.f32 %v250, %v250
  %v1404 = vmul.f32 %v251, %v251
  %v1405 = vmul.f32 %v252, %v252
  %v1406 = vmul.f32 %v253, %v253
  %v1407 = vmul.f32 %v254, %v254
  %v1408 = vmul.f32 %v255, %v255
  %v1409 = vmul.f32 %v256, %v256
  %v1410 = vmul.f32 %v257, %v257
  %v1411 = vmul.f32 %v258, %v258
  %v1412 = vmul.f32 %v259, %v259
  %v1413 = vmul.f32 %v260, %v260
  %v1414 = vmul.f32 %v261, %v261
  %v1415 = vmul.f32 %v262, %v262
  %v1416 = vmul.f32 %v263, %v263
  %v1417 = vmul.f32 %v264, %v264
  %v1418 = vmul.f32 %v265, %v265
  %v1419 = vmul.f32 %v266, %v266
  %v1420 = vmul.f32 %v267, %v267
  %v1421 = vmul.f32 %v268, %v268
  %v1422 = vmul.f32 %v269, %v269
  %v1423 = vmul.f32 %v270, %v270
  %v1424 = vmul.f32 %v271, %v271
  %v1425 = vmul.f32 %v272, %v272
  %v1426 = vmul.f32 %v273, %v273
  %v1427 = vmul.f32 %v274, %v274
  %v1428 = vmul.f32 %v275, %v275
  %v1429 = vmul.f32 %v276, %v276
  %v1430 = vmul.f32 %v277, %v277
  %v1431 = vmul.f32 %v278, %v278
  %v1432 = vmul.f32 %v279, %v279
  %v1433 = vmul.f32 %v280, %v280
  %v1434 = vmul.f32 %v281, %v281
  %v1435 = vmul.f32 %v282, %v282
  %v1436 = vmul.f32 %v283, %v283
  %v1437 = vmul.f32 %v284, %v284
  %v1438 = vmul.f32 %v285, %v285
  %v1439 = vmul.f32 %v286, %v286
  %v1440 = vmul.f32 %v287, %v287
  %v1441 = vmul.f32 %v288, %v288
  %v1442 = vmul.f32 %v289, %v289
  %v1443 = vmul.f32 %v290, %v290
  %v1444 = vmul.f32 %v291, %v291
  %v1445 = vmul.f32 %v292, %v292
  %v1446 = vmul.f32 %v293, %v293
  %v1447 = vmul.f32 %v294, %v294
  %v1448 = vmul.f32 %v295, %v295
  %v1449 = vmul.f32 %v296, %v296
  %v1450 = vmul.f32 %v297, %v297
  %v1451 = vmul.f32 %v298, %v298
  %v1452 = vmul.f32 %v299, %v299
  %v1453 = vmul.f32 %v300, %v300
  %v1454 = vmul.f32 %v301, %v301
  %v1455 = vsel %vm302, %v1167, 0.0
  %1456 = vadd.xlane.f32.xlu0 %v1455
  %v1457 = vpop.xlane.xlu0 %1456
  %v1458 = vsel %vm302, %v1168, 0.0
  %1459 = vadd.xlane.f32.xlu0 %v1458
  %v1460 = vpop.xlane.xlu0 %1459
  %v1461 = vsel %vm302, %v1169, 0.0
  %1462 = vadd.xlane.f32.xlu0 %v1461
  %v1463 = vpop.xlane.xlu0 %1462
  %v1464 = vsel %vm302, %v1170, 0.0
  %1465 = vadd.xlane.f32.xlu0 %v1464
  %v1466 = vpop.xlane.xlu0 %1465
  %v1467 = vsel %vm302, %v1171, 0.0
  %1468 = vadd.xlane.f32.xlu0 %v1467
  %v1469 = vpop.xlane.xlu0 %1468
  %v1470 = vsel %vm302, %v1172, 0.0
  %1471 = vadd.xlane.f32.xlu0 %v1470
  %v1472 = vpop.xlane.xlu0 %1471
  %v1473 = vsel %vm302, %v1173, 0.0
  %1474 = vadd.xlane.f32.xlu0 %v1473
  %v1475 = vpop.xlane.xlu0 %1474
  %v1476 = vsel %vm302, %v1174, 0.0
  %1477 = vadd.xlane.f32.xlu0 %v1476
  %v1478 = vpop.xlane.xlu0 %1477
  %v1479 = vsel %vm302, %v1175, 0.0
  %1480 = vadd.xlane.f32.xlu0 %v1479
  %v1481 = vpop.xlane.xlu0 %1480
  %v1482 = vsel %vm302, %v1176, 0.0
  %1483 = vadd.xlane.f32.xlu0 %v1482
  %v1484 = vpop.xlane.xlu0 %1483
  %v1485 = vsel %vm302, %v1177, 0.0
  %1486 = vadd.xlane.f32.xlu0 %v1485
  %v1487 = vpop.xlane.xlu0 %1486
  %v1488 = vsel %vm302, %v1178, 0.0
  %1489 = vadd.xlane.f32.xlu0 %v1488
  %v1490 = vpop.xlane.xlu0 %1489
  %v1491 = vsel %vm302, %v1179, 0.0
  %1492 = vadd.xlane.f32.xlu0 %v1491
  %v1493 = vpop.xlane.xlu0 %1492
  %v1494 = vsel %vm302, %v1180, 0.0
  %1495 = vadd.xlane.f32.xlu0 %v1494
  %v1496 = vpop.xlane.xlu0 %1495
  %v1497 = vsel %vm302, %v1181, 0.0
  %1498 = vadd.xlane.f32.xlu0 %v1497
  %v1499 = vpop.xlane.xlu0 %1498
  %v1500 = vsel %vm302, %v1182, 0.0
  %1501 = vadd.xlane.f32.xlu0 %v1500
  %v1502 = vpop.xlane.xlu0 %1501
  %v1503 = vsel %vm302, %v1183, 0.0
  %1504 = vadd.xlane.f32.xlu0 %v1503
  %v1505 = vpop.xlane.xlu0 %1504
  %v1506 = vsel %vm302, %v1184, 0.0
  %1507 = vadd.xlane.f32.xlu0 %v1506
  %v1508 = vpop.xlane.xlu0 %1507
  %v1509 = vsel %vm302, %v1185, 0.0
  %1510 = vadd.xlane.f32.xlu0 %v1509
  %v1511 = vpop.xlane.xlu0 %1510
  %v1512 = vsel %vm302, %v1186, 0.0
  %1513 = vadd.xlane.f32.xlu0 %v1512
  %v1514 = vpop.xlane.xlu0 %1513
  %v1515 = vsel %vm302, %v1187, 0.0
  %1516 = vadd.xlane.f32.xlu0 %v1515
  %v1517 = vpop.xlane.xlu0 %1516
  %v1518 = vsel %vm302, %v1188, 0.0
  %1519 = vadd.xlane.f32.xlu0 %v1518
  %v1520 = vpop.xlane.xlu0 %1519
  %v1521 = vsel %vm302, %v1189, 0.0
  %1522 = vadd.xlane.f32.xlu0 %v1521
  %v1523 = vpop.xlane.xlu0 %1522
  %v1524 = vsel %vm302, %v1190, 0.0
  %1525 = vadd.xlane.f32.xlu0 %v1524
  %v1526 = vpop.xlane.xlu0 %1525
  %v1527 = vsel %vm302, %v1191, 0.0
  %1528 = vadd.xlane.f32.xlu0 %v1527
  %v1529 = vpop.xlane.xlu0 %1528
  %v1530 = vsel %vm302, %v1192, 0.0
  %1531 = vadd.xlane.f32.xlu0 %v1530
  %v1532 = vpop.xlane.xlu0 %1531
  %v1533 = vsel %vm302, %v1193, 0.0
  %1534 = vadd.xlane.f32.xlu0 %v1533
  %v1535 = vpop.xlane.xlu0 %1534
  %v1536 = vsel %vm302, %v1194, 0.0
  %1537 = vadd.xlane.f32.xlu0 %v1536
  %v1538 = vpop.xlane.xlu0 %1537
  %v1539 = vsel %vm302, %v1195, 0.0
  %1540 = vadd.xlane.f32.xlu0 %v1539
  %v1541 = vpop.xlane.xlu0 %1540
  %v1542 = vsel %vm302, %v1196, 0.0
  %1543 = vadd.xlane.f32.xlu0 %v1542
  %v1544 = vpop.xlane.xlu0 %1543
  %v1545 = vsel %vm302, %v1197, 0.0
  %1546 = vadd.xlane.f32.xlu0 %v1545
  %v1547 = vpop.xlane.xlu0 %1546
  %v1548 = vsel %vm302, %v1198, 0.0
  %1549 = vadd.xlane.f32.xlu0 %v1548
  %v1550 = vpop.xlane.xlu0 %1549
  %v1551 = vsel %vm302, %v1199, 0.0
  %1552 = vadd.xlane.f32.xlu0 %v1551
  %v1553 = vpop.xlane.xlu0 %1552
  %v1554 = vsel %vm302, %v1200, 0.0
  %1555 = vadd.xlane.f32.xlu0 %v1554
  %v1556 = vpop.xlane.xlu0 %1555
  %v1557 = vsel %vm302, %v1201, 0.0
  %1558 = vadd.xlane.f32.xlu0 %v1557
  %v1559 = vpop.xlane.xlu0 %1558
  %v1560 = vsel %vm302, %v1202, 0.0
  %1561 = vadd.xlane.f32.xlu0 %v1560
  %v1562 = vpop.xlane.xlu0 %1561
  %v1563 = vsel %vm302, %v1203, 0.0
  %1564 = vadd.xlane.f32.xlu0 %v1563
  %v1565 = vpop.xlane.xlu0 %1564
  %v1566 = vsel %vm302, %v1204, 0.0
  %1567 = vadd.xlane.f32.xlu0 %v1566
  %v1568 = vpop.xlane.xlu0 %1567
  %v1569 = vsel %vm302, %v1205, 0.0
  %1570 = vadd.xlane.f32.xlu0 %v1569
  %v1571 = vpop.xlane.xlu0 %1570
  %v1572 = vsel %vm302, %v1206, 0.0
  %1573 = vadd.xlane.f32.xlu0 %v1572
  %v1574 = vpop.xlane.xlu0 %1573
  %v1575 = vsel %vm302, %v1207, 0.0
  %1576 = vadd.xlane.f32.xlu0 %v1575
  %v1577 = vpop.xlane.xlu0 %1576
  %v1578 = vsel %vm302, %v1208, 0.0
  %1579 = vadd.xlane.f32.xlu0 %v1578
  %v1580 = vpop.xlane.xlu0 %1579
  %v1581 = vsel %vm302, %v1209, 0.0
  %1582 = vadd.xlane.f32.xlu0 %v1581
  %v1583 = vpop.xlane.xlu0 %1582
  %v1584 = vsel %vm302, %v1210, 0.0
  %1585 = vadd.xlane.f32.xlu0 %v1584
  %v1586 = vpop.xlane.xlu0 %1585
  %v1587 = vsel %vm302, %v1211, 0.0
  %1588 = vadd.xlane.f32.xlu0 %v1587
  %v1589 = vpop.xlane.xlu0 %1588
  %v1590 = vsel %vm302, %v1212, 0.0
  %1591 = vadd.xlane.f32.xlu0 %v1590
  %v1592 = vpop.xlane.xlu0 %1591
  %v1593 = vsel %vm302, %v1213, 0.0
  %1594 = vadd.xlane.f32.xlu0 %v1593
  %v1595 = vpop.xlane.xlu0 %1594
  %v1596 = vsel %vm302, %v1214, 0.0
  %1597 = vadd.xlane.f32.xlu0 %v1596
  %v1598 = vpop.xlane.xlu0 %1597
  %v1599 = vsel %vm302, %v1215, 0.0
  %1600 = vadd.xlane.f32.xlu0 %v1599
  %v1601 = vpop.xlane.xlu0 %1600
  %v1602 = vsel %vm302, %v1216, 0.0
  %1603 = vadd.xlane.f32.xlu0 %v1602
  %v1604 = vpop.xlane.xlu0 %1603
  %v1605 = vsel %vm302, %v1217, 0.0
  %1606 = vadd.xlane.f32.xlu0 %v1605
  %v1607 = vpop.xlane.xlu0 %1606
  %v1608 = vsel %vm302, %v1218, 0.0
  %1609 = vadd.xlane.f32.xlu0 %v1608
  %v1610 = vpop.xlane.xlu0 %1609
  %v1611 = vsel %vm302, %v1219, 0.0
  %1612 = vadd.xlane.f32.xlu0 %v1611
  %v1613 = vpop.xlane.xlu0 %1612
  %v1614 = vsel %vm302, %v1220, 0.0
  %1615 = vadd.xlane.f32.xlu0 %v1614
  %v1616 = vpop.xlane.xlu0 %1615
  %v1617 = vsel %vm302, %v1221, 0.0
  %1618 = vadd.xlane.f32.xlu0 %v1617
  %v1619 = vpop.xlane.xlu0 %1618
  %v1620 = vsel %vm302, %v1222, 0.0
  %1621 = vadd.xlane.f32.xlu0 %v1620
  %v1622 = vpop.xlane.xlu0 %1621
  %v1623 = vsel %vm302, %v1223, 0.0
  %1624 = vadd.xlane.f32.xlu0 %v1623
  %v1625 = vpop.xlane.xlu0 %1624
  %v1626 = vsel %vm302, %v1224, 0.0
  %1627 = vadd.xlane.f32.xlu0 %v1626
  %v1628 = vpop.xlane.xlu0 %1627
  %v1629 = vsel %vm302, %v1225, 0.0
  %1630 = vadd.xlane.f32.xlu0 %v1629
  %v1631 = vpop.xlane.xlu0 %1630
  %v1632 = vsel %vm302, %v1226, 0.0
  %1633 = vadd.xlane.f32.xlu0 %v1632
  %v1634 = vpop.xlane.xlu0 %1633
  %v1635 = vsel %vm302, %v1227, 0.0
  %1636 = vadd.xlane.f32.xlu0 %v1635
  %v1637 = vpop.xlane.xlu0 %1636
  %v1638 = vsel %vm302, %v1228, 0.0
  %1639 = vadd.xlane.f32.xlu0 %v1638
  %v1640 = vpop.xlane.xlu0 %1639
  %v1641 = vsel %vm302, %v1229, 0.0
  %1642 = vadd.xlane.f32.xlu0 %v1641
  %v1643 = vpop.xlane.xlu0 %1642
  %v1644 = vsel %vm302, %v1230, 0.0
  %1645 = vadd.xlane.f32.xlu0 %v1644
  %v1646 = vpop.xlane.xlu0 %1645
  %v1647 = vsel %vm302, %v1231, 0.0
  %1648 = vadd.xlane.f32.xlu0 %v1647
  %v1649 = vpop.xlane.xlu0 %1648
  %v1650 = vsel %vm302, %v1232, 0.0
  %1651 = vadd.xlane.f32.xlu0 %v1650
  %v1652 = vpop.xlane.xlu0 %1651
  %v1653 = vsel %vm302, %v1233, 0.0
  %1654 = vadd.xlane.f32.xlu0 %v1653
  %v1655 = vpop.xlane.xlu0 %1654
  %v1656 = vsel %vm302, %v1234, 0.0
  %1657 = vadd.xlane.f32.xlu0 %v1656
  %v1658 = vpop.xlane.xlu0 %1657
  %v1659 = vsel %vm302, %v1235, 0.0
  %1660 = vadd.xlane.f32.xlu0 %v1659
  %v1661 = vpop.xlane.xlu0 %1660
  %v1662 = vsel %vm302, %v1236, 0.0
  %1663 = vadd.xlane.f32.xlu0 %v1662
  %v1664 = vpop.xlane.xlu0 %1663
  %v1665 = vsel %vm302, %v1237, 0.0
  %1666 = vadd.xlane.f32.xlu0 %v1665
  %v1667 = vpop.xlane.xlu0 %1666
  %v1668 = vsel %vm302, %v1238, 0.0
  %1669 = vadd.xlane.f32.xlu0 %v1668
  %v1670 = vpop.xlane.xlu0 %1669
  %v1671 = vsel %vm302, %v1239, 0.0
  %1672 = vadd.xlane.f32.xlu0 %v1671
  %v1673 = vpop.xlane.xlu0 %1672
  %v1674 = vsel %vm302, %v1240, 0.0
  %1675 = vadd.xlane.f32.xlu0 %v1674
  %v1676 = vpop.xlane.xlu0 %1675
  %v1677 = vsel %vm302, %v1241, 0.0
  %1678 = vadd.xlane.f32.xlu0 %v1677
  %v1679 = vpop.xlane.xlu0 %1678
  %v1680 = vsel %vm302, %v1242, 0.0
  %1681 = vadd.xlane.f32.xlu0 %v1680
  %v1682 = vpop.xlane.xlu0 %1681
  %v1683 = vsel %vm302, %v1243, 0.0
  %1684 = vadd.xlane.f32.xlu0 %v1683
  %v1685 = vpop.xlane.xlu0 %1684
  %v1686 = vsel %vm302, %v1244, 0.0
  %1687 = vadd.xlane.f32.xlu0 %v1686
  %v1688 = vpop.xlane.xlu0 %1687
  %v1689 = vsel %vm302, %v1245, 0.0
  %1690 = vadd.xlane.f32.xlu0 %v1689
  %v1691 = vpop.xlane.xlu0 %1690
  %v1692 = vsel %vm302, %v1246, 0.0
  %1693 = vadd.xlane.f32.xlu0 %v1692
  %v1694 = vpop.xlane.xlu0 %1693
  %v1695 = vsel %vm302, %v1247, 0.0
  %1696 = vadd.xlane.f32.xlu0 %v1695
  %v1697 = vpop.xlane.xlu0 %1696
  %v1698 = vsel %vm302, %v1248, 0.0
  %1699 = vadd.xlane.f32.xlu0 %v1698
  %v1700 = vpop.xlane.xlu0 %1699
  %v1701 = vsel %vm302, %v1249, 0.0
  %1702 = vadd.xlane.f32.xlu0 %v1701
  %v1703 = vpop.xlane.xlu0 %1702
  %v1704 = vsel %vm302, %v1250, 0.0
  %1705 = vadd.xlane.f32.xlu0 %v1704
  %v1706 = vpop.xlane.xlu0 %1705
  %v1707 = vsel %vm302, %v1251, 0.0
  %1708 = vadd.xlane.f32.xlu0 %v1707
  %v1709 = vpop.xlane.xlu0 %1708
  %v1710 = vsel %vm302, %v1252, 0.0
  %1711 = vadd.xlane.f32.xlu0 %v1710
  %v1712 = vpop.xlane.xlu0 %1711
  %v1713 = vsel %vm302, %v1253, 0.0
  %1714 = vadd.xlane.f32.xlu0 %v1713
  %v1715 = vpop.xlane.xlu0 %1714
  %v1716 = vsel %vm302, %v1254, 0.0
  %1717 = vadd.xlane.f32.xlu0 %v1716
  %v1718 = vpop.xlane.xlu0 %1717
  %v1719 = vsel %vm302, %v1255, 0.0
  %1720 = vadd.xlane.f32.xlu0 %v1719
  %v1721 = vpop.xlane.xlu0 %1720
  %v1722 = vsel %vm302, %v1256, 0.0
  %1723 = vadd.xlane.f32.xlu0 %v1722
  %v1724 = vpop.xlane.xlu0 %1723
  %v1725 = vsel %vm302, %v1257, 0.0
  %1726 = vadd.xlane.f32.xlu0 %v1725
  %v1727 = vpop.xlane.xlu0 %1726
  %v1728 = vsel %vm302, %v1258, 0.0
  %1729 = vadd.xlane.f32.xlu0 %v1728
  %v1730 = vpop.xlane.xlu0 %1729
  %v1731 = vsel %vm302, %v1259, 0.0
  %1732 = vadd.xlane.f32.xlu0 %v1731
  %v1733 = vpop.xlane.xlu0 %1732
  %v1734 = vsel %vm302, %v1260, 0.0
  %1735 = vadd.xlane.f32.xlu0 %v1734
  %v1736 = vpop.xlane.xlu0 %1735
  %v1737 = vsel %vm302, %v1261, 0.0
  %1738 = vadd.xlane.f32.xlu0 %v1737
  %v1739 = vpop.xlane.xlu0 %1738
  %v1740 = vsel %vm302, %v1262, 0.0
  %1741 = vadd.xlane.f32.xlu0 %v1740
  %v1742 = vpop.xlane.xlu0 %1741
  %v1743 = vsel %vm302, %v1263, 0.0
  %1744 = vadd.xlane.f32.xlu0 %v1743
  %v1745 = vpop.xlane.xlu0 %1744
  %v1746 = vsel %vm302, %v1264, 0.0
  %1747 = vadd.xlane.f32.xlu0 %v1746
  %v1748 = vpop.xlane.xlu0 %1747
  %v1749 = vsel %vm302, %v1265, 0.0
  %1750 = vadd.xlane.f32.xlu0 %v1749
  %v1751 = vpop.xlane.xlu0 %1750
  %v1752 = vsel %vm302, %v1266, 0.0
  %1753 = vadd.xlane.f32.xlu0 %v1752
  %v1754 = vpop.xlane.xlu0 %1753
  %v1755 = vsel %vm302, %v1267, 0.0
  %1756 = vadd.xlane.f32.xlu0 %v1755
  %v1757 = vpop.xlane.xlu0 %1756
  %v1758 = vsel %vm302, %v1268, 0.0
  %1759 = vadd.xlane.f32.xlu0 %v1758
  %v1760 = vpop.xlane.xlu0 %1759
  %v1761 = vsel %vm302, %v1269, 0.0
  %1762 = vadd.xlane.f32.xlu0 %v1761
  %v1763 = vpop.xlane.xlu0 %1762
  %v1764 = vsel %vm302, %v1270, 0.0
  %1765 = vadd.xlane.f32.xlu0 %v1764
  %v1766 = vpop.xlane.xlu0 %1765
  %v1767 = vsel %vm302, %v1271, 0.0
  %1768 = vadd.xlane.f32.xlu0 %v1767
  %v1769 = vpop.xlane.xlu0 %1768
  %v1770 = vsel %vm302, %v1272, 0.0
  %1771 = vadd.xlane.f32.xlu0 %v1770
  %v1772 = vpop.xlane.xlu0 %1771
  %v1773 = vsel %vm302, %v1273, 0.0
  %1774 = vadd.xlane.f32.xlu0 %v1773
  %v1775 = vpop.xlane.xlu0 %1774
  %v1776 = vsel %vm302, %v1274, 0.0
  %1777 = vadd.xlane.f32.xlu0 %v1776
  %v1778 = vpop.xlane.xlu0 %1777
  %v1779 = vsel %vm302, %v1275, 0.0
  %1780 = vadd.xlane.f32.xlu0 %v1779
  %v1781 = vpop.xlane.xlu0 %1780
  %v1782 = vsel %vm302, %v1276, 0.0
  %1783 = vadd.xlane.f32.xlu0 %v1782
  %v1784 = vpop.xlane.xlu0 %1783
  %v1785 = vsel %vm302, %v1277, 0.0
  %1786 = vadd.xlane.f32.xlu0 %v1785
  %v1787 = vpop.xlane.xlu0 %1786
  %v1788 = vsel %vm302, %v1278, 0.0
  %1789 = vadd.xlane.f32.xlu0 %v1788
  %v1790 = vpop.xlane.xlu0 %1789
  %v1791 = vsel %vm302, %v1279, 0.0
  %1792 = vadd.xlane.f32.xlu0 %v1791
  %v1793 = vpop.xlane.xlu0 %1792
  %v1794 = vsel %vm302, %v1280, 0.0
  %1795 = vadd.xlane.f32.xlu0 %v1794
  %v1796 = vpop.xlane.xlu0 %1795
  %v1797 = vsel %vm302, %v1281, 0.0
  %1798 = vadd.xlane.f32.xlu0 %v1797
  %v1799 = vpop.xlane.xlu0 %1798
  %v1800 = vsel %vm302, %v1282, 0.0
  %1801 = vadd.xlane.f32.xlu0 %v1800
  %v1802 = vpop.xlane.xlu0 %1801
  %v1803 = vsel %vm302, %v1283, 0.0
  %1804 = vadd.xlane.f32.xlu0 %v1803
  %v1805 = vpop.xlane.xlu0 %1804
  %v1806 = vsel %vm302, %v1284, 0.0
  %1807 = vadd.xlane.f32.xlu0 %v1806
  %v1808 = vpop.xlane.xlu0 %1807
  %v1809 = vsel %vm302, %v1285, 0.0
  %1810 = vadd.xlane.f32.xlu0 %v1809
  %v1811 = vpop.xlane.xlu0 %1810
  %v1812 = vsel %vm302, %v1286, 0.0
  %1813 = vadd.xlane.f32.xlu0 %v1812
  %v1814 = vpop.xlane.xlu0 %1813
  %v1815 = vsel %vm302, %v1287, 0.0
  %1816 = vadd.xlane.f32.xlu0 %v1815
  %v1817 = vpop.xlane.xlu0 %1816
  %v1818 = vsel %vm302, %v1288, 0.0
  %1819 = vadd.xlane.f32.xlu0 %v1818
  %v1820 = vpop.xlane.xlu0 %1819
  %v1821 = vsel %vm302, %v1289, 0.0
  %1822 = vadd.xlane.f32.xlu0 %v1821
  %v1823 = vpop.xlane.xlu0 %1822
  %v1824 = vsel %vm302, %v1290, 0.0
  %1825 = vadd.xlane.f32.xlu0 %v1824
  %v1826 = vpop.xlane.xlu0 %1825
  %v1827 = vsel %vm302, %v1291, 0.0
  %1828 = vadd.xlane.f32.xlu0 %v1827
  %v1829 = vpop.xlane.xlu0 %1828
  %v1830 = vsel %vm302, %v1292, 0.0
  %1831 = vadd.xlane.f32.xlu0 %v1830
  %v1832 = vpop.xlane.xlu0 %1831
  %v1833 = vsel %vm302, %v1293, 0.0
  %1834 = vadd.xlane.f32.xlu0 %v1833
  %v1835 = vpop.xlane.xlu0 %1834
  %v1836 = vsel %vm302, %v1294, 0.0
  %1837 = vadd.xlane.f32.xlu0 %v1836
  %v1838 = vpop.xlane.xlu0 %1837
  %v1839 = vsel %vm302, %v1295, 0.0
  %1840 = vadd.xlane.f32.xlu0 %v1839
  %v1841 = vpop.xlane.xlu0 %1840
  %v1842 = vsel %vm302, %v1296, 0.0
  %1843 = vadd.xlane.f32.xlu0 %v1842
  %v1844 = vpop.xlane.xlu0 %1843
  %v1845 = vsel %vm302, %v1297, 0.0
  %1846 = vadd.xlane.f32.xlu0 %v1845
  %v1847 = vpop.xlane.xlu0 %1846
  %v1848 = vsel %vm302, %v1298, 0.0
  %1849 = vadd.xlane.f32.xlu0 %v1848
  %v1850 = vpop.xlane.xlu0 %1849
  %v1851 = vsel %vm302, %v1299, 0.0
  %1852 = vadd.xlane.f32.xlu0 %v1851
  %v1853 = vpop.xlane.xlu0 %1852
  %v1854 = vsel %vm302, %v1300, 0.0
  %1855 = vadd.xlane.f32.xlu0 %v1854
  %v1856 = vpop.xlane.xlu0 %1855
  %v1857 = vsel %vm302, %v1301, 0.0
  %1858 = vadd.xlane.f32.xlu0 %v1857
  %v1859 = vpop.xlane.xlu0 %1858
  %v1860 = vsel %vm302, %v1302, 0.0
  %1861 = vadd.xlane.f32.xlu0 %v1860
  %v1862 = vpop.xlane.xlu0 %1861
  %v1863 = vsel %vm302, %v1303, 0.0
  %1864 = vadd.xlane.f32.xlu0 %v1863
  %v1865 = vpop.xlane.xlu0 %1864
  %v1866 = vsel %vm302, %v1304, 0.0
  %1867 = vadd.xlane.f32.xlu0 %v1866
  %v1868 = vpop.xlane.xlu0 %1867
  %v1869 = vsel %vm302, %v1305, 0.0
  %1870 = vadd.xlane.f32.xlu0 %v1869
  %v1871 = vpop.xlane.xlu0 %1870
  %v1872 = vsel %vm302, %v1306, 0.0
  %1873 = vadd.xlane.f32.xlu0 %v1872
  %v1874 = vpop.xlane.xlu0 %1873
  %v1875 = vsel %vm302, %v1307, 0.0
  %1876 = vadd.xlane.f32.xlu0 %v1875
  %v1877 = vpop.xlane.xlu0 %1876
  %v1878 = vsel %vm302, %v1308, 0.0
  %1879 = vadd.xlane.f32.xlu0 %v1878
  %v1880 = vpop.xlane.xlu0 %1879
  %v1881 = vsel %vm302, %v1309, 0.0
  %1882 = vadd.xlane.f32.xlu0 %v1881
  %v1883 = vpop.xlane.xlu0 %1882
  %v1884 = vsel %vm302, %v1310, 0.0
  %1885 = vadd.xlane.f32.xlu0 %v1884
  %v1886 = vpop.xlane.xlu0 %1885
  %v1887 = vsel %vm302, %v1311, 0.0
  %1888 = vadd.xlane.f32.xlu0 %v1887
  %v1889 = vpop.xlane.xlu0 %1888
  %v1890 = vsel %vm302, %v1312, 0.0
  %1891 = vadd.xlane.f32.xlu0 %v1890
  %v1892 = vpop.xlane.xlu0 %1891
  %v1893 = vsel %vm302, %v1313, 0.0
  %1894 = vadd.xlane.f32.xlu0 %v1893
  %v1895 = vpop.xlane.xlu0 %1894
  %v1896 = vsel %vm302, %v1314, 0.0
  %1897 = vadd.xlane.f32.xlu0 %v1896
  %v1898 = vpop.xlane.xlu0 %1897
  %v1899 = vsel %vm302, %v1315, 0.0
  %1900 = vadd.xlane.f32.xlu0 %v1899
  %v1901 = vpop.xlane.xlu0 %1900
  %v1902 = vsel %vm302, %v1316, 0.0
  %1903 = vadd.xlane.f32.xlu0 %v1902
  %v1904 = vpop.xlane.xlu0 %1903
  %v1905 = vsel %vm302, %v1317, 0.0
  %1906 = vadd.xlane.f32.xlu0 %v1905
  %v1907 = vpop.xlane.xlu0 %1906
  %v1908 = vsel %vm302, %v1318, 0.0
  %1909 = vadd.xlane.f32.xlu0 %v1908
  %v1910 = vpop.xlane.xlu0 %1909
  %v1911 = vsel %vm302, %v1319, 0.0
  %1912 = vadd.xlane.f32.xlu0 %v1911
  %v1913 = vpop.xlane.xlu0 %1912
  %v1914 = vsel %vm302, %v1320, 0.0
  %1915 = vadd.xlane.f32.xlu0 %v1914
  %v1916 = vpop.xlane.xlu0 %1915
  %v1917 = vsel %vm302, %v1321, 0.0
  %1918 = vadd.xlane.f32.xlu0 %v1917
  %v1919 = vpop.xlane.xlu0 %1918
  %v1920 = vsel %vm302, %v1322, 0.0
  %1921 = vadd.xlane.f32.xlu0 %v1920
  %v1922 = vpop.xlane.xlu0 %1921
  %v1923 = vsel %vm302, %v1323, 0.0
  %1924 = vadd.xlane.f32.xlu0 %v1923
  %v1925 = vpop.xlane.xlu0 %1924
  %v1926 = vsel %vm302, %v1324, 0.0
  %1927 = vadd.xlane.f32.xlu0 %v1926
  %v1928 = vpop.xlane.xlu0 %1927
  %v1929 = vsel %vm302, %v1325, 0.0
  %1930 = vadd.xlane.f32.xlu0 %v1929
  %v1931 = vpop.xlane.xlu0 %1930
  %v1932 = vsel %vm302, %v1326, 0.0
  %1933 = vadd.xlane.f32.xlu0 %v1932
  %v1934 = vpop.xlane.xlu0 %1933
  %v1935 = vsel %vm302, %v1327, 0.0
  %1936 = vadd.xlane.f32.xlu0 %v1935
  %v1937 = vpop.xlane.xlu0 %1936
  %v1938 = vsel %vm302, %v1328, 0.0
  %1939 = vadd.xlane.f32.xlu0 %v1938
  %v1940 = vpop.xlane.xlu0 %1939
  %v1941 = vsel %vm302, %v1329, 0.0
  %1942 = vadd.xlane.f32.xlu0 %v1941
  %v1943 = vpop.xlane.xlu0 %1942
  %v1944 = vsel %vm302, %v1330, 0.0
  %1945 = vadd.xlane.f32.xlu0 %v1944
  %v1946 = vpop.xlane.xlu0 %1945
  %v1947 = vsel %vm302, %v1331, 0.0
  %1948 = vadd.xlane.f32.xlu0 %v1947
  %v1949 = vpop.xlane.xlu0 %1948
  %v1950 = vsel %vm302, %v1332, 0.0
  %1951 = vadd.xlane.f32.xlu0 %v1950
  %v1952 = vpop.xlane.xlu0 %1951
  %v1953 = vsel %vm302, %v1333, 0.0
  %1954 = vadd.xlane.f32.xlu0 %v1953
  %v1955 = vpop.xlane.xlu0 %1954
  %v1956 = vsel %vm302, %v1334, 0.0
  %1957 = vadd.xlane.f32.xlu0 %v1956
  %v1958 = vpop.xlane.xlu0 %1957
  %v1959 = vsel %vm302, %v1335, 0.0
  %1960 = vadd.xlane.f32.xlu0 %v1959
  %v1961 = vpop.xlane.xlu0 %1960
  %v1962 = vsel %vm302, %v1336, 0.0
  %1963 = vadd.xlane.f32.xlu0 %v1962
  %v1964 = vpop.xlane.xlu0 %1963
  %v1965 = vsel %vm302, %v1337, 0.0
  %1966 = vadd.xlane.f32.xlu0 %v1965
  %v1967 = vpop.xlane.xlu0 %1966
  %v1968 = vsel %vm302, %v1338, 0.0
  %1969 = vadd.xlane.f32.xlu0 %v1968
  %v1970 = vpop.xlane.xlu0 %1969
  %v1971 = vsel %vm302, %v1339, 0.0
  %1972 = vadd.xlane.f32.xlu0 %v1971
  %v1973 = vpop.xlane.xlu0 %1972
  %v1974 = vsel %vm302, %v1340, 0.0
  %1975 = vadd.xlane.f32.xlu0 %v1974
  %v1976 = vpop.xlane.xlu0 %1975
  %v1977 = vsel %vm302, %v1341, 0.0
  %1978 = vadd.xlane.f32.xlu0 %v1977
  %v1979 = vpop.xlane.xlu0 %1978
  %v1980 = vsel %vm302, %v1342, 0.0
  %1981 = vadd.xlane.f32.xlu0 %v1980
  %v1982 = vpop.xlane.xlu0 %1981
  %v1983 = vsel %vm302, %v1343, 0.0
  %1984 = vadd.xlane.f32.xlu0 %v1983
  %v1985 = vpop.xlane.xlu0 %1984
  %v1986 = vsel %vm302, %v1344, 0.0
  %1987 = vadd.xlane.f32.xlu0 %v1986
  %v1988 = vpop.xlane.xlu0 %1987
  %v1989 = vsel %vm302, %v1345, 0.0
  %1990 = vadd.xlane.f32.xlu0 %v1989
  %v1991 = vpop.xlane.xlu0 %1990
  %v1992 = vsel %vm302, %v1346, 0.0
  %1993 = vadd.xlane.f32.xlu0 %v1992
  %v1994 = vpop.xlane.xlu0 %1993
  %v1995 = vsel %vm302, %v1347, 0.0
  %1996 = vadd.xlane.f32.xlu0 %v1995
  %v1997 = vpop.xlane.xlu0 %1996
  %v1998 = vsel %vm302, %v1348, 0.0
  %1999 = vadd.xlane.f32.xlu0 %v1998
  %v2000 = vpop.xlane.xlu0 %1999
  %v2001 = vsel %vm302, %v1349, 0.0
  %2002 = vadd.xlane.f32.xlu0 %v2001
  %v2003 = vpop.xlane.xlu0 %2002
  %v2004 = vsel %vm302, %v1350, 0.0
  %2005 = vadd.xlane.f32.xlu0 %v2004
  %v2006 = vpop.xlane.xlu0 %2005
  %v2007 = vsel %vm302, %v1351, 0.0
  %2008 = vadd.xlane.f32.xlu0 %v2007
  %v2009 = vpop.xlane.xlu0 %2008
  %v2010 = vsel %vm302, %v1352, 0.0
  %2011 = vadd.xlane.f32.xlu0 %v2010
  %v2012 = vpop.xlane.xlu0 %2011
  %v2013 = vsel %vm302, %v1353, 0.0
  %2014 = vadd.xlane.f32.xlu0 %v2013
  %v2015 = vpop.xlane.xlu0 %2014
  %v2016 = vsel %vm302, %v1354, 0.0
  %2017 = vadd.xlane.f32.xlu0 %v2016
  %v2018 = vpop.xlane.xlu0 %2017
  %v2019 = vsel %vm302, %v1355, 0.0
  %2020 = vadd.xlane.f32.xlu0 %v2019
  %v2021 = vpop.xlane.xlu0 %2020
  %v2022 = vsel %vm302, %v1356, 0.0
  %2023 = vadd.xlane.f32.xlu0 %v2022
  %v2024 = vpop.xlane.xlu0 %2023
  %v2025 = vsel %vm302, %v1357, 0.0
  %2026 = vadd.xlane.f32.xlu0 %v2025
  %v2027 = vpop.xlane.xlu0 %2026
  %v2028 = vsel %vm302, %v1358, 0.0
  %2029 = vadd.xlane.f32.xlu0 %v2028
  %v2030 = vpop.xlane.xlu0 %2029
  %v2031 = vsel %vm302, %v1359, 0.0
  %2032 = vadd.xlane.f32.xlu0 %v2031
  %v2033 = vpop.xlane.xlu0 %2032
  %v2034 = vsel %vm302, %v1360, 0.0
  %2035 = vadd.xlane.f32.xlu0 %v2034
  %v2036 = vpop.xlane.xlu0 %2035
  %v2037 = vsel %vm302, %v1361, 0.0
  %2038 = vadd.xlane.f32.xlu0 %v2037
  %v2039 = vpop.xlane.xlu0 %2038
  %v2040 = vsel %vm302, %v1362, 0.0
  %2041 = vadd.xlane.f32.xlu0 %v2040
  %v2042 = vpop.xlane.xlu0 %2041
  %v2043 = vsel %vm302, %v1363, 0.0
  %2044 = vadd.xlane.f32.xlu0 %v2043
  %v2045 = vpop.xlane.xlu0 %2044
  %v2046 = vsel %vm302, %v1364, 0.0
  %2047 = vadd.xlane.f32.xlu0 %v2046
  %v2048 = vpop.xlane.xlu0 %2047
  %v2049 = vsel %vm302, %v1365, 0.0
  %2050 = vadd.xlane.f32.xlu0 %v2049
  %v2051 = vpop.xlane.xlu0 %2050
  %v2052 = vsel %vm302, %v1366, 0.0
  %2053 = vadd.xlane.f32.xlu0 %v2052
  %v2054 = vpop.xlane.xlu0 %2053
  %v2055 = vsel %vm302, %v1367, 0.0
  %2056 = vadd.xlane.f32.xlu0 %v2055
  %v2057 = vpop.xlane.xlu0 %2056
  %v2058 = vsel %vm302, %v1368, 0.0
  %2059 = vadd.xlane.f32.xlu0 %v2058
  %v2060 = vpop.xlane.xlu0 %2059
  %v2061 = vsel %vm302, %v1369, 0.0
  %2062 = vadd.xlane.f32.xlu0 %v2061
  %v2063 = vpop.xlane.xlu0 %2062
  %v2064 = vsel %vm302, %v1370, 0.0
  %2065 = vadd.xlane.f32.xlu0 %v2064
  %v2066 = vpop.xlane.xlu0 %2065
  %v2067 = vsel %vm302, %v1371, 0.0
  %2068 = vadd.xlane.f32.xlu0 %v2067
  %v2069 = vpop.xlane.xlu0 %2068
  %v2070 = vsel %vm302, %v1372, 0.0
  %2071 = vadd.xlane.f32.xlu0 %v2070
  %v2072 = vpop.xlane.xlu0 %2071
  %v2073 = vsel %vm302, %v1373, 0.0
  %2074 = vadd.xlane.f32.xlu0 %v2073
  %v2075 = vpop.xlane.xlu0 %2074
  %v2076 = vsel %vm302, %v1374, 0.0
  %2077 = vadd.xlane.f32.xlu0 %v2076
  %v2078 = vpop.xlane.xlu0 %2077
  %v2079 = vsel %vm302, %v1375, 0.0
  %2080 = vadd.xlane.f32.xlu0 %v2079
  %v2081 = vpop.xlane.xlu0 %2080
  %v2082 = vsel %vm302, %v1376, 0.0
  %2083 = vadd.xlane.f32.xlu0 %v2082
  %v2084 = vpop.xlane.xlu0 %2083
  %v2085 = vsel %vm302, %v1377, 0.0
  %2086 = vadd.xlane.f32.xlu0 %v2085
  %v2087 = vpop.xlane.xlu0 %2086
  %v2088 = vsel %vm302, %v1378, 0.0
  %2089 = vadd.xlane.f32.xlu0 %v2088
  %v2090 = vpop.xlane.xlu0 %2089
  %v2091 = vsel %vm302, %v1379, 0.0
  %2092 = vadd.xlane.f32.xlu0 %v2091
  %v2093 = vpop.xlane.xlu0 %2092
  %v2094 = vsel %vm302, %v1380, 0.0
  %2095 = vadd.xlane.f32.xlu0 %v2094
  %v2096 = vpop.xlane.xlu0 %2095
  %v2097 = vsel %vm302, %v1381, 0.0
  %2098 = vadd.xlane.f32.xlu0 %v2097
  %v2099 = vpop.xlane.xlu0 %2098
  %v2100 = vsel %vm302, %v1382, 0.0
  %2101 = vadd.xlane.f32.xlu0 %v2100
  %v2102 = vpop.xlane.xlu0 %2101
  %v2103 = vsel %vm302, %v1383, 0.0
  %2104 = vadd.xlane.f32.xlu0 %v2103
  %v2105 = vpop.xlane.xlu0 %2104
  %v2106 = vsel %vm302, %v1384, 0.0
  %2107 = vadd.xlane.f32.xlu0 %v2106
  %v2108 = vpop.xlane.xlu0 %2107
  %v2109 = vsel %vm302, %v1385, 0.0
  %2110 = vadd.xlane.f32.xlu0 %v2109
  %v2111 = vpop.xlane.xlu0 %2110
  %v2112 = vsel %vm302, %v1386, 0.0
  %2113 = vadd.xlane.f32.xlu0 %v2112
  %v2114 = vpop.xlane.xlu0 %2113
  %v2115 = vsel %vm302, %v1387, 0.0
  %2116 = vadd.xlane.f32.xlu0 %v2115
  %v2117 = vpop.xlane.xlu0 %2116
  %v2118 = vsel %vm302, %v1388, 0.0
  %2119 = vadd.xlane.f32.xlu0 %v2118
  %v2120 = vpop.xlane.xlu0 %2119
  %v2121 = vsel %vm302, %v1389, 0.0
  %2122 = vadd.xlane.f32.xlu0 %v2121
  %v2123 = vpop.xlane.xlu0 %2122
  %v2124 = vsel %vm302, %v1390, 0.0
  %2125 = vadd.xlane.f32.xlu0 %v2124
  %v2126 = vpop.xlane.xlu0 %2125
  %v2127 = vsel %vm302, %v1391, 0.0
  %2128 = vadd.xlane.f32.xlu0 %v2127
  %v2129 = vpop.xlane.xlu0 %2128
  %v2130 = vsel %vm302, %v1392, 0.0
  %2131 = vadd.xlane.f32.xlu0 %v2130
  %v2132 = vpop.xlane.xlu0 %2131
  %v2133 = vsel %vm302, %v1393, 0.0
  %2134 = vadd.xlane.f32.xlu0 %v2133
  %v2135 = vpop.xlane.xlu0 %2134
  %v2136 = vsel %vm302, %v1394, 0.0
  %2137 = vadd.xlane.f32.xlu0 %v2136
  %v2138 = vpop.xlane.xlu0 %2137
  %v2139 = vsel %vm302, %v1395, 0.0
  %2140 = vadd.xlane.f32.xlu0 %v2139
  %v2141 = vpop.xlane.xlu0 %2140
  %v2142 = vsel %vm302, %v1396, 0.0
  %2143 = vadd.xlane.f32.xlu0 %v2142
  %v2144 = vpop.xlane.xlu0 %2143
  %v2145 = vsel %vm302, %v1397, 0.0
  %2146 = vadd.xlane.f32.xlu0 %v2145
  %v2147 = vpop.xlane.xlu0 %2146
  %v2148 = vsel %vm302, %v1398, 0.0
  %2149 = vadd.xlane.f32.xlu0 %v2148
  %v2150 = vpop.xlane.xlu0 %2149
  %v2151 = vsel %vm302, %v1399, 0.0
  %2152 = vadd.xlane.f32.xlu0 %v2151
  %v2153 = vpop.xlane.xlu0 %2152
  %v2154 = vsel %vm302, %v1400, 0.0
  %2155 = vadd.xlane.f32.xlu0 %v2154
  %v2156 = vpop.xlane.xlu0 %2155
  %v2157 = vsel %vm302, %v1401, 0.0
  %2158 = vadd.xlane.f32.xlu0 %v2157
  %v2159 = vpop.xlane.xlu0 %2158
  %v2160 = vsel %vm302, %v1402, 0.0
  %2161 = vadd.xlane.f32.xlu0 %v2160
  %v2162 = vpop.xlane.xlu0 %2161
  %v2163 = vsel %vm302, %v1403, 0.0
  %2164 = vadd.xlane.f32.xlu0 %v2163
  %v2165 = vpop.xlane.xlu0 %2164
  %v2166 = vsel %vm302, %v1404, 0.0
  %2167 = vadd.xlane.f32.xlu0 %v2166
  %v2168 = vpop.xlane.xlu0 %2167
  %v2169 = vsel %vm302, %v1405, 0.0
  %2170 = vadd.xlane.f32.xlu0 %v2169
  %v2171 = vpop.xlane.xlu0 %2170
  %v2172 = vsel %vm302, %v1406, 0.0
  %2173 = vadd.xlane.f32.xlu0 %v2172
  %v2174 = vpop.xlane.xlu0 %2173
  %v2175 = vsel %vm302, %v1407, 0.0
  %2176 = vadd.xlane.f32.xlu0 %v2175
  %v2177 = vpop.xlane.xlu0 %2176
  %v2178 = vsel %vm302, %v1408, 0.0
  %2179 = vadd.xlane.f32.xlu0 %v2178
  %v2180 = vpop.xlane.xlu0 %2179
  %v2181 = vsel %vm302, %v1409, 0.0
  %2182 = vadd.xlane.f32.xlu0 %v2181
  %v2183 = vpop.xlane.xlu0 %2182
  %v2184 = vsel %vm302, %v1410, 0.0
  %2185 = vadd.xlane.f32.xlu0 %v2184
  %v2186 = vpop.xlane.xlu0 %2185
  %v2187 = vsel %vm302, %v1411, 0.0
  %2188 = vadd.xlane.f32.xlu0 %v2187
  %v2189 = vpop.xlane.xlu0 %2188
  %v2190 = vsel %vm302, %v1412, 0.0
  %2191 = vadd.xlane.f32.xlu0 %v2190
  %v2192 = vpop.xlane.xlu0 %2191
  %v2193 = vsel %vm302, %v1413, 0.0
  %2194 = vadd.xlane.f32.xlu0 %v2193
  %v2195 = vpop.xlane.xlu0 %2194
  %v2196 = vsel %vm302, %v1414, 0.0
  %2197 = vadd.xlane.f32.xlu0 %v2196
  %v2198 = vpop.xlane.xlu0 %2197
  %v2199 = vsel %vm302, %v1415, 0.0
  %2200 = vadd.xlane.f32.xlu0 %v2199
  %v2201 = vpop.xlane.xlu0 %2200
  %v2202 = vsel %vm302, %v1416, 0.0
  %2203 = vadd.xlane.f32.xlu0 %v2202
  %v2204 = vpop.xlane.xlu0 %2203
  %v2205 = vsel %vm302, %v1417, 0.0
  %2206 = vadd.xlane.f32.xlu0 %v2205
  %v2207 = vpop.xlane.xlu0 %2206
  %v2208 = vsel %vm302, %v1418, 0.0
  %2209 = vadd.xlane.f32.xlu0 %v2208
  %v2210 = vpop.xlane.xlu0 %2209
  %v2211 = vsel %vm302, %v1419, 0.0
  %2212 = vadd.xlane.f32.xlu0 %v2211
  %v2213 = vpop.xlane.xlu0 %2212
  %v2214 = vsel %vm302, %v1420, 0.0
  %2215 = vadd.xlane.f32.xlu0 %v2214
  %v2216 = vpop.xlane.xlu0 %2215
  %v2217 = vsel %vm302, %v1421, 0.0
  %2218 = vadd.xlane.f32.xlu0 %v2217
  %v2219 = vpop.xlane.xlu0 %2218
  %v2220 = vsel %vm302, %v1422, 0.0
  %2221 = vadd.xlane.f32.xlu0 %v2220
  %v2222 = vpop.xlane.xlu0 %2221
  %v2223 = vsel %vm302, %v1423, 0.0
  %2224 = vadd.xlane.f32.xlu0 %v2223
  %v2225 = vpop.xlane.xlu0 %2224
  %v2226 = vsel %vm302, %v1424, 0.0
  %2227 = vadd.xlane.f32.xlu0 %v2226
  %v2228 = vpop.xlane.xlu0 %2227
  %v2229 = vsel %vm302, %v1425, 0.0
  %2230 = vadd.xlane.f32.xlu0 %v2229
  %v2231 = vpop.xlane.xlu0 %2230
  %v2232 = vsel %vm302, %v1426, 0.0
  %2233 = vadd.xlane.f32.xlu0 %v2232
  %v2234 = vpop.xlane.xlu0 %2233
  %v2235 = vsel %vm302, %v1427, 0.0
  %2236 = vadd.xlane.f32.xlu0 %v2235
  %v2237 = vpop.xlane.xlu0 %2236
  %v2238 = vsel %vm302, %v1428, 0.0
  %2239 = vadd.xlane.f32.xlu0 %v2238
  %v2240 = vpop.xlane.xlu0 %2239
  %v2241 = vsel %vm302, %v1429, 0.0
  %2242 = vadd.xlane.f32.xlu0 %v2241
  %v2243 = vpop.xlane.xlu0 %2242
  %v2244 = vsel %vm302, %v1430, 0.0
  %2245 = vadd.xlane.f32.xlu0 %v2244
  %v2246 = vpop.xlane.xlu0 %2245
  %v2247 = vsel %vm302, %v1431, 0.0
  %2248 = vadd.xlane.f32.xlu0 %v2247
  %v2249 = vpop.xlane.xlu0 %2248
  %v2250 = vsel %vm302, %v1432, 0.0
  %2251 = vadd.xlane.f32.xlu0 %v2250
  %v2252 = vpop.xlane.xlu0 %2251
  %v2253 = vsel %vm302, %v1433, 0.0
  %2254 = vadd.xlane.f32.xlu0 %v2253
  %v2255 = vpop.xlane.xlu0 %2254
  %v2256 = vsel %vm302, %v1434, 0.0
  %2257 = vadd.xlane.f32.xlu0 %v2256
  %v2258 = vpop.xlane.xlu0 %2257
  %v2259 = vsel %vm302, %v1435, 0.0
  %2260 = vadd.xlane.f32.xlu0 %v2259
  %v2261 = vpop.xlane.xlu0 %2260
  %v2262 = vsel %vm302, %v1436, 0.0
  %2263 = vadd.xlane.f32.xlu0 %v2262
  %v2264 = vpop.xlane.xlu0 %2263
  %v2265 = vsel %vm302, %v1437, 0.0
  %2266 = vadd.xlane.f32.xlu0 %v2265
  %v2267 = vpop.xlane.xlu0 %2266
  %v2268 = vsel %vm302, %v1438, 0.0
  %2269 = vadd.xlane.f32.xlu0 %v2268
  %v2270 = vpop.xlane.xlu0 %2269
  %v2271 = vsel %vm302, %v1439, 0.0
  %2272 = vadd.xlane.f32.xlu0 %v2271
  %v2273 = vpop.xlane.xlu0 %2272
  %v2274 = vsel %vm302, %v1440, 0.0
  %2275 = vadd.xlane.f32.xlu0 %v2274
  %v2276 = vpop.xlane.xlu0 %2275
  %v2277 = vsel %vm302, %v1441, 0.0
  %2278 = vadd.xlane.f32.xlu0 %v2277
  %v2279 = vpop.xlane.xlu0 %2278
  %v2280 = vsel %vm302, %v1442, 0.0
  %2281 = vadd.xlane.f32.xlu0 %v2280
  %v2282 = vpop.xlane.xlu0 %2281
  %v2283 = vsel %vm302, %v1443, 0.0
  %2284 = vadd.xlane.f32.xlu0 %v2283
  %v2285 = vpop.xlane.xlu0 %2284
  %v2286 = vsel %vm302, %v1444, 0.0
  %2287 = vadd.xlane.f32.xlu0 %v2286
  %v2288 = vpop.xlane.xlu0 %2287
  %v2289 = vsel %vm302, %v1445, 0.0
  %2290 = vadd.xlane.f32.xlu0 %v2289
  %v2291 = vpop.xlane.xlu0 %2290
  %v2292 = vsel %vm302, %v1446, 0.0
  %2293 = vadd.xlane.f32.xlu0 %v2292
  %v2294 = vpop.xlane.xlu0 %2293
  %v2295 = vsel %vm302, %v1447, 0.0
  %2296 = vadd.xlane.f32.xlu0 %v2295
  %v2297 = vpop.xlane.xlu0 %2296
  %v2298 = vsel %vm302, %v1448, 0.0
  %2299 = vadd.xlane.f32.xlu0 %v2298
  %v2300 = vpop.xlane.xlu0 %2299
  %v2301 = vsel %vm302, %v1449, 0.0
  %2302 = vadd.xlane.f32.xlu0 %v2301
  %v2303 = vpop.xlane.xlu0 %2302
  %v2304 = vsel %vm302, %v1450, 0.0
  %2305 = vadd.xlane.f32.xlu0 %v2304
  %v2306 = vpop.xlane.xlu0 %2305
  %v2307 = vsel %vm302, %v1451, 0.0
  %2308 = vadd.xlane.f32.xlu0 %v2307
  %v2309 = vpop.xlane.xlu0 %2308
  %v2310 = vsel %vm302, %v1452, 0.0
  %2311 = vadd.xlane.f32.xlu0 %v2310
  %v2312 = vpop.xlane.xlu0 %2311
  %v2313 = vsel %vm302, %v1453, 0.0
  %2314 = vadd.xlane.f32.xlu0 %v2313
  %v2315 = vpop.xlane.xlu0 %2314
  %v2316 = vsel %vm302, %v1454, 0.0
  %2317 = vadd.xlane.f32.xlu0 %v2316
  %v2318 = vpop.xlane.xlu0 %2317
  %v2319 = vmul.f32 %v305, 0.020408163
  %v2320 = vmul.f32 %v308, 0.020408163
  %v2321 = vmul.f32 %v311, 0.020408163
  %v2322 = vmul.f32 %v314, 0.020408163
  %v2323 = vmul.f32 %v317, 0.020408163
  %v2324 = vmul.f32 %v320, 0.020408163
  %v2325 = vmul.f32 %v323, 0.020408163
  %v2326 = vmul.f32 %v326, 0.020408163
  %v2327 = vmul.f32 %v329, 0.020408163
  %v2328 = vmul.f32 %v332, 0.020408163
  %v2329 = vmul.f32 %v335, 0.020408163
  %v2330 = vmul.f32 %v338, 0.020408163
  %v2331 = vmul.f32 %v341, 0.020408163
  %v2332 = vmul.f32 %v344, 0.020408163
  %v2333 = vmul.f32 %v347, 0.020408163
  %v2334 = vmul.f32 %v350, 0.020408163
  %v2335 = vmul.f32 %v353, 0.020408163
  %v2336 = vmul.f32 %v356, 0.020408163
  %v2337 = vmul.f32 %v359, 0.020408163
  %v2338 = vmul.f32 %v362, 0.020408163
  %v2339 = vmul.f32 %v365, 0.020408163
  %v2340 = vmul.f32 %v368, 0.020408163
  %v2341 = vmul.f32 %v371, 0.020408163
  %v2342 = vmul.f32 %v374, 0.020408163
  %v2343 = vmul.f32 %v377, 0.020408163
  %v2344 = vmul.f32 %v380, 0.020408163
  %v2345 = vmul.f32 %v383, 0.020408163
  %v2346 = vmul.f32 %v386, 0.020408163
  %v2347 = vmul.f32 %v389, 0.020408163
  %v2348 = vmul.f32 %v392, 0.020408163
  %v2349 = vmul.f32 %v395, 0.020408163
  %v2350 = vmul.f32 %v398, 0.020408163
  %v2351 = vmul.f32 %v401, 0.020408163
  %v2352 = vmul.f32 %v404, 0.020408163
  %v2353 = vmul.f32 %v407, 0.020408163
  %v2354 = vmul.f32 %v410, 0.020408163
  %v2355 = vmul.f32 %v413, 0.020408163
  %v2356 = vmul.f32 %v416, 0.020408163
  %v2357 = vmul.f32 %v419, 0.020408163
  %v2358 = vmul.f32 %v422, 0.020408163
  %v2359 = vmul.f32 %v425, 0.020408163
  %v2360 = vmul.f32 %v428, 0.020408163
  %v2361 = vmul.f32 %v431, 0.020408163
  %v2362 = vmul.f32 %v434, 0.020408163
  %v2363 = vmul.f32 %v437, 0.020408163
  %v2364 = vmul.f32 %v440, 0.020408163
  %v2365 = vmul.f32 %v443, 0.020408163
  %v2366 = vmul.f32 %v446, 0.020408163
  %v2367 = vmul.f32 %v449, 0.020408163
  %v2368 = vmul.f32 %v452, 0.020408163
  %v2369 = vmul.f32 %v455, 0.020408163
  %v2370 = vmul.f32 %v458, 0.020408163
  %v2371 = vmul.f32 %v461, 0.020408163
  %v2372 = vmul.f32 %v464, 0.020408163
  %v2373 = vmul.f32 %v467, 0.020408163
  %v2374 = vmul.f32 %v470, 0.020408163
  %v2375 = vmul.f32 %v473, 0.020408163
  %v2376 = vmul.f32 %v476, 0.020408163
  %v2377 = vmul.f32 %v479, 0.020408163
  %v2378 = vmul.f32 %v482, 0.020408163
  %v2379 = vmul.f32 %v485, 0.020408163
  %v2380 = vmul.f32 %v488, 0.020408163
  %v2381 = vmul.f32 %v491, 0.020408163
  %v2382 = vmul.f32 %v494, 0.020408163
  %v2383 = vmul.f32 %v497, 0.020408163
  %v2384 = vmul.f32 %v500, 0.020408163
  %v2385 = vmul.f32 %v503, 0.020408163
  %v2386 = vmul.f32 %v506, 0.020408163
  %v2387 = vmul.f32 %v509, 0.020408163
  %v2388 = vmul.f32 %v512, 0.020408163
  %v2389 = vmul.f32 %v515, 0.020408163
  %v2390 = vmul.f32 %v518, 0.020408163
  %v2391 = vmul.f32 %v521, 0.020408163
  %v2392 = vmul.f32 %v524, 0.020408163
  %v2393 = vmul.f32 %v527, 0.020408163
  %v2394 = vmul.f32 %v530, 0.020408163
  %v2395 = vmul.f32 %v533, 0.020408163
  %v2396 = vmul.f32 %v536, 0.020408163
  %v2397 = vmul.f32 %v539, 0.020408163
  %v2398 = vmul.f32 %v542, 0.020408163
  %v2399 = vmul.f32 %v545, 0.020408163
  %v2400 = vmul.f32 %v548, 0.020408163
  %v2401 = vmul.f32 %v551, 0.020408163
  %v2402 = vmul.f32 %v554, 0.020408163
  %v2403 = vmul.f32 %v557, 0.020408163
  %v2404 = vmul.f32 %v560, 0.020408163
  %v2405 = vmul.f32 %v563, 0.020408163
  %v2406 = vmul.f32 %v566, 0.020408163
  %v2407 = vmul.f32 %v569, 0.020408163
  %v2408 = vmul.f32 %v572, 0.020408163
  %v2409 = vmul.f32 %v575, 0.020408163
  %v2410 = vmul.f32 %v578, 0.020408163
  %v2411 = vmul.f32 %v581, 0.020408163
  %v2412 = vmul.f32 %v584, 0.020408163
  %v2413 = vmul.f32 %v587, 0.020408163
  %v2414 = vmul.f32 %v590, 0.020408163
  %v2415 = vmul.f32 %v593, 0.020408163
  %v2416 = vmul.f32 %v596, 0.020408163
  %v2417 = vmul.f32 %v599, 0.020408163
  %v2418 = vmul.f32 %v602, 0.020408163
  %v2419 = vmul.f32 %v605, 0.020408163
  %v2420 = vmul.f32 %v608, 0.020408163
  %v2421 = vmul.f32 %v611, 0.020408163
  %v2422 = vmul.f32 %v614, 0.020408163
  %v2423 = vmul.f32 %v617, 0.020408163
  %v2424 = vmul.f32 %v620, 0.020408163
  %v2425 = vmul.f32 %v623, 0.020408163
  %v2426 = vmul.f32 %v626, 0.020408163
  %v2427 = vmul.f32 %v629, 0.020408163
  %v2428 = vmul.f32 %v632, 0.020408163
  %v2429 = vmul.f32 %v635, 0.020408163
  %v2430 = vmul.f32 %v638, 0.020408163
  %v2431 = vmul.f32 %v641, 0.020408163
  %v2432 = vmul.f32 %v644, 0.020408163
  %v2433 = vmul.f32 %v647, 0.020408163
  %v2434 = vmul.f32 %v650, 0.020408163
  %v2435 = vmul.f32 %v653, 0.020408163
  %v2436 = vmul.f32 %v656, 0.020408163
  %v2437 = vmul.f32 %v659, 0.020408163
  %v2438 = vmul.f32 %v662, 0.020408163
  %v2439 = vmul.f32 %v665, 0.020408163
  %v2440 = vmul.f32 %v668, 0.020408163
  %v2441 = vmul.f32 %v671, 0.020408163
  %v2442 = vmul.f32 %v674, 0.020408163
  %v2443 = vmul.f32 %v677, 0.020408163
  %v2444 = vmul.f32 %v680, 0.020408163
  %v2445 = vmul.f32 %v683, 0.020408163
  %v2446 = vmul.f32 %v686, 0.020408163
  %v2447 = vmul.f32 %v689, 0.020408163
  %v2448 = vmul.f32 %v692, 0.020408163
  %v2449 = vmul.f32 %v695, 0.020408163
  %v2450 = vmul.f32 %v698, 0.020408163
  %v2451 = vmul.f32 %v701, 0.020408163
  %v2452 = vmul.f32 %v704, 0.020408163
  %v2453 = vmul.f32 %v707, 0.020408163
  %v2454 = vmul.f32 %v710, 0.020408163
  %v2455 = vmul.f32 %v713, 0.020408163
  %v2456 = vmul.f32 %v716, 0.020408163
  %v2457 = vmul.f32 %v719, 0.020408163
  %v2458 = vmul.f32 %v722, 0.020408163
  %v2459 = vmul.f32 %v725, 0.020408163
  %v2460 = vmul.f32 %v728, 0.020408163
  %v2461 = vmul.f32 %v731, 0.020408163
  %v2462 = vmul.f32 %v734, 0.020408163
  %v2463 = vmul.f32 %v737, 0.020408163
  %v2464 = vmul.f32 %v740, 0.020408163
  %v2465 = vmul.f32 %v743, 0.020408163
  %v2466 = vmul.f32 %v746, 0.020408163
  %v2467 = vmul.f32 %v749, 0.020408163
  %v2468 = vmul.f32 %v752, 0.020408163
  %v2469 = vmul.f32 %v755, 0.020408163
  %v2470 = vmul.f32 %v758, 0.020408163
  %v2471 = vmul.f32 %v761, 0.020408163
  %v2472 = vmul.f32 %v764, 0.020408163
  %v2473 = vmul.f32 %v767, 0.020408163
  %v2474 = vmul.f32 %v770, 0.020408163
  %v2475 = vmul.f32 %v773, 0.020408163
  %v2476 = vmul.f32 %v776, 0.020408163
  %v2477 = vmul.f32 %v779, 0.020408163
  %v2478 = vmul.f32 %v782, 0.020408163
  %v2479 = vmul.f32 %v785, 0.020408163
  %v2480 = vmul.f32 %v788, 0.020408163
  %v2481 = vmul.f32 %v791, 0.020408163
  %v2482 = vmul.f32 %v794, 0.020408163
  %v2483 = vmul.f32 %v797, 0.020408163
  %v2484 = vmul.f32 %v800, 0.020408163
  %v2485 = vmul.f32 %v803, 0.020408163
  %v2486 = vmul.f32 %v806, 0.020408163
  %v2487 = vmul.f32 %v809, 0.020408163
  %v2488 = vmul.f32 %v812, 0.020408163
  %v2489 = vmul.f32 %v815, 0.020408163
  %v2490 = vmul.f32 %v818, 0.020408163
  %v2491 = vmul.f32 %v821, 0.020408163
  %v2492 = vmul.f32 %v824, 0.020408163
  %v2493 = vmul.f32 %v827, 0.020408163
  %v2494 = vmul.f32 %v830, 0.020408163
  %v2495 = vmul.f32 %v833, 0.020408163
  %v2496 = vmul.f32 %v836, 0.020408163
  %v2497 = vmul.f32 %v839, 0.020408163
  %v2498 = vmul.f32 %v842, 0.020408163
  %v2499 = vmul.f32 %v845, 0.020408163
  %v2500 = vmul.f32 %v848, 0.020408163
  %v2501 = vmul.f32 %v851, 0.020408163
  %v2502 = vmul.f32 %v854, 0.020408163
  %v2503 = vmul.f32 %v857, 0.020408163
  %v2504 = vmul.f32 %v860, 0.020408163
  %v2505 = vmul.f32 %v863, 0.020408163
  %v2506 = vmul.f32 %v866, 0.020408163
  %v2507 = vmul.f32 %v869, 0.020408163
  %v2508 = vmul.f32 %v872, 0.020408163
  %v2509 = vmul.f32 %v875, 0.020408163
  %v2510 = vmul.f32 %v878, 0.020408163
  %v2511 = vmul.f32 %v881, 0.020408163
  %v2512 = vmul.f32 %v884, 0.020408163
  %v2513 = vmul.f32 %v887, 0.020408163
  %v2514 = vmul.f32 %v890, 0.020408163
  %v2515 = vmul.f32 %v893, 0.020408163
  %v2516 = vmul.f32 %v896, 0.020408163
  %v2517 = vmul.f32 %v899, 0.020408163
  %v2518 = vmul.f32 %v902, 0.020408163
  %v2519 = vmul.f32 %v905, 0.020408163
  %v2520 = vmul.f32 %v908, 0.020408163
  %v2521 = vmul.f32 %v911, 0.020408163
  %v2522 = vmul.f32 %v914, 0.020408163
  %v2523 = vmul.f32 %v917, 0.020408163
  %v2524 = vmul.f32 %v920, 0.020408163
  %v2525 = vmul.f32 %v923, 0.020408163
  %v2526 = vmul.f32 %v926, 0.020408163
  %v2527 = vmul.f32 %v929, 0.020408163
  %v2528 = vmul.f32 %v932, 0.020408163
  %v2529 = vmul.f32 %v935, 0.020408163
  %v2530 = vmul.f32 %v938, 0.020408163
  %v2531 = vmul.f32 %v941, 0.020408163
  %v2532 = vmul.f32 %v944, 0.020408163
  %v2533 = vmul.f32 %v947, 0.020408163
  %v2534 = vmul.f32 %v950, 0.020408163
  %v2535 = vmul.f32 %v953, 0.020408163
  %v2536 = vmul.f32 %v956, 0.020408163
  %v2537 = vmul.f32 %v959, 0.020408163
  %v2538 = vmul.f32 %v962, 0.020408163
  %v2539 = vmul.f32 %v965, 0.020408163
  %v2540 = vmul.f32 %v968, 0.020408163
  %v2541 = vmul.f32 %v971, 0.020408163
  %v2542 = vmul.f32 %v974, 0.020408163
  %v2543 = vmul.f32 %v977, 0.020408163
  %v2544 = vmul.f32 %v980, 0.020408163
  %v2545 = vmul.f32 %v983, 0.020408163
  %v2546 = vmul.f32 %v986, 0.020408163
  %v2547 = vmul.f32 %v989, 0.020408163
  %v2548 = vmul.f32 %v992, 0.020408163
  %v2549 = vmul.f32 %v995, 0.020408163
  %v2550 = vmul.f32 %v998, 0.020408163
  %v2551 = vmul.f32 %v1001, 0.020408163
  %v2552 = vmul.f32 %v1004, 0.020408163
  %v2553 = vmul.f32 %v1007, 0.020408163
  %v2554 = vmul.f32 %v1010, 0.020408163
  %v2555 = vmul.f32 %v1013, 0.020408163
  %v2556 = vmul.f32 %v1016, 0.020408163
  %v2557 = vmul.f32 %v1019, 0.020408163
  %v2558 = vmul.f32 %v1022, 0.020408163
  %v2559 = vmul.f32 %v1025, 0.020408163
  %v2560 = vmul.f32 %v1028, 0.020408163
  %v2561 = vmul.f32 %v1031, 0.020408163
  %v2562 = vmul.f32 %v1034, 0.020408163
  %v2563 = vmul.f32 %v1037, 0.020408163
  %v2564 = vmul.f32 %v1040, 0.020408163
  %v2565 = vmul.f32 %v1043, 0.020408163
  %v2566 = vmul.f32 %v1046, 0.020408163
  %v2567 = vmul.f32 %v1049, 0.020408163
  %v2568 = vmul.f32 %v1052, 0.020408163
  %v2569 = vmul.f32 %v1055, 0.020408163
  %v2570 = vmul.f32 %v1058, 0.020408163
  %v2571 = vmul.f32 %v1061, 0.020408163
  %v2572 = vmul.f32 %v1064, 0.020408163
  %v2573 = vmul.f32 %v1067, 0.020408163
  %v2574 = vmul.f32 %v1070, 0.020408163
  %v2575 = vmul.f32 %v1073, 0.020408163
  %v2576 = vmul.f32 %v1076, 0.020408163
  %v2577 = vmul.f32 %v1079, 0.020408163
  %v2578 = vmul.f32 %v1082, 0.020408163
  %v2579 = vmul.f32 %v1085, 0.020408163
  %v2580 = vmul.f32 %v1088, 0.020408163
  %v2581 = vmul.f32 %v1091, 0.020408163
  %v2582 = vmul.f32 %v1094, 0.020408163
  %v2583 = vmul.f32 %v1097, 0.020408163
  %v2584 = vmul.f32 %v1100, 0.020408163
  %v2585 = vmul.f32 %v1103, 0.020408163
  %v2586 = vmul.f32 %v1106, 0.020408163
  %v2587 = vmul.f32 %v1109, 0.020408163
  %v2588 = vmul.f32 %v1112, 0.020408163
  %v2589 = vmul.f32 %v1115, 0.020408163
  %v2590 = vmul.f32 %v1118, 0.020408163
  %v2591 = vmul.f32 %v1121, 0.020408163
  %v2592 = vmul.f32 %v1124, 0.020408163
  %v2593 = vmul.f32 %v1127, 0.020408163
  %v2594 = vmul.f32 %v1130, 0.020408163
  %v2595 = vmul.f32 %v1133, 0.020408163
  %v2596 = vmul.f32 %v1136, 0.020408163
  %v2597 = vmul.f32 %v1139, 0.020408163
  %v2598 = vmul.f32 %v1142, 0.020408163
  %v2599 = vmul.f32 %v1145, 0.020408163
  %v2600 = vmul.f32 %v1148, 0.020408163
  %v2601 = vmul.f32 %v1151, 0.020408163
  %v2602 = vmul.f32 %v1154, 0.020408163
  %v2603 = vmul.f32 %v1157, 0.020408163
  %v2604 = vmul.f32 %v1160, 0.020408163
  %v2605 = vmul.f32 %v1163, 0.020408163
  %v2606 = vmul.f32 %v1166, 0.020408163
  %v2607 = vmul.f32 %v1457, 0.020408163
  %v2608 = vmul.f32 %v1460, 0.020408163
  %v2609 = vmul.f32 %v1463, 0.020408163
  %v2610 = vmul.f32 %v1466, 0.020408163
  %v2611 = vmul.f32 %v1469, 0.020408163
  %v2612 = vmul.f32 %v1472, 0.020408163
  %v2613 = vmul.f32 %v1475, 0.020408163
  %v2614 = vmul.f32 %v1478, 0.020408163
  %v2615 = vmul.f32 %v1481, 0.020408163
  %v2616 = vmul.f32 %v1484, 0.020408163
  %v2617 = vmul.f32 %v1487, 0.020408163
  %v2618 = vmul.f32 %v1490, 0.020408163
  %v2619 = vmul.f32 %v1493, 0.020408163
  %v2620 = vmul.f32 %v1496, 0.020408163
  %v2621 = vmul.f32 %v1499, 0.020408163
  %v2622 = vmul.f32 %v1502, 0.020408163
  %v2623 = vmul.f32 %v1505, 0.020408163
  %v2624 = vmul.f32 %v1508, 0.020408163
  %v2625 = vmul.f32 %v1511, 0.020408163
  %v2626 = vmul.f32 %v1514, 0.020408163
  %v2627 = vmul.f32 %v1517, 0.020408163
  %v2628 = vmul.f32 %v1520, 0.020408163
  %v2629 = vmul.f32 %v1523, 0.020408163
  %v2630 = vmul.f32 %v1526, 0.020408163
  %v2631 = vmul.f32 %v1529, 0.020408163
  %v2632 = vmul.f32 %v1532, 0.020408163
  %v2633 = vmul.f32 %v1535, 0.020408163
  %v2634 = vmul.f32 %v1538, 0.020408163
  %v2635 = vmul.f32 %v1541, 0.020408163
  %v2636 = vmul.f32 %v1544, 0.020408163
  %v2637 = vmul.f32 %v1547, 0.020408163
  %v2638 = vmul.f32 %v1550, 0.020408163
  %v2639 = vmul.f32 %v1553, 0.020408163
  %v2640 = vmul.f32 %v1556, 0.020408163
  %v2641 = vmul.f32 %v1559, 0.020408163
  %v2642 = vmul.f32 %v1562, 0.020408163
  %v2643 = vmul.f32 %v1565, 0.020408163
  %v2644 = vmul.f32 %v1568, 0.020408163
  %v2645 = vmul.f32 %v1571, 0.020408163
  %v2646 = vmul.f32 %v1574, 0.020408163
  %v2647 = vmul.f32 %v1577, 0.020408163
  %v2648 = vmul.f32 %v1580, 0.020408163
  %v2649 = vmul.f32 %v1583, 0.020408163
  %v2650 = vmul.f32 %v1586, 0.020408163
  %v2651 = vmul.f32 %v1589, 0.020408163
  %v2652 = vmul.f32 %v1592, 0.020408163
  %v2653 = vmul.f32 %v1595, 0.020408163
  %v2654 = vmul.f32 %v1598, 0.020408163
  %v2655 = vmul.f32 %v1601, 0.020408163
  %v2656 = vmul.f32 %v1604, 0.020408163
  %v2657 = vmul.f32 %v1607, 0.020408163
  %v2658 = vmul.f32 %v1610, 0.020408163
  %v2659 = vmul.f32 %v1613, 0.020408163
  %v2660 = vmul.f32 %v1616, 0.020408163
  %v2661 = vmul.f32 %v1619, 0.020408163
  %v2662 = vmul.f32 %v1622, 0.020408163
  %v2663 = vmul.f32 %v1625, 0.020408163
  %v2664 = vmul.f32 %v1628, 0.020408163
  %v2665 = vmul.f32 %v1631, 0.020408163
  %v2666 = vmul.f32 %v1634, 0.020408163
  %v2667 = vmul.f32 %v1637, 0.020408163
  %v2668 = vmul.f32 %v1640, 0.020408163
  %v2669 = vmul.f32 %v1643, 0.020408163
  %v2670 = vmul.f32 %v1646, 0.020408163
  %v2671 = vmul.f32 %v1649, 0.020408163
  %v2672 = vmul.f32 %v1652, 0.020408163
  %v2673 = vmul.f32 %v1655, 0.020408163
  %v2674 = vmul.f32 %v1658, 0.020408163
  %v2675 = vmul.f32 %v1661, 0.020408163
  %v2676 = vmul.f32 %v1664, 0.020408163
  %v2677 = vmul.f32 %v1667, 0.020408163
  %v2678 = vmul.f32 %v1670, 0.020408163
  %v2679 = vmul.f32 %v1673, 0.020408163
  %v2680 = vmul.f32 %v1676, 0.020408163
  %v2681 = vmul.f32 %v1679, 0.020408163
  %v2682 = vmul.f32 %v1682, 0.020408163
  %v2683 = vmul.f32 %v1685, 0.020408163
  %v2684 = vmul.f32 %v1688, 0.020408163
  %v2685 = vmul.f32 %v1691, 0.020408163
  %v2686 = vmul.f32 %v1694, 0.020408163
  %v2687 = vmul.f32 %v1697, 0.020408163
  %v2688 = vmul.f32 %v1700, 0.020408163
  %v2689 = vmul.f32 %v1703, 0.020408163
  %v2690 = vmul.f32 %v1706, 0.020408163
  %v2691 = vmul.f32 %v1709, 0.020408163
  %v2692 = vmul.f32 %v1712, 0.020408163
  %v2693 = vmul.f32 %v1715, 0.020408163
  %v2694 = vmul.f32 %v1718, 0.020408163
  %v2695 = vmul.f32 %v1721, 0.020408163
  %v2696 = vmul.f32 %v1724, 0.020408163
  %v2697 = vmul.f32 %v1727, 0.020408163
  %v2698 = vmul.f32 %v1730, 0.020408163
  %v2699 = vmul.f32 %v1733, 0.020408163
  %v2700 = vmul.f32 %v1736, 0.020408163
  %v2701 = vmul.f32 %v1739, 0.020408163
  %v2702 = vmul.f32 %v1742, 0.020408163
  %v2703 = vmul.f32 %v1745, 0.020408163
  %v2704 = vmul.f32 %v1748, 0.020408163
  %v2705 = vmul.f32 %v1751, 0.020408163
  %v2706 = vmul.f32 %v1754, 0.020408163
  %v2707 = vmul.f32 %v1757, 0.020408163
  %v2708 = vmul.f32 %v1760, 0.020408163
  %v2709 = vmul.f32 %v1763, 0.020408163
  %v2710 = vmul.f32 %v1766, 0.020408163
  %v2711 = vmul.f32 %v1769, 0.020408163
  %v2712 = vmul.f32 %v1772, 0.020408163
  %v2713 = vmul.f32 %v1775, 0.020408163
  %v2714 = vmul.f32 %v1778, 0.020408163
  %v2715 = vmul.f32 %v1781, 0.020408163
  %v2716 = vmul.f32 %v1784, 0.020408163
  %v2717 = vmul.f32 %v1787, 0.020408163
  %v2718 = vmul.f32 %v1790, 0.020408163
  %v2719 = vmul.f32 %v1793, 0.020408163
  %v2720 = vmul.f32 %v1796, 0.020408163
  %v2721 = vmul.f32 %v1799, 0.020408163
  %v2722 = vmul.f32 %v1802, 0.020408163
  %v2723 = vmul.f32 %v1805, 0.020408163
  %v2724 = vmul.f32 %v1808, 0.020408163
  %v2725 = vmul.f32 %v1811, 0.020408163
  %v2726 = vmul.f32 %v1814, 0.020408163
  %v2727 = vmul.f32 %v1817, 0.020408163
  %v2728 = vmul.f32 %v1820, 0.020408163
  %v2729 = vmul.f32 %v1823, 0.020408163
  %v2730 = vmul.f32 %v1826, 0.020408163
  %v2731 = vmul.f32 %v1829, 0.020408163
  %v2732 = vmul.f32 %v1832, 0.020408163
  %v2733 = vmul.f32 %v1835, 0.020408163
  %v2734 = vmul.f32 %v1838, 0.020408163
  %v2735 = vmul.f32 %v1841, 0.020408163
  %v2736 = vmul.f32 %v1844, 0.020408163
  %v2737 = vmul.f32 %v1847, 0.020408163
  %v2738 = vmul.f32 %v1850, 0.020408163
  %v2739 = vmul.f32 %v1853, 0.020408163
  %v2740 = vmul.f32 %v1856, 0.020408163
  %v2741 = vmul.f32 %v1859, 0.020408163
  %v2742 = vmul.f32 %v1862, 0.020408163
  %v2743 = vmul.f32 %v1865, 0.020408163
  %v2744 = vmul.f32 %v1868, 0.020408163
  %v2745 = vmul.f32 %v1871, 0.020408163
  %v2746 = vmul.f32 %v1874, 0.020408163
  %v2747 = vmul.f32 %v1877, 0.020408163
  %v2748 = vmul.f32 %v1880, 0.020408163
  %v2749 = vmul.f32 %v1883, 0.020408163
  %v2750 = vmul.f32 %v1886, 0.020408163
  %v2751 = vmul.f32 %v1889, 0.020408163
  %v2752 = vmul.f32 %v1892, 0.020408163
  %v2753 = vmul.f32 %v1895, 0.020408163
  %v2754 = vmul.f32 %v1898, 0.020408163
  %v2755 = vmul.f32 %v1901, 0.020408163
  %v2756 = vmul.f32 %v1904, 0.020408163
  %v2757 = vmul.f32 %v1907, 0.020408163
  %v2758 = vmul.f32 %v1910, 0.020408163
  %v2759 = vmul.f32 %v1913, 0.020408163
  %v2760 = vmul.f32 %v1916, 0.020408163
  %v2761 = vmul.f32 %v1919, 0.020408163
  %v2762 = vmul.f32 %v1922, 0.020408163
  %v2763 = vmul.f32 %v1925, 0.020408163
  %v2764 = vmul.f32 %v1928, 0.020408163
  %v2765 = vmul.f32 %v1931, 0.020408163
  %v2766 = vmul.f32 %v1934, 0.020408163
  %v2767 = vmul.f32 %v1937, 0.020408163
  %v2768 = vmul.f32 %v1940, 0.020408163
  %v2769 = vmul.f32 %v1943, 0.020408163
  %v2770 = vmul.f32 %v1946, 0.020408163
  %v2771 = vmul.f32 %v1949, 0.020408163
  %v2772 = vmul.f32 %v1952, 0.020408163
  %v2773 = vmul.f32 %v1955, 0.020408163
  %v2774 = vmul.f32 %v1958, 0.020408163
  %v2775 = vmul.f32 %v1961, 0.020408163
  %v2776 = vmul.f32 %v1964, 0.020408163
  %v2777 = vmul.f32 %v1967, 0.020408163
  %v2778 = vmul.f32 %v1970, 0.020408163
  %v2779 = vmul.f32 %v1973, 0.020408163
  %v2780 = vmul.f32 %v1976, 0.020408163
  %v2781 = vmul.f32 %v1979, 0.020408163
  %v2782 = vmul.f32 %v1982, 0.020408163
  %v2783 = vmul.f32 %v1985, 0.020408163
  %v2784 = vmul.f32 %v1988, 0.020408163
  %v2785 = vmul.f32 %v1991, 0.020408163
  %v2786 = vmul.f32 %v1994, 0.020408163
  %v2787 = vmul.f32 %v1997, 0.020408163
  %v2788 = vmul.f32 %v2000, 0.020408163
  %v2789 = vmul.f32 %v2003, 0.020408163
  %v2790 = vmul.f32 %v2006, 0.020408163
  %v2791 = vmul.f32 %v2009, 0.020408163
  %v2792 = vmul.f32 %v2012, 0.020408163
  %v2793 = vmul.f32 %v2015, 0.020408163
  %v2794 = vmul.f32 %v2018, 0.020408163
  %v2795 = vmul.f32 %v2021, 0.020408163
  %v2796 = vmul.f32 %v2024, 0.020408163
  %v2797 = vmul.f32 %v2027, 0.020408163
  %v2798 = vmul.f32 %v2030, 0.020408163
  %v2799 = vmul.f32 %v2033, 0.020408163
  %v2800 = vmul.f32 %v2036, 0.020408163
  %v2801 = vmul.f32 %v2039, 0.020408163
  %v2802 = vmul.f32 %v2042, 0.020408163
  %v2803 = vmul.f32 %v2045, 0.020408163
  %v2804 = vmul.f32 %v2048, 0.020408163
  %v2805 = vmul.f32 %v2051, 0.020408163
  %v2806 = vmul.f32 %v2054, 0.020408163
  %v2807 = vmul.f32 %v2057, 0.020408163
  %v2808 = vmul.f32 %v2060, 0.020408163
  %v2809 = vmul.f32 %v2063, 0.020408163
  %v2810 = vmul.f32 %v2066, 0.020408163
  %v2811 = vmul.f32 %v2069, 0.020408163
  %v2812 = vmul.f32 %v2072, 0.020408163
  %v2813 = vmul.f32 %v2075, 0.020408163
  %v2814 = vmul.f32 %v2078, 0.020408163
  %v2815 = vmul.f32 %v2081, 0.020408163
  %v2816 = vmul.f32 %v2084, 0.020408163
  %v2817 = vmul.f32 %v2087, 0.020408163
  %v2818 = vmul.f32 %v2090, 0.020408163
  %v2819 = vmul.f32 %v2093, 0.020408163
  %v2820 = vmul.f32 %v2096, 0.020408163
  %v2821 = vmul.f32 %v2099, 0.020408163
  %v2822 = vmul.f32 %v2102, 0.020408163
  %v2823 = vmul.f32 %v2105, 0.020408163
  %v2824 = vmul.f32 %v2108, 0.020408163
  %v2825 = vmul.f32 %v2111, 0.020408163
  %v2826 = vmul.f32 %v2114, 0.020408163
  %v2827 = vmul.f32 %v2117, 0.020408163
  %v2828 = vmul.f32 %v2120, 0.020408163
  %v2829 = vmul.f32 %v2123, 0.020408163
  %v2830 = vmul.f32 %v2126, 0.020408163
  %v2831 = vmul.f32 %v2129, 0.020408163
  %v2832 = vmul.f32 %v2132, 0.020408163
  %v2833 = vmul.f32 %v2135, 0.020408163
  %v2834 = vmul.f32 %v2138, 0.020408163
  %v2835 = vmul.f32 %v2141, 0.020408163
  %v2836 = vmul.f32 %v2144, 0.020408163
  %v2837 = vmul.f32 %v2147, 0.020408163
  %v2838 = vmul.f32 %v2150, 0.020408163
  %v2839 = vmul.f32 %v2153, 0.020408163
  %v2840 = vmul.f32 %v2156, 0.020408163
  %v2841 = vmul.f32 %v2159, 0.020408163
  %v2842 = vmul.f32 %v2162, 0.020408163
  %v2843 = vmul.f32 %v2165, 0.020408163
  %v2844 = vmul.f32 %v2168, 0.020408163
  %v2845 = vmul.f32 %v2171, 0.020408163
  %v2846 = vmul.f32 %v2174, 0.020408163
  %v2847 = vmul.f32 %v2177, 0.020408163
  %v2848 = vmul.f32 %v2180, 0.020408163
  %v2849 = vmul.f32 %v2183, 0.020408163
  %v2850 = vmul.f32 %v2186, 0.020408163
  %v2851 = vmul.f32 %v2189, 0.020408163
  %v2852 = vmul.f32 %v2192, 0.020408163
  %v2853 = vmul.f32 %v2195, 0.020408163
  %v2854 = vmul.f32 %v2198, 0.020408163
  %v2855 = vmul.f32 %v2201, 0.020408163
  %v2856 = vmul.f32 %v2204, 0.020408163
  %v2857 = vmul.f32 %v2207, 0.020408163
  %v2858 = vmul.f32 %v2210, 0.020408163
  %v2859 = vmul.f32 %v2213, 0.020408163
  %v2860 = vmul.f32 %v2216, 0.020408163
  %v2861 = vmul.f32 %v2219, 0.020408163
  %v2862 = vmul.f32 %v2222, 0.020408163
  %v2863 = vmul.f32 %v2225, 0.020408163
  %v2864 = vmul.f32 %v2228, 0.020408163
  %v2865 = vmul.f32 %v2231, 0.020408163
  %v2866 = vmul.f32 %v2234, 0.020408163
  %v2867 = vmul.f32 %v2237, 0.020408163
  %v2868 = vmul.f32 %v2240, 0.020408163
  %v2869 = vmul.f32 %v2243, 0.020408163
  %v2870 = vmul.f32 %v2246, 0.020408163
  %v2871 = vmul.f32 %v2249, 0.020408163
  %v2872 = vmul.f32 %v2252, 0.020408163
  %v2873 = vmul.f32 %v2255, 0.020408163
  %v2874 = vmul.f32 %v2258, 0.020408163
  %v2875 = vmul.f32 %v2261, 0.020408163
  %v2876 = vmul.f32 %v2264, 0.020408163
  %v2877 = vmul.f32 %v2267, 0.020408163
  %v2878 = vmul.f32 %v2270, 0.020408163
  %v2879 = vmul.f32 %v2273, 0.020408163
  %v2880 = vmul.f32 %v2276, 0.020408163
  %v2881 = vmul.f32 %v2279, 0.020408163
  %v2882 = vmul.f32 %v2282, 0.020408163
  %v2883 = vmul.f32 %v2285, 0.020408163
  %v2884 = vmul.f32 %v2288, 0.020408163
  %v2885 = vmul.f32 %v2291, 0.020408163
  %v2886 = vmul.f32 %v2294, 0.020408163
  %v2887 = vmul.f32 %v2297, 0.020408163
  %v2888 = vmul.f32 %v2300, 0.020408163
  %v2889 = vmul.f32 %v2303, 0.020408163
  %v2890 = vmul.f32 %v2306, 0.020408163
  %v2891 = vmul.f32 %v2309, 0.020408163
  %v2892 = vmul.f32 %v2312, 0.020408163
  %v2893 = vmul.f32 %v2315, 0.020408163
  %v2894 = vmul.f32 %v2318, 0.020408163
  %v2895 = vmul.f32 %v2319, %v2319
  %v2896 = vmul.f32 %v2320, %v2320
  %v2897 = vmul.f32 %v2321, %v2321
  %v2898 = vmul.f32 %v2322, %v2322
  %v2899 = vmul.f32 %v2323, %v2323
  %v2900 = vmul.f32 %v2324, %v2324
  %v2901 = vmul.f32 %v2325, %v2325
  %v2902 = vmul.f32 %v2326, %v2326
  %v2903 = vmul.f32 %v2327, %v2327
  %v2904 = vmul.f32 %v2328, %v2328
  %v2905 = vmul.f32 %v2329, %v2329
  %v2906 = vmul.f32 %v2330, %v2330
  %v2907 = vmul.f32 %v2331, %v2331
  %v2908 = vmul.f32 %v2332, %v2332
  %v2909 = vmul.f32 %v2333, %v2333
  %v2910 = vmul.f32 %v2334, %v2334
  %v2911 = vmul.f32 %v2335, %v2335
  %v2912 = vmul.f32 %v2336, %v2336
  %v2913 = vmul.f32 %v2337, %v2337
  %v2914 = vmul.f32 %v2338, %v2338
  %v2915 = vmul.f32 %v2339, %v2339
  %v2916 = vmul.f32 %v2340, %v2340
  %v2917 = vmul.f32 %v2341, %v2341
  %v2918 = vmul.f32 %v2342, %v2342
  %v2919 = vmul.f32 %v2343, %v2343
  %v2920 = vmul.f32 %v2344, %v2344
  %v2921 = vmul.f32 %v2345, %v2345
  %v2922 = vmul.f32 %v2346, %v2346
  %v2923 = vmul.f32 %v2347, %v2347
  %v2924 = vmul.f32 %v2348, %v2348
  %v2925 = vmul.f32 %v2349, %v2349
  %v2926 = vmul.f32 %v2350, %v2350
  %v2927 = vmul.f32 %v2351, %v2351
  %v2928 = vmul.f32 %v2352, %v2352
  %v2929 = vmul.f32 %v2353, %v2353
  %v2930 = vmul.f32 %v2354, %v2354
  %v2931 = vmul.f32 %v2355, %v2355
  %v2932 = vmul.f32 %v2356, %v2356
  %v2933 = vmul.f32 %v2357, %v2357
  %v2934 = vmul.f32 %v2358, %v2358
  %v2935 = vmul.f32 %v2359, %v2359
  %v2936 = vmul.f32 %v2360, %v2360
  %v2937 = vmul.f32 %v2361, %v2361
  %v2938 = vmul.f32 %v2362, %v2362
  %v2939 = vmul.f32 %v2363, %v2363
  %v2940 = vmul.f32 %v2364, %v2364
  %v2941 = vmul.f32 %v2365, %v2365
  %v2942 = vmul.f32 %v2366, %v2366
  %v2943 = vmul.f32 %v2367, %v2367
  %v2944 = vmul.f32 %v2368, %v2368
  %v2945 = vmul.f32 %v2369, %v2369
  %v2946 = vmul.f32 %v2370, %v2370
  %v2947 = vmul.f32 %v2371, %v2371
  %v2948 = vmul.f32 %v2372, %v2372
  %v2949 = vmul.f32 %v2373, %v2373
  %v2950 = vmul.f32 %v2374, %v2374
  %v2951 = vmul.f32 %v2375, %v2375
  %v2952 = vmul.f32 %v2376, %v2376
  %v2953 = vmul.f32 %v2377, %v2377
  %v2954 = vmul.f32 %v2378, %v2378
  %v2955 = vmul.f32 %v2379, %v2379
  %v2956 = vmul.f32 %v2380, %v2380
  %v2957 = vmul.f32 %v2381, %v2381
  %v2958 = vmul.f32 %v2382, %v2382
  %v2959 = vmul.f32 %v2383, %v2383
  %v2960 = vmul.f32 %v2384, %v2384
  %v2961 = vmul.f32 %v2385, %v2385
  %v2962 = vmul.f32 %v2386, %v2386
  %v2963 = vmul.f32 %v2387, %v2387
  %v2964 = vmul.f32 %v2388, %v2388
  %v2965 = vmul.f32 %v2389, %v2389
  %v2966 = vmul.f32 %v2390, %v2390
  %v2967 = vmul.f32 %v2391, %v2391
  %v2968 = vmul.f32 %v2392, %v2392
  %v2969 = vmul.f32 %v2393, %v2393
  %v2970 = vmul.f32 %v2394, %v2394
  %v2971 = vmul.f32 %v2395, %v2395
  %v2972 = vmul.f32 %v2396, %v2396
  %v2973 = vmul.f32 %v2397, %v2397
  %v2974 = vmul.f32 %v2398, %v2398
  %v2975 = vmul.f32 %v2399, %v2399
  %v2976 = vmul.f32 %v2400, %v2400
  %v2977 = vmul.f32 %v2401, %v2401
  %v2978 = vmul.f32 %v2402, %v2402
  %v2979 = vmul.f32 %v2403, %v2403
  %v2980 = vmul.f32 %v2404, %v2404
  %v2981 = vmul.f32 %v2405, %v2405
  %v2982 = vmul.f32 %v2406, %v2406
  %v2983 = vmul.f32 %v2407, %v2407
  %v2984 = vmul.f32 %v2408, %v2408
  %v2985 = vmul.f32 %v2409, %v2409
  %v2986 = vmul.f32 %v2410, %v2410
  %v2987 = vmul.f32 %v2411, %v2411
  %v2988 = vmul.f32 %v2412, %v2412
  %v2989 = vmul.f32 %v2413, %v2413
  %v2990 = vmul.f32 %v2414, %v2414
  %v2991 = vmul.f32 %v2415, %v2415
  %v2992 = vmul.f32 %v2416, %v2416
  %v2993 = vmul.f32 %v2417, %v2417
  %v2994 = vmul.f32 %v2418, %v2418
  %v2995 = vmul.f32 %v2419, %v2419
  %v2996 = vmul.f32 %v2420, %v2420
  %v2997 = vmul.f32 %v2421, %v2421
  %v2998 = vmul.f32 %v2422, %v2422
  %v2999 = vmul.f32 %v2423, %v2423
  %v3000 = vmul.f32 %v2424, %v2424
  %v3001 = vmul.f32 %v2425, %v2425
  %v3002 = vmul.f32 %v2426, %v2426
  %v3003 = vmul.f32 %v2427, %v2427
  %v3004 = vmul.f32 %v2428, %v2428
  %v3005 = vmul.f32 %v2429, %v2429
  %v3006 = vmul.f32 %v2430, %v2430
  %v3007 = vmul.f32 %v2431, %v2431
  %v3008 = vmul.f32 %v2432, %v2432
  %v3009 = vmul.f32 %v2433, %v2433
  %v3010 = vmul.f32 %v2434, %v2434
  %v3011 = vmul.f32 %v2435, %v2435
  %v3012 = vmul.f32 %v2436, %v2436
  %v3013 = vmul.f32 %v2437, %v2437
  %v3014 = vmul.f32 %v2438, %v2438
  %v3015 = vmul.f32 %v2439, %v2439
  %v3016 = vmul.f32 %v2440, %v2440
  %v3017 = vmul.f32 %v2441, %v2441
  %v3018 = vmul.f32 %v2442, %v2442
  %v3019 = vmul.f32 %v2443, %v2443
  %v3020 = vmul.f32 %v2444, %v2444
  %v3021 = vmul.f32 %v2445, %v2445
  %v3022 = vmul.f32 %v2446, %v2446
  %v3023 = vmul.f32 %v2447, %v2447
  %v3024 = vmul.f32 %v2448, %v2448
  %v3025 = vmul.f32 %v2449, %v2449
  %v3026 = vmul.f32 %v2450, %v2450
  %v3027 = vmul.f32 %v2451, %v2451
  %v3028 = vmul.f32 %v2452, %v2452
  %v3029 = vmul.f32 %v2453, %v2453
  %v3030 = vmul.f32 %v2454, %v2454
  %v3031 = vmul.f32 %v2455, %v2455
  %v3032 = vmul.f32 %v2456, %v2456
  %v3033 = vmul.f32 %v2457, %v2457
  %v3034 = vmul.f32 %v2458, %v2458
  %v3035 = vmul.f32 %v2459, %v2459
  %v3036 = vmul.f32 %v2460, %v2460
  %v3037 = vmul.f32 %v2461, %v2461
  %v3038 = vmul.f32 %v2462, %v2462
  %v3039 = vmul.f32 %v2463, %v2463
  %v3040 = vmul.f32 %v2464, %v2464
  %v3041 = vmul.f32 %v2465, %v2465
  %v3042 = vmul.f32 %v2466, %v2466
  %v3043 = vmul.f32 %v2467, %v2467
  %v3044 = vmul.f32 %v2468, %v2468
  %v3045 = vmul.f32 %v2469, %v2469
  %v3046 = vmul.f32 %v2470, %v2470
  %v3047 = vmul.f32 %v2471, %v2471
  %v3048 = vmul.f32 %v2472, %v2472
  %v3049 = vmul.f32 %v2473, %v2473
  %v3050 = vmul.f32 %v2474, %v2474
  %v3051 = vmul.f32 %v2475, %v2475
  %v3052 = vmul.f32 %v2476, %v2476
  %v3053 = vmul.f32 %v2477, %v2477
  %v3054 = vmul.f32 %v2478, %v2478
  %v3055 = vmul.f32 %v2479, %v2479
  %v3056 = vmul.f32 %v2480, %v2480
  %v3057 = vmul.f32 %v2481, %v2481
  %v3058 = vmul.f32 %v2482, %v2482
  %v3059 = vmul.f32 %v2483, %v2483
  %v3060 = vmul.f32 %v2484, %v2484
  %v3061 = vmul.f32 %v2485, %v2485
  %v3062 = vmul.f32 %v2486, %v2486
  %v3063 = vmul.f32 %v2487, %v2487
  %v3064 = vmul.f32 %v2488, %v2488
  %v3065 = vmul.f32 %v2489, %v2489
  %v3066 = vmul.f32 %v2490, %v2490
  %v3067 = vmul.f32 %v2491, %v2491
  %v3068 = vmul.f32 %v2492, %v2492
  %v3069 = vmul.f32 %v2493, %v2493
  %v3070 = vmul.f32 %v2494, %v2494
  %v3071 = vmul.f32 %v2495, %v2495
  %v3072 = vmul.f32 %v2496, %v2496
  %v3073 = vmul.f32 %v2497, %v2497
  %v3074 = vmul.f32 %v2498, %v2498
  %v3075 = vmul.f32 %v2499, %v2499
  %v3076 = vmul.f32 %v2500, %v2500
  %v3077 = vmul.f32 %v2501, %v2501
  %v3078 = vmul.f32 %v2502, %v2502
  %v3079 = vmul.f32 %v2503, %v2503
  %v3080 = vmul.f32 %v2504, %v2504
  %v3081 = vmul.f32 %v2505, %v2505
  %v3082 = vmul.f32 %v2506, %v2506
  %v3083 = vmul.f32 %v2507, %v2507
  %v3084 = vmul.f32 %v2508, %v2508
  %v3085 = vmul.f32 %v2509, %v2509
  %v3086 = vmul.f32 %v2510, %v2510
  %v3087 = vmul.f32 %v2511, %v2511
  %v3088 = vmul.f32 %v2512, %v2512
  %v3089 = vmul.f32 %v2513, %v2513
  %v3090 = vmul.f32 %v2514, %v2514
  %v3091 = vmul.f32 %v2515, %v2515
  %v3092 = vmul.f32 %v2516, %v2516
  %v3093 = vmul.f32 %v2517, %v2517
  %v3094 = vmul.f32 %v2518, %v2518
  %v3095 = vmul.f32 %v2519, %v2519
  %v3096 = vmul.f32 %v2520, %v2520
  %v3097 = vmul.f32 %v2521, %v2521
  %v3098 = vmul.f32 %v2522, %v2522
  %v3099 = vmul.f32 %v2523, %v2523
  %v3100 = vmul.f32 %v2524, %v2524
  %v3101 = vmul.f32 %v2525, %v2525
  %v3102 = vmul.f32 %v2526, %v2526
  %v3103 = vmul.f32 %v2527, %v2527
  %v3104 = vmul.f32 %v2528, %v2528
  %v3105 = vmul.f32 %v2529, %v2529
  %v3106 = vmul.f32 %v2530, %v2530
  %v3107 = vmul.f32 %v2531, %v2531
  %v3108 = vmul.f32 %v2532, %v2532
  %v3109 = vmul.f32 %v2533, %v2533
  %v3110 = vmul.f32 %v2534, %v2534
  %v3111 = vmul.f32 %v2535, %v2535
  %v3112 = vmul.f32 %v2536, %v2536
  %v3113 = vmul.f32 %v2537, %v2537
  %v3114 = vmul.f32 %v2538, %v2538
  %v3115 = vmul.f32 %v2539, %v2539
  %v3116 = vmul.f32 %v2540, %v2540
  %v3117 = vmul.f32 %v2541, %v2541
  %v3118 = vmul.f32 %v2542, %v2542
  %v3119 = vmul.f32 %v2543, %v2543
  %v3120 = vmul.f32 %v2544, %v2544
  %v3121 = vmul.f32 %v2545, %v2545
  %v3122 = vmul.f32 %v2546, %v2546
  %v3123 = vmul.f32 %v2547, %v2547
  %v3124 = vmul.f32 %v2548, %v2548
  %v3125 = vmul.f32 %v2549, %v2549
  %v3126 = vmul.f32 %v2550, %v2550
  %v3127 = vmul.f32 %v2551, %v2551
  %v3128 = vmul.f32 %v2552, %v2552
  %v3129 = vmul.f32 %v2553, %v2553
  %v3130 = vmul.f32 %v2554, %v2554
  %v3131 = vmul.f32 %v2555, %v2555
  %v3132 = vmul.f32 %v2556, %v2556
  %v3133 = vmul.f32 %v2557, %v2557
  %v3134 = vmul.f32 %v2558, %v2558
  %v3135 = vmul.f32 %v2559, %v2559
  %v3136 = vmul.f32 %v2560, %v2560
  %v3137 = vmul.f32 %v2561, %v2561
  %v3138 = vmul.f32 %v2562, %v2562
  %v3139 = vmul.f32 %v2563, %v2563
  %v3140 = vmul.f32 %v2564, %v2564
  %v3141 = vmul.f32 %v2565, %v2565
  %v3142 = vmul.f32 %v2566, %v2566
  %v3143 = vmul.f32 %v2567, %v2567
  %v3144 = vmul.f32 %v2568, %v2568
  %v3145 = vmul.f32 %v2569, %v2569
  %v3146 = vmul.f32 %v2570, %v2570
  %v3147 = vmul.f32 %v2571, %v2571
  %v3148 = vmul.f32 %v2572, %v2572
  %v3149 = vmul.f32 %v2573, %v2573
  %v3150 = vmul.f32 %v2574, %v2574
  %v3151 = vmul.f32 %v2575, %v2575
  %v3152 = vmul.f32 %v2576, %v2576
  %v3153 = vmul.f32 %v2577, %v2577
  %v3154 = vmul.f32 %v2578, %v2578
  %v3155 = vmul.f32 %v2579, %v2579
  %v3156 = vmul.f32 %v2580, %v2580
  %v3157 = vmul.f32 %v2581, %v2581
  %v3158 = vmul.f32 %v2582, %v2582
  %v3159 = vmul.f32 %v2583, %v2583
  %v3160 = vmul.f32 %v2584, %v2584
  %v3161 = vmul.f32 %v2585, %v2585
  %v3162 = vmul.f32 %v2586, %v2586
  %v3163 = vmul.f32 %v2587, %v2587
  %v3164 = vmul.f32 %v2588, %v2588
  %v3165 = vmul.f32 %v2589, %v2589
  %v3166 = vmul.f32 %v2590, %v2590
  %v3167 = vmul.f32 %v2591, %v2591
  %v3168 = vmul.f32 %v2592, %v2592
  %v3169 = vmul.f32 %v2593, %v2593
  %v3170 = vmul.f32 %v2594, %v2594
  %v3171 = vmul.f32 %v2595, %v2595
  %v3172 = vmul.f32 %v2596, %v2596
  %v3173 = vmul.f32 %v2597, %v2597
  %v3174 = vmul.f32 %v2598, %v2598
  %v3175 = vmul.f32 %v2599, %v2599
  %v3176 = vmul.f32 %v2600, %v2600
  %v3177 = vmul.f32 %v2601, %v2601
  %v3178 = vmul.f32 %v2602, %v2602
  %v3179 = vmul.f32 %v2603, %v2603
  %v3180 = vmul.f32 %v2604, %v2604
  %v3181 = vmul.f32 %v2605, %v2605
  %v3182 = vmul.f32 %v2606, %v2606
  %v3183 = vsub.f32 %v2607, %v2895
  %v3184 = vsub.f32 %v2608, %v2896
  %v3185 = vsub.f32 %v2609, %v2897
  %v3186 = vsub.f32 %v2610, %v2898
  %v3187 = vsub.f32 %v2611, %v2899
  %v3188 = vsub.f32 %v2612, %v2900
  %v3189 = vsub.f32 %v2613, %v2901
  %v3190 = vsub.f32 %v2614, %v2902
  %v3191 = vsub.f32 %v2615, %v2903
  %v3192 = vsub.f32 %v2616, %v2904
  %v3193 = vsub.f32 %v2617, %v2905
  %v3194 = vsub.f32 %v2618, %v2906
  %v3195 = vsub.f32 %v2619, %v2907
  %v3196 = vsub.f32 %v2620, %v2908
  %v3197 = vsub.f32 %v2621, %v2909
  %v3198 = vsub.f32 %v2622, %v2910
  %v3199 = vsub.f32 %v2623, %v2911
  %v3200 = vsub.f32 %v2624, %v2912
  %v3201 = vsub.f32 %v2625, %v2913
  %v3202 = vsub.f32 %v2626, %v2914
  %v3203 = vsub.f32 %v2627, %v2915
  %v3204 = vsub.f32 %v2628, %v2916
  %v3205 = vsub.f32 %v2629, %v2917
  %v3206 = vsub.f32 %v2630, %v2918
  %v3207 = vsub.f32 %v2631, %v2919
  %v3208 = vsub.f32 %v2632, %v2920
  %v3209 = vsub.f32 %v2633, %v2921
  %v3210 = vsub.f32 %v2634, %v2922
  %v3211 = vsub.f32 %v2635, %v2923
  %v3212 = vsub.f32 %v2636, %v2924
  %v3213 = vsub.f32 %v2637, %v2925
  %v3214 = vsub.f32 %v2638, %v2926
  %v3215 = vsub.f32 %v2639, %v2927
  %v3216 = vsub.f32 %v2640, %v2928
  %v3217 = vsub.f32 %v2641, %v2929
  %v3218 = vsub.f32 %v2642, %v2930
  %v3219 = vsub.f32 %v2643, %v2931
  %v3220 = vsub.f32 %v2644, %v2932
  %v3221 = vsub.f32 %v2645, %v2933
  %v3222 = vsub.f32 %v2646, %v2934
  %v3223 = vsub.f32 %v2647, %v2935
  %v3224 = vsub.f32 %v2648, %v2936
  %v3225 = vsub.f32 %v2649, %v2937
  %v3226 = vsub.f32 %v2650, %v2938
  %v3227 = vsub.f32 %v2651, %v2939
  %v3228 = vsub.f32 %v2652, %v2940
  %v3229 = vsub.f32 %v2653, %v2941
  %v3230 = vsub.f32 %v2654, %v2942
  %v3231 = vsub.f32 %v2655, %v2943
  %v3232 = vsub.f32 %v2656, %v2944
  %v3233 = vsub.f32 %v2657, %v2945
  %v3234 = vsub.f32 %v2658, %v2946
  %v3235 = vsub.f32 %v2659, %v2947
  %v3236 = vsub.f32 %v2660, %v2948
  %v3237 = vsub.f32 %v2661, %v2949
  %v3238 = vsub.f32 %v2662, %v2950
  %v3239 = vsub.f32 %v2663, %v2951
  %v3240 = vsub.f32 %v2664, %v2952
  %v3241 = vsub.f32 %v2665, %v2953
  %v3242 = vsub.f32 %v2666, %v2954
  %v3243 = vsub.f32 %v2667, %v2955
  %v3244 = vsub.f32 %v2668, %v2956
  %v3245 = vsub.f32 %v2669, %v2957
  %v3246 = vsub.f32 %v2670, %v2958
  %v3247 = vsub.f32 %v2671, %v2959
  %v3248 = vsub.f32 %v2672, %v2960
  %v3249 = vsub.f32 %v2673, %v2961
  %v3250 = vsub.f32 %v2674, %v2962
  %v3251 = vsub.f32 %v2675, %v2963
  %v3252 = vsub.f32 %v2676, %v2964
  %v3253 = vsub.f32 %v2677, %v2965
  %v3254 = vsub.f32 %v2678, %v2966
  %v3255 = vsub.f32 %v2679, %v2967
  %v3256 = vsub.f32 %v2680, %v2968
  %v3257 = vsub.f32 %v2681, %v2969
  %v3258 = vsub.f32 %v2682, %v2970
  %v3259 = vsub.f32 %v2683, %v2971
  %v3260 = vsub.f32 %v2684, %v2972
  %v3261 = vsub.f32 %v2685, %v2973
  %v3262 = vsub.f32 %v2686, %v2974
  %v3263 = vsub.f32 %v2687, %v2975
  %v3264 = vsub.f32 %v2688, %v2976
  %v3265 = vsub.f32 %v2689, %v2977
  %v3266 = vsub.f32 %v2690, %v2978
  %v3267 = vsub.f32 %v2691, %v2979
  %v3268 = vsub.f32 %v2692, %v2980
  %v3269 = vsub.f32 %v2693, %v2981
  %v3270 = vsub.f32 %v2694, %v2982
  %v3271 = vsub.f32 %v2695, %v2983
  %v3272 = vsub.f32 %v2696, %v2984
  %v3273 = vsub.f32 %v2697, %v2985
  %v3274 = vsub.f32 %v2698, %v2986
  %v3275 = vsub.f32 %v2699, %v2987
  %v3276 = vsub.f32 %v2700, %v2988
  %v3277 = vsub.f32 %v2701, %v2989
  %v3278 = vsub.f32 %v2702, %v2990
  %v3279 = vsub.f32 %v2703, %v2991
  %v3280 = vsub.f32 %v2704, %v2992
  %v3281 = vsub.f32 %v2705, %v2993
  %v3282 = vsub.f32 %v2706, %v2994
  %v3283 = vsub.f32 %v2707, %v2995
  %v3284 = vsub.f32 %v2708, %v2996
  %v3285 = vsub.f32 %v2709, %v2997
  %v3286 = vsub.f32 %v2710, %v2998
  %v3287 = vsub.f32 %v2711, %v2999
  %v3288 = vsub.f32 %v2712, %v3000
  %v3289 = vsub.f32 %v2713, %v3001
  %v3290 = vsub.f32 %v2714, %v3002
  %v3291 = vsub.f32 %v2715, %v3003
  %v3292 = vsub.f32 %v2716, %v3004
  %v3293 = vsub.f32 %v2717, %v3005
  %v3294 = vsub.f32 %v2718, %v3006
  %v3295 = vsub.f32 %v2719, %v3007
  %v3296 = vsub.f32 %v2720, %v3008
  %v3297 = vsub.f32 %v2721, %v3009
  %v3298 = vsub.f32 %v2722, %v3010
  %v3299 = vsub.f32 %v2723, %v3011
  %v3300 = vsub.f32 %v2724, %v3012
  %v3301 = vsub.f32 %v2725, %v3013
  %v3302 = vsub.f32 %v2726, %v3014
  %v3303 = vsub.f32 %v2727, %v3015
  %v3304 = vsub.f32 %v2728, %v3016
  %v3305 = vsub.f32 %v2729, %v3017
  %v3306 = vsub.f32 %v2730, %v3018
  %v3307 = vsub.f32 %v2731, %v3019
  %v3308 = vsub.f32 %v2732, %v3020
  %v3309 = vsub.f32 %v2733, %v3021
  %v3310 = vsub.f32 %v2734, %v3022
  %v3311 = vsub.f32 %v2735, %v3023
  %v3312 = vsub.f32 %v2736, %v3024
  %v3313 = vsub.f32 %v2737, %v3025
  %v3314 = vsub.f32 %v2738, %v3026
  %v3315 = vsub.f32 %v2739, %v3027
  %v3316 = vsub.f32 %v2740, %v3028
  %v3317 = vsub.f32 %v2741, %v3029
  %v3318 = vsub.f32 %v2742, %v3030
  %v3319 = vsub.f32 %v2743, %v3031
  %v3320 = vsub.f32 %v2744, %v3032
  %v3321 = vsub.f32 %v2745, %v3033
  %v3322 = vsub.f32 %v2746, %v3034
  %v3323 = vsub.f32 %v2747, %v3035
  %v3324 = vsub.f32 %v2748, %v3036
  %v3325 = vsub.f32 %v2749, %v3037
  %v3326 = vsub.f32 %v2750, %v3038
  %v3327 = vsub.f32 %v2751, %v3039
  %v3328 = vsub.f32 %v2752, %v3040
  %v3329 = vsub.f32 %v2753, %v3041
  %v3330 = vsub.f32 %v2754, %v3042
  %v3331 = vsub.f32 %v2755, %v3043
  %v3332 = vsub.f32 %v2756, %v3044
  %v3333 = vsub.f32 %v2757, %v3045
  %v3334 = vsub.f32 %v2758, %v3046
  %v3335 = vsub.f32 %v2759, %v3047
  %v3336 = vsub.f32 %v2760, %v3048
  %v3337 = vsub.f32 %v2761, %v3049
  %v3338 = vsub.f32 %v2762, %v3050
  %v3339 = vsub.f32 %v2763, %v3051
  %v3340 = vsub.f32 %v2764, %v3052
  %v3341 = vsub.f32 %v2765, %v3053
  %v3342 = vsub.f32 %v2766, %v3054
  %v3343 = vsub.f32 %v2767, %v3055
  %v3344 = vsub.f32 %v2768, %v3056
  %v3345 = vsub.f32 %v2769, %v3057
  %v3346 = vsub.f32 %v2770, %v3058
  %v3347 = vsub.f32 %v2771, %v3059
  %v3348 = vsub.f32 %v2772, %v3060
  %v3349 = vsub.f32 %v2773, %v3061
  %v3350 = vsub.f32 %v2774, %v3062
  %v3351 = vsub.f32 %v2775, %v3063
  %v3352 = vsub.f32 %v2776, %v3064
  %v3353 = vsub.f32 %v2777, %v3065
  %v3354 = vsub.f32 %v2778, %v3066
  %v3355 = vsub.f32 %v2779, %v3067
  %v3356 = vsub.f32 %v2780, %v3068
  %v3357 = vsub.f32 %v2781, %v3069
  %v3358 = vsub.f32 %v2782, %v3070
  %v3359 = vsub.f32 %v2783, %v3071
  %v3360 = vsub.f32 %v2784, %v3072
  %v3361 = vsub.f32 %v2785, %v3073
  %v3362 = vsub.f32 %v2786, %v3074
  %v3363 = vsub.f32 %v2787, %v3075
  %v3364 = vsub.f32 %v2788, %v3076
  %v3365 = vsub.f32 %v2789, %v3077
  %v3366 = vsub.f32 %v2790, %v3078
  %v3367 = vsub.f32 %v2791, %v3079
  %v3368 = vsub.f32 %v2792, %v3080
  %v3369 = vsub.f32 %v2793, %v3081
  %v3370 = vsub.f32 %v2794, %v3082
  %v3371 = vsub.f32 %v2795, %v3083
  %v3372 = vsub.f32 %v2796, %v3084
  %v3373 = vsub.f32 %v2797, %v3085
  %v3374 = vsub.f32 %v2798, %v3086
  %v3375 = vsub.f32 %v2799, %v3087
  %v3376 = vsub.f32 %v2800, %v3088
  %v3377 = vsub.f32 %v2801, %v3089
  %v3378 = vsub.f32 %v2802, %v3090
  %v3379 = vsub.f32 %v2803, %v3091
  %v3380 = vsub.f32 %v2804, %v3092
  %v3381 = vsub.f32 %v2805, %v3093
  %v3382 = vsub.f32 %v2806, %v3094
  %v3383 = vsub.f32 %v2807, %v3095
  %v3384 = vsub.f32 %v2808, %v3096
  %v3385 = vsub.f32 %v2809, %v3097
  %v3386 = vsub.f32 %v2810, %v3098
  %v3387 = vsub.f32 %v2811, %v3099
  %v3388 = vsub.f32 %v2812, %v3100
  %v3389 = vsub.f32 %v2813, %v3101
  %v3390 = vsub.f32 %v2814, %v3102
  %v3391 = vsub.f32 %v2815, %v3103
  %v3392 = vsub.f32 %v2816, %v3104
  %v3393 = vsub.f32 %v2817, %v3105
  %v3394 = vsub.f32 %v2818, %v3106
  %v3395 = vsub.f32 %v2819, %v3107
  %v3396 = vsub.f32 %v2820, %v3108
  %v3397 = vsub.f32 %v2821, %v3109
  %v3398 = vsub.f32 %v2822, %v3110
  %v3399 = vsub.f32 %v2823, %v3111
  %v3400 = vsub.f32 %v2824, %v3112
  %v3401 = vsub.f32 %v2825, %v3113
  %v3402 = vsub.f32 %v2826, %v3114
  %v3403 = vsub.f32 %v2827, %v3115
  %v3404 = vsub.f32 %v2828, %v3116
  %v3405 = vsub.f32 %v2829, %v3117
  %v3406 = vsub.f32 %v2830, %v3118
  %v3407 = vsub.f32 %v2831, %v3119
  %v3408 = vsub.f32 %v2832, %v3120
  %v3409 = vsub.f32 %v2833, %v3121
  %v3410 = vsub.f32 %v2834, %v3122
  %v3411 = vsub.f32 %v2835, %v3123
  %v3412 = vsub.f32 %v2836, %v3124
  %v3413 = vsub.f32 %v2837, %v3125
  %v3414 = vsub.f32 %v2838, %v3126
  %v3415 = vsub.f32 %v2839, %v3127
  %v3416 = vsub.f32 %v2840, %v3128
  %v3417 = vsub.f32 %v2841, %v3129
  %v3418 = vsub.f32 %v2842, %v3130
  %v3419 = vsub.f32 %v2843, %v3131
  %v3420 = vsub.f32 %v2844, %v3132
  %v3421 = vsub.f32 %v2845, %v3133
  %v3422 = vsub.f32 %v2846, %v3134
  %v3423 = vsub.f32 %v2847, %v3135
  %v3424 = vsub.f32 %v2848, %v3136
  %v3425 = vsub.f32 %v2849, %v3137
  %v3426 = vsub.f32 %v2850, %v3138
  %v3427 = vsub.f32 %v2851, %v3139
  %v3428 = vsub.f32 %v2852, %v3140
  %v3429 = vsub.f32 %v2853, %v3141
  %v3430 = vsub.f32 %v2854, %v3142
  %v3431 = vsub.f32 %v2855, %v3143
  %v3432 = vsub.f32 %v2856, %v3144
  %v3433 = vsub.f32 %v2857, %v3145
  %v3434 = vsub.f32 %v2858, %v3146
  %v3435 = vsub.f32 %v2859, %v3147
  %v3436 = vsub.f32 %v2860, %v3148
  %v3437 = vsub.f32 %v2861, %v3149
  %v3438 = vsub.f32 %v2862, %v3150
  %v3439 = vsub.f32 %v2863, %v3151
  %v3440 = vsub.f32 %v2864, %v3152
  %v3441 = vsub.f32 %v2865, %v3153
  %v3442 = vsub.f32 %v2866, %v3154
  %v3443 = vsub.f32 %v2867, %v3155
  %v3444 = vsub.f32 %v2868, %v3156
  %v3445 = vsub.f32 %v2869, %v3157
  %v3446 = vsub.f32 %v2870, %v3158
  %v3447 = vsub.f32 %v2871, %v3159
  %v3448 = vsub.f32 %v2872, %v3160
  %v3449 = vsub.f32 %v2873, %v3161
  %v3450 = vsub.f32 %v2874, %v3162
  %v3451 = vsub.f32 %v2875, %v3163
  %v3452 = vsub.f32 %v2876, %v3164
  %v3453 = vsub.f32 %v2877, %v3165
  %v3454 = vsub.f32 %v2878, %v3166
  %v3455 = vsub.f32 %v2879, %v3167
  %v3456 = vsub.f32 %v2880, %v3168
  %v3457 = vsub.f32 %v2881, %v3169
  %v3458 = vsub.f32 %v2882, %v3170
  %v3459 = vsub.f32 %v2883, %v3171
  %v3460 = vsub.f32 %v2884, %v3172
  %v3461 = vsub.f32 %v2885, %v3173
  %v3462 = vsub.f32 %v2886, %v3174
  %v3463 = vsub.f32 %v2887, %v3175
  %v3464 = vsub.f32 %v2888, %v3176
  %v3465 = vsub.f32 %v2889, %v3177
  %v3466 = vsub.f32 %v2890, %v3178
  %v3467 = vsub.f32 %v2891, %v3179
  %v3468 = vsub.f32 %v2892, %v3180
  %v3469 = vsub.f32 %v2893, %v3181
  %v3470 = vsub.f32 %v2894, %v3182
  %v3471 = vadd.f32 %v3183, 0.001
  %v3472 = vadd.f32 %v3184, 0.001
  %v3473 = vadd.f32 %v3185, 0.001
  %v3474 = vadd.f32 %v3186, 0.001
  %v3475 = vadd.f32 %v3187, 0.001
  %v3476 = vadd.f32 %v3188, 0.001
  %v3477 = vadd.f32 %v3189, 0.001
  %v3478 = vadd.f32 %v3190, 0.001
  %v3479 = vadd.f32 %v3191, 0.001
  %v3480 = vadd.f32 %v3192, 0.001
  %v3481 = vadd.f32 %v3193, 0.001
  %v3482 = vadd.f32 %v3194, 0.001
  %v3483 = vadd.f32 %v3195, 0.001
  %v3484 = vadd.f32 %v3196, 0.001
  %v3485 = vadd.f32 %v3197, 0.001
  %v3486 = vadd.f32 %v3198, 0.001
  %v3487 = vadd.f32 %v3199, 0.001
  %v3488 = vadd.f32 %v3200, 0.001
  %v3489 = vadd.f32 %v3201, 0.001
  %v3490 = vadd.f32 %v3202, 0.001
  %v3491 = vadd.f32 %v3203, 0.001
  %v3492 = vadd.f32 %v3204, 0.001
  %v3493 = vadd.f32 %v3205, 0.001
  %v3494 = vadd.f32 %v3206, 0.001
  %v3495 = vadd.f32 %v3207, 0.001
  %v3496 = vadd.f32 %v3208, 0.001
  %v3497 = vadd.f32 %v3209, 0.001
  %v3498 = vadd.f32 %v3210, 0.001
  %v3499 = vadd.f32 %v3211, 0.001
  %v3500 = vadd.f32 %v3212, 0.001
  %v3501 = vadd.f32 %v3213, 0.001
  %v3502 = vadd.f32 %v3214, 0.001
  %v3503 = vadd.f32 %v3215, 0.001
  %v3504 = vadd.f32 %v3216, 0.001
  %v3505 = vadd.f32 %v3217, 0.001
  %v3506 = vadd.f32 %v3218, 0.001
  %v3507 = vadd.f32 %v3219, 0.001
  %v3508 = vadd.f32 %v3220, 0.001
  %v3509 = vadd.f32 %v3221, 0.001
  %v3510 = vadd.f32 %v3222, 0.001
  %v3511 = vadd.f32 %v3223, 0.001
  %v3512 = vadd.f32 %v3224, 0.001
  %v3513 = vadd.f32 %v3225, 0.001
  %v3514 = vadd.f32 %v3226, 0.001
  %v3515 = vadd.f32 %v3227, 0.001
  %v3516 = vadd.f32 %v3228, 0.001
  %v3517 = vadd.f32 %v3229, 0.001
  %v3518 = vadd.f32 %v3230, 0.001
  %v3519 = vadd.f32 %v3231, 0.001
  %v3520 = vadd.f32 %v3232, 0.001
  %v3521 = vadd.f32 %v3233, 0.001
  %v3522 = vadd.f32 %v3234, 0.001
  %v3523 = vadd.f32 %v3235, 0.001
  %v3524 = vadd.f32 %v3236, 0.001
  %v3525 = vadd.f32 %v3237, 0.001
  %v3526 = vadd.f32 %v3238, 0.001
  %v3527 = vadd.f32 %v3239, 0.001
  %v3528 = vadd.f32 %v3240, 0.001
  %v3529 = vadd.f32 %v3241, 0.001
  %v3530 = vadd.f32 %v3242, 0.001
  %v3531 = vadd.f32 %v3243, 0.001
  %v3532 = vadd.f32 %v3244, 0.001
  %v3533 = vadd.f32 %v3245, 0.001
  %v3534 = vadd.f32 %v3246, 0.001
  %v3535 = vadd.f32 %v3247, 0.001
  %v3536 = vadd.f32 %v3248, 0.001
  %v3537 = vadd.f32 %v3249, 0.001
  %v3538 = vadd.f32 %v3250, 0.001
  %v3539 = vadd.f32 %v3251, 0.001
  %v3540 = vadd.f32 %v3252, 0.001
  %v3541 = vadd.f32 %v3253, 0.001
  %v3542 = vadd.f32 %v3254, 0.001
  %v3543 = vadd.f32 %v3255, 0.001
  %v3544 = vadd.f32 %v3256, 0.001
  %v3545 = vadd.f32 %v3257, 0.001
  %v3546 = vadd.f32 %v3258, 0.001
  %v3547 = vadd.f32 %v3259, 0.001
  %v3548 = vadd.f32 %v3260, 0.001
  %v3549 = vadd.f32 %v3261, 0.001
  %v3550 = vadd.f32 %v3262, 0.001
  %v3551 = vadd.f32 %v3263, 0.001
  %v3552 = vadd.f32 %v3264, 0.001
  %v3553 = vadd.f32 %v3265, 0.001
  %v3554 = vadd.f32 %v3266, 0.001
  %v3555 = vadd.f32 %v3267, 0.001
  %v3556 = vadd.f32 %v3268, 0.001
  %v3557 = vadd.f32 %v3269, 0.001
  %v3558 = vadd.f32 %v3270, 0.001
  %v3559 = vadd.f32 %v3271, 0.001
  %v3560 = vadd.f32 %v3272, 0.001
  %v3561 = vadd.f32 %v3273, 0.001
  %v3562 = vadd.f32 %v3274, 0.001
  %v3563 = vadd.f32 %v3275, 0.001
  %v3564 = vadd.f32 %v3276, 0.001
  %v3565 = vadd.f32 %v3277, 0.001
  %v3566 = vadd.f32 %v3278, 0.001
  %v3567 = vadd.f32 %v3279, 0.001
  %v3568 = vadd.f32 %v3280, 0.001
  %v3569 = vadd.f32 %v3281, 0.001
  %v3570 = vadd.f32 %v3282, 0.001
  %v3571 = vadd.f32 %v3283, 0.001
  %v3572 = vadd.f32 %v3284, 0.001
  %v3573 = vadd.f32 %v3285, 0.001
  %v3574 = vadd.f32 %v3286, 0.001
  %v3575 = vadd.f32 %v3287, 0.001
  %v3576 = vadd.f32 %v3288, 0.001
  %v3577 = vadd.f32 %v3289, 0.001
  %v3578 = vadd.f32 %v3290, 0.001
  %v3579 = vadd.f32 %v3291, 0.001
  %v3580 = vadd.f32 %v3292, 0.001
  %v3581 = vadd.f32 %v3293, 0.001
  %v3582 = vadd.f32 %v3294, 0.001
  %v3583 = vadd.f32 %v3295, 0.001
  %v3584 = vadd.f32 %v3296, 0.001
  %v3585 = vadd.f32 %v3297, 0.001
  %v3586 = vadd.f32 %v3298, 0.001
  %v3587 = vadd.f32 %v3299, 0.001
  %v3588 = vadd.f32 %v3300, 0.001
  %v3589 = vadd.f32 %v3301, 0.001
  %v3590 = vadd.f32 %v3302, 0.001
  %v3591 = vadd.f32 %v3303, 0.001
  %v3592 = vadd.f32 %v3304, 0.001
  %v3593 = vadd.f32 %v3305, 0.001
  %v3594 = vadd.f32 %v3306, 0.001
  %v3595 = vadd.f32 %v3307, 0.001
  %v3596 = vadd.f32 %v3308, 0.001
  %v3597 = vadd.f32 %v3309, 0.001
  %v3598 = vadd.f32 %v3310, 0.001
  %v3599 = vadd.f32 %v3311, 0.001
  %v3600 = vadd.f32 %v3312, 0.001
  %v3601 = vadd.f32 %v3313, 0.001
  %v3602 = vadd.f32 %v3314, 0.001
  %v3603 = vadd.f32 %v3315, 0.001
  %v3604 = vadd.f32 %v3316, 0.001
  %v3605 = vadd.f32 %v3317, 0.001
  %v3606 = vadd.f32 %v3318, 0.001
  %v3607 = vadd.f32 %v3319, 0.001
  %v3608 = vadd.f32 %v3320, 0.001
  %v3609 = vadd.f32 %v3321, 0.001
  %v3610 = vadd.f32 %v3322, 0.001
  %v3611 = vadd.f32 %v3323, 0.001
  %v3612 = vadd.f32 %v3324, 0.001
  %v3613 = vadd.f32 %v3325, 0.001
  %v3614 = vadd.f32 %v3326, 0.001
  %v3615 = vadd.f32 %v3327, 0.001
  %v3616 = vadd.f32 %v3328, 0.001
  %v3617 = vadd.f32 %v3329, 0.001
  %v3618 = vadd.f32 %v3330, 0.001
  %v3619 = vadd.f32 %v3331, 0.001
  %v3620 = vadd.f32 %v3332, 0.001
  %v3621 = vadd.f32 %v3333, 0.001
  %v3622 = vadd.f32 %v3334, 0.001
  %v3623 = vadd.f32 %v3335, 0.001
  %v3624 = vadd.f32 %v3336, 0.001
  %v3625 = vadd.f32 %v3337, 0.001
  %v3626 = vadd.f32 %v3338, 0.001
  %v3627 = vadd.f32 %v3339, 0.001
  %v3628 = vadd.f32 %v3340, 0.001
  %v3629 = vadd.f32 %v3341, 0.001
  %v3630 = vadd.f32 %v3342, 0.001
  %v3631 = vadd.f32 %v3343, 0.001
  %v3632 = vadd.f32 %v3344, 0.001
  %v3633 = vadd.f32 %v3345, 0.001
  %v3634 = vadd.f32 %v3346, 0.001
  %v3635 = vadd.f32 %v3347, 0.001
  %v3636 = vadd.f32 %v3348, 0.001
  %v3637 = vadd.f32 %v3349, 0.001
  %v3638 = vadd.f32 %v3350, 0.001
  %v3639 = vadd.f32 %v3351, 0.001
  %v3640 = vadd.f32 %v3352, 0.001
  %v3641 = vadd.f32 %v3353, 0.001
  %v3642 = vadd.f32 %v3354, 0.001
  %v3643 = vadd.f32 %v3355, 0.001
  %v3644 = vadd.f32 %v3356, 0.001
  %v3645 = vadd.f32 %v3357, 0.001
  %v3646 = vadd.f32 %v3358, 0.001
  %v3647 = vadd.f32 %v3359, 0.001
  %v3648 = vadd.f32 %v3360, 0.001
  %v3649 = vadd.f32 %v3361, 0.001
  %v3650 = vadd.f32 %v3362, 0.001
  %v3651 = vadd.f32 %v3363, 0.001
  %v3652 = vadd.f32 %v3364, 0.001
  %v3653 = vadd.f32 %v3365, 0.001
  %v3654 = vadd.f32 %v3366, 0.001
  %v3655 = vadd.f32 %v3367, 0.001
  %v3656 = vadd.f32 %v3368, 0.001
  %v3657 = vadd.f32 %v3369, 0.001
  %v3658 = vadd.f32 %v3370, 0.001
  %v3659 = vadd.f32 %v3371, 0.001
  %v3660 = vadd.f32 %v3372, 0.001
  %v3661 = vadd.f32 %v3373, 0.001
  %v3662 = vadd.f32 %v3374, 0.001
  %v3663 = vadd.f32 %v3375, 0.001
  %v3664 = vadd.f32 %v3376, 0.001
  %v3665 = vadd.f32 %v3377, 0.001
  %v3666 = vadd.f32 %v3378, 0.001
  %v3667 = vadd.f32 %v3379, 0.001
  %v3668 = vadd.f32 %v3380, 0.001
  %v3669 = vadd.f32 %v3381, 0.001
  %v3670 = vadd.f32 %v3382, 0.001
  %v3671 = vadd.f32 %v3383, 0.001
  %v3672 = vadd.f32 %v3384, 0.001
  %v3673 = vadd.f32 %v3385, 0.001
  %v3674 = vadd.f32 %v3386, 0.001
  %v3675 = vadd.f32 %v3387, 0.001
  %v3676 = vadd.f32 %v3388, 0.001
  %v3677 = vadd.f32 %v3389, 0.001
  %v3678 = vadd.f32 %v3390, 0.001
  %v3679 = vadd.f32 %v3391, 0.001
  %v3680 = vadd.f32 %v3392, 0.001
  %v3681 = vadd.f32 %v3393, 0.001
  %v3682 = vadd.f32 %v3394, 0.001
  %v3683 = vadd.f32 %v3395, 0.001
  %v3684 = vadd.f32 %v3396, 0.001
  %v3685 = vadd.f32 %v3397, 0.001
  %v3686 = vadd.f32 %v3398, 0.001
  %v3687 = vadd.f32 %v3399, 0.001
  %v3688 = vadd.f32 %v3400, 0.001
  %v3689 = vadd.f32 %v3401, 0.001
  %v3690 = vadd.f32 %v3402, 0.001
  %v3691 = vadd.f32 %v3403, 0.001
  %v3692 = vadd.f32 %v3404, 0.001
  %v3693 = vadd.f32 %v3405, 0.001
  %v3694 = vadd.f32 %v3406, 0.001
  %v3695 = vadd.f32 %v3407, 0.001
  %v3696 = vadd.f32 %v3408, 0.001
  %v3697 = vadd.f32 %v3409, 0.001
  %v3698 = vadd.f32 %v3410, 0.001
  %v3699 = vadd.f32 %v3411, 0.001
  %v3700 = vadd.f32 %v3412, 0.001
  %v3701 = vadd.f32 %v3413, 0.001
  %v3702 = vadd.f32 %v3414, 0.001
  %v3703 = vadd.f32 %v3415, 0.001
  %v3704 = vadd.f32 %v3416, 0.001
  %v3705 = vadd.f32 %v3417, 0.001
  %v3706 = vadd.f32 %v3418, 0.001
  %v3707 = vadd.f32 %v3419, 0.001
  %v3708 = vadd.f32 %v3420, 0.001
  %v3709 = vadd.f32 %v3421, 0.001
  %v3710 = vadd.f32 %v3422, 0.001
  %v3711 = vadd.f32 %v3423, 0.001
  %v3712 = vadd.f32 %v3424, 0.001
  %v3713 = vadd.f32 %v3425, 0.001
  %v3714 = vadd.f32 %v3426, 0.001
  %v3715 = vadd.f32 %v3427, 0.001
  %v3716 = vadd.f32 %v3428, 0.001
  %v3717 = vadd.f32 %v3429, 0.001
  %v3718 = vadd.f32 %v3430, 0.001
  %v3719 = vadd.f32 %v3431, 0.001
  %v3720 = vadd.f32 %v3432, 0.001
  %v3721 = vadd.f32 %v3433, 0.001
  %v3722 = vadd.f32 %v3434, 0.001
  %v3723 = vadd.f32 %v3435, 0.001
  %v3724 = vadd.f32 %v3436, 0.001
  %v3725 = vadd.f32 %v3437, 0.001
  %v3726 = vadd.f32 %v3438, 0.001
  %v3727 = vadd.f32 %v3439, 0.001
  %v3728 = vadd.f32 %v3440, 0.001
  %v3729 = vadd.f32 %v3441, 0.001
  %v3730 = vadd.f32 %v3442, 0.001
  %v3731 = vadd.f32 %v3443, 0.001
  %v3732 = vadd.f32 %v3444, 0.001
  %v3733 = vadd.f32 %v3445, 0.001
  %v3734 = vadd.f32 %v3446, 0.001
  %v3735 = vadd.f32 %v3447, 0.001
  %v3736 = vadd.f32 %v3448, 0.001
  %v3737 = vadd.f32 %v3449, 0.001
  %v3738 = vadd.f32 %v3450, 0.001
  %v3739 = vadd.f32 %v3451, 0.001
  %v3740 = vadd.f32 %v3452, 0.001
  %v3741 = vadd.f32 %v3453, 0.001
  %v3742 = vadd.f32 %v3454, 0.001
  %v3743 = vadd.f32 %v3455, 0.001
  %v3744 = vadd.f32 %v3456, 0.001
  %v3745 = vadd.f32 %v3457, 0.001
  %v3746 = vadd.f32 %v3458, 0.001
  %v3747 = vadd.f32 %v3459, 0.001
  %v3748 = vadd.f32 %v3460, 0.001
  %v3749 = vadd.f32 %v3461, 0.001
  %v3750 = vadd.f32 %v3462, 0.001
  %v3751 = vadd.f32 %v3463, 0.001
  %v3752 = vadd.f32 %v3464, 0.001
  %v3753 = vadd.f32 %v3465, 0.001
  %v3754 = vadd.f32 %v3466, 0.001
  %v3755 = vadd.f32 %v3467, 0.001
  %v3756 = vadd.f32 %v3468, 0.001
  %v3757 = vadd.f32 %v3469, 0.001
  %v3758 = vadd.f32 %v3470, 0.001
  %v3759 = vrsqrt.pop %v3471
  %v3760 = vrsqrt.pop %v3472
  %v3761 = vrsqrt.pop %v3473
  %v3762 = vrsqrt.pop %v3474
  %v3763 = vrsqrt.pop %v3475
  %v3764 = vrsqrt.pop %v3476
  %v3765 = vrsqrt.pop %v3477
  %v3766 = vrsqrt.pop %v3478
  %v3767 = vrsqrt.pop %v3479
  %v3768 = vrsqrt.pop %v3480
  %v3769 = vrsqrt.pop %v3481
  %v3770 = vrsqrt.pop %v3482
  %v3771 = vrsqrt.pop %v3483
  %v3772 = vrsqrt.pop %v3484
  %v3773 = vrsqrt.pop %v3485
  %v3774 = vrsqrt.pop %v3486
  %v3775 = vrsqrt.pop %v3487
  %v3776 = vrsqrt.pop %v3488
  %v3777 = vrsqrt.pop %v3489
  %v3778 = vrsqrt.pop %v3490
  %v3779 = vrsqrt.pop %v3491
  %v3780 = vrsqrt.pop %v3492
  %v3781 = vrsqrt.pop %v3493
  %v3782 = vrsqrt.pop %v3494
  %v3783 = vrsqrt.pop %v3495
  %v3784 = vrsqrt.pop %v3496
  %v3785 = vrsqrt.pop %v3497
  %v3786 = vrsqrt.pop %v3498
  %v3787 = vrsqrt.pop %v3499
  %v3788 = vrsqrt.pop %v3500
  %v3789 = vrsqrt.pop %v3501
  %v3790 = vrsqrt.pop %v3502
  %v3791 = vrsqrt.pop %v3503
  %v3792 = vrsqrt.pop %v3504
  %v3793 = vrsqrt.pop %v3505
  %v3794 = vrsqrt.pop %v3506
  %v3795 = vrsqrt.pop %v3507
  %v3796 = vrsqrt.pop %v3508
  %v3797 = vrsqrt.pop %v3509
  %v3798 = vrsqrt.pop %v3510
  %v3799 = vrsqrt.pop %v3511
  %v3800 = vrsqrt.pop %v3512
  %v3801 = vrsqrt.pop %v3513
  %v3802 = vrsqrt.pop %v3514
  %v3803 = vrsqrt.pop %v3515
  %v3804 = vrsqrt.pop %v3516
  %v3805 = vrsqrt.pop %v3517
  %v3806 = vrsqrt.pop %v3518
  %v3807 = vrsqrt.pop %v3519
  %v3808 = vrsqrt.pop %v3520
  %v3809 = vrsqrt.pop %v3521
  %v3810 = vrsqrt.pop %v3522
  %v3811 = vrsqrt.pop %v3523
  %v3812 = vrsqrt.pop %v3524
  %v3813 = vrsqrt.pop %v3525
  %v3814 = vrsqrt.pop %v3526
  %v3815 = vrsqrt.pop %v3527
  %v3816 = vrsqrt.pop %v3528
  %v3817 = vrsqrt.pop %v3529
  %v3818 = vrsqrt.pop %v3530
  %v3819 = vrsqrt.pop %v3531
  %v3820 = vrsqrt.pop %v3532
  %v3821 = vrsqrt.pop %v3533
  %v3822 = vrsqrt.pop %v3534
  %v3823 = vrsqrt.pop %v3535
  %v3824 = vrsqrt.pop %v3536
  %v3825 = vrsqrt.pop %v3537
  %v3826 = vrsqrt.pop %v3538
  %v3827 = vrsqrt.pop %v3539
  %v3828 = vrsqrt.pop %v3540
  %v3829 = vrsqrt.pop %v3541
  %v3830 = vrsqrt.pop %v3542
  %v3831 = vrsqrt.pop %v3543
  %v3832 = vrsqrt.pop %v3544
  %v3833 = vrsqrt.pop %v3545
  %v3834 = vrsqrt.pop %v3546
  %v3835 = vrsqrt.pop %v3547
  %v3836 = vrsqrt.pop %v3548
  %v3837 = vrsqrt.pop %v3549
  %v3838 = vrsqrt.pop %v3550
  %v3839 = vrsqrt.pop %v3551
  %v3840 = vrsqrt.pop %v3552
  %v3841 = vrsqrt.pop %v3553
  %v3842 = vrsqrt.pop %v3554
  %v3843 = vrsqrt.pop %v3555
  %v3844 = vrsqrt.pop %v3556
  %v3845 = vrsqrt.pop %v3557
  %v3846 = vrsqrt.pop %v3558
  %v3847 = vrsqrt.pop %v3559
  %v3848 = vrsqrt.pop %v3560
  %v3849 = vrsqrt.pop %v3561
  %v3850 = vrsqrt.pop %v3562
  %v3851 = vrsqrt.pop %v3563
  %v3852 = vrsqrt.pop %v3564
  %v3853 = vrsqrt.pop %v3565
  %v3854 = vrsqrt.pop %v3566
  %v3855 = vrsqrt.pop %v3567
  %v3856 = vrsqrt.pop %v3568
  %v3857 = vrsqrt.pop %v3569
  %v3858 = vrsqrt.pop %v3570
  %v3859 = vrsqrt.pop %v3571
  %v3860 = vrsqrt.pop %v3572
  %v3861 = vrsqrt.pop %v3573
  %v3862 = vrsqrt.pop %v3574
  %v3863 = vrsqrt.pop %v3575
  %v3864 = vrsqrt.pop %v3576
  %v3865 = vrsqrt.pop %v3577
  %v3866 = vrsqrt.pop %v3578
  %v3867 = vrsqrt.pop %v3579
  %v3868 = vrsqrt.pop %v3580
  %v3869 = vrsqrt.pop %v3581
  %v3870 = vrsqrt.pop %v3582
  %v3871 = vrsqrt.pop %v3583
  %v3872 = vrsqrt.pop %v3584
  %v3873 = vrsqrt.pop %v3585
  %v3874 = vrsqrt.pop %v3586
  %v3875 = vrsqrt.pop %v3587
  %v3876 = vrsqrt.pop %v3588
  %v3877 = vrsqrt.pop %v3589
  %v3878 = vrsqrt.pop %v3590
  %v3879 = vrsqrt.pop %v3591
  %v3880 = vrsqrt.pop %v3592
  %v3881 = vrsqrt.pop %v3593
  %v3882 = vrsqrt.pop %v3594
  %v3883 = vrsqrt.pop %v3595
  %v3884 = vrsqrt.pop %v3596
  %v3885 = vrsqrt.pop %v3597
  %v3886 = vrsqrt.pop %v3598
  %v3887 = vrsqrt.pop %v3599
  %v3888 = vrsqrt.pop %v3600
  %v3889 = vrsqrt.pop %v3601
  %v3890 = vrsqrt.pop %v3602
  %v3891 = vrsqrt.pop %v3603
  %v3892 = vrsqrt.pop %v3604
  %v3893 = vrsqrt.pop %v3605
  %v3894 = vrsqrt.pop %v3606
  %v3895 = vrsqrt.pop %v3607
  %v3896 = vrsqrt.pop %v3608
  %v3897 = vrsqrt.pop %v3609
  %v3898 = vrsqrt.pop %v3610
  %v3899 = vrsqrt.pop %v3611
  %v3900 = vrsqrt.pop %v3612
  %v3901 = vrsqrt.pop %v3613
  %v3902 = vrsqrt.pop %v3614
  %v3903 = vrsqrt.pop %v3615
  %v3904 = vrsqrt.pop %v3616
  %v3905 = vrsqrt.pop %v3617
  %v3906 = vrsqrt.pop %v3618
  %v3907 = vrsqrt.pop %v3619
  %v3908 = vrsqrt.pop %v3620
  %v3909 = vrsqrt.pop %v3621
  %v3910 = vrsqrt.pop %v3622
  %v3911 = vrsqrt.pop %v3623
  %v3912 = vrsqrt.pop %v3624
  %v3913 = vrsqrt.pop %v3625
  %v3914 = vrsqrt.pop %v3626
  %v3915 = vrsqrt.pop %v3627
  %v3916 = vrsqrt.pop %v3628
  %v3917 = vrsqrt.pop %v3629
  %v3918 = vrsqrt.pop %v3630
  %v3919 = vrsqrt.pop %v3631
  %v3920 = vrsqrt.pop %v3632
  %v3921 = vrsqrt.pop %v3633
  %v3922 = vrsqrt.pop %v3634
  %v3923 = vrsqrt.pop %v3635
  %v3924 = vrsqrt.pop %v3636
  %v3925 = vrsqrt.pop %v3637
  %v3926 = vrsqrt.pop %v3638
  %v3927 = vrsqrt.pop %v3639
  %v3928 = vrsqrt.pop %v3640
  %v3929 = vrsqrt.pop %v3641
  %v3930 = vrsqrt.pop %v3642
  %v3931 = vrsqrt.pop %v3643
  %v3932 = vrsqrt.pop %v3644
  %v3933 = vrsqrt.pop %v3645
  %v3934 = vrsqrt.pop %v3646
  %v3935 = vrsqrt.pop %v3647
  %v3936 = vrsqrt.pop %v3648
  %v3937 = vrsqrt.pop %v3649
  %v3938 = vrsqrt.pop %v3650
  %v3939 = vrsqrt.pop %v3651
  %v3940 = vrsqrt.pop %v3652
  %v3941 = vrsqrt.pop %v3653
  %v3942 = vrsqrt.pop %v3654
  %v3943 = vrsqrt.pop %v3655
  %v3944 = vrsqrt.pop %v3656
  %v3945 = vrsqrt.pop %v3657
  %v3946 = vrsqrt.pop %v3658
  %v3947 = vrsqrt.pop %v3659
  %v3948 = vrsqrt.pop %v3660
  %v3949 = vrsqrt.pop %v3661
  %v3950 = vrsqrt.pop %v3662
  %v3951 = vrsqrt.pop %v3663
  %v3952 = vrsqrt.pop %v3664
  %v3953 = vrsqrt.pop %v3665
  %v3954 = vrsqrt.pop %v3666
  %v3955 = vrsqrt.pop %v3667
  %v3956 = vrsqrt.pop %v3668
  %v3957 = vrsqrt.pop %v3669
  %v3958 = vrsqrt.pop %v3670
  %v3959 = vrsqrt.pop %v3671
  %v3960 = vrsqrt.pop %v3672
  %v3961 = vrsqrt.pop %v3673
  %v3962 = vrsqrt.pop %v3674
  %v3963 = vrsqrt.pop %v3675
  %v3964 = vrsqrt.pop %v3676
  %v3965 = vrsqrt.pop %v3677
  %v3966 = vrsqrt.pop %v3678
  %v3967 = vrsqrt.pop %v3679
  %v3968 = vrsqrt.pop %v3680
  %v3969 = vrsqrt.pop %v3681
  %v3970 = vrsqrt.pop %v3682
  %v3971 = vrsqrt.pop %v3683
  %v3972 = vrsqrt.pop %v3684
  %v3973 = vrsqrt.pop %v3685
  %v3974 = vrsqrt.pop %v3686
  %v3975 = vrsqrt.pop %v3687
  %v3976 = vrsqrt.pop %v3688
  %v3977 = vrsqrt.pop %v3689
  %v3978 = vrsqrt.pop %v3690
  %v3979 = vrsqrt.pop %v3691
  %v3980 = vrsqrt.pop %v3692
  %v3981 = vrsqrt.pop %v3693
  %v3982 = vrsqrt.pop %v3694
  %v3983 = vrsqrt.pop %v3695
  %v3984 = vrsqrt.pop %v3696
  %v3985 = vrsqrt.pop %v3697
  %v3986 = vrsqrt.pop %v3698
  %v3987 = vrsqrt.pop %v3699
  %v3988 = vrsqrt.pop %v3700
  %v3989 = vrsqrt.pop %v3701
  %v3990 = vrsqrt.pop %v3702
  %v3991 = vrsqrt.pop %v3703
  %v3992 = vrsqrt.pop %v3704
  %v3993 = vrsqrt.pop %v3705
  %v3994 = vrsqrt.pop %v3706
  %v3995 = vrsqrt.pop %v3707
  %v3996 = vrsqrt.pop %v3708
  %v3997 = vrsqrt.pop %v3709
  %v3998 = vrsqrt.pop %v3710
  %v3999 = vrsqrt.pop %v3711
  %v4000 = vrsqrt.pop %v3712
  %v4001 = vrsqrt.pop %v3713
  %v4002 = vrsqrt.pop %v3714
  %v4003 = vrsqrt.pop %v3715
  %v4004 = vrsqrt.pop %v3716
  %v4005 = vrsqrt.pop %v3717
  %v4006 = vrsqrt.pop %v3718
  %v4007 = vrsqrt.pop %v3719
  %v4008 = vrsqrt.pop %v3720
  %v4009 = vrsqrt.pop %v3721
  %v4010 = vrsqrt.pop %v3722
  %v4011 = vrsqrt.pop %v3723
  %v4012 = vrsqrt.pop %v3724
  %v4013 = vrsqrt.pop %v3725
  %v4014 = vrsqrt.pop %v3726
  %v4015 = vrsqrt.pop %v3727
  %v4016 = vrsqrt.pop %v3728
  %v4017 = vrsqrt.pop %v3729
  %v4018 = vrsqrt.pop %v3730
  %v4019 = vrsqrt.pop %v3731
  %v4020 = vrsqrt.pop %v3732
  %v4021 = vrsqrt.pop %v3733
  %v4022 = vrsqrt.pop %v3734
  %v4023 = vrsqrt.pop %v3735
  %v4024 = vrsqrt.pop %v3736
  %v4025 = vrsqrt.pop %v3737
  %v4026 = vrsqrt.pop %v3738
  %v4027 = vrsqrt.pop %v3739
  %v4028 = vrsqrt.pop %v3740
  %v4029 = vrsqrt.pop %v3741
  %v4030 = vrsqrt.pop %v3742
  %v4031 = vrsqrt.pop %v3743
  %v4032 = vrsqrt.pop %v3744
  %v4033 = vrsqrt.pop %v3745
  %v4034 = vrsqrt.pop %v3746
  %v4035 = vrsqrt.pop %v3747
  %v4036 = vrsqrt.pop %v3748
  %v4037 = vrsqrt.pop %v3749
  %v4038 = vrsqrt.pop %v3750
  %v4039 = vrsqrt.pop %v3751
  %v4040 = vrsqrt.pop %v3752
  %v4041 = vrsqrt.pop %v3753
  %v4042 = vrsqrt.pop %v3754
  %v4043 = vrsqrt.pop %v3755
  %v4044 = vrsqrt.pop %v3756
  %v4045 = vrsqrt.pop %v3757
  %v4046 = vrsqrt.pop %v3758
  %v4047 = vld [vmem:[%s1] sm:$0xff]
  %v4048 = vld [vmem:[%s1 + $0x8] sm:$0xff]
  %v4049 = vld [vmem:[%s1 + $0x10] sm:$0xff]
  %v4050 = vld [vmem:[%s1 + $0x18] sm:$0xff]
  %v4051 = vld [vmem:[%s1 + $0x20] sm:$0xff]
  %v4052 = vld [vmem:[%s1 + $0x28] sm:$0xff]
  %v4053 = vld [vmem:[%s1 + $0x30] sm:$0xff]
  %v4054 = vld [vmem:[%s1 + $0x38] sm:$0xff]
  %v4055 = vld [vmem:[%s1 + $0x40] sm:$0xff]
  %v4056 = vld [vmem:[%s1 + $0x48] sm:$0xff]
  %v4057 = vld [vmem:[%s1 + $0x50] sm:$0xff]
  %v4058 = vld [vmem:[%s1 + $0x58] sm:$0xff]
  %v4059 = vld [vmem:[%s1 + $0x60] sm:$0xff]
  %v4060 = vld [vmem:[%s1 + $0x68] sm:$0xff]
  %v4061 = vld [vmem:[%s1 + $0x70] sm:$0xff]
  %v4062 = vld [vmem:[%s1 + $0x78] sm:$0xff]
  %v4063 = vld [vmem:[%s1 + $0x80] sm:$0xff]
  %v4064 = vld [vmem:[%s1 + $0x88] sm:$0xff]
  %v4065 = vld [vmem:[%s1 + $0x90] sm:$0xff]
  %v4066 = vld [vmem:[%s1 + $0x98] sm:$0xff]
  %v4067 = vld [vmem:[%s1 + $0xa0] sm:$0xff]
  %v4068 = vld [vmem:[%s1 + $0xa8] sm:$0xff]
  %v4069 = vld [vmem:[%s1 + $0xb0] sm:$0xff]
  %v4070 = vld [vmem:[%s1 + $0xb8] sm:$0xff]
  %v4071 = vld [vmem:[%s1 + $0xc0] sm:$0xff]
  %v4072 = vld [vmem:[%s1 + $0xc8] sm:$0xff]
  %v4073 = vld [vmem:[%s1 + $0xd0] sm:$0xff]
  %v4074 = vld [vmem:[%s1 + $0xd8] sm:$0xff]
  %v4075 = vld [vmem:[%s1 + $0xe0] sm:$0xff]
  %v4076 = vld [vmem:[%s1 + $0xe8] sm:$0xff]
  %v4077 = vld [vmem:[%s1 + $0xf0] sm:$0xff]
  %v4078 = vld [vmem:[%s1 + $0xf8] sm:$0xff]
  %v4079 = vld [vmem:[%s1 + $0x100] sm:$0xff]
  %v4080 = vld [vmem:[%s1 + $0x108] sm:$0xff]
  %v4081 = vld [vmem:[%s1 + $0x110] sm:$0xff]
  %v4082 = vld [vmem:[%s1 + $0x118] sm:$0xff]
  %v4083 = vld [vmem:[%s1 + $0x120] sm:$0xff]
  %v4084 = vld [vmem:[%s1 + $0x128] sm:$0xff]
  %v4085 = vld [vmem:[%s1 + $0x130] sm:$0xff]
  %v4086 = vld [vmem:[%s1 + $0x138] sm:$0xff]
  %v4087 = vld [vmem:[%s1 + $0x140] sm:$0xff]
  %v4088 = vld [vmem:[%s1 + $0x148] sm:$0xff]
  %v4089 = vld [vmem:[%s1 + $0x150] sm:$0xff]
  %v4090 = vld [vmem:[%s1 + $0x158] sm:$0xff]
  %v4091 = vld [vmem:[%s1 + $0x160] sm:$0xff]
  %v4092 = vld [vmem:[%s1 + $0x168] sm:$0xff]
  %v4093 = vld [vmem:[%s1 + $0x170] sm:$0xff]
  %v4094 = vld [vmem:[%s1 + $0x178] sm:$0xff]
  %v4095 = vld [vmem:[%s1 + $0x180] sm:$0xff]
  %v4096 = vld [vmem:[%s1 + $0x188] sm:$0xff]
  %v4097 = vld [vmem:[%s1 + $0x190] sm:$0xff]
  %v4098 = vld [vmem:[%s1 + $0x198] sm:$0xff]
  %v4099 = vld [vmem:[%s1 + $0x1a0] sm:$0xff]
  %v4100 = vld [vmem:[%s1 + $0x1a8] sm:$0xff]
  %v4101 = vld [vmem:[%s1 + $0x1b0] sm:$0xff]
  %v4102 = vld [vmem:[%s1 + $0x1b8] sm:$0xff]
  %v4103 = vld [vmem:[%s1 + $0x1c0] sm:$0xff]
  %v4104 = vld [vmem:[%s1 + $0x1c8] sm:$0xff]
  %v4105 = vld [vmem:[%s1 + $0x1d0] sm:$0xff]
  %v4106 = vld [vmem:[%s1 + $0x1d8] sm:$0xff]
  %v4107 = vld [vmem:[%s1 + $0x1e0] sm:$0xff]
  %v4108 = vld [vmem:[%s1 + $0x1e8] sm:$0xff]
  %v4109 = vld [vmem:[%s1 + $0x1f0] sm:$0xff]
  %v4110 = vld [vmem:[%s1 + $0x1f8] sm:$0xff]
  %v4111 = vld [vmem:[%s1 + $0x200] sm:$0xff]
  %v4112 = vld [vmem:[%s1 + $0x208] sm:$0xff]
  %v4113 = vld [vmem:[%s1 + $0x210] sm:$0xff]
  %v4114 = vld [vmem:[%s1 + $0x218] sm:$0xff]
  %v4115 = vld [vmem:[%s1 + $0x220] sm:$0xff]
  %v4116 = vld [vmem:[%s1 + $0x228] sm:$0xff]
  %v4117 = vld [vmem:[%s1 + $0x230] sm:$0xff]
  %v4118 = vld [vmem:[%s1 + $0x238] sm:$0xff]
  %v4119 = vld [vmem:[%s1 + $0x240] sm:$0xff]
  %v4120 = vld [vmem:[%s1 + $0x248] sm:$0xff]
  %v4121 = vld [vmem:[%s1 + $0x250] sm:$0xff]
  %v4122 = vld [vmem:[%s1 + $0x258] sm:$0xff]
  %v4123 = vld [vmem:[%s1 + $0x260] sm:$0xff]
  %v4124 = vld [vmem:[%s1 + $0x268] sm:$0xff]
  %v4125 = vld [vmem:[%s1 + $0x270] sm:$0xff]
  %v4126 = vld [vmem:[%s1 + $0x278] sm:$0xff]
  %v4127 = vld [vmem:[%s1 + $0x280] sm:$0xff]
  %v4128 = vld [vmem:[%s1 + $0x288] sm:$0xff]
  %v4129 = vld [vmem:[%s1 + $0x290] sm:$0xff]
  %v4130 = vld [vmem:[%s1 + $0x298] sm:$0xff]
  %v4131 = vld [vmem:[%s1 + $0x2a0] sm:$0xff]
  %v4132 = vld [vmem:[%s1 + $0x2a8] sm:$0xff]
  %v4133 = vld [vmem:[%s1 + $0x2b0] sm:$0xff]
  %v4134 = vld [vmem:[%s1 + $0x2b8] sm:$0xff]
  %v4135 = vld [vmem:[%s1 + $0x2c0] sm:$0xff]
  %v4136 = vld [vmem:[%s1 + $0x2c8] sm:$0xff]
  %v4137 = vld [vmem:[%s1 + $0x2d0] sm:$0xff]
  %v4138 = vld [vmem:[%s1 + $0x2d8] sm:$0xff]
  %v4139 = vld [vmem:[%s1 + $0x2e0] sm:$0xff]
  %v4140 = vld [vmem:[%s1 + $0x2e8] sm:$0xff]
  %v4141 = vld [vmem:[%s1 + $0x2f0] sm:$0xff]
  %v4142 = vld [vmem:[%s1 + $0x2f8] sm:$0xff]
  %v4143 = vld [vmem:[%s1 + $0x300] sm:$0xff]
  %v4144 = vld [vmem:[%s1 + $0x308] sm:$0xff]
  %v4145 = vld [vmem:[%s1 + $0x310] sm:$0xff]
  %v4146 = vld [vmem:[%s1 + $0x318] sm:$0xff]
  %v4147 = vld [vmem:[%s1 + $0x320] sm:$0xff]
  %v4148 = vld [vmem:[%s1 + $0x328] sm:$0xff]
  %v4149 = vld [vmem:[%s1 + $0x330] sm:$0xff]
  %v4150 = vld [vmem:[%s1 + $0x338] sm:$0xff]
  %v4151 = vld [vmem:[%s1 + $0x340] sm:$0xff]
  %v4152 = vld [vmem:[%s1 + $0x348] sm:$0xff]
  %v4153 = vld [vmem:[%s1 + $0x350] sm:$0xff]
  %v4154 = vld [vmem:[%s1 + $0x358] sm:$0xff]
  %v4155 = vld [vmem:[%s1 + $0x360] sm:$0xff]
  %v4156 = vld [vmem:[%s1 + $0x368] sm:$0xff]
  %v4157 = vld [vmem:[%s1 + $0x370] sm:$0xff]
  %v4158 = vld [vmem:[%s1 + $0x378] sm:$0xff]
  %v4159 = vld [vmem:[%s1 + $0x380] sm:$0xff]
  %v4160 = vld [vmem:[%s1 + $0x388] sm:$0xff]
  %v4161 = vld [vmem:[%s1 + $0x390] sm:$0xff]
  %v4162 = vld [vmem:[%s1 + $0x398] sm:$0xff]
  %v4163 = vld [vmem:[%s1 + $0x3a0] sm:$0xff]
  %v4164 = vld [vmem:[%s1 + $0x3a8] sm:$0xff]
  %v4165 = vld [vmem:[%s1 + $0x3b0] sm:$0xff]
  %v4166 = vld [vmem:[%s1 + $0x3b8] sm:$0xff]
  %v4167 = vld [vmem:[%s1 + $0x3c0] sm:$0xff]
  %v4168 = vld [vmem:[%s1 + $0x3c8] sm:$0xff]
  %v4169 = vld [vmem:[%s1 + $0x3d0] sm:$0xff]
  %v4170 = vld [vmem:[%s1 + $0x3d8] sm:$0xff]
  %v4171 = vld [vmem:[%s1 + $0x3e0] sm:$0xff]
  %v4172 = vld [vmem:[%s1 + $0x3e8] sm:$0xff]
  %v4173 = vld [vmem:[%s1 + $0x3f0] sm:$0xff]
  %v4174 = vld [vmem:[%s1 + $0x3f8] sm:$0xff]
  %v4175 = vld [vmem:[%s1 + $0x400] sm:$0xff]
  %v4176 = vld [vmem:[%s1 + $0x408] sm:$0xff]
  %v4177 = vld [vmem:[%s1 + $0x410] sm:$0xff]
  %v4178 = vld [vmem:[%s1 + $0x418] sm:$0xff]
  %v4179 = vld [vmem:[%s1 + $0x420] sm:$0xff]
  %v4180 = vld [vmem:[%s1 + $0x428] sm:$0xff]
  %v4181 = vld [vmem:[%s1 + $0x430] sm:$0xff]
  %v4182 = vld [vmem:[%s1 + $0x438] sm:$0xff]
  %v4183 = vld [vmem:[%s1 + $0x440] sm:$0xff]
  %v4184 = vld [vmem:[%s1 + $0x448] sm:$0xff]
  %v4185 = vld [vmem:[%s1 + $0x450] sm:$0xff]
  %v4186 = vld [vmem:[%s1 + $0x458] sm:$0xff]
  %v4187 = vld [vmem:[%s1 + $0x460] sm:$0xff]
  %v4188 = vld [vmem:[%s1 + $0x468] sm:$0xff]
  %v4189 = vld [vmem:[%s1 + $0x470] sm:$0xff]
  %v4190 = vld [vmem:[%s1 + $0x478] sm:$0xff]
  %v4191 = vld [vmem:[%s1 + $0x480] sm:$0xff]
  %v4192 = vld [vmem:[%s1 + $0x488] sm:$0xff]
  %v4193 = vld [vmem:[%s1 + $0x490] sm:$0xff]
  %v4194 = vld [vmem:[%s1 + $0x498] sm:$0xff]
  %v4195 = vld [vmem:[%s1 + $0x4a0] sm:$0xff]
  %v4196 = vld [vmem:[%s1 + $0x4a8] sm:$0xff]
  %v4197 = vld [vmem:[%s1 + $0x4b0] sm:$0xff]
  %v4198 = vld [vmem:[%s1 + $0x4b8] sm:$0xff]
  %v4199 = vld [vmem:[%s1 + $0x4c0] sm:$0xff]
  %v4200 = vld [vmem:[%s1 + $0x4c8] sm:$0xff]
  %v4201 = vld [vmem:[%s1 + $0x4d0] sm:$0xff]
  %v4202 = vld [vmem:[%s1 + $0x4d8] sm:$0xff]
  %v4203 = vld [vmem:[%s1 + $0x4e0] sm:$0xff]
  %v4204 = vld [vmem:[%s1 + $0x4e8] sm:$0xff]
  %v4205 = vld [vmem:[%s1 + $0x4f0] sm:$0xff]
  %v4206 = vld [vmem:[%s1 + $0x4f8] sm:$0xff]
  %v4207 = vld [vmem:[%s1 + $0x500] sm:$0xff]
  %v4208 = vld [vmem:[%s1 + $0x508] sm:$0xff]
  %v4209 = vld [vmem:[%s1 + $0x510] sm:$0xff]
  %v4210 = vld [vmem:[%s1 + $0x518] sm:$0xff]
  %v4211 = vld [vmem:[%s1 + $0x520] sm:$0xff]
  %v4212 = vld [vmem:[%s1 + $0x528] sm:$0xff]
  %v4213 = vld [vmem:[%s1 + $0x530] sm:$0xff]
  %v4214 = vld [vmem:[%s1 + $0x538] sm:$0xff]
  %v4215 = vld [vmem:[%s1 + $0x540] sm:$0xff]
  %v4216 = vld [vmem:[%s1 + $0x548] sm:$0xff]
  %v4217 = vld [vmem:[%s1 + $0x550] sm:$0xff]
  %v4218 = vld [vmem:[%s1 + $0x558] sm:$0xff]
  %v4219 = vld [vmem:[%s1 + $0x560] sm:$0xff]
  %v4220 = vld [vmem:[%s1 + $0x568] sm:$0xff]
  %v4221 = vld [vmem:[%s1 + $0x570] sm:$0xff]
  %v4222 = vld [vmem:[%s1 + $0x578] sm:$0xff]
  %v4223 = vld [vmem:[%s1 + $0x580] sm:$0xff]
  %v4224 = vld [vmem:[%s1 + $0x588] sm:$0xff]
  %v4225 = vld [vmem:[%s1 + $0x590] sm:$0xff]
  %v4226 = vld [vmem:[%s1 + $0x598] sm:$0xff]
  %v4227 = vld [vmem:[%s1 + $0x5a0] sm:$0xff]
  %v4228 = vld [vmem:[%s1 + $0x5a8] sm:$0xff]
  %v4229 = vld [vmem:[%s1 + $0x5b0] sm:$0xff]
  %v4230 = vld [vmem:[%s1 + $0x5b8] sm:$0xff]
  %v4231 = vld [vmem:[%s1 + $0x5c0] sm:$0xff]
  %v4232 = vld [vmem:[%s1 + $0x5c8] sm:$0xff]
  %v4233 = vld [vmem:[%s1 + $0x5d0] sm:$0xff]
  %v4234 = vld [vmem:[%s1 + $0x5d8] sm:$0xff]
  %v4235 = vld [vmem:[%s1 + $0x5e0] sm:$0xff]
  %v4236 = vld [vmem:[%s1 + $0x5e8] sm:$0xff]
  %v4237 = vld [vmem:[%s1 + $0x5f0] sm:$0xff]
  %v4238 = vld [vmem:[%s1 + $0x5f8] sm:$0xff]
  %v4239 = vld [vmem:[%s1 + $0x600] sm:$0xff]
  %v4240 = vld [vmem:[%s1 + $0x608] sm:$0xff]
  %v4241 = vld [vmem:[%s1 + $0x610] sm:$0xff]
  %v4242 = vld [vmem:[%s1 + $0x618] sm:$0xff]
  %v4243 = vld [vmem:[%s1 + $0x620] sm:$0xff]
  %v4244 = vld [vmem:[%s1 + $0x628] sm:$0xff]
  %v4245 = vld [vmem:[%s1 + $0x630] sm:$0xff]
  %v4246 = vld [vmem:[%s1 + $0x638] sm:$0xff]
  %v4247 = vld [vmem:[%s1 + $0x640] sm:$0xff]
  %v4248 = vld [vmem:[%s1 + $0x648] sm:$0xff]
  %v4249 = vld [vmem:[%s1 + $0x650] sm:$0xff]
  %v4250 = vld [vmem:[%s1 + $0x658] sm:$0xff]
  %v4251 = vld [vmem:[%s1 + $0x660] sm:$0xff]
  %v4252 = vld [vmem:[%s1 + $0x668] sm:$0xff]
  %v4253 = vld [vmem:[%s1 + $0x670] sm:$0xff]
  %v4254 = vld [vmem:[%s1 + $0x678] sm:$0xff]
  %v4255 = vld [vmem:[%s1 + $0x680] sm:$0xff]
  %v4256 = vld [vmem:[%s1 + $0x688] sm:$0xff]
  %v4257 = vld [vmem:[%s1 + $0x690] sm:$0xff]
  %v4258 = vld [vmem:[%s1 + $0x698] sm:$0xff]
  %v4259 = vld [vmem:[%s1 + $0x6a0] sm:$0xff]
  %v4260 = vld [vmem:[%s1 + $0x6a8] sm:$0xff]
  %v4261 = vld [vmem:[%s1 + $0x6b0] sm:$0xff]
  %v4262 = vld [vmem:[%s1 + $0x6b8] sm:$0xff]
  %v4263 = vld [vmem:[%s1 + $0x6c0] sm:$0xff]
  %v4264 = vld [vmem:[%s1 + $0x6c8] sm:$0xff]
  %v4265 = vld [vmem:[%s1 + $0x6d0] sm:$0xff]
  %v4266 = vld [vmem:[%s1 + $0x6d8] sm:$0xff]
  %v4267 = vld [vmem:[%s1 + $0x6e0] sm:$0xff]
  %v4268 = vld [vmem:[%s1 + $0x6e8] sm:$0xff]
  %v4269 = vld [vmem:[%s1 + $0x6f0] sm:$0xff]
  %v4270 = vld [vmem:[%s1 + $0x6f8] sm:$0xff]
  %v4271 = vld [vmem:[%s1 + $0x700] sm:$0xff]
  %v4272 = vld [vmem:[%s1 + $0x708] sm:$0xff]
  %v4273 = vld [vmem:[%s1 + $0x710] sm:$0xff]
  %v4274 = vld [vmem:[%s1 + $0x718] sm:$0xff]
  %v4275 = vld [vmem:[%s1 + $0x720] sm:$0xff]
  %v4276 = vld [vmem:[%s1 + $0x728] sm:$0xff]
  %v4277 = vld [vmem:[%s1 + $0x730] sm:$0xff]
  %v4278 = vld [vmem:[%s1 + $0x738] sm:$0xff]
  %v4279 = vld [vmem:[%s1 + $0x740] sm:$0xff]
  %v4280 = vld [vmem:[%s1 + $0x748] sm:$0xff]
  %v4281 = vld [vmem:[%s1 + $0x750] sm:$0xff]
  %v4282 = vld [vmem:[%s1 + $0x758] sm:$0xff]
  %v4283 = vld [vmem:[%s1 + $0x760] sm:$0xff]
  %v4284 = vld [vmem:[%s1 + $0x768] sm:$0xff]
  %v4285 = vld [vmem:[%s1 + $0x770] sm:$0xff]
  %v4286 = vld [vmem:[%s1 + $0x778] sm:$0xff]
  %v4287 = vld [vmem:[%s1 + $0x780] sm:$0xff]
  %v4288 = vld [vmem:[%s1 + $0x788] sm:$0xff]
  %v4289 = vld [vmem:[%s1 + $0x790] sm:$0xff]
  %v4290 = vld [vmem:[%s1 + $0x798] sm:$0xff]
  %v4291 = vld [vmem:[%s1 + $0x7a0] sm:$0xff]
  %v4292 = vld [vmem:[%s1 + $0x7a8] sm:$0xff]
  %v4293 = vld [vmem:[%s1 + $0x7b0] sm:$0xff]
  %v4294 = vld [vmem:[%s1 + $0x7b8] sm:$0xff]
  %v4295 = vld [vmem:[%s1 + $0x7c0] sm:$0xff]
  %v4296 = vld [vmem:[%s1 + $0x7c8] sm:$0xff]
  %v4297 = vld [vmem:[%s1 + $0x7d0] sm:$0xff]
  %v4298 = vld [vmem:[%s1 + $0x7d8] sm:$0xff]
  %v4299 = vld [vmem:[%s1 + $0x7e0] sm:$0xff]
  %v4300 = vld [vmem:[%s1 + $0x7e8] sm:$0xff]
  %v4301 = vld [vmem:[%s1 + $0x7f0] sm:$0xff]
  %v4302 = vld [vmem:[%s1 + $0x7f8] sm:$0xff]
  %v4303 = vld [vmem:[%s1 + $0x800] sm:$0xff]
  %v4304 = vld [vmem:[%s1 + $0x808] sm:$0xff]
  %v4305 = vld [vmem:[%s1 + $0x810] sm:$0xff]
  %v4306 = vld [vmem:[%s1 + $0x818] sm:$0xff]
  %v4307 = vld [vmem:[%s1 + $0x820] sm:$0xff]
  %v4308 = vld [vmem:[%s1 + $0x828] sm:$0xff]
  %v4309 = vld [vmem:[%s1 + $0x830] sm:$0xff]
  %v4310 = vld [vmem:[%s1 + $0x838] sm:$0xff]
  %v4311 = vld [vmem:[%s1 + $0x840] sm:$0xff]
  %v4312 = vld [vmem:[%s1 + $0x848] sm:$0xff]
  %v4313 = vld [vmem:[%s1 + $0x850] sm:$0xff]
  %v4314 = vld [vmem:[%s1 + $0x858] sm:$0xff]
  %v4315 = vld [vmem:[%s1 + $0x860] sm:$0xff]
  %v4316 = vld [vmem:[%s1 + $0x868] sm:$0xff]
  %v4317 = vld [vmem:[%s1 + $0x870] sm:$0xff]
  %v4318 = vld [vmem:[%s1 + $0x878] sm:$0xff]
  %v4319 = vld [vmem:[%s1 + $0x880] sm:$0xff]
  %v4320 = vld [vmem:[%s1 + $0x888] sm:$0xff]
  %v4321 = vld [vmem:[%s1 + $0x890] sm:$0xff]
  %v4322 = vld [vmem:[%s1 + $0x898] sm:$0xff]
  %v4323 = vld [vmem:[%s1 + $0x8a0] sm:$0xff]
  %v4324 = vld [vmem:[%s1 + $0x8a8] sm:$0xff]
  %v4325 = vld [vmem:[%s1 + $0x8b0] sm:$0xff]
  %v4326 = vld [vmem:[%s1 + $0x8b8] sm:$0xff]
  %v4327 = vld [vmem:[%s1 + $0x8c0] sm:$0xff]
  %v4328 = vld [vmem:[%s1 + $0x8c8] sm:$0xff]
  %v4329 = vld [vmem:[%s1 + $0x8d0] sm:$0xff]
  %v4330 = vld [vmem:[%s1 + $0x8d8] sm:$0xff]
  %v4331 = vld [vmem:[%s1 + $0x8e0] sm:$0xff]
  %v4332 = vld [vmem:[%s1 + $0x8e8] sm:$0xff]
  %v4333 = vld [vmem:[%s1 + $0x8f0] sm:$0xff]
  %v4334 = vld [vmem:[%s1 + $0x8f8] sm:$0xff]
  %v4335 = vmul.f32 %v3759, %v4047
  %v4336 = vmul.f32 %v3760, %v4048
  %v4337 = vmul.f32 %v3761, %v4049
  %v4338 = vmul.f32 %v3762, %v4050
  %v4339 = vmul.f32 %v3763, %v4051
  %v4340 = vmul.f32 %v3764, %v4052
  %v4341 = vmul.f32 %v3765, %v4053
  %v4342 = vmul.f32 %v3766, %v4054
  %v4343 = vmul.f32 %v3767, %v4055
  %v4344 = vmul.f32 %v3768, %v4056
  %v4345 = vmul.f32 %v3769, %v4057
  %v4346 = vmul.f32 %v3770, %v4058
  %v4347 = vmul.f32 %v3771, %v4059
  %v4348 = vmul.f32 %v3772, %v4060
  %v4349 = vmul.f32 %v3773, %v4061
  %v4350 = vmul.f32 %v3774, %v4062
  %v4351 = vmul.f32 %v3775, %v4063
  %v4352 = vmul.f32 %v3776, %v4064
  %v4353 = vmul.f32 %v3777, %v4065
  %v4354 = vmul.f32 %v3778, %v4066
  %v4355 = vmul.f32 %v3779, %v4067
  %v4356 = vmul.f32 %v3780, %v4068
  %v4357 = vmul.f32 %v3781, %v4069
  %v4358 = vmul.f32 %v3782, %v4070
  %v4359 = vmul.f32 %v3783, %v4071
  %v4360 = vmul.f32 %v3784, %v4072
  %v4361 = vmul.f32 %v3785, %v4073
  %v4362 = vmul.f32 %v3786, %v4074
  %v4363 = vmul.f32 %v3787, %v4075
  %v4364 = vmul.f32 %v3788, %v4076
  %v4365 = vmul.f32 %v3789, %v4077
  %v4366 = vmul.f32 %v3790, %v4078
  %v4367 = vmul.f32 %v3791, %v4079
  %v4368 = vmul.f32 %v3792, %v4080
  %v4369 = vmul.f32 %v3793, %v4081
  %v4370 = vmul.f32 %v3794, %v4082
  %v4371 = vmul.f32 %v3795, %v4083
  %v4372 = vmul.f32 %v3796, %v4084
  %v4373 = vmul.f32 %v3797, %v4085
  %v4374 = vmul.f32 %v3798, %v4086
  %v4375 = vmul.f32 %v3799, %v4087
  %v4376 = vmul.f32 %v3800, %v4088
  %v4377 = vmul.f32 %v3801, %v4089
  %v4378 = vmul.f32 %v3802, %v4090
  %v4379 = vmul.f32 %v3803, %v4091
  %v4380 = vmul.f32 %v3804, %v4092
  %v4381 = vmul.f32 %v3805, %v4093
  %v4382 = vmul.f32 %v3806, %v4094
  %v4383 = vmul.f32 %v3807, %v4095
  %v4384 = vmul.f32 %v3808, %v4096
  %v4385 = vmul.f32 %v3809, %v4097
  %v4386 = vmul.f32 %v3810, %v4098
  %v4387 = vmul.f32 %v3811, %v4099
  %v4388 = vmul.f32 %v3812, %v4100
  %v4389 = vmul.f32 %v3813, %v4101
  %v4390 = vmul.f32 %v3814, %v4102
  %v4391 = vmul.f32 %v3815, %v4103
  %v4392 = vmul.f32 %v3816, %v4104
  %v4393 = vmul.f32 %v3817, %v4105
  %v4394 = vmul.f32 %v3818, %v4106
  %v4395 = vmul.f32 %v3819, %v4107
  %v4396 = vmul.f32 %v3820, %v4108
  %v4397 = vmul.f32 %v3821, %v4109
  %v4398 = vmul.f32 %v3822, %v4110
  %v4399 = vmul.f32 %v3823, %v4111
  %v4400 = vmul.f32 %v3824, %v4112
  %v4401 = vmul.f32 %v3825, %v4113
  %v4402 = vmul.f32 %v3826, %v4114
  %v4403 = vmul.f32 %v3827, %v4115
  %v4404 = vmul.f32 %v3828, %v4116
  %v4405 = vmul.f32 %v3829, %v4117
  %v4406 = vmul.f32 %v3830, %v4118
  %v4407 = vmul.f32 %v3831, %v4119
  %v4408 = vmul.f32 %v3832, %v4120
  %v4409 = vmul.f32 %v3833, %v4121
  %v4410 = vmul.f32 %v3834, %v4122
  %v4411 = vmul.f32 %v3835, %v4123
  %v4412 = vmul.f32 %v3836, %v4124
  %v4413 = vmul.f32 %v3837, %v4125
  %v4414 = vmul.f32 %v3838, %v4126
  %v4415 = vmul.f32 %v3839, %v4127
  %v4416 = vmul.f32 %v3840, %v4128
  %v4417 = vmul.f32 %v3841, %v4129
  %v4418 = vmul.f32 %v3842, %v4130
  %v4419 = vmul.f32 %v3843, %v4131
  %v4420 = vmul.f32 %v3844, %v4132
  %v4421 = vmul.f32 %v3845, %v4133
  %v4422 = vmul.f32 %v3846, %v4134
  %v4423 = vmul.f32 %v3847, %v4135
  %v4424 = vmul.f32 %v3848, %v4136
  %v4425 = vmul.f32 %v3849, %v4137
  %v4426 = vmul.f32 %v3850, %v4138
  %v4427 = vmul.f32 %v3851, %v4139
  %v4428 = vmul.f32 %v3852, %v4140
  %v4429 = vmul.f32 %v3853, %v4141
  %v4430 = vmul.f32 %v3854, %v4142
  %v4431 = vmul.f32 %v3855, %v4143
  %v4432 = vmul.f32 %v3856, %v4144
  %v4433 = vmul.f32 %v3857, %v4145
  %v4434 = vmul.f32 %v3858, %v4146
  %v4435 = vmul.f32 %v3859, %v4147
  %v4436 = vmul.f32 %v3860, %v4148
  %v4437 = vmul.f32 %v3861, %v4149
  %v4438 = vmul.f32 %v3862, %v4150
  %v4439 = vmul.f32 %v3863, %v4151
  %v4440 = vmul.f32 %v3864, %v4152
  %v4441 = vmul.f32 %v3865, %v4153
  %v4442 = vmul.f32 %v3866, %v4154
  %v4443 = vmul.f32 %v3867, %v4155
  %v4444 = vmul.f32 %v3868, %v4156
  %v4445 = vmul.f32 %v3869, %v4157
  %v4446 = vmul.f32 %v3870, %v4158
  %v4447 = vmul.f32 %v3871, %v4159
  %v4448 = vmul.f32 %v3872, %v4160
  %v4449 = vmul.f32 %v3873, %v4161
  %v4450 = vmul.f32 %v3874, %v4162
  %v4451 = vmul.f32 %v3875, %v4163
  %v4452 = vmul.f32 %v3876, %v4164
  %v4453 = vmul.f32 %v3877, %v4165
  %v4454 = vmul.f32 %v3878, %v4166
  %v4455 = vmul.f32 %v3879, %v4167
  %v4456 = vmul.f32 %v3880, %v4168
  %v4457 = vmul.f32 %v3881, %v4169
  %v4458 = vmul.f32 %v3882, %v4170
  %v4459 = vmul.f32 %v3883, %v4171
  %v4460 = vmul.f32 %v3884, %v4172
  %v4461 = vmul.f32 %v3885, %v4173
  %v4462 = vmul.f32 %v3886, %v4174
  %v4463 = vmul.f32 %v3887, %v4175
  %v4464 = vmul.f32 %v3888, %v4176
  %v4465 = vmul.f32 %v3889, %v4177
  %v4466 = vmul.f32 %v3890, %v4178
  %v4467 = vmul.f32 %v3891, %v4179
  %v4468 = vmul.f32 %v3892, %v4180
  %v4469 = vmul.f32 %v3893, %v4181
  %v4470 = vmul.f32 %v3894, %v4182
  %v4471 = vmul.f32 %v3895, %v4183
  %v4472 = vmul.f32 %v3896, %v4184
  %v4473 = vmul.f32 %v3897, %v4185
  %v4474 = vmul.f32 %v3898, %v4186
  %v4475 = vmul.f32 %v3899, %v4187
  %v4476 = vmul.f32 %v3900, %v4188
  %v4477 = vmul.f32 %v3901, %v4189
  %v4478 = vmul.f32 %v3902, %v4190
  %v4479 = vmul.f32 %v3903, %v4191
  %v4480 = vmul.f32 %v3904, %v4192
  %v4481 = vmul.f32 %v3905, %v4193
  %v4482 = vmul.f32 %v3906, %v4194
  %v4483 = vmul.f32 %v3907, %v4195
  %v4484 = vmul.f32 %v3908, %v4196
  %v4485 = vmul.f32 %v3909, %v4197
  %v4486 = vmul.f32 %v3910, %v4198
  %v4487 = vmul.f32 %v3911, %v4199
  %v4488 = vmul.f32 %v3912, %v4200
  %v4489 = vmul.f32 %v3913, %v4201
  %v4490 = vmul.f32 %v3914, %v4202
  %v4491 = vmul.f32 %v3915, %v4203
  %v4492 = vmul.f32 %v3916, %v4204
  %v4493 = vmul.f32 %v3917, %v4205
  %v4494 = vmul.f32 %v3918, %v4206
  %v4495 = vmul.f32 %v3919, %v4207
  %v4496 = vmul.f32 %v3920, %v4208
  %v4497 = vmul.f32 %v3921, %v4209
  %v4498 = vmul.f32 %v3922, %v4210
  %v4499 = vmul.f32 %v3923, %v4211
  %v4500 = vmul.f32 %v3924, %v4212
  %v4501 = vmul.f32 %v3925, %v4213
  %v4502 = vmul.f32 %v3926, %v4214
  %v4503 = vmul.f32 %v3927, %v4215
  %v4504 = vmul.f32 %v3928, %v4216
  %v4505 = vmul.f32 %v3929, %v4217
  %v4506 = vmul.f32 %v3930, %v4218
  %v4507 = vmul.f32 %v3931, %v4219
  %v4508 = vmul.f32 %v3932, %v4220
  %v4509 = vmul.f32 %v3933, %v4221
  %v4510 = vmul.f32 %v3934, %v4222
  %v4511 = vmul.f32 %v3935, %v4223
  %v4512 = vmul.f32 %v3936, %v4224
  %v4513 = vmul.f32 %v3937, %v4225
  %v4514 = vmul.f32 %v3938, %v4226
  %v4515 = vmul.f32 %v3939, %v4227
  %v4516 = vmul.f32 %v3940, %v4228
  %v4517 = vmul.f32 %v3941, %v4229
  %v4518 = vmul.f32 %v3942, %v4230
  %v4519 = vmul.f32 %v3943, %v4231
  %v4520 = vmul.f32 %v3944, %v4232
  %v4521 = vmul.f32 %v3945, %v4233
  %v4522 = vmul.f32 %v3946, %v4234
  %v4523 = vmul.f32 %v3947, %v4235
  %v4524 = vmul.f32 %v3948, %v4236
  %v4525 = vmul.f32 %v3949, %v4237
  %v4526 = vmul.f32 %v3950, %v4238
  %v4527 = vmul.f32 %v3951, %v4239
  %v4528 = vmul.f32 %v3952, %v4240
  %v4529 = vmul.f32 %v3953, %v4241
  %v4530 = vmul.f32 %v3954, %v4242
  %v4531 = vmul.f32 %v3955, %v4243
  %v4532 = vmul.f32 %v3956, %v4244
  %v4533 = vmul.f32 %v3957, %v4245
  %v4534 = vmul.f32 %v3958, %v4246
  %v4535 = vmul.f32 %v3959, %v4247
  %v4536 = vmul.f32 %v3960, %v4248
  %v4537 = vmul.f32 %v3961, %v4249
  %v4538 = vmul.f32 %v3962, %v4250
  %v4539 = vmul.f32 %v3963, %v4251
  %v4540 = vmul.f32 %v3964, %v4252
  %v4541 = vmul.f32 %v3965, %v4253
  %v4542 = vmul.f32 %v3966, %v4254
  %v4543 = vmul.f32 %v3967, %v4255
  %v4544 = vmul.f32 %v3968, %v4256
  %v4545 = vmul.f32 %v3969, %v4257
  %v4546 = vmul.f32 %v3970, %v4258
  %v4547 = vmul.f32 %v3971, %v4259
  %v4548 = vmul.f32 %v3972, %v4260
  %v4549 = vmul.f32 %v3973, %v4261
  %v4550 = vmul.f32 %v3974, %v4262
  %v4551 = vmul.f32 %v3975, %v4263
  %v4552 = vmul.f32 %v3976, %v4264
  %v4553 = vmul.f32 %v3977, %v4265
  %v4554 = vmul.f32 %v3978, %v4266
  %v4555 = vmul.f32 %v3979, %v4267
  %v4556 = vmul.f32 %v3980, %v4268
  %v4557 = vmul.f32 %v3981, %v4269
  %v4558 = vmul.f32 %v3982, %v4270
  %v4559 = vmul.f32 %v3983, %v4271
  %v4560 = vmul.f32 %v3984, %v4272
  %v4561 = vmul.f32 %v3985, %v4273
  %v4562 = vmul.f32 %v3986, %v4274
  %v4563 = vmul.f32 %v3987, %v4275
  %v4564 = vmul.f32 %v3988, %v4276
  %v4565 = vmul.f32 %v3989, %v4277
  %v4566 = vmul.f32 %v3990, %v4278
  %v4567 = vmul.f32 %v3991, %v4279
  %v4568 = vmul.f32 %v3992, %v4280
  %v4569 = vmul.f32 %v3993, %v4281
  %v4570 = vmul.f32 %v3994, %v4282
  %v4571 = vmul.f32 %v3995, %v4283
  %v4572 = vmul.f32 %v3996, %v4284
  %v4573 = vmul.f32 %v3997, %v4285
  %v4574 = vmul.f32 %v3998, %v4286
  %v4575 = vmul.f32 %v3999, %v4287
  %v4576 = vmul.f32 %v4000, %v4288
  %v4577 = vmul.f32 %v4001, %v4289
  %v4578 = vmul.f32 %v4002, %v4290
  %v4579 = vmul.f32 %v4003, %v4291
  %v4580 = vmul.f32 %v4004, %v4292
  %v4581 = vmul.f32 %v4005, %v4293
  %v4582 = vmul.f32 %v4006, %v4294
  %v4583 = vmul.f32 %v4007, %v4295
  %v4584 = vmul.f32 %v4008, %v4296
  %v4585 = vmul.f32 %v4009, %v4297
  %v4586 = vmul.f32 %v4010, %v4298
  %v4587 = vmul.f32 %v4011, %v4299
  %v4588 = vmul.f32 %v4012, %v4300
  %v4589 = vmul.f32 %v4013, %v4301
  %v4590 = vmul.f32 %v4014, %v4302
  %v4591 = vmul.f32 %v4015, %v4303
  %v4592 = vmul.f32 %v4016, %v4304
  %v4593 = vmul.f32 %v4017, %v4305
  %v4594 = vmul.f32 %v4018, %v4306
  %v4595 = vmul.f32 %v4019, %v4307
  %v4596 = vmul.f32 %v4020, %v4308
  %v4597 = vmul.f32 %v4021, %v4309
  %v4598 = vmul.f32 %v4022, %v4310
  %v4599 = vmul.f32 %v4023, %v4311
  %v4600 = vmul.f32 %v4024, %v4312
  %v4601 = vmul.f32 %v4025, %v4313
  %v4602 = vmul.f32 %v4026, %v4314
  %v4603 = vmul.f32 %v4027, %v4315
  %v4604 = vmul.f32 %v4028, %v4316
  %v4605 = vmul.f32 %v4029, %v4317
  %v4606 = vmul.f32 %v4030, %v4318
  %v4607 = vmul.f32 %v4031, %v4319
  %v4608 = vmul.f32 %v4032, %v4320
  %v4609 = vmul.f32 %v4033, %v4321
  %v4610 = vmul.f32 %v4034, %v4322
  %v4611 = vmul.f32 %v4035, %v4323
  %v4612 = vmul.f32 %v4036, %v4324
  %v4613 = vmul.f32 %v4037, %v4325
  %v4614 = vmul.f32 %v4038, %v4326
  %v4615 = vmul.f32 %v4039, %v4327
  %v4616 = vmul.f32 %v4040, %v4328
  %v4617 = vmul.f32 %v4041, %v4329
  %v4618 = vmul.f32 %v4042, %v4330
  %v4619 = vmul.f32 %v4043, %v4331
  %v4620 = vmul.f32 %v4044, %v4332
  %v4621 = vmul.f32 %v4045, %v4333
  %v4622 = vmul.f32 %v4046, %v4334
  %v4623 = vld [vmem:[%s2] sm:$0xff]
  %v4624 = vld [vmem:[%s2 + $0x8] sm:$0xff]
  %v4625 = vld [vmem:[%s2 + $0x10] sm:$0xff]
  %v4626 = vld [vmem:[%s2 + $0x18] sm:$0xff]
  %v4627 = vld [vmem:[%s2 + $0x20] sm:$0xff]
  %v4628 = vld [vmem:[%s2 + $0x28] sm:$0xff]
  %v4629 = vld [vmem:[%s2 + $0x30] sm:$0xff]
  %v4630 = vld [vmem:[%s2 + $0x38] sm:$0xff]
  %v4631 = vld [vmem:[%s2 + $0x40] sm:$0xff]
  %v4632 = vld [vmem:[%s2 + $0x48] sm:$0xff]
  %v4633 = vld [vmem:[%s2 + $0x50] sm:$0xff]
  %v4634 = vld [vmem:[%s2 + $0x58] sm:$0xff]
  %v4635 = vld [vmem:[%s2 + $0x60] sm:$0xff]
  %v4636 = vld [vmem:[%s2 + $0x68] sm:$0xff]
  %v4637 = vld [vmem:[%s2 + $0x70] sm:$0xff]
  %v4638 = vld [vmem:[%s2 + $0x78] sm:$0xff]
  %v4639 = vld [vmem:[%s2 + $0x80] sm:$0xff]
  %v4640 = vld [vmem:[%s2 + $0x88] sm:$0xff]
  %v4641 = vld [vmem:[%s2 + $0x90] sm:$0xff]
  %v4642 = vld [vmem:[%s2 + $0x98] sm:$0xff]
  %v4643 = vld [vmem:[%s2 + $0xa0] sm:$0xff]
  %v4644 = vld [vmem:[%s2 + $0xa8] sm:$0xff]
  %v4645 = vld [vmem:[%s2 + $0xb0] sm:$0xff]
  %v4646 = vld [vmem:[%s2 + $0xb8] sm:$0xff]
  %v4647 = vld [vmem:[%s2 + $0xc0] sm:$0xff]
  %v4648 = vld [vmem:[%s2 + $0xc8] sm:$0xff]
  %v4649 = vld [vmem:[%s2 + $0xd0] sm:$0xff]
  %v4650 = vld [vmem:[%s2 + $0xd8] sm:$0xff]
  %v4651 = vld [vmem:[%s2 + $0xe0] sm:$0xff]
  %v4652 = vld [vmem:[%s2 + $0xe8] sm:$0xff]
  %v4653 = vld [vmem:[%s2 + $0xf0] sm:$0xff]
  %v4654 = vld [vmem:[%s2 + $0xf8] sm:$0xff]
  %v4655 = vld [vmem:[%s2 + $0x100] sm:$0xff]
  %v4656 = vld [vmem:[%s2 + $0x108] sm:$0xff]
  %v4657 = vld [vmem:[%s2 + $0x110] sm:$0xff]
  %v4658 = vld [vmem:[%s2 + $0x118] sm:$0xff]
  %v4659 = vld [vmem:[%s2 + $0x120] sm:$0xff]
  %v4660 = vld [vmem:[%s2 + $0x128] sm:$0xff]
  %v4661 = vld [vmem:[%s2 + $0x130] sm:$0xff]
  %v4662 = vld [vmem:[%s2 + $0x138] sm:$0xff]
  %v4663 = vld [vmem:[%s2 + $0x140] sm:$0xff]
  %v4664 = vld [vmem:[%s2 + $0x148] sm:$0xff]
  %v4665 = vld [vmem:[%s2 + $0x150] sm:$0xff]
  %v4666 = vld [vmem:[%s2 + $0x158] sm:$0xff]
  %v4667 = vld [vmem:[%s2 + $0x160] sm:$0xff]
  %v4668 = vld [vmem:[%s2 + $0x168] sm:$0xff]
  %v4669 = vld [vmem:[%s2 + $0x170] sm:$0xff]
  %v4670 = vld [vmem:[%s2 + $0x178] sm:$0xff]
  %v4671 = vld [vmem:[%s2 + $0x180] sm:$0xff]
  %v4672 = vld [vmem:[%s2 + $0x188] sm:$0xff]
  %v4673 = vld [vmem:[%s2 + $0x190] sm:$0xff]
  %v4674 = vld [vmem:[%s2 + $0x198] sm:$0xff]
  %v4675 = vld [vmem:[%s2 + $0x1a0] sm:$0xff]
  %v4676 = vld [vmem:[%s2 + $0x1a8] sm:$0xff]
  %v4677 = vld [vmem:[%s2 + $0x1b0] sm:$0xff]
  %v4678 = vld [vmem:[%s2 + $0x1b8] sm:$0xff]
  %v4679 = vld [vmem:[%s2 + $0x1c0] sm:$0xff]
  %v4680 = vld [vmem:[%s2 + $0x1c8] sm:$0xff]
  %v4681 = vld [vmem:[%s2 + $0x1d0] sm:$0xff]
  %v4682 = vld [vmem:[%s2 + $0x1d8] sm:$0xff]
  %v4683 = vld [vmem:[%s2 + $0x1e0] sm:$0xff]
  %v4684 = vld [vmem:[%s2 + $0x1e8] sm:$0xff]
  %v4685 = vld [vmem:[%s2 + $0x1f0] sm:$0xff]
  %v4686 = vld [vmem:[%s2 + $0x1f8] sm:$0xff]
  %v4687 = vld [vmem:[%s2 + $0x200] sm:$0xff]
  %v4688 = vld [vmem:[%s2 + $0x208] sm:$0xff]
  %v4689 = vld [vmem:[%s2 + $0x210] sm:$0xff]
  %v4690 = vld [vmem:[%s2 + $0x218] sm:$0xff]
  %v4691 = vld [vmem:[%s2 + $0x220] sm:$0xff]
  %v4692 = vld [vmem:[%s2 + $0x228] sm:$0xff]
  %v4693 = vld [vmem:[%s2 + $0x230] sm:$0xff]
  %v4694 = vld [vmem:[%s2 + $0x238] sm:$0xff]
  %v4695 = vld [vmem:[%s2 + $0x240] sm:$0xff]
  %v4696 = vld [vmem:[%s2 + $0x248] sm:$0xff]
  %v4697 = vld [vmem:[%s2 + $0x250] sm:$0xff]
  %v4698 = vld [vmem:[%s2 + $0x258] sm:$0xff]
  %v4699 = vld [vmem:[%s2 + $0x260] sm:$0xff]
  %v4700 = vld [vmem:[%s2 + $0x268] sm:$0xff]
  %v4701 = vld [vmem:[%s2 + $0x270] sm:$0xff]
  %v4702 = vld [vmem:[%s2 + $0x278] sm:$0xff]
  %v4703 = vld [vmem:[%s2 + $0x280] sm:$0xff]
  %v4704 = vld [vmem:[%s2 + $0x288] sm:$0xff]
  %v4705 = vld [vmem:[%s2 + $0x290] sm:$0xff]
  %v4706 = vld [vmem:[%s2 + $0x298] sm:$0xff]
  %v4707 = vld [vmem:[%s2 + $0x2a0] sm:$0xff]
  %v4708 = vld [vmem:[%s2 + $0x2a8] sm:$0xff]
  %v4709 = vld [vmem:[%s2 + $0x2b0] sm:$0xff]
  %v4710 = vld [vmem:[%s2 + $0x2b8] sm:$0xff]
  %v4711 = vld [vmem:[%s2 + $0x2c0] sm:$0xff]
  %v4712 = vld [vmem:[%s2 + $0x2c8] sm:$0xff]
  %v4713 = vld [vmem:[%s2 + $0x2d0] sm:$0xff]
  %v4714 = vld [vmem:[%s2 + $0x2d8] sm:$0xff]
  %v4715 = vld [vmem:[%s2 + $0x2e0] sm:$0xff]
  %v4716 = vld [vmem:[%s2 + $0x2e8] sm:$0xff]
  %v4717 = vld [vmem:[%s2 + $0x2f0] sm:$0xff]
  %v4718 = vld [vmem:[%s2 + $0x2f8] sm:$0xff]
  %v4719 = vld [vmem:[%s2 + $0x300] sm:$0xff]
  %v4720 = vld [vmem:[%s2 + $0x308] sm:$0xff]
  %v4721 = vld [vmem:[%s2 + $0x310] sm:$0xff]
  %v4722 = vld [vmem:[%s2 + $0x318] sm:$0xff]
  %v4723 = vld [vmem:[%s2 + $0x320] sm:$0xff]
  %v4724 = vld [vmem:[%s2 + $0x328] sm:$0xff]
  %v4725 = vld [vmem:[%s2 + $0x330] sm:$0xff]
  %v4726 = vld [vmem:[%s2 + $0x338] sm:$0xff]
  %v4727 = vld [vmem:[%s2 + $0x340] sm:$0xff]
  %v4728 = vld [vmem:[%s2 + $0x348] sm:$0xff]
  %v4729 = vld [vmem:[%s2 + $0x350] sm:$0xff]
  %v4730 = vld [vmem:[%s2 + $0x358] sm:$0xff]
  %v4731 = vld [vmem:[%s2 + $0x360] sm:$0xff]
  %v4732 = vld [vmem:[%s2 + $0x368] sm:$0xff]
  %v4733 = vld [vmem:[%s2 + $0x370] sm:$0xff]
  %v4734 = vld [vmem:[%s2 + $0x378] sm:$0xff]
  %v4735 = vld [vmem:[%s2 + $0x380] sm:$0xff]
  %v4736 = vld [vmem:[%s2 + $0x388] sm:$0xff]
  %v4737 = vld [vmem:[%s2 + $0x390] sm:$0xff]
  %v4738 = vld [vmem:[%s2 + $0x398] sm:$0xff]
  %v4739 = vld [vmem:[%s2 + $0x3a0] sm:$0xff]
  %v4740 = vld [vmem:[%s2 + $0x3a8] sm:$0xff]
  %v4741 = vld [vmem:[%s2 + $0x3b0] sm:$0xff]
  %v4742 = vld [vmem:[%s2 + $0x3b8] sm:$0xff]
  %v4743 = vld [vmem:[%s2 + $0x3c0] sm:$0xff]
  %v4744 = vld [vmem:[%s2 + $0x3c8] sm:$0xff]
  %v4745 = vld [vmem:[%s2 + $0x3d0] sm:$0xff]
  %v4746 = vld [vmem:[%s2 + $0x3d8] sm:$0xff]
  %v4747 = vld [vmem:[%s2 + $0x3e0] sm:$0xff]
  %v4748 = vld [vmem:[%s2 + $0x3e8] sm:$0xff]
  %v4749 = vld [vmem:[%s2 + $0x3f0] sm:$0xff]
  %v4750 = vld [vmem:[%s2 + $0x3f8] sm:$0xff]
  %v4751 = vld [vmem:[%s2 + $0x400] sm:$0xff]
  %v4752 = vld [vmem:[%s2 + $0x408] sm:$0xff]
  %v4753 = vld [vmem:[%s2 + $0x410] sm:$0xff]
  %v4754 = vld [vmem:[%s2 + $0x418] sm:$0xff]
  %v4755 = vld [vmem:[%s2 + $0x420] sm:$0xff]
  %v4756 = vld [vmem:[%s2 + $0x428] sm:$0xff]
  %v4757 = vld [vmem:[%s2 + $0x430] sm:$0xff]
  %v4758 = vld [vmem:[%s2 + $0x438] sm:$0xff]
  %v4759 = vld [vmem:[%s2 + $0x440] sm:$0xff]
  %v4760 = vld [vmem:[%s2 + $0x448] sm:$0xff]
  %v4761 = vld [vmem:[%s2 + $0x450] sm:$0xff]
  %v4762 = vld [vmem:[%s2 + $0x458] sm:$0xff]
  %v4763 = vld [vmem:[%s2 + $0x460] sm:$0xff]
  %v4764 = vld [vmem:[%s2 + $0x468] sm:$0xff]
  %v4765 = vld [vmem:[%s2 + $0x470] sm:$0xff]
  %v4766 = vld [vmem:[%s2 + $0x478] sm:$0xff]
  %v4767 = vld [vmem:[%s2 + $0x480] sm:$0xff]
  %v4768 = vld [vmem:[%s2 + $0x488] sm:$0xff]
  %v4769 = vld [vmem:[%s2 + $0x490] sm:$0xff]
  %v4770 = vld [vmem:[%s2 + $0x498] sm:$0xff]
  %v4771 = vld [vmem:[%s2 + $0x4a0] sm:$0xff]
  %v4772 = vld [vmem:[%s2 + $0x4a8] sm:$0xff]
  %v4773 = vld [vmem:[%s2 + $0x4b0] sm:$0xff]
  %v4774 = vld [vmem:[%s2 + $0x4b8] sm:$0xff]
  %v4775 = vld [vmem:[%s2 + $0x4c0] sm:$0xff]
  %v4776 = vld [vmem:[%s2 + $0x4c8] sm:$0xff]
  %v4777 = vld [vmem:[%s2 + $0x4d0] sm:$0xff]
  %v4778 = vld [vmem:[%s2 + $0x4d8] sm:$0xff]
  %v4779 = vld [vmem:[%s2 + $0x4e0] sm:$0xff]
  %v4780 = vld [vmem:[%s2 + $0x4e8] sm:$0xff]
  %v4781 = vld [vmem:[%s2 + $0x4f0] sm:$0xff]
  %v4782 = vld [vmem:[%s2 + $0x4f8] sm:$0xff]
  %v4783 = vld [vmem:[%s2 + $0x500] sm:$0xff]
  %v4784 = vld [vmem:[%s2 + $0x508] sm:$0xff]
  %v4785 = vld [vmem:[%s2 + $0x510] sm:$0xff]
  %v4786 = vld [vmem:[%s2 + $0x518] sm:$0xff]
  %v4787 = vld [vmem:[%s2 + $0x520] sm:$0xff]
  %v4788 = vld [vmem:[%s2 + $0x528] sm:$0xff]
  %v4789 = vld [vmem:[%s2 + $0x530] sm:$0xff]
  %v4790 = vld [vmem:[%s2 + $0x538] sm:$0xff]
  %v4791 = vld [vmem:[%s2 + $0x540] sm:$0xff]
  %v4792 = vld [vmem:[%s2 + $0x548] sm:$0xff]
  %v4793 = vld [vmem:[%s2 + $0x550] sm:$0xff]
  %v4794 = vld [vmem:[%s2 + $0x558] sm:$0xff]
  %v4795 = vld [vmem:[%s2 + $0x560] sm:$0xff]
  %v4796 = vld [vmem:[%s2 + $0x568] sm:$0xff]
  %v4797 = vld [vmem:[%s2 + $0x570] sm:$0xff]
  %v4798 = vld [vmem:[%s2 + $0x578] sm:$0xff]
  %v4799 = vld [vmem:[%s2 + $0x580] sm:$0xff]
  %v4800 = vld [vmem:[%s2 + $0x588] sm:$0xff]
  %v4801 = vld [vmem:[%s2 + $0x590] sm:$0xff]
  %v4802 = vld [vmem:[%s2 + $0x598] sm:$0xff]
  %v4803 = vld [vmem:[%s2 + $0x5a0] sm:$0xff]
  %v4804 = vld [vmem:[%s2 + $0x5a8] sm:$0xff]
  %v4805 = vld [vmem:[%s2 + $0x5b0] sm:$0xff]
  %v4806 = vld [vmem:[%s2 + $0x5b8] sm:$0xff]
  %v4807 = vld [vmem:[%s2 + $0x5c0] sm:$0xff]
  %v4808 = vld [vmem:[%s2 + $0x5c8] sm:$0xff]
  %v4809 = vld [vmem:[%s2 + $0x5d0] sm:$0xff]
  %v4810 = vld [vmem:[%s2 + $0x5d8] sm:$0xff]
  %v4811 = vld [vmem:[%s2 + $0x5e0] sm:$0xff]
  %v4812 = vld [vmem:[%s2 + $0x5e8] sm:$0xff]
  %v4813 = vld [vmem:[%s2 + $0x5f0] sm:$0xff]
  %v4814 = vld [vmem:[%s2 + $0x5f8] sm:$0xff]
  %v4815 = vld [vmem:[%s2 + $0x600] sm:$0xff]
  %v4816 = vld [vmem:[%s2 + $0x608] sm:$0xff]
  %v4817 = vld [vmem:[%s2 + $0x610] sm:$0xff]
  %v4818 = vld [vmem:[%s2 + $0x618] sm:$0xff]
  %v4819 = vld [vmem:[%s2 + $0x620] sm:$0xff]
  %v4820 = vld [vmem:[%s2 + $0x628] sm:$0xff]
  %v4821 = vld [vmem:[%s2 + $0x630] sm:$0xff]
  %v4822 = vld [vmem:[%s2 + $0x638] sm:$0xff]
  %v4823 = vld [vmem:[%s2 + $0x640] sm:$0xff]
  %v4824 = vld [vmem:[%s2 + $0x648] sm:$0xff]
  %v4825 = vld [vmem:[%s2 + $0x650] sm:$0xff]
  %v4826 = vld [vmem:[%s2 + $0x658] sm:$0xff]
  %v4827 = vld [vmem:[%s2 + $0x660] sm:$0xff]
  %v4828 = vld [vmem:[%s2 + $0x668] sm:$0xff]
  %v4829 = vld [vmem:[%s2 + $0x670] sm:$0xff]
  %v4830 = vld [vmem:[%s2 + $0x678] sm:$0xff]
  %v4831 = vld [vmem:[%s2 + $0x680] sm:$0xff]
  %v4832 = vld [vmem:[%s2 + $0x688] sm:$0xff]
  %v4833 = vld [vmem:[%s2 + $0x690] sm:$0xff]
  %v4834 = vld [vmem:[%s2 + $0x698] sm:$0xff]
  %v4835 = vld [vmem:[%s2 + $0x6a0] sm:$0xff]
  %v4836 = vld [vmem:[%s2 + $0x6a8] sm:$0xff]
  %v4837 = vld [vmem:[%s2 + $0x6b0] sm:$0xff]
  %v4838 = vld [vmem:[%s2 + $0x6b8] sm:$0xff]
  %v4839 = vld [vmem:[%s2 + $0x6c0] sm:$0xff]
  %v4840 = vld [vmem:[%s2 + $0x6c8] sm:$0xff]
  %v4841 = vld [vmem:[%s2 + $0x6d0] sm:$0xff]
  %v4842 = vld [vmem:[%s2 + $0x6d8] sm:$0xff]
  %v4843 = vld [vmem:[%s2 + $0x6e0] sm:$0xff]
  %v4844 = vld [vmem:[%s2 + $0x6e8] sm:$0xff]
  %v4845 = vld [vmem:[%s2 + $0x6f0] sm:$0xff]
  %v4846 = vld [vmem:[%s2 + $0x6f8] sm:$0xff]
  %v4847 = vld [vmem:[%s2 + $0x700] sm:$0xff]
  %v4848 = vld [vmem:[%s2 + $0x708] sm:$0xff]
  %v4849 = vld [vmem:[%s2 + $0x710] sm:$0xff]
  %v4850 = vld [vmem:[%s2 + $0x718] sm:$0xff]
  %v4851 = vld [vmem:[%s2 + $0x720] sm:$0xff]
  %v4852 = vld [vmem:[%s2 + $0x728] sm:$0xff]
  %v4853 = vld [vmem:[%s2 + $0x730] sm:$0xff]
  %v4854 = vld [vmem:[%s2 + $0x738] sm:$0xff]
  %v4855 = vld [vmem:[%s2 + $0x740] sm:$0xff]
  %v4856 = vld [vmem:[%s2 + $0x748] sm:$0xff]
  %v4857 = vld [vmem:[%s2 + $0x750] sm:$0xff]
  %v4858 = vld [vmem:[%s2 + $0x758] sm:$0xff]
  %v4859 = vld [vmem:[%s2 + $0x760] sm:$0xff]
  %v4860 = vld [vmem:[%s2 + $0x768] sm:$0xff]
  %v4861 = vld [vmem:[%s2 + $0x770] sm:$0xff]
  %v4862 = vld [vmem:[%s2 + $0x778] sm:$0xff]
  %v4863 = vld [vmem:[%s2 + $0x780] sm:$0xff]
  %v4864 = vld [vmem:[%s2 + $0x788] sm:$0xff]
  %v4865 = vld [vmem:[%s2 + $0x790] sm:$0xff]
  %v4866 = vld [vmem:[%s2 + $0x798] sm:$0xff]
  %v4867 = vld [vmem:[%s2 + $0x7a0] sm:$0xff]
  %v4868 = vld [vmem:[%s2 + $0x7a8] sm:$0xff]
  %v4869 = vld [vmem:[%s2 + $0x7b0] sm:$0xff]
  %v4870 = vld [vmem:[%s2 + $0x7b8] sm:$0xff]
  %v4871 = vld [vmem:[%s2 + $0x7c0] sm:$0xff]
  %v4872 = vld [vmem:[%s2 + $0x7c8] sm:$0xff]
  %v4873 = vld [vmem:[%s2 + $0x7d0] sm:$0xff]
  %v4874 = vld [vmem:[%s2 + $0x7d8] sm:$0xff]
  %v4875 = vld [vmem:[%s2 + $0x7e0] sm:$0xff]
  %v4876 = vld [vmem:[%s2 + $0x7e8] sm:$0xff]
  %v4877 = vld [vmem:[%s2 + $0x7f0] sm:$0xff]
  %v4878 = vld [vmem:[%s2 + $0x7f8] sm:$0xff]
  %v4879 = vld [vmem:[%s2 + $0x800] sm:$0xff]
  %v4880 = vld [vmem:[%s2 + $0x808] sm:$0xff]
  %v4881 = vld [vmem:[%s2 + $0x810] sm:$0xff]
  %v4882 = vld [vmem:[%s2 + $0x818] sm:$0xff]
  %v4883 = vld [vmem:[%s2 + $0x820] sm:$0xff]
  %v4884 = vld [vmem:[%s2 + $0x828] sm:$0xff]
  %v4885 = vld [vmem:[%s2 + $0x830] sm:$0xff]
  %v4886 = vld [vmem:[%s2 + $0x838] sm:$0xff]
  %v4887 = vld [vmem:[%s2 + $0x840] sm:$0xff]
  %v4888 = vld [vmem:[%s2 + $0x848] sm:$0xff]
  %v4889 = vld [vmem:[%s2 + $0x850] sm:$0xff]
  %v4890 = vld [vmem:[%s2 + $0x858] sm:$0xff]
  %v4891 = vld [vmem:[%s2 + $0x860] sm:$0xff]
  %v4892 = vld [vmem:[%s2 + $0x868] sm:$0xff]
  %v4893 = vld [vmem:[%s2 + $0x870] sm:$0xff]
  %v4894 = vld [vmem:[%s2 + $0x878] sm:$0xff]
  %v4895 = vld [vmem:[%s2 + $0x880] sm:$0xff]
  %v4896 = vld [vmem:[%s2 + $0x888] sm:$0xff]
  %v4897 = vld [vmem:[%s2 + $0x890] sm:$0xff]
  %v4898 = vld [vmem:[%s2 + $0x898] sm:$0xff]
  %v4899 = vld [vmem:[%s2 + $0x8a0] sm:$0xff]
  %v4900 = vld [vmem:[%s2 + $0x8a8] sm:$0xff]
  %v4901 = vld [vmem:[%s2 + $0x8b0] sm:$0xff]
  %v4902 = vld [vmem:[%s2 + $0x8b8] sm:$0xff]
  %v4903 = vld [vmem:[%s2 + $0x8c0] sm:$0xff]
  %v4904 = vld [vmem:[%s2 + $0x8c8] sm:$0xff]
  %v4905 = vld [vmem:[%s2 + $0x8d0] sm:$0xff]
  %v4906 = vld [vmem:[%s2 + $0x8d8] sm:$0xff]
  %v4907 = vld [vmem:[%s2 + $0x8e0] sm:$0xff]
  %v4908 = vld [vmem:[%s2 + $0x8e8] sm:$0xff]
  %v4909 = vld [vmem:[%s2 + $0x8f0] sm:$0xff]
  %v4910 = vld [vmem:[%s2 + $0x8f8] sm:$0xff]
  %v4911 = vmul.f32 %v2319, %v4335
  %v4912 = vmul.f32 %v2320, %v4336
  %v4913 = vmul.f32 %v2321, %v4337
  %v4914 = vmul.f32 %v2322, %v4338
  %v4915 = vmul.f32 %v2323, %v4339
  %v4916 = vmul.f32 %v2324, %v4340
  %v4917 = vmul.f32 %v2325, %v4341
  %v4918 = vmul.f32 %v2326, %v4342
  %v4919 = vmul.f32 %v2327, %v4343
  %v4920 = vmul.f32 %v2328, %v4344
  %v4921 = vmul.f32 %v2329, %v4345
  %v4922 = vmul.f32 %v2330, %v4346
  %v4923 = vmul.f32 %v2331, %v4347
  %v4924 = vmul.f32 %v2332, %v4348
  %v4925 = vmul.f32 %v2333, %v4349
  %v4926 = vmul.f32 %v2334, %v4350
  %v4927 = vmul.f32 %v2335, %v4351
  %v4928 = vmul.f32 %v2336, %v4352
  %v4929 = vmul.f32 %v2337, %v4353
  %v4930 = vmul.f32 %v2338, %v4354
  %v4931 = vmul.f32 %v2339, %v4355
  %v4932 = vmul.f32 %v2340, %v4356
  %v4933 = vmul.f32 %v2341, %v4357
  %v4934 = vmul.f32 %v2342, %v4358
  %v4935 = vmul.f32 %v2343, %v4359
  %v4936 = vmul.f32 %v2344, %v4360
  %v4937 = vmul.f32 %v2345, %v4361
  %v4938 = vmul.f32 %v2346, %v4362
  %v4939 = vmul.f32 %v2347, %v4363
  %v4940 = vmul.f32 %v2348, %v4364
  %v4941 = vmul.f32 %v2349, %v4365
  %v4942 = vmul.f32 %v2350, %v4366
  %v4943 = vmul.f32 %v2351, %v4367
  %v4944 = vmul.f32 %v2352, %v4368
  %v4945 = vmul.f32 %v2353, %v4369
  %v4946 = vmul.f32 %v2354, %v4370
  %v4947 = vmul.f32 %v2355, %v4371
  %v4948 = vmul.f32 %v2356, %v4372
  %v4949 = vmul.f32 %v2357, %v4373
  %v4950 = vmul.f32 %v2358, %v4374
  %v4951 = vmul.f32 %v2359, %v4375
  %v4952 = vmul.f32 %v2360, %v4376
  %v4953 = vmul.f32 %v2361, %v4377
  %v4954 = vmul.f32 %v2362, %v4378
  %v4955 = vmul.f32 %v2363, %v4379
  %v4956 = vmul.f32 %v2364, %v4380
  %v4957 = vmul.f32 %v2365, %v4381
  %v4958 = vmul.f32 %v2366, %v4382
  %v4959 = vmul.f32 %v2367, %v4383
  %v4960 = vmul.f32 %v2368, %v4384
  %v4961 = vmul.f32 %v2369, %v4385
  %v4962 = vmul.f32 %v2370, %v4386
  %v4963 = vmul.f32 %v2371, %v4387
  %v4964 = vmul.f32 %v2372, %v4388
  %v4965 = vmul.f32 %v2373, %v4389
  %v4966 = vmul.f32 %v2374, %v4390
  %v4967 = vmul.f32 %v2375, %v4391
  %v4968 = vmul.f32 %v2376, %v4392
  %v4969 = vmul.f32 %v2377, %v4393
  %v4970 = vmul.f32 %v2378, %v4394
  %v4971 = vmul.f32 %v2379, %v4395
  %v4972 = vmul.f32 %v2380, %v4396
  %v4973 = vmul.f32 %v2381, %v4397
  %v4974 = vmul.f32 %v2382, %v4398
  %v4975 = vmul.f32 %v2383, %v4399
  %v4976 = vmul.f32 %v2384, %v4400
  %v4977 = vmul.f32 %v2385, %v4401
  %v4978 = vmul.f32 %v2386, %v4402
  %v4979 = vmul.f32 %v2387, %v4403
  %v4980 = vmul.f32 %v2388, %v4404
  %v4981 = vmul.f32 %v2389, %v4405
  %v4982 = vmul.f32 %v2390, %v4406
  %v4983 = vmul.f32 %v2391, %v4407
  %v4984 = vmul.f32 %v2392, %v4408
  %v4985 = vmul.f32 %v2393, %v4409
  %v4986 = vmul.f32 %v2394, %v4410
  %v4987 = vmul.f32 %v2395, %v4411
  %v4988 = vmul.f32 %v2396, %v4412
  %v4989 = vmul.f32 %v2397, %v4413
  %v4990 = vmul.f32 %v2398, %v4414
  %v4991 = vmul.f32 %v2399, %v4415
  %v4992 = vmul.f32 %v2400, %v4416
  %v4993 = vmul.f32 %v2401, %v4417
  %v4994 = vmul.f32 %v2402, %v4418
  %v4995 = vmul.f32 %v2403, %v4419
  %v4996 = vmul.f32 %v2404, %v4420
  %v4997 = vmul.f32 %v2405, %v4421
  %v4998 = vmul.f32 %v2406, %v4422
  %v4999 = vmul.f32 %v2407, %v4423
  %v5000 = vmul.f32 %v2408, %v4424
  %v5001 = vmul.f32 %v2409, %v4425
  %v5002 = vmul.f32 %v2410, %v4426
  %v5003 = vmul.f32 %v2411, %v4427
  %v5004 = vmul.f32 %v2412, %v4428
  %v5005 = vmul.f32 %v2413, %v4429
  %v5006 = vmul.f32 %v2414, %v4430
  %v5007 = vmul.f32 %v2415, %v4431
  %v5008 = vmul.f32 %v2416, %v4432
  %v5009 = vmul.f32 %v2417, %v4433
  %v5010 = vmul.f32 %v2418, %v4434
  %v5011 = vmul.f32 %v2419, %v4435
  %v5012 = vmul.f32 %v2420, %v4436
  %v5013 = vmul.f32 %v2421, %v4437
  %v5014 = vmul.f32 %v2422, %v4438
  %v5015 = vmul.f32 %v2423, %v4439
  %v5016 = vmul.f32 %v2424, %v4440
  %v5017 = vmul.f32 %v2425, %v4441
  %v5018 = vmul.f32 %v2426, %v4442
  %v5019 = vmul.f32 %v2427, %v4443
  %v5020 = vmul.f32 %v2428, %v4444
  %v5021 = vmul.f32 %v2429, %v4445
  %v5022 = vmul.f32 %v2430, %v4446
  %v5023 = vmul.f32 %v2431, %v4447
  %v5024 = vmul.f32 %v2432, %v4448
  %v5025 = vmul.f32 %v2433, %v4449
  %v5026 = vmul.f32 %v2434, %v4450
  %v5027 = vmul.f32 %v2435, %v4451
  %v5028 = vmul.f32 %v2436, %v4452
  %v5029 = vmul.f32 %v2437, %v4453
  %v5030 = vmul.f32 %v2438, %v4454
  %v5031 = vmul.f32 %v2439, %v4455
  %v5032 = vmul.f32 %v2440, %v4456
  %v5033 = vmul.f32 %v2441, %v4457
  %v5034 = vmul.f32 %v2442, %v4458
  %v5035 = vmul.f32 %v2443, %v4459
  %v5036 = vmul.f32 %v2444, %v4460
  %v5037 = vmul.f32 %v2445, %v4461
  %v5038 = vmul.f32 %v2446, %v4462
  %v5039 = vmul.f32 %v2447, %v4463
  %v5040 = vmul.f32 %v2448, %v4464
  %v5041 = vmul.f32 %v2449, %v4465
  %v5042 = vmul.f32 %v2450, %v4466
  %v5043 = vmul.f32 %v2451, %v4467
  %v5044 = vmul.f32 %v2452, %v4468
  %v5045 = vmul.f32 %v2453, %v4469
  %v5046 = vmul.f32 %v2454, %v4470
  %v5047 = vmul.f32 %v2455, %v4471
  %v5048 = vmul.f32 %v2456, %v4472
  %v5049 = vmul.f32 %v2457, %v4473
  %v5050 = vmul.f32 %v2458, %v4474
  %v5051 = vmul.f32 %v2459, %v4475
  %v5052 = vmul.f32 %v2460, %v4476
  %v5053 = vmul.f32 %v2461, %v4477
  %v5054 = vmul.f32 %v2462, %v4478
  %v5055 = vmul.f32 %v2463, %v4479
  %v5056 = vmul.f32 %v2464, %v4480
  %v5057 = vmul.f32 %v2465, %v4481
  %v5058 = vmul.f32 %v2466, %v4482
  %v5059 = vmul.f32 %v2467, %v4483
  %v5060 = vmul.f32 %v2468, %v4484
  %v5061 = vmul.f32 %v2469, %v4485
  %v5062 = vmul.f32 %v2470, %v4486
  %v5063 = vmul.f32 %v2471, %v4487
  %v5064 = vmul.f32 %v2472, %v4488
  %v5065 = vmul.f32 %v2473, %v4489
  %v5066 = vmul.f32 %v2474, %v4490
  %v5067 = vmul.f32 %v2475, %v4491
  %v5068 = vmul.f32 %v2476, %v4492
  %v5069 = vmul.f32 %v2477, %v4493
  %v5070 = vmul.f32 %v2478, %v4494
  %v5071 = vmul.f32 %v2479, %v4495
  %v5072 = vmul.f32 %v2480, %v4496
  %v5073 = vmul.f32 %v2481, %v4497
  %v5074 = vmul.f32 %v2482, %v4498
  %v5075 = vmul.f32 %v2483, %v4499
  %v5076 = vmul.f32 %v2484, %v4500
  %v5077 = vmul.f32 %v2485, %v4501
  %v5078 = vmul.f32 %v2486, %v4502
  %v5079 = vmul.f32 %v2487, %v4503
  %v5080 = vmul.f32 %v2488, %v4504
  %v5081 = vmul.f32 %v2489, %v4505
  %v5082 = vmul.f32 %v2490, %v4506
  %v5083 = vmul.f32 %v2491, %v4507
  %v5084 = vmul.f32 %v2492, %v4508
  %v5085 = vmul.f32 %v2493, %v4509
  %v5086 = vmul.f32 %v2494, %v4510
  %v5087 = vmul.f32 %v2495, %v4511
  %v5088 = vmul.f32 %v2496, %v4512
  %v5089 = vmul.f32 %v2497, %v4513
  %v5090 = vmul.f32 %v2498, %v4514
  %v5091 = vmul.f32 %v2499, %v4515
  %v5092 = vmul.f32 %v2500, %v4516
  %v5093 = vmul.f32 %v2501, %v4517
  %v5094 = vmul.f32 %v2502, %v4518
  %v5095 = vmul.f32 %v2503, %v4519
  %v5096 = vmul.f32 %v2504, %v4520
  %v5097 = vmul.f32 %v2505, %v4521
  %v5098 = vmul.f32 %v2506, %v4522
  %v5099 = vmul.f32 %v2507, %v4523
  %v5100 = vmul.f32 %v2508, %v4524
  %v5101 = vmul.f32 %v2509, %v4525
  %v5102 = vmul.f32 %v2510, %v4526
  %v5103 = vmul.f32 %v2511, %v4527
  %v5104 = vmul.f32 %v2512, %v4528
  %v5105 = vmul.f32 %v2513, %v4529
  %v5106 = vmul.f32 %v2514, %v4530
  %v5107 = vmul.f32 %v2515, %v4531
  %v5108 = vmul.f32 %v2516, %v4532
  %v5109 = vmul.f32 %v2517, %v4533
  %v5110 = vmul.f32 %v2518, %v4534
  %v5111 = vmul.f32 %v2519, %v4535
  %v5112 = vmul.f32 %v2520, %v4536
  %v5113 = vmul.f32 %v2521, %v4537
  %v5114 = vmul.f32 %v2522, %v4538
  %v5115 = vmul.f32 %v2523, %v4539
  %v5116 = vmul.f32 %v2524, %v4540
  %v5117 = vmul.f32 %v2525, %v4541
  %v5118 = vmul.f32 %v2526, %v4542
  %v5119 = vmul.f32 %v2527, %v4543
  %v5120 = vmul.f32 %v2528, %v4544
  %v5121 = vmul.f32 %v2529, %v4545
  %v5122 = vmul.f32 %v2530, %v4546
  %v5123 = vmul.f32 %v2531, %v4547
  %v5124 = vmul.f32 %v2532, %v4548
  %v5125 = vmul.f32 %v2533, %v4549
  %v5126 = vmul.f32 %v2534, %v4550
  %v5127 = vmul.f32 %v2535, %v4551
  %v5128 = vmul.f32 %v2536, %v4552
  %v5129 = vmul.f32 %v2537, %v4553
  %v5130 = vmul.f32 %v2538, %v4554
  %v5131 = vmul.f32 %v2539, %v4555
  %v5132 = vmul.f32 %v2540, %v4556
  %v5133 = vmul.f32 %v2541, %v4557
  %v5134 = vmul.f32 %v2542, %v4558
  %v5135 = vmul.f32 %v2543, %v4559
  %v5136 = vmul.f32 %v2544, %v4560
  %v5137 = vmul.f32 %v2545, %v4561
  %v5138 = vmul.f32 %v2546, %v4562
  %v5139 = vmul.f32 %v2547, %v4563
  %v5140 = vmul.f32 %v2548, %v4564
  %v5141 = vmul.f32 %v2549, %v4565
  %v5142 = vmul.f32 %v2550, %v4566
  %v5143 = vmul.f32 %v2551, %v4567
  %v5144 = vmul.f32 %v2552, %v4568
  %v5145 = vmul.f32 %v2553, %v4569
  %v5146 = vmul.f32 %v2554, %v4570
  %v5147 = vmul.f32 %v2555, %v4571
  %v5148 = vmul.f32 %v2556, %v4572
  %v5149 = vmul.f32 %v2557, %v4573
  %v5150 = vmul.f32 %v2558, %v4574
  %v5151 = vmul.f32 %v2559, %v4575
  %v5152 = vmul.f32 %v2560, %v4576
  %v5153 = vmul.f32 %v2561, %v4577
  %v5154 = vmul.f32 %v2562, %v4578
  %v5155 = vmul.f32 %v2563, %v4579
  %v5156 = vmul.f32 %v2564, %v4580
  %v5157 = vmul.f32 %v2565, %v4581
  %v5158 = vmul.f32 %v2566, %v4582
  %v5159 = vmul.f32 %v2567, %v4583
  %v5160 = vmul.f32 %v2568, %v4584
  %v5161 = vmul.f32 %v2569, %v4585
  %v5162 = vmul.f32 %v2570, %v4586
  %v5163 = vmul.f32 %v2571, %v4587
  %v5164 = vmul.f32 %v2572, %v4588
  %v5165 = vmul.f32 %v2573, %v4589
  %v5166 = vmul.f32 %v2574, %v4590
  %v5167 = vmul.f32 %v2575, %v4591
  %v5168 = vmul.f32 %v2576, %v4592
  %v5169 = vmul.f32 %v2577, %v4593
  %v5170 = vmul.f32 %v2578, %v4594
  %v5171 = vmul.f32 %v2579, %v4595
  %v5172 = vmul.f32 %v2580, %v4596
  %v5173 = vmul.f32 %v2581, %v4597
  %v5174 = vmul.f32 %v2582, %v4598
  %v5175 = vmul.f32 %v2583, %v4599
  %v5176 = vmul.f32 %v2584, %v4600
  %v5177 = vmul.f32 %v2585, %v4601
  %v5178 = vmul.f32 %v2586, %v4602
  %v5179 = vmul.f32 %v2587, %v4603
  %v5180 = vmul.f32 %v2588, %v4604
  %v5181 = vmul.f32 %v2589, %v4605
  %v5182 = vmul.f32 %v2590, %v4606
  %v5183 = vmul.f32 %v2591, %v4607
  %v5184 = vmul.f32 %v2592, %v4608
  %v5185 = vmul.f32 %v2593, %v4609
  %v5186 = vmul.f32 %v2594, %v4610
  %v5187 = vmul.f32 %v2595, %v4611
  %v5188 = vmul.f32 %v2596, %v4612
  %v5189 = vmul.f32 %v2597, %v4613
  %v5190 = vmul.f32 %v2598, %v4614
  %v5191 = vmul.f32 %v2599, %v4615
  %v5192 = vmul.f32 %v2600, %v4616
  %v5193 = vmul.f32 %v2601, %v4617
  %v5194 = vmul.f32 %v2602, %v4618
  %v5195 = vmul.f32 %v2603, %v4619
  %v5196 = vmul.f32 %v2604, %v4620
  %v5197 = vmul.f32 %v2605, %v4621
  %v5198 = vmul.f32 %v2606, %v4622
  %v5199 = vsub.f32 %v4623, %v4911
  %v5200 = vsub.f32 %v4624, %v4912
  %v5201 = vsub.f32 %v4625, %v4913
  %v5202 = vsub.f32 %v4626, %v4914
  %v5203 = vsub.f32 %v4627, %v4915
  %v5204 = vsub.f32 %v4628, %v4916
  %v5205 = vsub.f32 %v4629, %v4917
  %v5206 = vsub.f32 %v4630, %v4918
  %v5207 = vsub.f32 %v4631, %v4919
  %v5208 = vsub.f32 %v4632, %v4920
  %v5209 = vsub.f32 %v4633, %v4921
  %v5210 = vsub.f32 %v4634, %v4922
  %v5211 = vsub.f32 %v4635, %v4923
  %v5212 = vsub.f32 %v4636, %v4924
  %v5213 = vsub.f32 %v4637, %v4925
  %v5214 = vsub.f32 %v4638, %v4926
  %v5215 = vsub.f32 %v4639, %v4927
  %v5216 = vsub.f32 %v4640, %v4928
  %v5217 = vsub.f32 %v4641, %v4929
  %v5218 = vsub.f32 %v4642, %v4930
  %v5219 = vsub.f32 %v4643, %v4931
  %v5220 = vsub.f32 %v4644, %v4932
  %v5221 = vsub.f32 %v4645, %v4933
  %v5222 = vsub.f32 %v4646, %v4934
  %v5223 = vsub.f32 %v4647, %v4935
  %v5224 = vsub.f32 %v4648, %v4936
  %v5225 = vsub.f32 %v4649, %v4937
  %v5226 = vsub.f32 %v4650, %v4938
  %v5227 = vsub.f32 %v4651, %v4939
  %v5228 = vsub.f32 %v4652, %v4940
  %v5229 = vsub.f32 %v4653, %v4941
  %v5230 = vsub.f32 %v4654, %v4942
  %v5231 = vsub.f32 %v4655, %v4943
  %v5232 = vsub.f32 %v4656, %v4944
  %v5233 = vsub.f32 %v4657, %v4945
  %v5234 = vsub.f32 %v4658, %v4946
  %v5235 = vsub.f32 %v4659, %v4947
  %v5236 = vsub.f32 %v4660, %v4948
  %v5237 = vsub.f32 %v4661, %v4949
  %v5238 = vsub.f32 %v4662, %v4950
  %v5239 = vsub.f32 %v4663, %v4951
  %v5240 = vsub.f32 %v4664, %v4952
  %v5241 = vsub.f32 %v4665, %v4953
  %v5242 = vsub.f32 %v4666, %v4954
  %v5243 = vsub.f32 %v4667, %v4955
  %v5244 = vsub.f32 %v4668, %v4956
  %v5245 = vsub.f32 %v4669, %v4957
  %v5246 = vsub.f32 %v4670, %v4958
  %v5247 = vsub.f32 %v4671, %v4959
  %v5248 = vsub.f32 %v4672, %v4960
  %v5249 = vsub.f32 %v4673, %v4961
  %v5250 = vsub.f32 %v4674, %v4962
  %v5251 = vsub.f32 %v4675, %v4963
  %v5252 = vsub.f32 %v4676, %v4964
  %v5253 = vsub.f32 %v4677, %v4965
  %v5254 = vsub.f32 %v4678, %v4966
  %v5255 = vsub.f32 %v4679, %v4967
  %v5256 = vsub.f32 %v4680, %v4968
  %v5257 = vsub.f32 %v4681, %v4969
  %v5258 = vsub.f32 %v4682, %v4970
  %v5259 = vsub.f32 %v4683, %v4971
  %v5260 = vsub.f32 %v4684, %v4972
  %v5261 = vsub.f32 %v4685, %v4973
  %v5262 = vsub.f32 %v4686, %v4974
  %v5263 = vsub.f32 %v4687, %v4975
  %v5264 = vsub.f32 %v4688, %v4976
  %v5265 = vsub.f32 %v4689, %v4977
  %v5266 = vsub.f32 %v4690, %v4978
  %v5267 = vsub.f32 %v4691, %v4979
  %v5268 = vsub.f32 %v4692, %v4980
  %v5269 = vsub.f32 %v4693, %v4981
  %v5270 = vsub.f32 %v4694, %v4982
  %v5271 = vsub.f32 %v4695, %v4983
  %v5272 = vsub.f32 %v4696, %v4984
  %v5273 = vsub.f32 %v4697, %v4985
  %v5274 = vsub.f32 %v4698, %v4986
  %v5275 = vsub.f32 %v4699, %v4987
  %v5276 = vsub.f32 %v4700, %v4988
  %v5277 = vsub.f32 %v4701, %v4989
  %v5278 = vsub.f32 %v4702, %v4990
  %v5279 = vsub.f32 %v4703, %v4991
  %v5280 = vsub.f32 %v4704, %v4992
  %v5281 = vsub.f32 %v4705, %v4993
  %v5282 = vsub.f32 %v4706, %v4994
  %v5283 = vsub.f32 %v4707, %v4995
  %v5284 = vsub.f32 %v4708, %v4996
  %v5285 = vsub.f32 %v4709, %v4997
  %v5286 = vsub.f32 %v4710, %v4998
  %v5287 = vsub.f32 %v4711, %v4999
  %v5288 = vsub.f32 %v4712, %v5000
  %v5289 = vsub.f32 %v4713, %v5001
  %v5290 = vsub.f32 %v4714, %v5002
  %v5291 = vsub.f32 %v4715, %v5003
  %v5292 = vsub.f32 %v4716, %v5004
  %v5293 = vsub.f32 %v4717, %v5005
  %v5294 = vsub.f32 %v4718, %v5006
  %v5295 = vsub.f32 %v4719, %v5007
  %v5296 = vsub.f32 %v4720, %v5008
  %v5297 = vsub.f32 %v4721, %v5009
  %v5298 = vsub.f32 %v4722, %v5010
  %v5299 = vsub.f32 %v4723, %v5011
  %v5300 = vsub.f32 %v4724, %v5012
  %v5301 = vsub.f32 %v4725, %v5013
  %v5302 = vsub.f32 %v4726, %v5014
  %v5303 = vsub.f32 %v4727, %v5015
  %v5304 = vsub.f32 %v4728, %v5016
  %v5305 = vsub.f32 %v4729, %v5017
  %v5306 = vsub.f32 %v4730, %v5018
  %v5307 = vsub.f32 %v4731, %v5019
  %v5308 = vsub.f32 %v4732, %v5020
  %v5309 = vsub.f32 %v4733, %v5021
  %v5310 = vsub.f32 %v4734, %v5022
  %v5311 = vsub.f32 %v4735, %v5023
  %v5312 = vsub.f32 %v4736, %v5024
  %v5313 = vsub.f32 %v4737, %v5025
  %v5314 = vsub.f32 %v4738, %v5026
  %v5315 = vsub.f32 %v4739, %v5027
  %v5316 = vsub.f32 %v4740, %v5028
  %v5317 = vsub.f32 %v4741, %v5029
  %v5318 = vsub.f32 %v4742, %v5030
  %v5319 = vsub.f32 %v4743, %v5031
  %v5320 = vsub.f32 %v4744, %v5032
  %v5321 = vsub.f32 %v4745, %v5033
  %v5322 = vsub.f32 %v4746, %v5034
  %v5323 = vsub.f32 %v4747, %v5035
  %v5324 = vsub.f32 %v4748, %v5036
  %v5325 = vsub.f32 %v4749, %v5037
  %v5326 = vsub.f32 %v4750, %v5038
  %v5327 = vsub.f32 %v4751, %v5039
  %v5328 = vsub.f32 %v4752, %v5040
  %v5329 = vsub.f32 %v4753, %v5041
  %v5330 = vsub.f32 %v4754, %v5042
  %v5331 = vsub.f32 %v4755, %v5043
  %v5332 = vsub.f32 %v4756, %v5044
  %v5333 = vsub.f32 %v4757, %v5045
  %v5334 = vsub.f32 %v4758, %v5046
  %v5335 = vsub.f32 %v4759, %v5047
  %v5336 = vsub.f32 %v4760, %v5048
  %v5337 = vsub.f32 %v4761, %v5049
  %v5338 = vsub.f32 %v4762, %v5050
  %v5339 = vsub.f32 %v4763, %v5051
  %v5340 = vsub.f32 %v4764, %v5052
  %v5341 = vsub.f32 %v4765, %v5053
  %v5342 = vsub.f32 %v4766, %v5054
  %v5343 = vsub.f32 %v4767, %v5055
  %v5344 = vsub.f32 %v4768, %v5056
  %v5345 = vsub.f32 %v4769, %v5057
  %v5346 = vsub.f32 %v4770, %v5058
  %v5347 = vsub.f32 %v4771, %v5059
  %v5348 = vsub.f32 %v4772, %v5060
  %v5349 = vsub.f32 %v4773, %v5061
  %v5350 = vsub.f32 %v4774, %v5062
  %v5351 = vsub.f32 %v4775, %v5063
  %v5352 = vsub.f32 %v4776, %v5064
  %v5353 = vsub.f32 %v4777, %v5065
  %v5354 = vsub.f32 %v4778, %v5066
  %v5355 = vsub.f32 %v4779, %v5067
  %v5356 = vsub.f32 %v4780, %v5068
  %v5357 = vsub.f32 %v4781, %v5069
  %v5358 = vsub.f32 %v4782, %v5070
  %v5359 = vsub.f32 %v4783, %v5071
  %v5360 = vsub.f32 %v4784, %v5072
  %v5361 = vsub.f32 %v4785, %v5073
  %v5362 = vsub.f32 %v4786, %v5074
  %v5363 = vsub.f32 %v4787, %v5075
  %v5364 = vsub.f32 %v4788, %v5076
  %v5365 = vsub.f32 %v4789, %v5077
  %v5366 = vsub.f32 %v4790, %v5078
  %v5367 = vsub.f32 %v4791, %v5079
  %v5368 = vsub.f32 %v4792, %v5080
  %v5369 = vsub.f32 %v4793, %v5081
  %v5370 = vsub.f32 %v4794, %v5082
  %v5371 = vsub.f32 %v4795, %v5083
  %v5372 = vsub.f32 %v4796, %v5084
  %v5373 = vsub.f32 %v4797, %v5085
  %v5374 = vsub.f32 %v4798, %v5086
  %v5375 = vsub.f32 %v4799, %v5087
  %v5376 = vsub.f32 %v4800, %v5088
  %v5377 = vsub.f32 %v4801, %v5089
  %v5378 = vsub.f32 %v4802, %v5090
  %v5379 = vsub.f32 %v4803, %v5091
  %v5380 = vsub.f32 %v4804, %v5092
  %v5381 = vsub.f32 %v4805, %v5093
  %v5382 = vsub.f32 %v4806, %v5094
  %v5383 = vsub.f32 %v4807, %v5095
  %v5384 = vsub.f32 %v4808, %v5096
  %v5385 = vsub.f32 %v4809, %v5097
  %v5386 = vsub.f32 %v4810, %v5098
  %v5387 = vsub.f32 %v4811, %v5099
  %v5388 = vsub.f32 %v4812, %v5100
  %v5389 = vsub.f32 %v4813, %v5101
  %v5390 = vsub.f32 %v4814, %v5102
  %v5391 = vsub.f32 %v4815, %v5103
  %v5392 = vsub.f32 %v4816, %v5104
  %v5393 = vsub.f32 %v4817, %v5105
  %v5394 = vsub.f32 %v4818, %v5106
  %v5395 = vsub.f32 %v4819, %v5107
  %v5396 = vsub.f32 %v4820, %v5108
  %v5397 = vsub.f32 %v4821, %v5109
  %v5398 = vsub.f32 %v4822, %v5110
  %v5399 = vsub.f32 %v4823, %v5111
  %v5400 = vsub.f32 %v4824, %v5112
  %v5401 = vsub.f32 %v4825, %v5113
  %v5402 = vsub.f32 %v4826, %v5114
  %v5403 = vsub.f32 %v4827, %v5115
  %v5404 = vsub.f32 %v4828, %v5116
  %v5405 = vsub.f32 %v4829, %v5117
  %v5406 = vsub.f32 %v4830, %v5118
  %v5407 = vsub.f32 %v4831, %v5119
  %v5408 = vsub.f32 %v4832, %v5120
  %v5409 = vsub.f32 %v4833, %v5121
  %v5410 = vsub.f32 %v4834, %v5122
  %v5411 = vsub.f32 %v4835, %v5123
  %v5412 = vsub.f32 %v4836, %v5124
  %v5413 = vsub.f32 %v4837, %v5125
  %v5414 = vsub.f32 %v4838, %v5126
  %v5415 = vsub.f32 %v4839, %v5127
  %v5416 = vsub.f32 %v4840, %v5128
  %v5417 = vsub.f32 %v4841, %v5129
  %v5418 = vsub.f32 %v4842, %v5130
  %v5419 = vsub.f32 %v4843, %v5131
  %v5420 = vsub.f32 %v4844, %v5132
  %v5421 = vsub.f32 %v4845, %v5133
  %v5422 = vsub.f32 %v4846, %v5134
  %v5423 = vsub.f32 %v4847, %v5135
  %v5424 = vsub.f32 %v4848, %v5136
  %v5425 = vsub.f32 %v4849, %v5137
  %v5426 = vsub.f32 %v4850, %v5138
  %v5427 = vsub.f32 %v4851, %v5139
  %v5428 = vsub.f32 %v4852, %v5140
  %v5429 = vsub.f32 %v4853, %v5141
  %v5430 = vsub.f32 %v4854, %v5142
  %v5431 = vsub.f32 %v4855, %v5143
  %v5432 = vsub.f32 %v4856, %v5144
  %v5433 = vsub.f32 %v4857, %v5145
  %v5434 = vsub.f32 %v4858, %v5146
  %v5435 = vsub.f32 %v4859, %v5147
  %v5436 = vsub.f32 %v4860, %v5148
  %v5437 = vsub.f32 %v4861, %v5149
  %v5438 = vsub.f32 %v4862, %v5150
  %v5439 = vsub.f32 %v4863, %v5151
  %v5440 = vsub.f32 %v4864, %v5152
  %v5441 = vsub.f32 %v4865, %v5153
  %v5442 = vsub.f32 %v4866, %v5154
  %v5443 = vsub.f32 %v4867, %v5155
  %v5444 = vsub.f32 %v4868, %v5156
  %v5445 = vsub.f32 %v4869, %v5157
  %v5446 = vsub.f32 %v4870, %v5158
  %v5447 = vsub.f32 %v4871, %v5159
  %v5448 = vsub.f32 %v4872, %v5160
  %v5449 = vsub.f32 %v4873, %v5161
  %v5450 = vsub.f32 %v4874, %v5162
  %v5451 = vsub.f32 %v4875, %v5163
  %v5452 = vsub.f32 %v4876, %v5164
  %v5453 = vsub.f32 %v4877, %v5165
  %v5454 = vsub.f32 %v4878, %v5166
  %v5455 = vsub.f32 %v4879, %v5167
  %v5456 = vsub.f32 %v4880, %v5168
  %v5457 = vsub.f32 %v4881, %v5169
  %v5458 = vsub.f32 %v4882, %v5170
  %v5459 = vsub.f32 %v4883, %v5171
  %v5460 = vsub.f32 %v4884, %v5172
  %v5461 = vsub.f32 %v4885, %v5173
  %v5462 = vsub.f32 %v4886, %v5174
  %v5463 = vsub.f32 %v4887, %v5175
  %v5464 = vsub.f32 %v4888, %v5176
  %v5465 = vsub.f32 %v4889, %v5177
  %v5466 = vsub.f32 %v4890, %v5178
  %v5467 = vsub.f32 %v4891, %v5179
  %v5468 = vsub.f32 %v4892, %v5180
  %v5469 = vsub.f32 %v4893, %v5181
  %v5470 = vsub.f32 %v4894, %v5182
  %v5471 = vsub.f32 %v4895, %v5183
  %v5472 = vsub.f32 %v4896, %v5184
  %v5473 = vsub.f32 %v4897, %v5185
  %v5474 = vsub.f32 %v4898, %v5186
  %v5475 = vsub.f32 %v4899, %v5187
  %v5476 = vsub.f32 %v4900, %v5188
  %v5477 = vsub.f32 %v4901, %v5189
  %v5478 = vsub.f32 %v4902, %v5190
  %v5479 = vsub.f32 %v4903, %v5191
  %v5480 = vsub.f32 %v4904, %v5192
  %v5481 = vsub.f32 %v4905, %v5193
  %v5482 = vsub.f32 %v4906, %v5194
  %v5483 = vsub.f32 %v4907, %v5195
  %v5484 = vsub.f32 %v4908, %v5196
  %v5485 = vsub.f32 %v4909, %v5197
  %v5486 = vsub.f32 %v4910, %v5198
  %5488 = vset.pattern.permute.xlu0 0
  %5489 = vperm.xlu0 %5488, %v4335
  %v5490 = vpop.permute.xlu0 %5489
  %5493 = vset.pattern.permute.xlu0 0
  %5494 = vperm.xlu0 %5493, %v4336
  %v5495 = vpop.permute.xlu0 %5494
  %5498 = vset.pattern.permute.xlu0 0
  %5499 = vperm.xlu0 %5498, %v4337
  %v5500 = vpop.permute.xlu0 %5499
  %5503 = vset.pattern.permute.xlu0 0
  %5504 = vperm.xlu0 %5503, %v4338
  %v5505 = vpop.permute.xlu0 %5504
  %5508 = vset.pattern.permute.xlu0 0
  %5509 = vperm.xlu0 %5508, %v4339
  %v5510 = vpop.permute.xlu0 %5509
  %5513 = vset.pattern.permute.xlu0 0
  %5514 = vperm.xlu0 %5513, %v4340
  %v5515 = vpop.permute.xlu0 %5514
  %5518 = vset.pattern.permute.xlu0 0
  %5519 = vperm.xlu0 %5518, %v4341
  %v5520 = vpop.permute.xlu0 %5519
  %5523 = vset.pattern.permute.xlu0 0
  %5524 = vperm.xlu0 %5523, %v4342
  %v5525 = vpop.permute.xlu0 %5524
  %5528 = vset.pattern.permute.xlu0 0
  %5529 = vperm.xlu0 %5528, %v4343
  %v5530 = vpop.permute.xlu0 %5529
  %5533 = vset.pattern.permute.xlu0 0
  %5534 = vperm.xlu0 %5533, %v4344
  %v5535 = vpop.permute.xlu0 %5534
  %5538 = vset.pattern.permute.xlu0 0
  %5539 = vperm.xlu0 %5538, %v4345
  %v5540 = vpop.permute.xlu0 %5539
  %5543 = vset.pattern.permute.xlu0 0
  %5544 = vperm.xlu0 %5543, %v4346
  %v5545 = vpop.permute.xlu0 %5544
  %5548 = vset.pattern.permute.xlu0 0
  %5549 = vperm.xlu0 %5548, %v4347
  %v5550 = vpop.permute.xlu0 %5549
  %5553 = vset.pattern.permute.xlu0 0
  %5554 = vperm.xlu0 %5553, %v4348
  %v5555 = vpop.permute.xlu0 %5554
  %5558 = vset.pattern.permute.xlu0 0
  %5559 = vperm.xlu0 %5558, %v4349
  %v5560 = vpop.permute.xlu0 %5559
  %5563 = vset.pattern.permute.xlu0 0
  %5564 = vperm.xlu0 %5563, %v4350
  %v5565 = vpop.permute.xlu0 %5564
  %5568 = vset.pattern.permute.xlu0 0
  %5569 = vperm.xlu0 %5568, %v4351
  %v5570 = vpop.permute.xlu0 %5569
  %5573 = vset.pattern.permute.xlu0 0
  %5574 = vperm.xlu0 %5573, %v4352
  %v5575 = vpop.permute.xlu0 %5574
  %5578 = vset.pattern.permute.xlu0 0
  %5579 = vperm.xlu0 %5578, %v4353
  %v5580 = vpop.permute.xlu0 %5579
  %5583 = vset.pattern.permute.xlu0 0
  %5584 = vperm.xlu0 %5583, %v4354
  %v5585 = vpop.permute.xlu0 %5584
  %5588 = vset.pattern.permute.xlu0 0
  %5589 = vperm.xlu0 %5588, %v4355
  %v5590 = vpop.permute.xlu0 %5589
  %5593 = vset.pattern.permute.xlu0 0
  %5594 = vperm.xlu0 %5593, %v4356
  %v5595 = vpop.permute.xlu0 %5594
  %5598 = vset.pattern.permute.xlu0 0
  %5599 = vperm.xlu0 %5598, %v4357
  %v5600 = vpop.permute.xlu0 %5599
  %5603 = vset.pattern.permute.xlu0 0
  %5604 = vperm.xlu0 %5603, %v4358
  %v5605 = vpop.permute.xlu0 %5604
  %5608 = vset.pattern.permute.xlu0 0
  %5609 = vperm.xlu0 %5608, %v4359
  %v5610 = vpop.permute.xlu0 %5609
  %5613 = vset.pattern.permute.xlu0 0
  %5614 = vperm.xlu0 %5613, %v4360
  %v5615 = vpop.permute.xlu0 %5614
  %5618 = vset.pattern.permute.xlu0 0
  %5619 = vperm.xlu0 %5618, %v4361
  %v5620 = vpop.permute.xlu0 %5619
  %5623 = vset.pattern.permute.xlu0 0
  %5624 = vperm.xlu0 %5623, %v4362
  %v5625 = vpop.permute.xlu0 %5624
  %5628 = vset.pattern.permute.xlu0 0
  %5629 = vperm.xlu0 %5628, %v4363
  %v5630 = vpop.permute.xlu0 %5629
  %5633 = vset.pattern.permute.xlu0 0
  %5634 = vperm.xlu0 %5633, %v4364
  %v5635 = vpop.permute.xlu0 %5634
  %5638 = vset.pattern.permute.xlu0 0
  %5639 = vperm.xlu0 %5638, %v4365
  %v5640 = vpop.permute.xlu0 %5639
  %5643 = vset.pattern.permute.xlu0 0
  %5644 = vperm.xlu0 %5643, %v4366
  %v5645 = vpop.permute.xlu0 %5644
  %5648 = vset.pattern.permute.xlu0 0
  %5649 = vperm.xlu0 %5648, %v4367
  %v5650 = vpop.permute.xlu0 %5649
  %5653 = vset.pattern.permute.xlu0 0
  %5654 = vperm.xlu0 %5653, %v4368
  %v5655 = vpop.permute.xlu0 %5654
  %5658 = vset.pattern.permute.xlu0 0
  %5659 = vperm.xlu0 %5658, %v4369
  %v5660 = vpop.permute.xlu0 %5659
  %5663 = vset.pattern.permute.xlu0 0
  %5664 = vperm.xlu0 %5663, %v4370
  %v5665 = vpop.permute.xlu0 %5664
  %5668 = vset.pattern.permute.xlu0 0
  %5669 = vperm.xlu0 %5668, %v4371
  %v5670 = vpop.permute.xlu0 %5669
  %5673 = vset.pattern.permute.xlu0 0
  %5674 = vperm.xlu0 %5673, %v4372
  %v5675 = vpop.permute.xlu0 %5674
  %5678 = vset.pattern.permute.xlu0 0
  %5679 = vperm.xlu0 %5678, %v4373
  %v5680 = vpop.permute.xlu0 %5679
  %5683 = vset.pattern.permute.xlu0 0
  %5684 = vperm.xlu0 %5683, %v4374
  %v5685 = vpop.permute.xlu0 %5684
  %5688 = vset.pattern.permute.xlu0 0
  %5689 = vperm.xlu0 %5688, %v4375
  %v5690 = vpop.permute.xlu0 %5689
  %5693 = vset.pattern.permute.xlu0 0
  %5694 = vperm.xlu0 %5693, %v4376
  %v5695 = vpop.permute.xlu0 %5694
  %5698 = vset.pattern.permute.xlu0 0
  %5699 = vperm.xlu0 %5698, %v4377
  %v5700 = vpop.permute.xlu0 %5699
  %5703 = vset.pattern.permute.xlu0 0
  %5704 = vperm.xlu0 %5703, %v4378
  %v5705 = vpop.permute.xlu0 %5704
  %5708 = vset.pattern.permute.xlu0 0
  %5709 = vperm.xlu0 %5708, %v4379
  %v5710 = vpop.permute.xlu0 %5709
  %5713 = vset.pattern.permute.xlu0 0
  %5714 = vperm.xlu0 %5713, %v4380
  %v5715 = vpop.permute.xlu0 %5714
  %5718 = vset.pattern.permute.xlu0 0
  %5719 = vperm.xlu0 %5718, %v4381
  %v5720 = vpop.permute.xlu0 %5719
  %5723 = vset.pattern.permute.xlu0 0
  %5724 = vperm.xlu0 %5723, %v4382
  %v5725 = vpop.permute.xlu0 %5724
  %5728 = vset.pattern.permute.xlu0 0
  %5729 = vperm.xlu0 %5728, %v4383
  %v5730 = vpop.permute.xlu0 %5729
  %5733 = vset.pattern.permute.xlu0 0
  %5734 = vperm.xlu0 %5733, %v4384
  %v5735 = vpop.permute.xlu0 %5734
  %5738 = vset.pattern.permute.xlu0 0
  %5739 = vperm.xlu0 %5738, %v4385
  %v5740 = vpop.permute.xlu0 %5739
  %5743 = vset.pattern.permute.xlu0 0
  %5744 = vperm.xlu0 %5743, %v4386
  %v5745 = vpop.permute.xlu0 %5744
  %5748 = vset.pattern.permute.xlu0 0
  %5749 = vperm.xlu0 %5748, %v4387
  %v5750 = vpop.permute.xlu0 %5749
  %5753 = vset.pattern.permute.xlu0 0
  %5754 = vperm.xlu0 %5753, %v4388
  %v5755 = vpop.permute.xlu0 %5754
  %5758 = vset.pattern.permute.xlu0 0
  %5759 = vperm.xlu0 %5758, %v4389
  %v5760 = vpop.permute.xlu0 %5759
  %5763 = vset.pattern.permute.xlu0 0
  %5764 = vperm.xlu0 %5763, %v4390
  %v5765 = vpop.permute.xlu0 %5764
  %5768 = vset.pattern.permute.xlu0 0
  %5769 = vperm.xlu0 %5768, %v4391
  %v5770 = vpop.permute.xlu0 %5769
  %5773 = vset.pattern.permute.xlu0 0
  %5774 = vperm.xlu0 %5773, %v4392
  %v5775 = vpop.permute.xlu0 %5774
  %5778 = vset.pattern.permute.xlu0 0
  %5779 = vperm.xlu0 %5778, %v4393
  %v5780 = vpop.permute.xlu0 %5779
  %5783 = vset.pattern.permute.xlu0 0
  %5784 = vperm.xlu0 %5783, %v4394
  %v5785 = vpop.permute.xlu0 %5784
  %5788 = vset.pattern.permute.xlu0 0
  %5789 = vperm.xlu0 %5788, %v4395
  %v5790 = vpop.permute.xlu0 %5789
  %5793 = vset.pattern.permute.xlu0 0
  %5794 = vperm.xlu0 %5793, %v4396
  %v5795 = vpop.permute.xlu0 %5794
  %5798 = vset.pattern.permute.xlu0 0
  %5799 = vperm.xlu0 %5798, %v4397
  %v5800 = vpop.permute.xlu0 %5799
  %5803 = vset.pattern.permute.xlu0 0
  %5804 = vperm.xlu0 %5803, %v4398
  %v5805 = vpop.permute.xlu0 %5804
  %5808 = vset.pattern.permute.xlu0 0
  %5809 = vperm.xlu0 %5808, %v4399
  %v5810 = vpop.permute.xlu0 %5809
  %5813 = vset.pattern.permute.xlu0 0
  %5814 = vperm.xlu0 %5813, %v4400
  %v5815 = vpop.permute.xlu0 %5814
  %5818 = vset.pattern.permute.xlu0 0
  %5819 = vperm.xlu0 %5818, %v4401
  %v5820 = vpop.permute.xlu0 %5819
  %5823 = vset.pattern.permute.xlu0 0
  %5824 = vperm.xlu0 %5823, %v4402
  %v5825 = vpop.permute.xlu0 %5824
  %5828 = vset.pattern.permute.xlu0 0
  %5829 = vperm.xlu0 %5828, %v4403
  %v5830 = vpop.permute.xlu0 %5829
  %5833 = vset.pattern.permute.xlu0 0
  %5834 = vperm.xlu0 %5833, %v4404
  %v5835 = vpop.permute.xlu0 %5834
  %5838 = vset.pattern.permute.xlu0 0
  %5839 = vperm.xlu0 %5838, %v4405
  %v5840 = vpop.permute.xlu0 %5839
  %5843 = vset.pattern.permute.xlu0 0
  %5844 = vperm.xlu0 %5843, %v4406
  %v5845 = vpop.permute.xlu0 %5844
  %5848 = vset.pattern.permute.xlu0 0
  %5849 = vperm.xlu0 %5848, %v4407
  %v5850 = vpop.permute.xlu0 %5849
  %5853 = vset.pattern.permute.xlu0 0
  %5854 = vperm.xlu0 %5853, %v4408
  %v5855 = vpop.permute.xlu0 %5854
  %5858 = vset.pattern.permute.xlu0 0
  %5859 = vperm.xlu0 %5858, %v4409
  %v5860 = vpop.permute.xlu0 %5859
  %5863 = vset.pattern.permute.xlu0 0
  %5864 = vperm.xlu0 %5863, %v4410
  %v5865 = vpop.permute.xlu0 %5864
  %5868 = vset.pattern.permute.xlu0 0
  %5869 = vperm.xlu0 %5868, %v4411
  %v5870 = vpop.permute.xlu0 %5869
  %5873 = vset.pattern.permute.xlu0 0
  %5874 = vperm.xlu0 %5873, %v4412
  %v5875 = vpop.permute.xlu0 %5874
  %5878 = vset.pattern.permute.xlu0 0
  %5879 = vperm.xlu0 %5878, %v4413
  %v5880 = vpop.permute.xlu0 %5879
  %5883 = vset.pattern.permute.xlu0 0
  %5884 = vperm.xlu0 %5883, %v4414
  %v5885 = vpop.permute.xlu0 %5884
  %5888 = vset.pattern.permute.xlu0 0
  %5889 = vperm.xlu0 %5888, %v4415
  %v5890 = vpop.permute.xlu0 %5889
  %5893 = vset.pattern.permute.xlu0 0
  %5894 = vperm.xlu0 %5893, %v4416
  %v5895 = vpop.permute.xlu0 %5894
  %5898 = vset.pattern.permute.xlu0 0
  %5899 = vperm.xlu0 %5898, %v4417
  %v5900 = vpop.permute.xlu0 %5899
  %5903 = vset.pattern.permute.xlu0 0
  %5904 = vperm.xlu0 %5903, %v4418
  %v5905 = vpop.permute.xlu0 %5904
  %5908 = vset.pattern.permute.xlu0 0
  %5909 = vperm.xlu0 %5908, %v4419
  %v5910 = vpop.permute.xlu0 %5909
  %5913 = vset.pattern.permute.xlu0 0
  %5914 = vperm.xlu0 %5913, %v4420
  %v5915 = vpop.permute.xlu0 %5914
  %5918 = vset.pattern.permute.xlu0 0
  %5919 = vperm.xlu0 %5918, %v4421
  %v5920 = vpop.permute.xlu0 %5919
  %5923 = vset.pattern.permute.xlu0 0
  %5924 = vperm.xlu0 %5923, %v4422
  %v5925 = vpop.permute.xlu0 %5924
  %5928 = vset.pattern.permute.xlu0 0
  %5929 = vperm.xlu0 %5928, %v4423
  %v5930 = vpop.permute.xlu0 %5929
  %5933 = vset.pattern.permute.xlu0 0
  %5934 = vperm.xlu0 %5933, %v4424
  %v5935 = vpop.permute.xlu0 %5934
  %5938 = vset.pattern.permute.xlu0 0
  %5939 = vperm.xlu0 %5938, %v4425
  %v5940 = vpop.permute.xlu0 %5939
  %5943 = vset.pattern.permute.xlu0 0
  %5944 = vperm.xlu0 %5943, %v4426
  %v5945 = vpop.permute.xlu0 %5944
  %5948 = vset.pattern.permute.xlu0 0
  %5949 = vperm.xlu0 %5948, %v4427
  %v5950 = vpop.permute.xlu0 %5949
  %5953 = vset.pattern.permute.xlu0 0
  %5954 = vperm.xlu0 %5953, %v4428
  %v5955 = vpop.permute.xlu0 %5954
  %5958 = vset.pattern.permute.xlu0 0
  %5959 = vperm.xlu0 %5958, %v4429
  %v5960 = vpop.permute.xlu0 %5959
  %5963 = vset.pattern.permute.xlu0 0
  %5964 = vperm.xlu0 %5963, %v4430
  %v5965 = vpop.permute.xlu0 %5964
  %5968 = vset.pattern.permute.xlu0 0
  %5969 = vperm.xlu0 %5968, %v4431
  %v5970 = vpop.permute.xlu0 %5969
  %5973 = vset.pattern.permute.xlu0 0
  %5974 = vperm.xlu0 %5973, %v4432
  %v5975 = vpop.permute.xlu0 %5974
  %5978 = vset.pattern.permute.xlu0 0
  %5979 = vperm.xlu0 %5978, %v4433
  %v5980 = vpop.permute.xlu0 %5979
  %5983 = vset.pattern.permute.xlu0 0
  %5984 = vperm.xlu0 %5983, %v4434
  %v5985 = vpop.permute.xlu0 %5984
  %5988 = vset.pattern.permute.xlu0 0
  %5989 = vperm.xlu0 %5988, %v4435
  %v5990 = vpop.permute.xlu0 %5989
  %5993 = vset.pattern.permute.xlu0 0
  %5994 = vperm.xlu0 %5993, %v4436
  %v5995 = vpop.permute.xlu0 %5994
  %5998 = vset.pattern.permute.xlu0 0
  %5999 = vperm.xlu0 %5998, %v4437
  %v6000 = vpop.permute.xlu0 %5999
  %6003 = vset.pattern.permute.xlu0 0
  %6004 = vperm.xlu0 %6003, %v4438
  %v6005 = vpop.permute.xlu0 %6004
  %6008 = vset.pattern.permute.xlu0 0
  %6009 = vperm.xlu0 %6008, %v4439
  %v6010 = vpop.permute.xlu0 %6009
  %6013 = vset.pattern.permute.xlu0 0
  %6014 = vperm.xlu0 %6013, %v4440
  %v6015 = vpop.permute.xlu0 %6014
  %6018 = vset.pattern.permute.xlu0 0
  %6019 = vperm.xlu0 %6018, %v4441
  %v6020 = vpop.permute.xlu0 %6019
  %6023 = vset.pattern.permute.xlu0 0
  %6024 = vperm.xlu0 %6023, %v4442
  %v6025 = vpop.permute.xlu0 %6024
  %6028 = vset.pattern.permute.xlu0 0
  %6029 = vperm.xlu0 %6028, %v4443
  %v6030 = vpop.permute.xlu0 %6029
  %6033 = vset.pattern.permute.xlu0 0
  %6034 = vperm.xlu0 %6033, %v4444
  %v6035 = vpop.permute.xlu0 %6034
  %6038 = vset.pattern.permute.xlu0 0
  %6039 = vperm.xlu0 %6038, %v4445
  %v6040 = vpop.permute.xlu0 %6039
  %6043 = vset.pattern.permute.xlu0 0
  %6044 = vperm.xlu0 %6043, %v4446
  %v6045 = vpop.permute.xlu0 %6044
  %6048 = vset.pattern.permute.xlu0 0
  %6049 = vperm.xlu0 %6048, %v4447
  %v6050 = vpop.permute.xlu0 %6049
  %6053 = vset.pattern.permute.xlu0 0
  %6054 = vperm.xlu0 %6053, %v4448
  %v6055 = vpop.permute.xlu0 %6054
  %6058 = vset.pattern.permute.xlu0 0
  %6059 = vperm.xlu0 %6058, %v4449
  %v6060 = vpop.permute.xlu0 %6059
  %6063 = vset.pattern.permute.xlu0 0
  %6064 = vperm.xlu0 %6063, %v4450
  %v6065 = vpop.permute.xlu0 %6064
  %6068 = vset.pattern.permute.xlu0 0
  %6069 = vperm.xlu0 %6068, %v4451
  %v6070 = vpop.permute.xlu0 %6069
  %6073 = vset.pattern.permute.xlu0 0
  %6074 = vperm.xlu0 %6073, %v4452
  %v6075 = vpop.permute.xlu0 %6074
  %6078 = vset.pattern.permute.xlu0 0
  %6079 = vperm.xlu0 %6078, %v4453
  %v6080 = vpop.permute.xlu0 %6079
  %6083 = vset.pattern.permute.xlu0 0
  %6084 = vperm.xlu0 %6083, %v4454
  %v6085 = vpop.permute.xlu0 %6084
  %6088 = vset.pattern.permute.xlu0 0
  %6089 = vperm.xlu0 %6088, %v4455
  %v6090 = vpop.permute.xlu0 %6089
  %6093 = vset.pattern.permute.xlu0 0
  %6094 = vperm.xlu0 %6093, %v4456
  %v6095 = vpop.permute.xlu0 %6094
  %6098 = vset.pattern.permute.xlu0 0
  %6099 = vperm.xlu0 %6098, %v4457
  %v6100 = vpop.permute.xlu0 %6099
  %6103 = vset.pattern.permute.xlu0 0
  %6104 = vperm.xlu0 %6103, %v4458
  %v6105 = vpop.permute.xlu0 %6104
  %6108 = vset.pattern.permute.xlu0 0
  %6109 = vperm.xlu0 %6108, %v4459
  %v6110 = vpop.permute.xlu0 %6109
  %6113 = vset.pattern.permute.xlu0 0
  %6114 = vperm.xlu0 %6113, %v4460
  %v6115 = vpop.permute.xlu0 %6114
  %6118 = vset.pattern.permute.xlu0 0
  %6119 = vperm.xlu0 %6118, %v4461
  %v6120 = vpop.permute.xlu0 %6119
  %6123 = vset.pattern.permute.xlu0 0
  %6124 = vperm.xlu0 %6123, %v4462
  %v6125 = vpop.permute.xlu0 %6124
  %6128 = vset.pattern.permute.xlu0 0
  %6129 = vperm.xlu0 %6128, %v4463
  %v6130 = vpop.permute.xlu0 %6129
  %6133 = vset.pattern.permute.xlu0 0
  %6134 = vperm.xlu0 %6133, %v4464
  %v6135 = vpop.permute.xlu0 %6134
  %6138 = vset.pattern.permute.xlu0 0
  %6139 = vperm.xlu0 %6138, %v4465
  %v6140 = vpop.permute.xlu0 %6139
  %6143 = vset.pattern.permute.xlu0 0
  %6144 = vperm.xlu0 %6143, %v4466
  %v6145 = vpop.permute.xlu0 %6144
  %6148 = vset.pattern.permute.xlu0 0
  %6149 = vperm.xlu0 %6148, %v4467
  %v6150 = vpop.permute.xlu0 %6149
  %6153 = vset.pattern.permute.xlu0 0
  %6154 = vperm.xlu0 %6153, %v4468
  %v6155 = vpop.permute.xlu0 %6154
  %6158 = vset.pattern.permute.xlu0 0
  %6159 = vperm.xlu0 %6158, %v4469
  %v6160 = vpop.permute.xlu0 %6159
  %6163 = vset.pattern.permute.xlu0 0
  %6164 = vperm.xlu0 %6163, %v4470
  %v6165 = vpop.permute.xlu0 %6164
  %6168 = vset.pattern.permute.xlu0 0
  %6169 = vperm.xlu0 %6168, %v4471
  %v6170 = vpop.permute.xlu0 %6169
  %6173 = vset.pattern.permute.xlu0 0
  %6174 = vperm.xlu0 %6173, %v4472
  %v6175 = vpop.permute.xlu0 %6174
  %6178 = vset.pattern.permute.xlu0 0
  %6179 = vperm.xlu0 %6178, %v4473
  %v6180 = vpop.permute.xlu0 %6179
  %6183 = vset.pattern.permute.xlu0 0
  %6184 = vperm.xlu0 %6183, %v4474
  %v6185 = vpop.permute.xlu0 %6184
  %6188 = vset.pattern.permute.xlu0 0
  %6189 = vperm.xlu0 %6188, %v4475
  %v6190 = vpop.permute.xlu0 %6189
  %6193 = vset.pattern.permute.xlu0 0
  %6194 = vperm.xlu0 %6193, %v4476
  %v6195 = vpop.permute.xlu0 %6194
  %6198 = vset.pattern.permute.xlu0 0
  %6199 = vperm.xlu0 %6198, %v4477
  %v6200 = vpop.permute.xlu0 %6199
  %6203 = vset.pattern.permute.xlu0 0
  %6204 = vperm.xlu0 %6203, %v4478
  %v6205 = vpop.permute.xlu0 %6204
  %6208 = vset.pattern.permute.xlu0 0
  %6209 = vperm.xlu0 %6208, %v4479
  %v6210 = vpop.permute.xlu0 %6209
  %6213 = vset.pattern.permute.xlu0 0
  %6214 = vperm.xlu0 %6213, %v4480
  %v6215 = vpop.permute.xlu0 %6214
  %6218 = vset.pattern.permute.xlu0 0
  %6219 = vperm.xlu0 %6218, %v4481
  %v6220 = vpop.permute.xlu0 %6219
  %6223 = vset.pattern.permute.xlu0 0
  %6224 = vperm.xlu0 %6223, %v4482
  %v6225 = vpop.permute.xlu0 %6224
  %6228 = vset.pattern.permute.xlu0 0
  %6229 = vperm.xlu0 %6228, %v4483
  %v6230 = vpop.permute.xlu0 %6229
  %6233 = vset.pattern.permute.xlu0 0
  %6234 = vperm.xlu0 %6233, %v4484
  %v6235 = vpop.permute.xlu0 %6234
  %6238 = vset.pattern.permute.xlu0 0
  %6239 = vperm.xlu0 %6238, %v4485
  %v6240 = vpop.permute.xlu0 %6239
  %6243 = vset.pattern.permute.xlu0 0
  %6244 = vperm.xlu0 %6243, %v4486
  %v6245 = vpop.permute.xlu0 %6244
  %6248 = vset.pattern.permute.xlu0 0
  %6249 = vperm.xlu0 %6248, %v4487
  %v6250 = vpop.permute.xlu0 %6249
  %6253 = vset.pattern.permute.xlu0 0
  %6254 = vperm.xlu0 %6253, %v4488
  %v6255 = vpop.permute.xlu0 %6254
  %6258 = vset.pattern.permute.xlu0 0
  %6259 = vperm.xlu0 %6258, %v4489
  %v6260 = vpop.permute.xlu0 %6259
  %6263 = vset.pattern.permute.xlu0 0
  %6264 = vperm.xlu0 %6263, %v4490
  %v6265 = vpop.permute.xlu0 %6264
  %6268 = vset.pattern.permute.xlu0 0
  %6269 = vperm.xlu0 %6268, %v4491
  %v6270 = vpop.permute.xlu0 %6269
  %6273 = vset.pattern.permute.xlu0 0
  %6274 = vperm.xlu0 %6273, %v4492
  %v6275 = vpop.permute.xlu0 %6274
  %6278 = vset.pattern.permute.xlu0 0
  %6279 = vperm.xlu0 %6278, %v4493
  %v6280 = vpop.permute.xlu0 %6279
  %6283 = vset.pattern.permute.xlu0 0
  %6284 = vperm.xlu0 %6283, %v4494
  %v6285 = vpop.permute.xlu0 %6284
  %6288 = vset.pattern.permute.xlu0 0
  %6289 = vperm.xlu0 %6288, %v4495
  %v6290 = vpop.permute.xlu0 %6289
  %6293 = vset.pattern.permute.xlu0 0
  %6294 = vperm.xlu0 %6293, %v4496
  %v6295 = vpop.permute.xlu0 %6294
  %6298 = vset.pattern.permute.xlu0 0
  %6299 = vperm.xlu0 %6298, %v4497
  %v6300 = vpop.permute.xlu0 %6299
  %6303 = vset.pattern.permute.xlu0 0
  %6304 = vperm.xlu0 %6303, %v4498
  %v6305 = vpop.permute.xlu0 %6304
  %6308 = vset.pattern.permute.xlu0 0
  %6309 = vperm.xlu0 %6308, %v4499
  %v6310 = vpop.permute.xlu0 %6309
  %6313 = vset.pattern.permute.xlu0 0
  %6314 = vperm.xlu0 %6313, %v4500
  %v6315 = vpop.permute.xlu0 %6314
  %6318 = vset.pattern.permute.xlu0 0
  %6319 = vperm.xlu0 %6318, %v4501
  %v6320 = vpop.permute.xlu0 %6319
  %6323 = vset.pattern.permute.xlu0 0
  %6324 = vperm.xlu0 %6323, %v4502
  %v6325 = vpop.permute.xlu0 %6324
  %6328 = vset.pattern.permute.xlu0 0
  %6329 = vperm.xlu0 %6328, %v4503
  %v6330 = vpop.permute.xlu0 %6329
  %6333 = vset.pattern.permute.xlu0 0
  %6334 = vperm.xlu0 %6333, %v4504
  %v6335 = vpop.permute.xlu0 %6334
  %6338 = vset.pattern.permute.xlu0 0
  %6339 = vperm.xlu0 %6338, %v4505
  %v6340 = vpop.permute.xlu0 %6339
  %6343 = vset.pattern.permute.xlu0 0
  %6344 = vperm.xlu0 %6343, %v4506
  %v6345 = vpop.permute.xlu0 %6344
  %6348 = vset.pattern.permute.xlu0 0
  %6349 = vperm.xlu0 %6348, %v4507
  %v6350 = vpop.permute.xlu0 %6349
  %6353 = vset.pattern.permute.xlu0 0
  %6354 = vperm.xlu0 %6353, %v4508
  %v6355 = vpop.permute.xlu0 %6354
  %6358 = vset.pattern.permute.xlu0 0
  %6359 = vperm.xlu0 %6358, %v4509
  %v6360 = vpop.permute.xlu0 %6359
  %6363 = vset.pattern.permute.xlu0 0
  %6364 = vperm.xlu0 %6363, %v4510
  %v6365 = vpop.permute.xlu0 %6364
  %6368 = vset.pattern.permute.xlu0 0
  %6369 = vperm.xlu0 %6368, %v4511
  %v6370 = vpop.permute.xlu0 %6369
  %6373 = vset.pattern.permute.xlu0 0
  %6374 = vperm.xlu0 %6373, %v4512
  %v6375 = vpop.permute.xlu0 %6374
  %6378 = vset.pattern.permute.xlu0 0
  %6379 = vperm.xlu0 %6378, %v4513
  %v6380 = vpop.permute.xlu0 %6379
  %6383 = vset.pattern.permute.xlu0 0
  %6384 = vperm.xlu0 %6383, %v4514
  %v6385 = vpop.permute.xlu0 %6384
  %6388 = vset.pattern.permute.xlu0 0
  %6389 = vperm.xlu0 %6388, %v4515
  %v6390 = vpop.permute.xlu0 %6389
  %6393 = vset.pattern.permute.xlu0 0
  %6394 = vperm.xlu0 %6393, %v4516
  %v6395 = vpop.permute.xlu0 %6394
  %6398 = vset.pattern.permute.xlu0 0
  %6399 = vperm.xlu0 %6398, %v4517
  %v6400 = vpop.permute.xlu0 %6399
  %6403 = vset.pattern.permute.xlu0 0
  %6404 = vperm.xlu0 %6403, %v4518
  %v6405 = vpop.permute.xlu0 %6404
  %6408 = vset.pattern.permute.xlu0 0
  %6409 = vperm.xlu0 %6408, %v4519
  %v6410 = vpop.permute.xlu0 %6409
  %6413 = vset.pattern.permute.xlu0 0
  %6414 = vperm.xlu0 %6413, %v4520
  %v6415 = vpop.permute.xlu0 %6414
  %6418 = vset.pattern.permute.xlu0 0
  %6419 = vperm.xlu0 %6418, %v4521
  %v6420 = vpop.permute.xlu0 %6419
  %6423 = vset.pattern.permute.xlu0 0
  %6424 = vperm.xlu0 %6423, %v4522
  %v6425 = vpop.permute.xlu0 %6424
  %6428 = vset.pattern.permute.xlu0 0
  %6429 = vperm.xlu0 %6428, %v4523
  %v6430 = vpop.permute.xlu0 %6429
  %6433 = vset.pattern.permute.xlu0 0
  %6434 = vperm.xlu0 %6433, %v4524
  %v6435 = vpop.permute.xlu0 %6434
  %6438 = vset.pattern.permute.xlu0 0
  %6439 = vperm.xlu0 %6438, %v4525
  %v6440 = vpop.permute.xlu0 %6439
  %6443 = vset.pattern.permute.xlu0 0
  %6444 = vperm.xlu0 %6443, %v4526
  %v6445 = vpop.permute.xlu0 %6444
  %6448 = vset.pattern.permute.xlu0 0
  %6449 = vperm.xlu0 %6448, %v4527
  %v6450 = vpop.permute.xlu0 %6449
  %6453 = vset.pattern.permute.xlu0 0
  %6454 = vperm.xlu0 %6453, %v4528
  %v6455 = vpop.permute.xlu0 %6454
  %6458 = vset.pattern.permute.xlu0 0
  %6459 = vperm.xlu0 %6458, %v4529
  %v6460 = vpop.permute.xlu0 %6459
  %6463 = vset.pattern.permute.xlu0 0
  %6464 = vperm.xlu0 %6463, %v4530
  %v6465 = vpop.permute.xlu0 %6464
  %6468 = vset.pattern.permute.xlu0 0
  %6469 = vperm.xlu0 %6468, %v4531
  %v6470 = vpop.permute.xlu0 %6469
  %6473 = vset.pattern.permute.xlu0 0
  %6474 = vperm.xlu0 %6473, %v4532
  %v6475 = vpop.permute.xlu0 %6474
  %6478 = vset.pattern.permute.xlu0 0
  %6479 = vperm.xlu0 %6478, %v4533
  %v6480 = vpop.permute.xlu0 %6479
  %6483 = vset.pattern.permute.xlu0 0
  %6484 = vperm.xlu0 %6483, %v4534
  %v6485 = vpop.permute.xlu0 %6484
  %6488 = vset.pattern.permute.xlu0 0
  %6489 = vperm.xlu0 %6488, %v4535
  %v6490 = vpop.permute.xlu0 %6489
  %6493 = vset.pattern.permute.xlu0 0
  %6494 = vperm.xlu0 %6493, %v4536
  %v6495 = vpop.permute.xlu0 %6494
  %6498 = vset.pattern.permute.xlu0 0
  %6499 = vperm.xlu0 %6498, %v4537
  %v6500 = vpop.permute.xlu0 %6499
  %6503 = vset.pattern.permute.xlu0 0
  %6504 = vperm.xlu0 %6503, %v4538
  %v6505 = vpop.permute.xlu0 %6504
  %6508 = vset.pattern.permute.xlu0 0
  %6509 = vperm.xlu0 %6508, %v4539
  %v6510 = vpop.permute.xlu0 %6509
  %6513 = vset.pattern.permute.xlu0 0
  %6514 = vperm.xlu0 %6513, %v4540
  %v6515 = vpop.permute.xlu0 %6514
  %6518 = vset.pattern.permute.xlu0 0
  %6519 = vperm.xlu0 %6518, %v4541
  %v6520 = vpop.permute.xlu0 %6519
  %6523 = vset.pattern.permute.xlu0 0
  %6524 = vperm.xlu0 %6523, %v4542
  %v6525 = vpop.permute.xlu0 %6524
  %6528 = vset.pattern.permute.xlu0 0
  %6529 = vperm.xlu0 %6528, %v4543
  %v6530 = vpop.permute.xlu0 %6529
  %6533 = vset.pattern.permute.xlu0 0
  %6534 = vperm.xlu0 %6533, %v4544
  %v6535 = vpop.permute.xlu0 %6534
  %6538 = vset.pattern.permute.xlu0 0
  %6539 = vperm.xlu0 %6538, %v4545
  %v6540 = vpop.permute.xlu0 %6539
  %6543 = vset.pattern.permute.xlu0 0
  %6544 = vperm.xlu0 %6543, %v4546
  %v6545 = vpop.permute.xlu0 %6544
  %6548 = vset.pattern.permute.xlu0 0
  %6549 = vperm.xlu0 %6548, %v4547
  %v6550 = vpop.permute.xlu0 %6549
  %6553 = vset.pattern.permute.xlu0 0
  %6554 = vperm.xlu0 %6553, %v4548
  %v6555 = vpop.permute.xlu0 %6554
  %6558 = vset.pattern.permute.xlu0 0
  %6559 = vperm.xlu0 %6558, %v4549
  %v6560 = vpop.permute.xlu0 %6559
  %6563 = vset.pattern.permute.xlu0 0
  %6564 = vperm.xlu0 %6563, %v4550
  %v6565 = vpop.permute.xlu0 %6564
  %6568 = vset.pattern.permute.xlu0 0
  %6569 = vperm.xlu0 %6568, %v4551
  %v6570 = vpop.permute.xlu0 %6569
  %6573 = vset.pattern.permute.xlu0 0
  %6574 = vperm.xlu0 %6573, %v4552
  %v6575 = vpop.permute.xlu0 %6574
  %6578 = vset.pattern.permute.xlu0 0
  %6579 = vperm.xlu0 %6578, %v4553
  %v6580 = vpop.permute.xlu0 %6579
  %6583 = vset.pattern.permute.xlu0 0
  %6584 = vperm.xlu0 %6583, %v4554
  %v6585 = vpop.permute.xlu0 %6584
  %6588 = vset.pattern.permute.xlu0 0
  %6589 = vperm.xlu0 %6588, %v4555
  %v6590 = vpop.permute.xlu0 %6589
  %6593 = vset.pattern.permute.xlu0 0
  %6594 = vperm.xlu0 %6593, %v4556
  %v6595 = vpop.permute.xlu0 %6594
  %6598 = vset.pattern.permute.xlu0 0
  %6599 = vperm.xlu0 %6598, %v4557
  %v6600 = vpop.permute.xlu0 %6599
  %6603 = vset.pattern.permute.xlu0 0
  %6604 = vperm.xlu0 %6603, %v4558
  %v6605 = vpop.permute.xlu0 %6604
  %6608 = vset.pattern.permute.xlu0 0
  %6609 = vperm.xlu0 %6608, %v4559
  %v6610 = vpop.permute.xlu0 %6609
  %6613 = vset.pattern.permute.xlu0 0
  %6614 = vperm.xlu0 %6613, %v4560
  %v6615 = vpop.permute.xlu0 %6614
  %6618 = vset.pattern.permute.xlu0 0
  %6619 = vperm.xlu0 %6618, %v4561
  %v6620 = vpop.permute.xlu0 %6619
  %6623 = vset.pattern.permute.xlu0 0
  %6624 = vperm.xlu0 %6623, %v4562
  %v6625 = vpop.permute.xlu0 %6624
  %6628 = vset.pattern.permute.xlu0 0
  %6629 = vperm.xlu0 %6628, %v4563
  %v6630 = vpop.permute.xlu0 %6629
  %6633 = vset.pattern.permute.xlu0 0
  %6634 = vperm.xlu0 %6633, %v4564
  %v6635 = vpop.permute.xlu0 %6634
  %6638 = vset.pattern.permute.xlu0 0
  %6639 = vperm.xlu0 %6638, %v4565
  %v6640 = vpop.permute.xlu0 %6639
  %6643 = vset.pattern.permute.xlu0 0
  %6644 = vperm.xlu0 %6643, %v4566
  %v6645 = vpop.permute.xlu0 %6644
  %6648 = vset.pattern.permute.xlu0 0
  %6649 = vperm.xlu0 %6648, %v4567
  %v6650 = vpop.permute.xlu0 %6649
  %6653 = vset.pattern.permute.xlu0 0
  %6654 = vperm.xlu0 %6653, %v4568
  %v6655 = vpop.permute.xlu0 %6654
  %6658 = vset.pattern.permute.xlu0 0
  %6659 = vperm.xlu0 %6658, %v4569
  %v6660 = vpop.permute.xlu0 %6659
  %6663 = vset.pattern.permute.xlu0 0
  %6664 = vperm.xlu0 %6663, %v4570
  %v6665 = vpop.permute.xlu0 %6664
  %6668 = vset.pattern.permute.xlu0 0
  %6669 = vperm.xlu0 %6668, %v4571
  %v6670 = vpop.permute.xlu0 %6669
  %6673 = vset.pattern.permute.xlu0 0
  %6674 = vperm.xlu0 %6673, %v4572
  %v6675 = vpop.permute.xlu0 %6674
  %6678 = vset.pattern.permute.xlu0 0
  %6679 = vperm.xlu0 %6678, %v4573
  %v6680 = vpop.permute.xlu0 %6679
  %6683 = vset.pattern.permute.xlu0 0
  %6684 = vperm.xlu0 %6683, %v4574
  %v6685 = vpop.permute.xlu0 %6684
  %6688 = vset.pattern.permute.xlu0 0
  %6689 = vperm.xlu0 %6688, %v4575
  %v6690 = vpop.permute.xlu0 %6689
  %6693 = vset.pattern.permute.xlu0 0
  %6694 = vperm.xlu0 %6693, %v4576
  %v6695 = vpop.permute.xlu0 %6694
  %6698 = vset.pattern.permute.xlu0 0
  %6699 = vperm.xlu0 %6698, %v4577
  %v6700 = vpop.permute.xlu0 %6699
  %6703 = vset.pattern.permute.xlu0 0
  %6704 = vperm.xlu0 %6703, %v4578
  %v6705 = vpop.permute.xlu0 %6704
  %6708 = vset.pattern.permute.xlu0 0
  %6709 = vperm.xlu0 %6708, %v4579
  %v6710 = vpop.permute.xlu0 %6709
  %6713 = vset.pattern.permute.xlu0 0
  %6714 = vperm.xlu0 %6713, %v4580
  %v6715 = vpop.permute.xlu0 %6714
  %6718 = vset.pattern.permute.xlu0 0
  %6719 = vperm.xlu0 %6718, %v4581
  %v6720 = vpop.permute.xlu0 %6719
  %6723 = vset.pattern.permute.xlu0 0
  %6724 = vperm.xlu0 %6723, %v4582
  %v6725 = vpop.permute.xlu0 %6724
  %6728 = vset.pattern.permute.xlu0 0
  %6729 = vperm.xlu0 %6728, %v4583
  %v6730 = vpop.permute.xlu0 %6729
  %6733 = vset.pattern.permute.xlu0 0
  %6734 = vperm.xlu0 %6733, %v4584
  %v6735 = vpop.permute.xlu0 %6734
  %6738 = vset.pattern.permute.xlu0 0
  %6739 = vperm.xlu0 %6738, %v4585
  %v6740 = vpop.permute.xlu0 %6739
  %6743 = vset.pattern.permute.xlu0 0
  %6744 = vperm.xlu0 %6743, %v4586
  %v6745 = vpop.permute.xlu0 %6744
  %6748 = vset.pattern.permute.xlu0 0
  %6749 = vperm.xlu0 %6748, %v4587
  %v6750 = vpop.permute.xlu0 %6749
  %6753 = vset.pattern.permute.xlu0 0
  %6754 = vperm.xlu0 %6753, %v4588
  %v6755 = vpop.permute.xlu0 %6754
  %6758 = vset.pattern.permute.xlu0 0
  %6759 = vperm.xlu0 %6758, %v4589
  %v6760 = vpop.permute.xlu0 %6759
  %6763 = vset.pattern.permute.xlu0 0
  %6764 = vperm.xlu0 %6763, %v4590
  %v6765 = vpop.permute.xlu0 %6764
  %6768 = vset.pattern.permute.xlu0 0
  %6769 = vperm.xlu0 %6768, %v4591
  %v6770 = vpop.permute.xlu0 %6769
  %6773 = vset.pattern.permute.xlu0 0
  %6774 = vperm.xlu0 %6773, %v4592
  %v6775 = vpop.permute.xlu0 %6774
  %6778 = vset.pattern.permute.xlu0 0
  %6779 = vperm.xlu0 %6778, %v4593
  %v6780 = vpop.permute.xlu0 %6779
  %6783 = vset.pattern.permute.xlu0 0
  %6784 = vperm.xlu0 %6783, %v4594
  %v6785 = vpop.permute.xlu0 %6784
  %6788 = vset.pattern.permute.xlu0 0
  %6789 = vperm.xlu0 %6788, %v4595
  %v6790 = vpop.permute.xlu0 %6789
  %6793 = vset.pattern.permute.xlu0 0
  %6794 = vperm.xlu0 %6793, %v4596
  %v6795 = vpop.permute.xlu0 %6794
  %6798 = vset.pattern.permute.xlu0 0
  %6799 = vperm.xlu0 %6798, %v4597
  %v6800 = vpop.permute.xlu0 %6799
  %6803 = vset.pattern.permute.xlu0 0
  %6804 = vperm.xlu0 %6803, %v4598
  %v6805 = vpop.permute.xlu0 %6804
  %6808 = vset.pattern.permute.xlu0 0
  %6809 = vperm.xlu0 %6808, %v4599
  %v6810 = vpop.permute.xlu0 %6809
  %6813 = vset.pattern.permute.xlu0 0
  %6814 = vperm.xlu0 %6813, %v4600
  %v6815 = vpop.permute.xlu0 %6814
  %6818 = vset.pattern.permute.xlu0 0
  %6819 = vperm.xlu0 %6818, %v4601
  %v6820 = vpop.permute.xlu0 %6819
  %6823 = vset.pattern.permute.xlu0 0
  %6824 = vperm.xlu0 %6823, %v4602
  %v6825 = vpop.permute.xlu0 %6824
  %6828 = vset.pattern.permute.xlu0 0
  %6829 = vperm.xlu0 %6828, %v4603
  %v6830 = vpop.permute.xlu0 %6829
  %6833 = vset.pattern.permute.xlu0 0
  %6834 = vperm.xlu0 %6833, %v4604
  %v6835 = vpop.permute.xlu0 %6834
  %6838 = vset.pattern.permute.xlu0 0
  %6839 = vperm.xlu0 %6838, %v4605
  %v6840 = vpop.permute.xlu0 %6839
  %6843 = vset.pattern.permute.xlu0 0
  %6844 = vperm.xlu0 %6843, %v4606
  %v6845 = vpop.permute.xlu0 %6844
  %6848 = vset.pattern.permute.xlu0 0
  %6849 = vperm.xlu0 %6848, %v4607
  %v6850 = vpop.permute.xlu0 %6849
  %6853 = vset.pattern.permute.xlu0 0
  %6854 = vperm.xlu0 %6853, %v4608
  %v6855 = vpop.permute.xlu0 %6854
  %6858 = vset.pattern.permute.xlu0 0
  %6859 = vperm.xlu0 %6858, %v4609
  %v6860 = vpop.permute.xlu0 %6859
  %6863 = vset.pattern.permute.xlu0 0
  %6864 = vperm.xlu0 %6863, %v4610
  %v6865 = vpop.permute.xlu0 %6864
  %6868 = vset.pattern.permute.xlu0 0
  %6869 = vperm.xlu0 %6868, %v4611
  %v6870 = vpop.permute.xlu0 %6869
  %6873 = vset.pattern.permute.xlu0 0
  %6874 = vperm.xlu0 %6873, %v4612
  %v6875 = vpop.permute.xlu0 %6874
  %6878 = vset.pattern.permute.xlu0 0
  %6879 = vperm.xlu0 %6878, %v4613
  %v6880 = vpop.permute.xlu0 %6879
  %6883 = vset.pattern.permute.xlu0 0
  %6884 = vperm.xlu0 %6883, %v4614
  %v6885 = vpop.permute.xlu0 %6884
  %6888 = vset.pattern.permute.xlu0 0
  %6889 = vperm.xlu0 %6888, %v4615
  %v6890 = vpop.permute.xlu0 %6889
  %6893 = vset.pattern.permute.xlu0 0
  %6894 = vperm.xlu0 %6893, %v4616
  %v6895 = vpop.permute.xlu0 %6894
  %6898 = vset.pattern.permute.xlu0 0
  %6899 = vperm.xlu0 %6898, %v4617
  %v6900 = vpop.permute.xlu0 %6899
  %6903 = vset.pattern.permute.xlu0 0
  %6904 = vperm.xlu0 %6903, %v4618
  %v6905 = vpop.permute.xlu0 %6904
  %6908 = vset.pattern.permute.xlu0 0
  %6909 = vperm.xlu0 %6908, %v4619
  %v6910 = vpop.permute.xlu0 %6909
  %6913 = vset.pattern.permute.xlu0 0
  %6914 = vperm.xlu0 %6913, %v4620
  %v6915 = vpop.permute.xlu0 %6914
  %6918 = vset.pattern.permute.xlu0 0
  %6919 = vperm.xlu0 %6918, %v4621
  %v6920 = vpop.permute.xlu0 %6919
  %6923 = vset.pattern.permute.xlu0 0
  %6924 = vperm.xlu0 %6923, %v4622
  %v6925 = vpop.permute.xlu0 %6924
  %v6927 = vmul.f32 %v14, %v5490
  %v6928 = vmul.f32 %v15, %v5495
  %v6929 = vmul.f32 %v16, %v5500
  %v6930 = vmul.f32 %v17, %v5505
  %v6931 = vmul.f32 %v18, %v5510
  %v6932 = vmul.f32 %v19, %v5515
  %v6933 = vmul.f32 %v20, %v5520
  %v6934 = vmul.f32 %v21, %v5525
  %v6935 = vmul.f32 %v22, %v5530
  %v6936 = vmul.f32 %v23, %v5535
  %v6937 = vmul.f32 %v24, %v5540
  %v6938 = vmul.f32 %v25, %v5545
  %v6939 = vmul.f32 %v26, %v5550
  %v6940 = vmul.f32 %v27, %v5555
  %v6941 = vmul.f32 %v28, %v5560
  %v6942 = vmul.f32 %v29, %v5565
  %v6943 = vmul.f32 %v30, %v5570
  %v6944 = vmul.f32 %v31, %v5575
  %v6945 = vmul.f32 %v32, %v5580
  %v6946 = vmul.f32 %v33, %v5585
  %v6947 = vmul.f32 %v34, %v5590
  %v6948 = vmul.f32 %v35, %v5595
  %v6949 = vmul.f32 %v36, %v5600
  %v6950 = vmul.f32 %v37, %v5605
  %v6951 = vmul.f32 %v38, %v5610
  %v6952 = vmul.f32 %v39, %v5615
  %v6953 = vmul.f32 %v40, %v5620
  %v6954 = vmul.f32 %v41, %v5625
  %v6955 = vmul.f32 %v42, %v5630
  %v6956 = vmul.f32 %v43, %v5635
  %v6957 = vmul.f32 %v44, %v5640
  %v6958 = vmul.f32 %v45, %v5645
  %v6959 = vmul.f32 %v46, %v5650
  %v6960 = vmul.f32 %v47, %v5655
  %v6961 = vmul.f32 %v48, %v5660
  %v6962 = vmul.f32 %v49, %v5665
  %v6963 = vmul.f32 %v50, %v5670
  %v6964 = vmul.f32 %v51, %v5675
  %v6965 = vmul.f32 %v52, %v5680
  %v6966 = vmul.f32 %v53, %v5685
  %v6967 = vmul.f32 %v54, %v5690
  %v6968 = vmul.f32 %v55, %v5695
  %v6969 = vmul.f32 %v56, %v5700
  %v6970 = vmul.f32 %v57, %v5705
  %v6971 = vmul.f32 %v58, %v5710
  %v6972 = vmul.f32 %v59, %v5715
  %v6973 = vmul.f32 %v60, %v5720
  %v6974 = vmul.f32 %v61, %v5725
  %v6975 = vmul.f32 %v62, %v5730
  %v6976 = vmul.f32 %v63, %v5735
  %v6977 = vmul.f32 %v64, %v5740
  %v6978 = vmul.f32 %v65, %v5745
  %v6979 = vmul.f32 %v66, %v5750
  %v6980 = vmul.f32 %v67, %v5755
  %v6981 = vmul.f32 %v68, %v5760
  %v6982 = vmul.f32 %v69, %v5765
  %v6983 = vmul.f32 %v70, %v5770
  %v6984 = vmul.f32 %v71, %v5775
  %v6985 = vmul.f32 %v72, %v5780
  %v6986 = vmul.f32 %v73, %v5785
  %v6987 = vmul.f32 %v74, %v5790
  %v6988 = vmul.f32 %v75, %v5795
  %v6989 = vmul.f32 %v76, %v5800
  %v6990 = vmul.f32 %v77, %v5805
  %v6991 = vmul.f32 %v78, %v5810
  %v6992 = vmul.f32 %v79, %v5815
  %v6993 = vmul.f32 %v80, %v5820
  %v6994 = vmul.f32 %v81, %v5825
  %v6995 = vmul.f32 %v82, %v5830
  %v6996 = vmul.f32 %v83, %v5835
  %v6997 = vmul.f32 %v84, %v5840
  %v6998 = vmul.f32 %v85, %v5845
  %v6999 = vmul.f32 %v86, %v5850
  %v7000 = vmul.f32 %v87, %v5855
  %v7001 = vmul.f32 %v88, %v5860
  %v7002 = vmul.f32 %v89, %v5865
  %v7003 = vmul.f32 %v90, %v5870
  %v7004 = vmul.f32 %v91, %v5875
  %v7005 = vmul.f32 %v92, %v5880
  %v7006 = vmul.f32 %v93, %v5885
  %v7007 = vmul.f32 %v94, %v5890
  %v7008 = vmul.f32 %v95, %v5895
  %v7009 = vmul.f32 %v96, %v5900
  %v7010 = vmul.f32 %v97, %v5905
  %v7011 = vmul.f32 %v98, %v5910
  %v7012 = vmul.f32 %v99, %v5915
  %v7013 = vmul.f32 %v100, %v5920
  %v7014 = vmul.f32 %v101, %v5925
  %v7015 = vmul.f32 %v102, %v5930
  %v7016 = vmul.f32 %v103, %v5935
  %v7017 = vmul.f32 %v104, %v5940
  %v7018 = vmul.f32 %v105, %v5945
  %v7019 = vmul.f32 %v106, %v5950
  %v7020 = vmul.f32 %v107, %v5955
  %v7021 = vmul.f32 %v108, %v5960
  %v7022 = vmul.f32 %v109, %v5965
  %v7023 = vmul.f32 %v110, %v5970
  %v7024 = vmul.f32 %v111, %v5975
  %v7025 = vmul.f32 %v112, %v5980
  %v7026 = vmul.f32 %v113, %v5985
  %v7027 = vmul.f32 %v114, %v5990
  %v7028 = vmul.f32 %v115, %v5995
  %v7029 = vmul.f32 %v116, %v6000
  %v7030 = vmul.f32 %v117, %v6005
  %v7031 = vmul.f32 %v118, %v6010
  %v7032 = vmul.f32 %v119, %v6015
  %v7033 = vmul.f32 %v120, %v6020
  %v7034 = vmul.f32 %v121, %v6025
  %v7035 = vmul.f32 %v122, %v6030
  %v7036 = vmul.f32 %v123, %v6035
  %v7037 = vmul.f32 %v124, %v6040
  %v7038 = vmul.f32 %v125, %v6045
  %v7039 = vmul.f32 %v126, %v6050
  %v7040 = vmul.f32 %v127, %v6055
  %v7041 = vmul.f32 %v128, %v6060
  %v7042 = vmul.f32 %v129, %v6065
  %v7043 = vmul.f32 %v130, %v6070
  %v7044 = vmul.f32 %v131, %v6075
  %v7045 = vmul.f32 %v132, %v6080
  %v7046 = vmul.f32 %v133, %v6085
  %v7047 = vmul.f32 %v134, %v6090
  %v7048 = vmul.f32 %v135, %v6095
  %v7049 = vmul.f32 %v136, %v6100
  %v7050 = vmul.f32 %v137, %v6105
  %v7051 = vmul.f32 %v138, %v6110
  %v7052 = vmul.f32 %v139, %v6115
  %v7053 = vmul.f32 %v140, %v6120
  %v7054 = vmul.f32 %v141, %v6125
  %v7055 = vmul.f32 %v142, %v6130
  %v7056 = vmul.f32 %v143, %v6135
  %v7057 = vmul.f32 %v144, %v6140
  %v7058 = vmul.f32 %v145, %v6145
  %v7059 = vmul.f32 %v146, %v6150
  %v7060 = vmul.f32 %v147, %v6155
  %v7061 = vmul.f32 %v148, %v6160
  %v7062 = vmul.f32 %v149, %v6165
  %v7063 = vmul.f32 %v150, %v6170
  %v7064 = vmul.f32 %v151, %v6175
  %v7065 = vmul.f32 %v152, %v6180
  %v7066 = vmul.f32 %v153, %v6185
  %v7067 = vmul.f32 %v154, %v6190
  %v7068 = vmul.f32 %v155, %v6195
  %v7069 = vmul.f32 %v156, %v6200
  %v7070 = vmul.f32 %v157, %v6205
  %v7071 = vmul.f32 %v158, %v6210
  %v7072 = vmul.f32 %v159, %v6215
  %v7073 = vmul.f32 %v160, %v6220
  %v7074 = vmul.f32 %v161, %v6225
  %v7075 = vmul.f32 %v162, %v6230
  %v7076 = vmul.f32 %v163, %v6235
  %v7077 = vmul.f32 %v164, %v6240
  %v7078 = vmul.f32 %v165, %v6245
  %v7079 = vmul.f32 %v166, %v6250
  %v7080 = vmul.f32 %v167, %v6255
  %v7081 = vmul.f32 %v168, %v6260
  %v7082 = vmul.f32 %v169, %v6265
  %v7083 = vmul.f32 %v170, %v6270
  %v7084 = vmul.f32 %v171, %v6275
  %v7085 = vmul.f32 %v172, %v6280
  %v7086 = vmul.f32 %v173, %v6285
  %v7087 = vmul.f32 %v174, %v6290
  %v7088 = vmul.f32 %v175, %v6295
  %v7089 = vmul.f32 %v176, %v6300
  %v7090 = vmul.f32 %v177, %v6305
  %v7091 = vmul.f32 %v178, %v6310
  %v7092 = vmul.f32 %v179, %v6315
  %v7093 = vmul.f32 %v180, %v6320
  %v7094 = vmul.f32 %v181, %v6325
  %v7095 = vmul.f32 %v182, %v6330
  %v7096 = vmul.f32 %v183, %v6335
  %v7097 = vmul.f32 %v184, %v6340
  %v7098 = vmul.f32 %v185, %v6345
  %v7099 = vmul.f32 %v186, %v6350
  %v7100 = vmul.f32 %v187, %v6355
  %v7101 = vmul.f32 %v188, %v6360
  %v7102 = vmul.f32 %v189, %v6365
  %v7103 = vmul.f32 %v190, %v6370
  %v7104 = vmul.f32 %v191, %v6375
  %v7105 = vmul.f32 %v192, %v6380
  %v7106 = vmul.f32 %v193, %v6385
  %v7107 = vmul.f32 %v194, %v6390
  %v7108 = vmul.f32 %v195, %v6395
  %v7109 = vmul.f32 %v196, %v6400
  %v7110 = vmul.f32 %v197, %v6405
  %v7111 = vmul.f32 %v198, %v6410
  %v7112 = vmul.f32 %v199, %v6415
  %v7113 = vmul.f32 %v200, %v6420
  %v7114 = vmul.f32 %v201, %v6425
  %v7115 = vmul.f32 %v202, %v6430
  %v7116 = vmul.f32 %v203, %v6435
  %v7117 = vmul.f32 %v204, %v6440
  %v7118 = vmul.f32 %v205, %v6445
  %v7119 = vmul.f32 %v206, %v6450
  %v7120 = vmul.f32 %v207, %v6455
  %v7121 = vmul.f32 %v208, %v6460
  %v7122 = vmul.f32 %v209, %v6465
  %v7123 = vmul.f32 %v210, %v6470
  %v7124 = vmul.f32 %v211, %v6475
  %v7125 = vmul.f32 %v212, %v6480
  %v7126 = vmul.f32 %v213, %v6485
  %v7127 = vmul.f32 %v214, %v6490
  %v7128 = vmul.f32 %v215, %v6495
  %v7129 = vmul.f32 %v216, %v6500
  %v7130 = vmul.f32 %v217, %v6505
  %v7131 = vmul.f32 %v218, %v6510
  %v7132 = vmul.f32 %v219, %v6515
  %v7133 = vmul.f32 %v220, %v6520
  %v7134 = vmul.f32 %v221, %v6525
  %v7135 = vmul.f32 %v222, %v6530
  %v7136 = vmul.f32 %v223, %v6535
  %v7137 = vmul.f32 %v224, %v6540
  %v7138 = vmul.f32 %v225, %v6545
  %v7139 = vmul.f32 %v226, %v6550
  %v7140 = vmul.f32 %v227, %v6555
  %v7141 = vmul.f32 %v228, %v6560
  %v7142 = vmul.f32 %v229, %v6565
  %v7143 = vmul.f32 %v230, %v6570
  %v7144 = vmul.f32 %v231, %v6575
  %v7145 = vmul.f32 %v232, %v6580
  %v7146 = vmul.f32 %v233, %v6585
  %v7147 = vmul.f32 %v234, %v6590
  %v7148 = vmul.f32 %v235, %v6595
  %v7149 = vmul.f32 %v236, %v6600
  %v7150 = vmul.f32 %v237, %v6605
  %v7151 = vmul.f32 %v238, %v6610
  %v7152 = vmul.f32 %v239, %v6615
  %v7153 = vmul.f32 %v240, %v6620
  %v7154 = vmul.f32 %v241, %v6625
  %v7155 = vmul.f32 %v242, %v6630
  %v7156 = vmul.f32 %v243, %v6635
  %v7157 = vmul.f32 %v244, %v6640
  %v7158 = vmul.f32 %v245, %v6645
  %v7159 = vmul.f32 %v246, %v6650
  %v7160 = vmul.f32 %v247, %v6655
  %v7161 = vmul.f32 %v248, %v6660
  %v7162 = vmul.f32 %v249, %v6665
  %v7163 = vmul.f32 %v250, %v6670
  %v7164 = vmul.f32 %v251, %v6675
  %v7165 = vmul.f32 %v252, %v6680
  %v7166 = vmul.f32 %v253, %v6685
  %v7167 = vmul.f32 %v254, %v6690
  %v7168 = vmul.f32 %v255, %v6695
  %v7169 = vmul.f32 %v256, %v6700
  %v7170 = vmul.f32 %v257, %v6705
  %v7171 = vmul.f32 %v258, %v6710
  %v7172 = vmul.f32 %v259, %v6715
  %v7173 = vmul.f32 %v260, %v6720
  %v7174 = vmul.f32 %v261, %v6725
  %v7175 = vmul.f32 %v262, %v6730
  %v7176 = vmul.f32 %v263, %v6735
  %v7177 = vmul.f32 %v264, %v6740
  %v7178 = vmul.f32 %v265, %v6745
  %v7179 = vmul.f32 %v266, %v6750
  %v7180 = vmul.f32 %v267, %v6755
  %v7181 = vmul.f32 %v268, %v6760
  %v7182 = vmul.f32 %v269, %v6765
  %v7183 = vmul.f32 %v270, %v6770
  %v7184 = vmul.f32 %v271, %v6775
  %v7185 = vmul.f32 %v272, %v6780
  %v7186 = vmul.f32 %v273, %v6785
  %v7187 = vmul.f32 %v274, %v6790
  %v7188 = vmul.f32 %v275, %v6795
  %v7189 = vmul.f32 %v276, %v6800
  %v7190 = vmul.f32 %v277, %v6805
  %v7191 = vmul.f32 %v278, %v6810
  %v7192 = vmul.f32 %v279, %v6815
  %v7193 = vmul.f32 %v280, %v6820
  %v7194 = vmul.f32 %v281, %v6825
  %v7195 = vmul.f32 %v282, %v6830
  %v7196 = vmul.f32 %v283, %v6835
  %v7197 = vmul.f32 %v284, %v6840
  %v7198 = vmul.f32 %v285, %v6845
  %v7199 = vmul.f32 %v286, %v6850
  %v7200 = vmul.f32 %v287, %v6855
  %v7201 = vmul.f32 %v288, %v6860
  %v7202 = vmul.f32 %v289, %v6865
  %v7203 = vmul.f32 %v290, %v6870
  %v7204 = vmul.f32 %v291, %v6875
  %v7205 = vmul.f32 %v292, %v6880
  %v7206 = vmul.f32 %v293, %v6885
  %v7207 = vmul.f32 %v294, %v6890
  %v7208 = vmul.f32 %v295, %v6895
  %v7209 = vmul.f32 %v296, %v6900
  %v7210 = vmul.f32 %v297, %v6905
  %v7211 = vmul.f32 %v298, %v6910
  %v7212 = vmul.f32 %v299, %v6915
  %v7213 = vmul.f32 %v300, %v6920
  %v7214 = vmul.f32 %v301, %v6925
  %7216 = vset.pattern.permute.xlu0 0
  %7217 = vperm.xlu0 %7216, %v5199
  %v7218 = vpop.permute.xlu0 %7217
  %7221 = vset.pattern.permute.xlu0 0
  %7222 = vperm.xlu0 %7221, %v5200
  %v7223 = vpop.permute.xlu0 %7222
  %7226 = vset.pattern.permute.xlu0 0
  %7227 = vperm.xlu0 %7226, %v5201
  %v7228 = vpop.permute.xlu0 %7227
  %7231 = vset.pattern.permute.xlu0 0
  %7232 = vperm.xlu0 %7231, %v5202
  %v7233 = vpop.permute.xlu0 %7232
  %7236 = vset.pattern.permute.xlu0 0
  %7237 = vperm.xlu0 %7236, %v5203
  %v7238 = vpop.permute.xlu0 %7237
  %7241 = vset.pattern.permute.xlu0 0
  %7242 = vperm.xlu0 %7241, %v5204
  %v7243 = vpop.permute.xlu0 %7242
  %7246 = vset.pattern.permute.xlu0 0
  %7247 = vperm.xlu0 %7246, %v5205
  %v7248 = vpop.permute.xlu0 %7247
  %7251 = vset.pattern.permute.xlu0 0
  %7252 = vperm.xlu0 %7251, %v5206
  %v7253 = vpop.permute.xlu0 %7252
  %7256 = vset.pattern.permute.xlu0 0
  %7257 = vperm.xlu0 %7256, %v5207
  %v7258 = vpop.permute.xlu0 %7257
  %7261 = vset.pattern.permute.xlu0 0
  %7262 = vperm.xlu0 %7261, %v5208
  %v7263 = vpop.permute.xlu0 %7262
  %7266 = vset.pattern.permute.xlu0 0
  %7267 = vperm.xlu0 %7266, %v5209
  %v7268 = vpop.permute.xlu0 %7267
  %7271 = vset.pattern.permute.xlu0 0
  %7272 = vperm.xlu0 %7271, %v5210
  %v7273 = vpop.permute.xlu0 %7272
  %7276 = vset.pattern.permute.xlu0 0
  %7277 = vperm.xlu0 %7276, %v5211
  %v7278 = vpop.permute.xlu0 %7277
  %7281 = vset.pattern.permute.xlu0 0
  %7282 = vperm.xlu0 %7281, %v5212
  %v7283 = vpop.permute.xlu0 %7282
  %7286 = vset.pattern.permute.xlu0 0
  %7287 = vperm.xlu0 %7286, %v5213
  %v7288 = vpop.permute.xlu0 %7287
  %7291 = vset.pattern.permute.xlu0 0
  %7292 = vperm.xlu0 %7291, %v5214
  %v7293 = vpop.permute.xlu0 %7292
  %7296 = vset.pattern.permute.xlu0 0
  %7297 = vperm.xlu0 %7296, %v5215
  %v7298 = vpop.permute.xlu0 %7297
  %7301 = vset.pattern.permute.xlu0 0
  %7302 = vperm.xlu0 %7301, %v5216
  %v7303 = vpop.permute.xlu0 %7302
  %7306 = vset.pattern.permute.xlu0 0
  %7307 = vperm.xlu0 %7306, %v5217
  %v7308 = vpop.permute.xlu0 %7307
  %7311 = vset.pattern.permute.xlu0 0
  %7312 = vperm.xlu0 %7311, %v5218
  %v7313 = vpop.permute.xlu0 %7312
  %7316 = vset.pattern.permute.xlu0 0
  %7317 = vperm.xlu0 %7316, %v5219
  %v7318 = vpop.permute.xlu0 %7317
  %7321 = vset.pattern.permute.xlu0 0
  %7322 = vperm.xlu0 %7321, %v5220
  %v7323 = vpop.permute.xlu0 %7322
  %7326 = vset.pattern.permute.xlu0 0
  %7327 = vperm.xlu0 %7326, %v5221
  %v7328 = vpop.permute.xlu0 %7327
  %7331 = vset.pattern.permute.xlu0 0
  %7332 = vperm.xlu0 %7331, %v5222
  %v7333 = vpop.permute.xlu0 %7332
  %7336 = vset.pattern.permute.xlu0 0
  %7337 = vperm.xlu0 %7336, %v5223
  %v7338 = vpop.permute.xlu0 %7337
  %7341 = vset.pattern.permute.xlu0 0
  %7342 = vperm.xlu0 %7341, %v5224
  %v7343 = vpop.permute.xlu0 %7342
  %7346 = vset.pattern.permute.xlu0 0
  %7347 = vperm.xlu0 %7346, %v5225
  %v7348 = vpop.permute.xlu0 %7347
  %7351 = vset.pattern.permute.xlu0 0
  %7352 = vperm.xlu0 %7351, %v5226
  %v7353 = vpop.permute.xlu0 %7352
  %7356 = vset.pattern.permute.xlu0 0
  %7357 = vperm.xlu0 %7356, %v5227
  %v7358 = vpop.permute.xlu0 %7357
  %7361 = vset.pattern.permute.xlu0 0
  %7362 = vperm.xlu0 %7361, %v5228
  %v7363 = vpop.permute.xlu0 %7362
  %7366 = vset.pattern.permute.xlu0 0
  %7367 = vperm.xlu0 %7366, %v5229
  %v7368 = vpop.permute.xlu0 %7367
  %7371 = vset.pattern.permute.xlu0 0
  %7372 = vperm.xlu0 %7371, %v5230
  %v7373 = vpop.permute.xlu0 %7372
  %7376 = vset.pattern.permute.xlu0 0
  %7377 = vperm.xlu0 %7376, %v5231
  %v7378 = vpop.permute.xlu0 %7377
  %7381 = vset.pattern.permute.xlu0 0
  %7382 = vperm.xlu0 %7381, %v5232
  %v7383 = vpop.permute.xlu0 %7382
  %7386 = vset.pattern.permute.xlu0 0
  %7387 = vperm.xlu0 %7386, %v5233
  %v7388 = vpop.permute.xlu0 %7387
  %7391 = vset.pattern.permute.xlu0 0
  %7392 = vperm.xlu0 %7391, %v5234
  %v7393 = vpop.permute.xlu0 %7392
  %7396 = vset.pattern.permute.xlu0 0
  %7397 = vperm.xlu0 %7396, %v5235
  %v7398 = vpop.permute.xlu0 %7397
  %7401 = vset.pattern.permute.xlu0 0
  %7402 = vperm.xlu0 %7401, %v5236
  %v7403 = vpop.permute.xlu0 %7402
  %7406 = vset.pattern.permute.xlu0 0
  %7407 = vperm.xlu0 %7406, %v5237
  %v7408 = vpop.permute.xlu0 %7407
  %7411 = vset.pattern.permute.xlu0 0
  %7412 = vperm.xlu0 %7411, %v5238
  %v7413 = vpop.permute.xlu0 %7412
  %7416 = vset.pattern.permute.xlu0 0
  %7417 = vperm.xlu0 %7416, %v5239
  %v7418 = vpop.permute.xlu0 %7417
  %7421 = vset.pattern.permute.xlu0 0
  %7422 = vperm.xlu0 %7421, %v5240
  %v7423 = vpop.permute.xlu0 %7422
  %7426 = vset.pattern.permute.xlu0 0
  %7427 = vperm.xlu0 %7426, %v5241
  %v7428 = vpop.permute.xlu0 %7427
  %7431 = vset.pattern.permute.xlu0 0
  %7432 = vperm.xlu0 %7431, %v5242
  %v7433 = vpop.permute.xlu0 %7432
  %7436 = vset.pattern.permute.xlu0 0
  %7437 = vperm.xlu0 %7436, %v5243
  %v7438 = vpop.permute.xlu0 %7437
  %7441 = vset.pattern.permute.xlu0 0
  %7442 = vperm.xlu0 %7441, %v5244
  %v7443 = vpop.permute.xlu0 %7442
  %7446 = vset.pattern.permute.xlu0 0
  %7447 = vperm.xlu0 %7446, %v5245
  %v7448 = vpop.permute.xlu0 %7447
  %7451 = vset.pattern.permute.xlu0 0
  %7452 = vperm.xlu0 %7451, %v5246
  %v7453 = vpop.permute.xlu0 %7452
  %7456 = vset.pattern.permute.xlu0 0
  %7457 = vperm.xlu0 %7456, %v5247
  %v7458 = vpop.permute.xlu0 %7457
  %7461 = vset.pattern.permute.xlu0 0
  %7462 = vperm.xlu0 %7461, %v5248
  %v7463 = vpop.permute.xlu0 %7462
  %7466 = vset.pattern.permute.xlu0 0
  %7467 = vperm.xlu0 %7466, %v5249
  %v7468 = vpop.permute.xlu0 %7467
  %7471 = vset.pattern.permute.xlu0 0
  %7472 = vperm.xlu0 %7471, %v5250
  %v7473 = vpop.permute.xlu0 %7472
  %7476 = vset.pattern.permute.xlu0 0
  %7477 = vperm.xlu0 %7476, %v5251
  %v7478 = vpop.permute.xlu0 %7477
  %7481 = vset.pattern.permute.xlu0 0
  %7482 = vperm.xlu0 %7481, %v5252
  %v7483 = vpop.permute.xlu0 %7482
  %7486 = vset.pattern.permute.xlu0 0
  %7487 = vperm.xlu0 %7486, %v5253
  %v7488 = vpop.permute.xlu0 %7487
  %7491 = vset.pattern.permute.xlu0 0
  %7492 = vperm.xlu0 %7491, %v5254
  %v7493 = vpop.permute.xlu0 %7492
  %7496 = vset.pattern.permute.xlu0 0
  %7497 = vperm.xlu0 %7496, %v5255
  %v7498 = vpop.permute.xlu0 %7497
  %7501 = vset.pattern.permute.xlu0 0
  %7502 = vperm.xlu0 %7501, %v5256
  %v7503 = vpop.permute.xlu0 %7502
  %7506 = vset.pattern.permute.xlu0 0
  %7507 = vperm.xlu0 %7506, %v5257
  %v7508 = vpop.permute.xlu0 %7507
  %7511 = vset.pattern.permute.xlu0 0
  %7512 = vperm.xlu0 %7511, %v5258
  %v7513 = vpop.permute.xlu0 %7512
  %7516 = vset.pattern.permute.xlu0 0
  %7517 = vperm.xlu0 %7516, %v5259
  %v7518 = vpop.permute.xlu0 %7517
  %7521 = vset.pattern.permute.xlu0 0
  %7522 = vperm.xlu0 %7521, %v5260
  %v7523 = vpop.permute.xlu0 %7522
  %7526 = vset.pattern.permute.xlu0 0
  %7527 = vperm.xlu0 %7526, %v5261
  %v7528 = vpop.permute.xlu0 %7527
  %7531 = vset.pattern.permute.xlu0 0
  %7532 = vperm.xlu0 %7531, %v5262
  %v7533 = vpop.permute.xlu0 %7532
  %7536 = vset.pattern.permute.xlu0 0
  %7537 = vperm.xlu0 %7536, %v5263
  %v7538 = vpop.permute.xlu0 %7537
  %7541 = vset.pattern.permute.xlu0 0
  %7542 = vperm.xlu0 %7541, %v5264
  %v7543 = vpop.permute.xlu0 %7542
  %7546 = vset.pattern.permute.xlu0 0
  %7547 = vperm.xlu0 %7546, %v5265
  %v7548 = vpop.permute.xlu0 %7547
  %7551 = vset.pattern.permute.xlu0 0
  %7552 = vperm.xlu0 %7551, %v5266
  %v7553 = vpop.permute.xlu0 %7552
  %7556 = vset.pattern.permute.xlu0 0
  %7557 = vperm.xlu0 %7556, %v5267
  %v7558 = vpop.permute.xlu0 %7557
  %7561 = vset.pattern.permute.xlu0 0
  %7562 = vperm.xlu0 %7561, %v5268
  %v7563 = vpop.permute.xlu0 %7562
  %7566 = vset.pattern.permute.xlu0 0
  %7567 = vperm.xlu0 %7566, %v5269
  %v7568 = vpop.permute.xlu0 %7567
  %7571 = vset.pattern.permute.xlu0 0
  %7572 = vperm.xlu0 %7571, %v5270
  %v7573 = vpop.permute.xlu0 %7572
  %7576 = vset.pattern.permute.xlu0 0
  %7577 = vperm.xlu0 %7576, %v5271
  %v7578 = vpop.permute.xlu0 %7577
  %7581 = vset.pattern.permute.xlu0 0
  %7582 = vperm.xlu0 %7581, %v5272
  %v7583 = vpop.permute.xlu0 %7582
  %7586 = vset.pattern.permute.xlu0 0
  %7587 = vperm.xlu0 %7586, %v5273
  %v7588 = vpop.permute.xlu0 %7587
  %7591 = vset.pattern.permute.xlu0 0
  %7592 = vperm.xlu0 %7591, %v5274
  %v7593 = vpop.permute.xlu0 %7592
  %7596 = vset.pattern.permute.xlu0 0
  %7597 = vperm.xlu0 %7596, %v5275
  %v7598 = vpop.permute.xlu0 %7597
  %7601 = vset.pattern.permute.xlu0 0
  %7602 = vperm.xlu0 %7601, %v5276
  %v7603 = vpop.permute.xlu0 %7602
  %7606 = vset.pattern.permute.xlu0 0
  %7607 = vperm.xlu0 %7606, %v5277
  %v7608 = vpop.permute.xlu0 %7607
  %7611 = vset.pattern.permute.xlu0 0
  %7612 = vperm.xlu0 %7611, %v5278
  %v7613 = vpop.permute.xlu0 %7612
  %7616 = vset.pattern.permute.xlu0 0
  %7617 = vperm.xlu0 %7616, %v5279
  %v7618 = vpop.permute.xlu0 %7617
  %7621 = vset.pattern.permute.xlu0 0
  %7622 = vperm.xlu0 %7621, %v5280
  %v7623 = vpop.permute.xlu0 %7622
  %7626 = vset.pattern.permute.xlu0 0
  %7627 = vperm.xlu0 %7626, %v5281
  %v7628 = vpop.permute.xlu0 %7627
  %7631 = vset.pattern.permute.xlu0 0
  %7632 = vperm.xlu0 %7631, %v5282
  %v7633 = vpop.permute.xlu0 %7632
  %7636 = vset.pattern.permute.xlu0 0
  %7637 = vperm.xlu0 %7636, %v5283
  %v7638 = vpop.permute.xlu0 %7637
  %7641 = vset.pattern.permute.xlu0 0
  %7642 = vperm.xlu0 %7641, %v5284
  %v7643 = vpop.permute.xlu0 %7642
  %7646 = vset.pattern.permute.xlu0 0
  %7647 = vperm.xlu0 %7646, %v5285
  %v7648 = vpop.permute.xlu0 %7647
  %7651 = vset.pattern.permute.xlu0 0
  %7652 = vperm.xlu0 %7651, %v5286
  %v7653 = vpop.permute.xlu0 %7652
  %7656 = vset.pattern.permute.xlu0 0
  %7657 = vperm.xlu0 %7656, %v5287
  %v7658 = vpop.permute.xlu0 %7657
  %7661 = vset.pattern.permute.xlu0 0
  %7662 = vperm.xlu0 %7661, %v5288
  %v7663 = vpop.permute.xlu0 %7662
  %7666 = vset.pattern.permute.xlu0 0
  %7667 = vperm.xlu0 %7666, %v5289
  %v7668 = vpop.permute.xlu0 %7667
  %7671 = vset.pattern.permute.xlu0 0
  %7672 = vperm.xlu0 %7671, %v5290
  %v7673 = vpop.permute.xlu0 %7672
  %7676 = vset.pattern.permute.xlu0 0
  %7677 = vperm.xlu0 %7676, %v5291
  %v7678 = vpop.permute.xlu0 %7677
  %7681 = vset.pattern.permute.xlu0 0
  %7682 = vperm.xlu0 %7681, %v5292
  %v7683 = vpop.permute.xlu0 %7682
  %7686 = vset.pattern.permute.xlu0 0
  %7687 = vperm.xlu0 %7686, %v5293
  %v7688 = vpop.permute.xlu0 %7687
  %7691 = vset.pattern.permute.xlu0 0
  %7692 = vperm.xlu0 %7691, %v5294
  %v7693 = vpop.permute.xlu0 %7692
  %7696 = vset.pattern.permute.xlu0 0
  %7697 = vperm.xlu0 %7696, %v5295
  %v7698 = vpop.permute.xlu0 %7697
  %7701 = vset.pattern.permute.xlu0 0
  %7702 = vperm.xlu0 %7701, %v5296
  %v7703 = vpop.permute.xlu0 %7702
  %7706 = vset.pattern.permute.xlu0 0
  %7707 = vperm.xlu0 %7706, %v5297
  %v7708 = vpop.permute.xlu0 %7707
  %7711 = vset.pattern.permute.xlu0 0
  %7712 = vperm.xlu0 %7711, %v5298
  %v7713 = vpop.permute.xlu0 %7712
  %7716 = vset.pattern.permute.xlu0 0
  %7717 = vperm.xlu0 %7716, %v5299
  %v7718 = vpop.permute.xlu0 %7717
  %7721 = vset.pattern.permute.xlu0 0
  %7722 = vperm.xlu0 %7721, %v5300
  %v7723 = vpop.permute.xlu0 %7722
  %7726 = vset.pattern.permute.xlu0 0
  %7727 = vperm.xlu0 %7726, %v5301
  %v7728 = vpop.permute.xlu0 %7727
  %7731 = vset.pattern.permute.xlu0 0
  %7732 = vperm.xlu0 %7731, %v5302
  %v7733 = vpop.permute.xlu0 %7732
  %7736 = vset.pattern.permute.xlu0 0
  %7737 = vperm.xlu0 %7736, %v5303
  %v7738 = vpop.permute.xlu0 %7737
  %7741 = vset.pattern.permute.xlu0 0
  %7742 = vperm.xlu0 %7741, %v5304
  %v7743 = vpop.permute.xlu0 %7742
  %7746 = vset.pattern.permute.xlu0 0
  %7747 = vperm.xlu0 %7746, %v5305
  %v7748 = vpop.permute.xlu0 %7747
  %7751 = vset.pattern.permute.xlu0 0
  %7752 = vperm.xlu0 %7751, %v5306
  %v7753 = vpop.permute.xlu0 %7752
  %7756 = vset.pattern.permute.xlu0 0
  %7757 = vperm.xlu0 %7756, %v5307
  %v7758 = vpop.permute.xlu0 %7757
  %7761 = vset.pattern.permute.xlu0 0
  %7762 = vperm.xlu0 %7761, %v5308
  %v7763 = vpop.permute.xlu0 %7762
  %7766 = vset.pattern.permute.xlu0 0
  %7767 = vperm.xlu0 %7766, %v5309
  %v7768 = vpop.permute.xlu0 %7767
  %7771 = vset.pattern.permute.xlu0 0
  %7772 = vperm.xlu0 %7771, %v5310
  %v7773 = vpop.permute.xlu0 %7772
  %7776 = vset.pattern.permute.xlu0 0
  %7777 = vperm.xlu0 %7776, %v5311
  %v7778 = vpop.permute.xlu0 %7777
  %7781 = vset.pattern.permute.xlu0 0
  %7782 = vperm.xlu0 %7781, %v5312
  %v7783 = vpop.permute.xlu0 %7782
  %7786 = vset.pattern.permute.xlu0 0
  %7787 = vperm.xlu0 %7786, %v5313
  %v7788 = vpop.permute.xlu0 %7787
  %7791 = vset.pattern.permute.xlu0 0
  %7792 = vperm.xlu0 %7791, %v5314
  %v7793 = vpop.permute.xlu0 %7792
  %7796 = vset.pattern.permute.xlu0 0
  %7797 = vperm.xlu0 %7796, %v5315
  %v7798 = vpop.permute.xlu0 %7797
  %7801 = vset.pattern.permute.xlu0 0
  %7802 = vperm.xlu0 %7801, %v5316
  %v7803 = vpop.permute.xlu0 %7802
  %7806 = vset.pattern.permute.xlu0 0
  %7807 = vperm.xlu0 %7806, %v5317
  %v7808 = vpop.permute.xlu0 %7807
  %7811 = vset.pattern.permute.xlu0 0
  %7812 = vperm.xlu0 %7811, %v5318
  %v7813 = vpop.permute.xlu0 %7812
  %7816 = vset.pattern.permute.xlu0 0
  %7817 = vperm.xlu0 %7816, %v5319
  %v7818 = vpop.permute.xlu0 %7817
  %7821 = vset.pattern.permute.xlu0 0
  %7822 = vperm.xlu0 %7821, %v5320
  %v7823 = vpop.permute.xlu0 %7822
  %7826 = vset.pattern.permute.xlu0 0
  %7827 = vperm.xlu0 %7826, %v5321
  %v7828 = vpop.permute.xlu0 %7827
  %7831 = vset.pattern.permute.xlu0 0
  %7832 = vperm.xlu0 %7831, %v5322
  %v7833 = vpop.permute.xlu0 %7832
  %7836 = vset.pattern.permute.xlu0 0
  %7837 = vperm.xlu0 %7836, %v5323
  %v7838 = vpop.permute.xlu0 %7837
  %7841 = vset.pattern.permute.xlu0 0
  %7842 = vperm.xlu0 %7841, %v5324
  %v7843 = vpop.permute.xlu0 %7842
  %7846 = vset.pattern.permute.xlu0 0
  %7847 = vperm.xlu0 %7846, %v5325
  %v7848 = vpop.permute.xlu0 %7847
  %7851 = vset.pattern.permute.xlu0 0
  %7852 = vperm.xlu0 %7851, %v5326
  %v7853 = vpop.permute.xlu0 %7852
  %7856 = vset.pattern.permute.xlu0 0
  %7857 = vperm.xlu0 %7856, %v5327
  %v7858 = vpop.permute.xlu0 %7857
  %7861 = vset.pattern.permute.xlu0 0
  %7862 = vperm.xlu0 %7861, %v5328
  %v7863 = vpop.permute.xlu0 %7862
  %7866 = vset.pattern.permute.xlu0 0
  %7867 = vperm.xlu0 %7866, %v5329
  %v7868 = vpop.permute.xlu0 %7867
  %7871 = vset.pattern.permute.xlu0 0
  %7872 = vperm.xlu0 %7871, %v5330
  %v7873 = vpop.permute.xlu0 %7872
  %7876 = vset.pattern.permute.xlu0 0
  %7877 = vperm.xlu0 %7876, %v5331
  %v7878 = vpop.permute.xlu0 %7877
  %7881 = vset.pattern.permute.xlu0 0
  %7882 = vperm.xlu0 %7881, %v5332
  %v7883 = vpop.permute.xlu0 %7882
  %7886 = vset.pattern.permute.xlu0 0
  %7887 = vperm.xlu0 %7886, %v5333
  %v7888 = vpop.permute.xlu0 %7887
  %7891 = vset.pattern.permute.xlu0 0
  %7892 = vperm.xlu0 %7891, %v5334
  %v7893 = vpop.permute.xlu0 %7892
  %7896 = vset.pattern.permute.xlu0 0
  %7897 = vperm.xlu0 %7896, %v5335
  %v7898 = vpop.permute.xlu0 %7897
  %7901 = vset.pattern.permute.xlu0 0
  %7902 = vperm.xlu0 %7901, %v5336
  %v7903 = vpop.permute.xlu0 %7902
  %7906 = vset.pattern.permute.xlu0 0
  %7907 = vperm.xlu0 %7906, %v5337
  %v7908 = vpop.permute.xlu0 %7907
  %7911 = vset.pattern.permute.xlu0 0
  %7912 = vperm.xlu0 %7911, %v5338
  %v7913 = vpop.permute.xlu0 %7912
  %7916 = vset.pattern.permute.xlu0 0
  %7917 = vperm.xlu0 %7916, %v5339
  %v7918 = vpop.permute.xlu0 %7917
  %7921 = vset.pattern.permute.xlu0 0
  %7922 = vperm.xlu0 %7921, %v5340
  %v7923 = vpop.permute.xlu0 %7922
  %7926 = vset.pattern.permute.xlu0 0
  %7927 = vperm.xlu0 %7926, %v5341
  %v7928 = vpop.permute.xlu0 %7927
  %7931 = vset.pattern.permute.xlu0 0
  %7932 = vperm.xlu0 %7931, %v5342
  %v7933 = vpop.permute.xlu0 %7932
  %7936 = vset.pattern.permute.xlu0 0
  %7937 = vperm.xlu0 %7936, %v5343
  %v7938 = vpop.permute.xlu0 %7937
  %7941 = vset.pattern.permute.xlu0 0
  %7942 = vperm.xlu0 %7941, %v5344
  %v7943 = vpop.permute.xlu0 %7942
  %7946 = vset.pattern.permute.xlu0 0
  %7947 = vperm.xlu0 %7946, %v5345
  %v7948 = vpop.permute.xlu0 %7947
  %7951 = vset.pattern.permute.xlu0 0
  %7952 = vperm.xlu0 %7951, %v5346
  %v7953 = vpop.permute.xlu0 %7952
  %7956 = vset.pattern.permute.xlu0 0
  %7957 = vperm.xlu0 %7956, %v5347
  %v7958 = vpop.permute.xlu0 %7957
  %7961 = vset.pattern.permute.xlu0 0
  %7962 = vperm.xlu0 %7961, %v5348
  %v7963 = vpop.permute.xlu0 %7962
  %7966 = vset.pattern.permute.xlu0 0
  %7967 = vperm.xlu0 %7966, %v5349
  %v7968 = vpop.permute.xlu0 %7967
  %7971 = vset.pattern.permute.xlu0 0
  %7972 = vperm.xlu0 %7971, %v5350
  %v7973 = vpop.permute.xlu0 %7972
  %7976 = vset.pattern.permute.xlu0 0
  %7977 = vperm.xlu0 %7976, %v5351
  %v7978 = vpop.permute.xlu0 %7977
  %7981 = vset.pattern.permute.xlu0 0
  %7982 = vperm.xlu0 %7981, %v5352
  %v7983 = vpop.permute.xlu0 %7982
  %7986 = vset.pattern.permute.xlu0 0
  %7987 = vperm.xlu0 %7986, %v5353
  %v7988 = vpop.permute.xlu0 %7987
  %7991 = vset.pattern.permute.xlu0 0
  %7992 = vperm.xlu0 %7991, %v5354
  %v7993 = vpop.permute.xlu0 %7992
  %7996 = vset.pattern.permute.xlu0 0
  %7997 = vperm.xlu0 %7996, %v5355
  %v7998 = vpop.permute.xlu0 %7997
  %8001 = vset.pattern.permute.xlu0 0
  %8002 = vperm.xlu0 %8001, %v5356
  %v8003 = vpop.permute.xlu0 %8002
  %8006 = vset.pattern.permute.xlu0 0
  %8007 = vperm.xlu0 %8006, %v5357
  %v8008 = vpop.permute.xlu0 %8007
  %8011 = vset.pattern.permute.xlu0 0
  %8012 = vperm.xlu0 %8011, %v5358
  %v8013 = vpop.permute.xlu0 %8012
  %8016 = vset.pattern.permute.xlu0 0
  %8017 = vperm.xlu0 %8016, %v5359
  %v8018 = vpop.permute.xlu0 %8017
  %8021 = vset.pattern.permute.xlu0 0
  %8022 = vperm.xlu0 %8021, %v5360
  %v8023 = vpop.permute.xlu0 %8022
  %8026 = vset.pattern.permute.xlu0 0
  %8027 = vperm.xlu0 %8026, %v5361
  %v8028 = vpop.permute.xlu0 %8027
  %8031 = vset.pattern.permute.xlu0 0
  %8032 = vperm.xlu0 %8031, %v5362
  %v8033 = vpop.permute.xlu0 %8032
  %8036 = vset.pattern.permute.xlu0 0
  %8037 = vperm.xlu0 %8036, %v5363
  %v8038 = vpop.permute.xlu0 %8037
  %8041 = vset.pattern.permute.xlu0 0
  %8042 = vperm.xlu0 %8041, %v5364
  %v8043 = vpop.permute.xlu0 %8042
  %8046 = vset.pattern.permute.xlu0 0
  %8047 = vperm.xlu0 %8046, %v5365
  %v8048 = vpop.permute.xlu0 %8047
  %8051 = vset.pattern.permute.xlu0 0
  %8052 = vperm.xlu0 %8051, %v5366
  %v8053 = vpop.permute.xlu0 %8052
  %8056 = vset.pattern.permute.xlu0 0
  %8057 = vperm.xlu0 %8056, %v5367
  %v8058 = vpop.permute.xlu0 %8057
  %8061 = vset.pattern.permute.xlu0 0
  %8062 = vperm.xlu0 %8061, %v5368
  %v8063 = vpop.permute.xlu0 %8062
  %8066 = vset.pattern.permute.xlu0 0
  %8067 = vperm.xlu0 %8066, %v5369
  %v8068 = vpop.permute.xlu0 %8067
  %8071 = vset.pattern.permute.xlu0 0
  %8072 = vperm.xlu0 %8071, %v5370
  %v8073 = vpop.permute.xlu0 %8072
  %8076 = vset.pattern.permute.xlu0 0
  %8077 = vperm.xlu0 %8076, %v5371
  %v8078 = vpop.permute.xlu0 %8077
  %8081 = vset.pattern.permute.xlu0 0
  %8082 = vperm.xlu0 %8081, %v5372
  %v8083 = vpop.permute.xlu0 %8082
  %8086 = vset.pattern.permute.xlu0 0
  %8087 = vperm.xlu0 %8086, %v5373
  %v8088 = vpop.permute.xlu0 %8087
  %8091 = vset.pattern.permute.xlu0 0
  %8092 = vperm.xlu0 %8091, %v5374
  %v8093 = vpop.permute.xlu0 %8092
  %8096 = vset.pattern.permute.xlu0 0
  %8097 = vperm.xlu0 %8096, %v5375
  %v8098 = vpop.permute.xlu0 %8097
  %8101 = vset.pattern.permute.xlu0 0
  %8102 = vperm.xlu0 %8101, %v5376
  %v8103 = vpop.permute.xlu0 %8102
  %8106 = vset.pattern.permute.xlu0 0
  %8107 = vperm.xlu0 %8106, %v5377
  %v8108 = vpop.permute.xlu0 %8107
  %8111 = vset.pattern.permute.xlu0 0
  %8112 = vperm.xlu0 %8111, %v5378
  %v8113 = vpop.permute.xlu0 %8112
  %8116 = vset.pattern.permute.xlu0 0
  %8117 = vperm.xlu0 %8116, %v5379
  %v8118 = vpop.permute.xlu0 %8117
  %8121 = vset.pattern.permute.xlu0 0
  %8122 = vperm.xlu0 %8121, %v5380
  %v8123 = vpop.permute.xlu0 %8122
  %8126 = vset.pattern.permute.xlu0 0
  %8127 = vperm.xlu0 %8126, %v5381
  %v8128 = vpop.permute.xlu0 %8127
  %8131 = vset.pattern.permute.xlu0 0
  %8132 = vperm.xlu0 %8131, %v5382
  %v8133 = vpop.permute.xlu0 %8132
  %8136 = vset.pattern.permute.xlu0 0
  %8137 = vperm.xlu0 %8136, %v5383
  %v8138 = vpop.permute.xlu0 %8137
  %8141 = vset.pattern.permute.xlu0 0
  %8142 = vperm.xlu0 %8141, %v5384
  %v8143 = vpop.permute.xlu0 %8142
  %8146 = vset.pattern.permute.xlu0 0
  %8147 = vperm.xlu0 %8146, %v5385
  %v8148 = vpop.permute.xlu0 %8147
  %8151 = vset.pattern.permute.xlu0 0
  %8152 = vperm.xlu0 %8151, %v5386
  %v8153 = vpop.permute.xlu0 %8152
  %8156 = vset.pattern.permute.xlu0 0
  %8157 = vperm.xlu0 %8156, %v5387
  %v8158 = vpop.permute.xlu0 %8157
  %8161 = vset.pattern.permute.xlu0 0
  %8162 = vperm.xlu0 %8161, %v5388
  %v8163 = vpop.permute.xlu0 %8162
  %8166 = vset.pattern.permute.xlu0 0
  %8167 = vperm.xlu0 %8166, %v5389
  %v8168 = vpop.permute.xlu0 %8167
  %8171 = vset.pattern.permute.xlu0 0
  %8172 = vperm.xlu0 %8171, %v5390
  %v8173 = vpop.permute.xlu0 %8172
  %8176 = vset.pattern.permute.xlu0 0
  %8177 = vperm.xlu0 %8176, %v5391
  %v8178 = vpop.permute.xlu0 %8177
  %8181 = vset.pattern.permute.xlu0 0
  %8182 = vperm.xlu0 %8181, %v5392
  %v8183 = vpop.permute.xlu0 %8182
  %8186 = vset.pattern.permute.xlu0 0
  %8187 = vperm.xlu0 %8186, %v5393
  %v8188 = vpop.permute.xlu0 %8187
  %8191 = vset.pattern.permute.xlu0 0
  %8192 = vperm.xlu0 %8191, %v5394
  %v8193 = vpop.permute.xlu0 %8192
  %8196 = vset.pattern.permute.xlu0 0
  %8197 = vperm.xlu0 %8196, %v5395
  %v8198 = vpop.permute.xlu0 %8197
  %8201 = vset.pattern.permute.xlu0 0
  %8202 = vperm.xlu0 %8201, %v5396
  %v8203 = vpop.permute.xlu0 %8202
  %8206 = vset.pattern.permute.xlu0 0
  %8207 = vperm.xlu0 %8206, %v5397
  %v8208 = vpop.permute.xlu0 %8207
  %8211 = vset.pattern.permute.xlu0 0
  %8212 = vperm.xlu0 %8211, %v5398
  %v8213 = vpop.permute.xlu0 %8212
  %8216 = vset.pattern.permute.xlu0 0
  %8217 = vperm.xlu0 %8216, %v5399
  %v8218 = vpop.permute.xlu0 %8217
  %8221 = vset.pattern.permute.xlu0 0
  %8222 = vperm.xlu0 %8221, %v5400
  %v8223 = vpop.permute.xlu0 %8222
  %8226 = vset.pattern.permute.xlu0 0
  %8227 = vperm.xlu0 %8226, %v5401
  %v8228 = vpop.permute.xlu0 %8227
  %8231 = vset.pattern.permute.xlu0 0
  %8232 = vperm.xlu0 %8231, %v5402
  %v8233 = vpop.permute.xlu0 %8232
  %8236 = vset.pattern.permute.xlu0 0
  %8237 = vperm.xlu0 %8236, %v5403
  %v8238 = vpop.permute.xlu0 %8237
  %8241 = vset.pattern.permute.xlu0 0
  %8242 = vperm.xlu0 %8241, %v5404
  %v8243 = vpop.permute.xlu0 %8242
  %8246 = vset.pattern.permute.xlu0 0
  %8247 = vperm.xlu0 %8246, %v5405
  %v8248 = vpop.permute.xlu0 %8247
  %8251 = vset.pattern.permute.xlu0 0
  %8252 = vperm.xlu0 %8251, %v5406
  %v8253 = vpop.permute.xlu0 %8252
  %8256 = vset.pattern.permute.xlu0 0
  %8257 = vperm.xlu0 %8256, %v5407
  %v8258 = vpop.permute.xlu0 %8257
  %8261 = vset.pattern.permute.xlu0 0
  %8262 = vperm.xlu0 %8261, %v5408
  %v8263 = vpop.permute.xlu0 %8262
  %8266 = vset.pattern.permute.xlu0 0
  %8267 = vperm.xlu0 %8266, %v5409
  %v8268 = vpop.permute.xlu0 %8267
  %8271 = vset.pattern.permute.xlu0 0
  %8272 = vperm.xlu0 %8271, %v5410
  %v8273 = vpop.permute.xlu0 %8272
  %8276 = vset.pattern.permute.xlu0 0
  %8277 = vperm.xlu0 %8276, %v5411
  %v8278 = vpop.permute.xlu0 %8277
  %8281 = vset.pattern.permute.xlu0 0
  %8282 = vperm.xlu0 %8281, %v5412
  %v8283 = vpop.permute.xlu0 %8282
  %8286 = vset.pattern.permute.xlu0 0
  %8287 = vperm.xlu0 %8286, %v5413
  %v8288 = vpop.permute.xlu0 %8287
  %8291 = vset.pattern.permute.xlu0 0
  %8292 = vperm.xlu0 %8291, %v5414
  %v8293 = vpop.permute.xlu0 %8292
  %8296 = vset.pattern.permute.xlu0 0
  %8297 = vperm.xlu0 %8296, %v5415
  %v8298 = vpop.permute.xlu0 %8297
  %8301 = vset.pattern.permute.xlu0 0
  %8302 = vperm.xlu0 %8301, %v5416
  %v8303 = vpop.permute.xlu0 %8302
  %8306 = vset.pattern.permute.xlu0 0
  %8307 = vperm.xlu0 %8306, %v5417
  %v8308 = vpop.permute.xlu0 %8307
  %8311 = vset.pattern.permute.xlu0 0
  %8312 = vperm.xlu0 %8311, %v5418
  %v8313 = vpop.permute.xlu0 %8312
  %8316 = vset.pattern.permute.xlu0 0
  %8317 = vperm.xlu0 %8316, %v5419
  %v8318 = vpop.permute.xlu0 %8317
  %8321 = vset.pattern.permute.xlu0 0
  %8322 = vperm.xlu0 %8321, %v5420
  %v8323 = vpop.permute.xlu0 %8322
  %8326 = vset.pattern.permute.xlu0 0
  %8327 = vperm.xlu0 %8326, %v5421
  %v8328 = vpop.permute.xlu0 %8327
  %8331 = vset.pattern.permute.xlu0 0
  %8332 = vperm.xlu0 %8331, %v5422
  %v8333 = vpop.permute.xlu0 %8332
  %8336 = vset.pattern.permute.xlu0 0
  %8337 = vperm.xlu0 %8336, %v5423
  %v8338 = vpop.permute.xlu0 %8337
  %8341 = vset.pattern.permute.xlu0 0
  %8342 = vperm.xlu0 %8341, %v5424
  %v8343 = vpop.permute.xlu0 %8342
  %8346 = vset.pattern.permute.xlu0 0
  %8347 = vperm.xlu0 %8346, %v5425
  %v8348 = vpop.permute.xlu0 %8347
  %8351 = vset.pattern.permute.xlu0 0
  %8352 = vperm.xlu0 %8351, %v5426
  %v8353 = vpop.permute.xlu0 %8352
  %8356 = vset.pattern.permute.xlu0 0
  %8357 = vperm.xlu0 %8356, %v5427
  %v8358 = vpop.permute.xlu0 %8357
  %8361 = vset.pattern.permute.xlu0 0
  %8362 = vperm.xlu0 %8361, %v5428
  %v8363 = vpop.permute.xlu0 %8362
  %8366 = vset.pattern.permute.xlu0 0
  %8367 = vperm.xlu0 %8366, %v5429
  %v8368 = vpop.permute.xlu0 %8367
  %8371 = vset.pattern.permute.xlu0 0
  %8372 = vperm.xlu0 %8371, %v5430
  %v8373 = vpop.permute.xlu0 %8372
  %8376 = vset.pattern.permute.xlu0 0
  %8377 = vperm.xlu0 %8376, %v5431
  %v8378 = vpop.permute.xlu0 %8377
  %8381 = vset.pattern.permute.xlu0 0
  %8382 = vperm.xlu0 %8381, %v5432
  %v8383 = vpop.permute.xlu0 %8382
  %8386 = vset.pattern.permute.xlu0 0
  %8387 = vperm.xlu0 %8386, %v5433
  %v8388 = vpop.permute.xlu0 %8387
  %8391 = vset.pattern.permute.xlu0 0
  %8392 = vperm.xlu0 %8391, %v5434
  %v8393 = vpop.permute.xlu0 %8392
  %8396 = vset.pattern.permute.xlu0 0
  %8397 = vperm.xlu0 %8396, %v5435
  %v8398 = vpop.permute.xlu0 %8397
  %8401 = vset.pattern.permute.xlu0 0
  %8402 = vperm.xlu0 %8401, %v5436
  %v8403 = vpop.permute.xlu0 %8402
  %8406 = vset.pattern.permute.xlu0 0
  %8407 = vperm.xlu0 %8406, %v5437
  %v8408 = vpop.permute.xlu0 %8407
  %8411 = vset.pattern.permute.xlu0 0
  %8412 = vperm.xlu0 %8411, %v5438
  %v8413 = vpop.permute.xlu0 %8412
  %8416 = vset.pattern.permute.xlu0 0
  %8417 = vperm.xlu0 %8416, %v5439
  %v8418 = vpop.permute.xlu0 %8417
  %8421 = vset.pattern.permute.xlu0 0
  %8422 = vperm.xlu0 %8421, %v5440
  %v8423 = vpop.permute.xlu0 %8422
  %8426 = vset.pattern.permute.xlu0 0
  %8427 = vperm.xlu0 %8426, %v5441
  %v8428 = vpop.permute.xlu0 %8427
  %8431 = vset.pattern.permute.xlu0 0
  %8432 = vperm.xlu0 %8431, %v5442
  %v8433 = vpop.permute.xlu0 %8432
  %8436 = vset.pattern.permute.xlu0 0
  %8437 = vperm.xlu0 %8436, %v5443
  %v8438 = vpop.permute.xlu0 %8437
  %8441 = vset.pattern.permute.xlu0 0
  %8442 = vperm.xlu0 %8441, %v5444
  %v8443 = vpop.permute.xlu0 %8442
  %8446 = vset.pattern.permute.xlu0 0
  %8447 = vperm.xlu0 %8446, %v5445
  %v8448 = vpop.permute.xlu0 %8447
  %8451 = vset.pattern.permute.xlu0 0
  %8452 = vperm.xlu0 %8451, %v5446
  %v8453 = vpop.permute.xlu0 %8452
  %8456 = vset.pattern.permute.xlu0 0
  %8457 = vperm.xlu0 %8456, %v5447
  %v8458 = vpop.permute.xlu0 %8457
  %8461 = vset.pattern.permute.xlu0 0
  %8462 = vperm.xlu0 %8461, %v5448
  %v8463 = vpop.permute.xlu0 %8462
  %8466 = vset.pattern.permute.xlu0 0
  %8467 = vperm.xlu0 %8466, %v5449
  %v8468 = vpop.permute.xlu0 %8467
  %8471 = vset.pattern.permute.xlu0 0
  %8472 = vperm.xlu0 %8471, %v5450
  %v8473 = vpop.permute.xlu0 %8472
  %8476 = vset.pattern.permute.xlu0 0
  %8477 = vperm.xlu0 %8476, %v5451
  %v8478 = vpop.permute.xlu0 %8477
  %8481 = vset.pattern.permute.xlu0 0
  %8482 = vperm.xlu0 %8481, %v5452
  %v8483 = vpop.permute.xlu0 %8482
  %8486 = vset.pattern.permute.xlu0 0
  %8487 = vperm.xlu0 %8486, %v5453
  %v8488 = vpop.permute.xlu0 %8487
  %8491 = vset.pattern.permute.xlu0 0
  %8492 = vperm.xlu0 %8491, %v5454
  %v8493 = vpop.permute.xlu0 %8492
  %8496 = vset.pattern.permute.xlu0 0
  %8497 = vperm.xlu0 %8496, %v5455
  %v8498 = vpop.permute.xlu0 %8497
  %8501 = vset.pattern.permute.xlu0 0
  %8502 = vperm.xlu0 %8501, %v5456
  %v8503 = vpop.permute.xlu0 %8502
  %8506 = vset.pattern.permute.xlu0 0
  %8507 = vperm.xlu0 %8506, %v5457
  %v8508 = vpop.permute.xlu0 %8507
  %8511 = vset.pattern.permute.xlu0 0
  %8512 = vperm.xlu0 %8511, %v5458
  %v8513 = vpop.permute.xlu0 %8512
  %8516 = vset.pattern.permute.xlu0 0
  %8517 = vperm.xlu0 %8516, %v5459
  %v8518 = vpop.permute.xlu0 %8517
  %8521 = vset.pattern.permute.xlu0 0
  %8522 = vperm.xlu0 %8521, %v5460
  %v8523 = vpop.permute.xlu0 %8522
  %8526 = vset.pattern.permute.xlu0 0
  %8527 = vperm.xlu0 %8526, %v5461
  %v8528 = vpop.permute.xlu0 %8527
  %8531 = vset.pattern.permute.xlu0 0
  %8532 = vperm.xlu0 %8531, %v5462
  %v8533 = vpop.permute.xlu0 %8532
  %8536 = vset.pattern.permute.xlu0 0
  %8537 = vperm.xlu0 %8536, %v5463
  %v8538 = vpop.permute.xlu0 %8537
  %8541 = vset.pattern.permute.xlu0 0
  %8542 = vperm.xlu0 %8541, %v5464
  %v8543 = vpop.permute.xlu0 %8542
  %8546 = vset.pattern.permute.xlu0 0
  %8547 = vperm.xlu0 %8546, %v5465
  %v8548 = vpop.permute.xlu0 %8547
  %8551 = vset.pattern.permute.xlu0 0
  %8552 = vperm.xlu0 %8551, %v5466
  %v8553 = vpop.permute.xlu0 %8552
  %8556 = vset.pattern.permute.xlu0 0
  %8557 = vperm.xlu0 %8556, %v5467
  %v8558 = vpop.permute.xlu0 %8557
  %8561 = vset.pattern.permute.xlu0 0
  %8562 = vperm.xlu0 %8561, %v5468
  %v8563 = vpop.permute.xlu0 %8562
  %8566 = vset.pattern.permute.xlu0 0
  %8567 = vperm.xlu0 %8566, %v5469
  %v8568 = vpop.permute.xlu0 %8567
  %8571 = vset.pattern.permute.xlu0 0
  %8572 = vperm.xlu0 %8571, %v5470
  %v8573 = vpop.permute.xlu0 %8572
  %8576 = vset.pattern.permute.xlu0 0
  %8577 = vperm.xlu0 %8576, %v5471
  %v8578 = vpop.permute.xlu0 %8577
  %8581 = vset.pattern.permute.xlu0 0
  %8582 = vperm.xlu0 %8581, %v5472
  %v8583 = vpop.permute.xlu0 %8582
  %8586 = vset.pattern.permute.xlu0 0
  %8587 = vperm.xlu0 %8586, %v5473
  %v8588 = vpop.permute.xlu0 %8587
  %8591 = vset.pattern.permute.xlu0 0
  %8592 = vperm.xlu0 %8591, %v5474
  %v8593 = vpop.permute.xlu0 %8592
  %8596 = vset.pattern.permute.xlu0 0
  %8597 = vperm.xlu0 %8596, %v5475
  %v8598 = vpop.permute.xlu0 %8597
  %8601 = vset.pattern.permute.xlu0 0
  %8602 = vperm.xlu0 %8601, %v5476
  %v8603 = vpop.permute.xlu0 %8602
  %8606 = vset.pattern.permute.xlu0 0
  %8607 = vperm.xlu0 %8606, %v5477
  %v8608 = vpop.permute.xlu0 %8607
  %8611 = vset.pattern.permute.xlu0 0
  %8612 = vperm.xlu0 %8611, %v5478
  %v8613 = vpop.permute.xlu0 %8612
  %8616 = vset.pattern.permute.xlu0 0
  %8617 = vperm.xlu0 %8616, %v5479
  %v8618 = vpop.permute.xlu0 %8617
  %8621 = vset.pattern.permute.xlu0 0
  %8622 = vperm.xlu0 %8621, %v5480
  %v8623 = vpop.permute.xlu0 %8622
  %8626 = vset.pattern.permute.xlu0 0
  %8627 = vperm.xlu0 %8626, %v5481
  %v8628 = vpop.permute.xlu0 %8627
  %8631 = vset.pattern.permute.xlu0 0
  %8632 = vperm.xlu0 %8631, %v5482
  %v8633 = vpop.permute.xlu0 %8632
  %8636 = vset.pattern.permute.xlu0 0
  %8637 = vperm.xlu0 %8636, %v5483
  %v8638 = vpop.permute.xlu0 %8637
  %8641 = vset.pattern.permute.xlu0 0
  %8642 = vperm.xlu0 %8641, %v5484
  %v8643 = vpop.permute.xlu0 %8642
  %8646 = vset.pattern.permute.xlu0 0
  %8647 = vperm.xlu0 %8646, %v5485
  %v8648 = vpop.permute.xlu0 %8647
  %8651 = vset.pattern.permute.xlu0 0
  %8652 = vperm.xlu0 %8651, %v5486
  %v8653 = vpop.permute.xlu0 %8652
  %v8655 = vadd.f32 %v6927, %v7218
  %v8656 = vadd.f32 %v6928, %v7223
  %v8657 = vadd.f32 %v6929, %v7228
  %v8658 = vadd.f32 %v6930, %v7233
  %v8659 = vadd.f32 %v6931, %v7238
  %v8660 = vadd.f32 %v6932, %v7243
  %v8661 = vadd.f32 %v6933, %v7248
  %v8662 = vadd.f32 %v6934, %v7253
  %v8663 = vadd.f32 %v6935, %v7258
  %v8664 = vadd.f32 %v6936, %v7263
  %v8665 = vadd.f32 %v6937, %v7268
  %v8666 = vadd.f32 %v6938, %v7273
  %v8667 = vadd.f32 %v6939, %v7278
  %v8668 = vadd.f32 %v6940, %v7283
  %v8669 = vadd.f32 %v6941, %v7288
  %v8670 = vadd.f32 %v6942, %v7293
  %v8671 = vadd.f32 %v6943, %v7298
  %v8672 = vadd.f32 %v6944, %v7303
  %v8673 = vadd.f32 %v6945, %v7308
  %v8674 = vadd.f32 %v6946, %v7313
  %v8675 = vadd.f32 %v6947, %v7318
  %v8676 = vadd.f32 %v6948, %v7323
  %v8677 = vadd.f32 %v6949, %v7328
  %v8678 = vadd.f32 %v6950, %v7333
  %v8679 = vadd.f32 %v6951, %v7338
  %v8680 = vadd.f32 %v6952, %v7343
  %v8681 = vadd.f32 %v6953, %v7348
  %v8682 = vadd.f32 %v6954, %v7353
  %v8683 = vadd.f32 %v6955, %v7358
  %v8684 = vadd.f32 %v6956, %v7363
  %v8685 = vadd.f32 %v6957, %v7368
  %v8686 = vadd.f32 %v6958, %v7373
  %v8687 = vadd.f32 %v6959, %v7378
  %v8688 = vadd.f32 %v6960, %v7383
  %v8689 = vadd.f32 %v6961, %v7388
  %v8690 = vadd.f32 %v6962, %v7393
  %v8691 = vadd.f32 %v6963, %v7398
  %v8692 = vadd.f32 %v6964, %v7403
  %v8693 = vadd.f32 %v6965, %v7408
  %v8694 = vadd.f32 %v6966, %v7413
  %v8695 = vadd.f32 %v6967, %v7418
  %v8696 = vadd.f32 %v6968, %v7423
  %v8697 = vadd.f32 %v6969, %v7428
  %v8698 = vadd.f32 %v6970, %v7433
  %v8699 = vadd.f32 %v6971, %v7438
  %v8700 = vadd.f32 %v6972, %v7443
  %v8701 = vadd.f32 %v6973, %v7448
  %v8702 = vadd.f32 %v6974, %v7453
  %v8703 = vadd.f32 %v6975, %v7458
  %v8704 = vadd.f32 %v6976, %v7463
  %v8705 = vadd.f32 %v6977, %v7468
  %v8706 = vadd.f32 %v6978, %v7473
  %v8707 = vadd.f32 %v6979, %v7478
  %v8708 = vadd.f32 %v6980, %v7483
  %v8709 = vadd.f32 %v6981, %v7488
  %v8710 = vadd.f32 %v6982, %v7493
  %v8711 = vadd.f32 %v6983, %v7498
  %v8712 = vadd.f32 %v6984, %v7503
  %v8713 = vadd.f32 %v6985, %v7508
  %v8714 = vadd.f32 %v6986, %v7513
  %v8715 = vadd.f32 %v6987, %v7518
  %v8716 = vadd.f32 %v6988, %v7523
  %v8717 = vadd.f32 %v6989, %v7528
  %v8718 = vadd.f32 %v6990, %v7533
  %v8719 = vadd.f32 %v6991, %v7538
  %v8720 = vadd.f32 %v6992, %v7543
  %v8721 = vadd.f32 %v6993, %v7548
  %v8722 = vadd.f32 %v6994, %v7553
  %v8723 = vadd.f32 %v6995, %v7558
  %v8724 = vadd.f32 %v6996, %v7563
  %v8725 = vadd.f32 %v6997, %v7568
  %v8726 = vadd.f32 %v6998, %v7573
  %v8727 = vadd.f32 %v6999, %v7578
  %v8728 = vadd.f32 %v7000, %v7583
  %v8729 = vadd.f32 %v7001, %v7588
  %v8730 = vadd.f32 %v7002, %v7593
  %v8731 = vadd.f32 %v7003, %v7598
  %v8732 = vadd.f32 %v7004, %v7603
  %v8733 = vadd.f32 %v7005, %v7608
  %v8734 = vadd.f32 %v7006, %v7613
  %v8735 = vadd.f32 %v7007, %v7618
  %v8736 = vadd.f32 %v7008, %v7623
  %v8737 = vadd.f32 %v7009, %v7628
  %v8738 = vadd.f32 %v7010, %v7633
  %v8739 = vadd.f32 %v7011, %v7638
  %v8740 = vadd.f32 %v7012, %v7643
  %v8741 = vadd.f32 %v7013, %v7648
  %v8742 = vadd.f32 %v7014, %v7653
  %v8743 = vadd.f32 %v7015, %v7658
  %v8744 = vadd.f32 %v7016, %v7663
  %v8745 = vadd.f32 %v7017, %v7668
  %v8746 = vadd.f32 %v7018, %v7673
  %v8747 = vadd.f32 %v7019, %v7678
  %v8748 = vadd.f32 %v7020, %v7683
  %v8749 = vadd.f32 %v7021, %v7688
  %v8750 = vadd.f32 %v7022, %v7693
  %v8751 = vadd.f32 %v7023, %v7698
  %v8752 = vadd.f32 %v7024, %v7703
  %v8753 = vadd.f32 %v7025, %v7708
  %v8754 = vadd.f32 %v7026, %v7713
  %v8755 = vadd.f32 %v7027, %v7718
  %v8756 = vadd.f32 %v7028, %v7723
  %v8757 = vadd.f32 %v7029, %v7728
  %v8758 = vadd.f32 %v7030, %v7733
  %v8759 = vadd.f32 %v7031, %v7738
  %v8760 = vadd.f32 %v7032, %v7743
  %v8761 = vadd.f32 %v7033, %v7748
  %v8762 = vadd.f32 %v7034, %v7753
  %v8763 = vadd.f32 %v7035, %v7758
  %v8764 = vadd.f32 %v7036, %v7763
  %v8765 = vadd.f32 %v7037, %v7768
  %v8766 = vadd.f32 %v7038, %v7773
  %v8767 = vadd.f32 %v7039, %v7778
  %v8768 = vadd.f32 %v7040, %v7783
  %v8769 = vadd.f32 %v7041, %v7788
  %v8770 = vadd.f32 %v7042, %v7793
  %v8771 = vadd.f32 %v7043, %v7798
  %v8772 = vadd.f32 %v7044, %v7803
  %v8773 = vadd.f32 %v7045, %v7808
  %v8774 = vadd.f32 %v7046, %v7813
  %v8775 = vadd.f32 %v7047, %v7818
  %v8776 = vadd.f32 %v7048, %v7823
  %v8777 = vadd.f32 %v7049, %v7828
  %v8778 = vadd.f32 %v7050, %v7833
  %v8779 = vadd.f32 %v7051, %v7838
  %v8780 = vadd.f32 %v7052, %v7843
  %v8781 = vadd.f32 %v7053, %v7848
  %v8782 = vadd.f32 %v7054, %v7853
  %v8783 = vadd.f32 %v7055, %v7858
  %v8784 = vadd.f32 %v7056, %v7863
  %v8785 = vadd.f32 %v7057, %v7868
  %v8786 = vadd.f32 %v7058, %v7873
  %v8787 = vadd.f32 %v7059, %v7878
  %v8788 = vadd.f32 %v7060, %v7883
  %v8789 = vadd.f32 %v7061, %v7888
  %v8790 = vadd.f32 %v7062, %v7893
  %v8791 = vadd.f32 %v7063, %v7898
  %v8792 = vadd.f32 %v7064, %v7903
  %v8793 = vadd.f32 %v7065, %v7908
  %v8794 = vadd.f32 %v7066, %v7913
  %v8795 = vadd.f32 %v7067, %v7918
  %v8796 = vadd.f32 %v7068, %v7923
  %v8797 = vadd.f32 %v7069, %v7928
  %v8798 = vadd.f32 %v7070, %v7933
  %v8799 = vadd.f32 %v7071, %v7938
  %v8800 = vadd.f32 %v7072, %v7943
  %v8801 = vadd.f32 %v7073, %v7948
  %v8802 = vadd.f32 %v7074, %v7953
  %v8803 = vadd.f32 %v7075, %v7958
  %v8804 = vadd.f32 %v7076, %v7963
  %v8805 = vadd.f32 %v7077, %v7968
  %v8806 = vadd.f32 %v7078, %v7973
  %v8807 = vadd.f32 %v7079, %v7978
  %v8808 = vadd.f32 %v7080, %v7983
  %v8809 = vadd.f32 %v7081, %v7988
  %v8810 = vadd.f32 %v7082, %v7993
  %v8811 = vadd.f32 %v7083, %v7998
  %v8812 = vadd.f32 %v7084, %v8003
  %v8813 = vadd.f32 %v7085, %v8008
  %v8814 = vadd.f32 %v7086, %v8013
  %v8815 = vadd.f32 %v7087, %v8018
  %v8816 = vadd.f32 %v7088, %v8023
  %v8817 = vadd.f32 %v7089, %v8028
  %v8818 = vadd.f32 %v7090, %v8033
  %v8819 = vadd.f32 %v7091, %v8038
  %v8820 = vadd.f32 %v7092, %v8043
  %v8821 = vadd.f32 %v7093, %v8048
  %v8822 = vadd.f32 %v7094, %v8053
  %v8823 = vadd.f32 %v7095, %v8058
  %v8824 = vadd.f32 %v7096, %v8063
  %v8825 = vadd.f32 %v7097, %v8068
  %v8826 = vadd.f32 %v7098, %v8073
  %v8827 = vadd.f32 %v7099, %v8078
  %v8828 = vadd.f32 %v7100, %v8083
  %v8829 = vadd.f32 %v7101, %v8088
  %v8830 = vadd.f32 %v7102, %v8093
  %v8831 = vadd.f32 %v7103, %v8098
  %v8832 = vadd.f32 %v7104, %v8103
  %v8833 = vadd.f32 %v7105, %v8108
  %v8834 = vadd.f32 %v7106, %v8113
  %v8835 = vadd.f32 %v7107, %v8118
  %v8836 = vadd.f32 %v7108, %v8123
  %v8837 = vadd.f32 %v7109, %v8128
  %v8838 = vadd.f32 %v7110, %v8133
  %v8839 = vadd.f32 %v7111, %v8138
  %v8840 = vadd.f32 %v7112, %v8143
  %v8841 = vadd.f32 %v7113, %v8148
  %v8842 = vadd.f32 %v7114, %v8153
  %v8843 = vadd.f32 %v7115, %v8158
  %v8844 = vadd.f32 %v7116, %v8163
  %v8845 = vadd.f32 %v7117, %v8168
  %v8846 = vadd.f32 %v7118, %v8173
  %v8847 = vadd.f32 %v7119, %v8178
  %v8848 = vadd.f32 %v7120, %v8183
  %v8849 = vadd.f32 %v7121, %v8188
  %v8850 = vadd.f32 %v7122, %v8193
  %v8851 = vadd.f32 %v7123, %v8198
  %v8852 = vadd.f32 %v7124, %v8203
  %v8853 = vadd.f32 %v7125, %v8208
  %v8854 = vadd.f32 %v7126, %v8213
  %v8855 = vadd.f32 %v7127, %v8218
  %v8856 = vadd.f32 %v7128, %v8223
  %v8857 = vadd.f32 %v7129, %v8228
  %v8858 = vadd.f32 %v7130, %v8233
  %v8859 = vadd.f32 %v7131, %v8238
  %v8860 = vadd.f32 %v7132, %v8243
  %v8861 = vadd.f32 %v7133, %v8248
  %v8862 = vadd.f32 %v7134, %v8253
  %v8863 = vadd.f32 %v7135, %v8258
  %v8864 = vadd.f32 %v7136, %v8263
  %v8865 = vadd.f32 %v7137, %v8268
  %v8866 = vadd.f32 %v7138, %v8273
  %v8867 = vadd.f32 %v7139, %v8278
  %v8868 = vadd.f32 %v7140, %v8283
  %v8869 = vadd.f32 %v7141, %v8288
  %v8870 = vadd.f32 %v7142, %v8293
  %v8871 = vadd.f32 %v7143, %v8298
  %v8872 = vadd.f32 %v7144, %v8303
  %v8873 = vadd.f32 %v7145, %v8308
  %v8874 = vadd.f32 %v7146, %v8313
  %v8875 = vadd.f32 %v7147, %v8318
  %v8876 = vadd.f32 %v7148, %v8323
  %v8877 = vadd.f32 %v7149, %v8328
  %v8878 = vadd.f32 %v7150, %v8333
  %v8879 = vadd.f32 %v7151, %v8338
  %v8880 = vadd.f32 %v7152, %v8343
  %v8881 = vadd.f32 %v7153, %v8348
  %v8882 = vadd.f32 %v7154, %v8353
  %v8883 = vadd.f32 %v7155, %v8358
  %v8884 = vadd.f32 %v7156, %v8363
  %v8885 = vadd.f32 %v7157, %v8368
  %v8886 = vadd.f32 %v7158, %v8373
  %v8887 = vadd.f32 %v7159, %v8378
  %v8888 = vadd.f32 %v7160, %v8383
  %v8889 = vadd.f32 %v7161, %v8388
  %v8890 = vadd.f32 %v7162, %v8393
  %v8891 = vadd.f32 %v7163, %v8398
  %v8892 = vadd.f32 %v7164, %v8403
  %v8893 = vadd.f32 %v7165, %v8408
  %v8894 = vadd.f32 %v7166, %v8413
  %v8895 = vadd.f32 %v7167, %v8418
  %v8896 = vadd.f32 %v7168, %v8423
  %v8897 = vadd.f32 %v7169, %v8428
  %v8898 = vadd.f32 %v7170, %v8433
  %v8899 = vadd.f32 %v7171, %v8438
  %v8900 = vadd.f32 %v7172, %v8443
  %v8901 = vadd.f32 %v7173, %v8448
  %v8902 = vadd.f32 %v7174, %v8453
  %v8903 = vadd.f32 %v7175, %v8458
  %v8904 = vadd.f32 %v7176, %v8463
  %v8905 = vadd.f32 %v7177, %v8468
  %v8906 = vadd.f32 %v7178, %v8473
  %v8907 = vadd.f32 %v7179, %v8478
  %v8908 = vadd.f32 %v7180, %v8483
  %v8909 = vadd.f32 %v7181, %v8488
  %v8910 = vadd.f32 %v7182, %v8493
  %v8911 = vadd.f32 %v7183, %v8498
  %v8912 = vadd.f32 %v7184, %v8503
  %v8913 = vadd.f32 %v7185, %v8508
  %v8914 = vadd.f32 %v7186, %v8513
  %v8915 = vadd.f32 %v7187, %v8518
  %v8916 = vadd.f32 %v7188, %v8523
  %v8917 = vadd.f32 %v7189, %v8528
  %v8918 = vadd.f32 %v7190, %v8533
  %v8919 = vadd.f32 %v7191, %v8538
  %v8920 = vadd.f32 %v7192, %v8543
  %v8921 = vadd.f32 %v7193, %v8548
  %v8922 = vadd.f32 %v7194, %v8553
  %v8923 = vadd.f32 %v7195, %v8558
  %v8924 = vadd.f32 %v7196, %v8563
  %v8925 = vadd.f32 %v7197, %v8568
  %v8926 = vadd.f32 %v7198, %v8573
  %v8927 = vadd.f32 %v7199, %v8578
  %v8928 = vadd.f32 %v7200, %v8583
  %v8929 = vadd.f32 %v7201, %v8588
  %v8930 = vadd.f32 %v7202, %v8593
  %v8931 = vadd.f32 %v7203, %v8598
  %v8932 = vadd.f32 %v7204, %v8603
  %v8933 = vadd.f32 %v7205, %v8608
  %v8934 = vadd.f32 %v7206, %v8613
  %v8935 = vadd.f32 %v7207, %v8618
  %v8936 = vadd.f32 %v7208, %v8623
  %v8937 = vadd.f32 %v7209, %v8628
  %v8938 = vadd.f32 %v7210, %v8633
  %v8939 = vadd.f32 %v7211, %v8638
  %v8940 = vadd.f32 %v7212, %v8643
  %v8941 = vadd.f32 %v7213, %v8648
  %v8942 = vadd.f32 %v7214, %v8653
  %8943 = vst.msk [vmem:[%s3] sm:$0xff] %vm302, %v8655
  %8944 = vst.msk [vmem:[%s3 + $0x8] sm:$0xff] %vm302, %v8656
  %8945 = vst.msk [vmem:[%s3 + $0x10] sm:$0xff] %vm302, %v8657
  %8946 = vst.msk [vmem:[%s3 + $0x18] sm:$0xff] %vm302, %v8658
  %8947 = vst.msk [vmem:[%s3 + $0x20] sm:$0xff] %vm302, %v8659
  %8948 = vst.msk [vmem:[%s3 + $0x28] sm:$0xff] %vm302, %v8660
  %8949 = vst.msk [vmem:[%s3 + $0x30] sm:$0xff] %vm302, %v8661
  %8950 = vst.msk [vmem:[%s3 + $0x38] sm:$0xff] %vm302, %v8662
  %8951 = vst.msk [vmem:[%s3 + $0x40] sm:$0xff] %vm302, %v8663
  %8952 = vst.msk [vmem:[%s3 + $0x48] sm:$0xff] %vm302, %v8664
  %8953 = vst.msk [vmem:[%s3 + $0x50] sm:$0xff] %vm302, %v8665
  %8954 = vst.msk [vmem:[%s3 + $0x58] sm:$0xff] %vm302, %v8666
  %8955 = vst.msk [vmem:[%s3 + $0x60] sm:$0xff] %vm302, %v8667
  %8956 = vst.msk [vmem:[%s3 + $0x68] sm:$0xff] %vm302, %v8668
  %8957 = vst.msk [vmem:[%s3 + $0x70] sm:$0xff] %vm302, %v8669
  %8958 = vst.msk [vmem:[%s3 + $0x78] sm:$0xff] %vm302, %v8670
  %8959 = vst.msk [vmem:[%s3 + $0x80] sm:$0xff] %vm302, %v8671
  %8960 = vst.msk [vmem:[%s3 + $0x88] sm:$0xff] %vm302, %v8672
  %8961 = vst.msk [vmem:[%s3 + $0x90] sm:$0xff] %vm302, %v8673
  %8962 = vst.msk [vmem:[%s3 + $0x98] sm:$0xff] %vm302, %v8674
  %8963 = vst.msk [vmem:[%s3 + $0xa0] sm:$0xff] %vm302, %v8675
  %8964 = vst.msk [vmem:[%s3 + $0xa8] sm:$0xff] %vm302, %v8676
  %8965 = vst.msk [vmem:[%s3 + $0xb0] sm:$0xff] %vm302, %v8677
  %8966 = vst.msk [vmem:[%s3 + $0xb8] sm:$0xff] %vm302, %v8678
  %8967 = vst.msk [vmem:[%s3 + $0xc0] sm:$0xff] %vm302, %v8679
  %8968 = vst.msk [vmem:[%s3 + $0xc8] sm:$0xff] %vm302, %v8680
  %8969 = vst.msk [vmem:[%s3 + $0xd0] sm:$0xff] %vm302, %v8681
  %8970 = vst.msk [vmem:[%s3 + $0xd8] sm:$0xff] %vm302, %v8682
  %8971 = vst.msk [vmem:[%s3 + $0xe0] sm:$0xff] %vm302, %v8683
  %8972 = vst.msk [vmem:[%s3 + $0xe8] sm:$0xff] %vm302, %v8684
  %8973 = vst.msk [vmem:[%s3 + $0xf0] sm:$0xff] %vm302, %v8685
  %8974 = vst.msk [vmem:[%s3 + $0xf8] sm:$0xff] %vm302, %v8686
  %8975 = vst.msk [vmem:[%s3 + $0x100] sm:$0xff] %vm302, %v8687
  %8976 = vst.msk [vmem:[%s3 + $0x108] sm:$0xff] %vm302, %v8688
  %8977 = vst.msk [vmem:[%s3 + $0x110] sm:$0xff] %vm302, %v8689
  %8978 = vst.msk [vmem:[%s3 + $0x118] sm:$0xff] %vm302, %v8690
  %8979 = vst.msk [vmem:[%s3 + $0x120] sm:$0xff] %vm302, %v8691
  %8980 = vst.msk [vmem:[%s3 + $0x128] sm:$0xff] %vm302, %v8692
  %8981 = vst.msk [vmem:[%s3 + $0x130] sm:$0xff] %vm302, %v8693
  %8982 = vst.msk [vmem:[%s3 + $0x138] sm:$0xff] %vm302, %v8694
  %8983 = vst.msk [vmem:[%s3 + $0x140] sm:$0xff] %vm302, %v8695
  %8984 = vst.msk [vmem:[%s3 + $0x148] sm:$0xff] %vm302, %v8696
  %8985 = vst.msk [vmem:[%s3 + $0x150] sm:$0xff] %vm302, %v8697
  %8986 = vst.msk [vmem:[%s3 + $0x158] sm:$0xff] %vm302, %v8698
  %8987 = vst.msk [vmem:[%s3 + $0x160] sm:$0xff] %vm302, %v8699
  %8988 = vst.msk [vmem:[%s3 + $0x168] sm:$0xff] %vm302, %v8700
  %8989 = vst.msk [vmem:[%s3 + $0x170] sm:$0xff] %vm302, %v8701
  %8990 = vst.msk [vmem:[%s3 + $0x178] sm:$0xff] %vm302, %v8702
  %8991 = vst.msk [vmem:[%s3 + $0x180] sm:$0xff] %vm302, %v8703
  %8992 = vst.msk [vmem:[%s3 + $0x188] sm:$0xff] %vm302, %v8704
  %8993 = vst.msk [vmem:[%s3 + $0x190] sm:$0xff] %vm302, %v8705
  %8994 = vst.msk [vmem:[%s3 + $0x198] sm:$0xff] %vm302, %v8706
  %8995 = vst.msk [vmem:[%s3 + $0x1a0] sm:$0xff] %vm302, %v8707
  %8996 = vst.msk [vmem:[%s3 + $0x1a8] sm:$0xff] %vm302, %v8708
  %8997 = vst.msk [vmem:[%s3 + $0x1b0] sm:$0xff] %vm302, %v8709
  %8998 = vst.msk [vmem:[%s3 + $0x1b8] sm:$0xff] %vm302, %v8710
  %8999 = vst.msk [vmem:[%s3 + $0x1c0] sm:$0xff] %vm302, %v8711
  %9000 = vst.msk [vmem:[%s3 + $0x1c8] sm:$0xff] %vm302, %v8712
  %9001 = vst.msk [vmem:[%s3 + $0x1d0] sm:$0xff] %vm302, %v8713
  %9002 = vst.msk [vmem:[%s3 + $0x1d8] sm:$0xff] %vm302, %v8714
  %9003 = vst.msk [vmem:[%s3 + $0x1e0] sm:$0xff] %vm302, %v8715
  %9004 = vst.msk [vmem:[%s3 + $0x1e8] sm:$0xff] %vm302, %v8716
  %9005 = vst.msk [vmem:[%s3 + $0x1f0] sm:$0xff] %vm302, %v8717
  %9006 = vst.msk [vmem:[%s3 + $0x1f8] sm:$0xff] %vm302, %v8718
  %9007 = vst.msk [vmem:[%s3 + $0x200] sm:$0xff] %vm302, %v8719
  %9008 = vst.msk [vmem:[%s3 + $0x208] sm:$0xff] %vm302, %v8720
  %9009 = vst.msk [vmem:[%s3 + $0x210] sm:$0xff] %vm302, %v8721
  %9010 = vst.msk [vmem:[%s3 + $0x218] sm:$0xff] %vm302, %v8722
  %9011 = vst.msk [vmem:[%s3 + $0x220] sm:$0xff] %vm302, %v8723
  %9012 = vst.msk [vmem:[%s3 + $0x228] sm:$0xff] %vm302, %v8724
  %9013 = vst.msk [vmem:[%s3 + $0x230] sm:$0xff] %vm302, %v8725
  %9014 = vst.msk [vmem:[%s3 + $0x238] sm:$0xff] %vm302, %v8726
  %9015 = vst.msk [vmem:[%s3 + $0x240] sm:$0xff] %vm302, %v8727
  %9016 = vst.msk [vmem:[%s3 + $0x248] sm:$0xff] %vm302, %v8728
  %9017 = vst.msk [vmem:[%s3 + $0x250] sm:$0xff] %vm302, %v8729
  %9018 = vst.msk [vmem:[%s3 + $0x258] sm:$0xff] %vm302, %v8730
  %9019 = vst.msk [vmem:[%s3 + $0x260] sm:$0xff] %vm302, %v8731
  %9020 = vst.msk [vmem:[%s3 + $0x268] sm:$0xff] %vm302, %v8732
  %9021 = vst.msk [vmem:[%s3 + $0x270] sm:$0xff] %vm302, %v8733
  %9022 = vst.msk [vmem:[%s3 + $0x278] sm:$0xff] %vm302, %v8734
  %9023 = vst.msk [vmem:[%s3 + $0x280] sm:$0xff] %vm302, %v8735
  %9024 = vst.msk [vmem:[%s3 + $0x288] sm:$0xff] %vm302, %v8736
  %9025 = vst.msk [vmem:[%s3 + $0x290] sm:$0xff] %vm302, %v8737
  %9026 = vst.msk [vmem:[%s3 + $0x298] sm:$0xff] %vm302, %v8738
  %9027 = vst.msk [vmem:[%s3 + $0x2a0] sm:$0xff] %vm302, %v8739
  %9028 = vst.msk [vmem:[%s3 + $0x2a8] sm:$0xff] %vm302, %v8740
  %9029 = vst.msk [vmem:[%s3 + $0x2b0] sm:$0xff] %vm302, %v8741
  %9030 = vst.msk [vmem:[%s3 + $0x2b8] sm:$0xff] %vm302, %v8742
  %9031 = vst.msk [vmem:[%s3 + $0x2c0] sm:$0xff] %vm302, %v8743
  %9032 = vst.msk [vmem:[%s3 + $0x2c8] sm:$0xff] %vm302, %v8744
  %9033 = vst.msk [vmem:[%s3 + $0x2d0] sm:$0xff] %vm302, %v8745
  %9034 = vst.msk [vmem:[%s3 + $0x2d8] sm:$0xff] %vm302, %v8746
  %9035 = vst.msk [vmem:[%s3 + $0x2e0] sm:$0xff] %vm302, %v8747
  %9036 = vst.msk [vmem:[%s3 + $0x2e8] sm:$0xff] %vm302, %v8748
  %9037 = vst.msk [vmem:[%s3 + $0x2f0] sm:$0xff] %vm302, %v8749
  %9038 = vst.msk [vmem:[%s3 + $0x2f8] sm:$0xff] %vm302, %v8750
  %9039 = vst.msk [vmem:[%s3 + $0x300] sm:$0xff] %vm302, %v8751
  %9040 = vst.msk [vmem:[%s3 + $0x308] sm:$0xff] %vm302, %v8752
  %9041 = vst.msk [vmem:[%s3 + $0x310] sm:$0xff] %vm302, %v8753
  %9042 = vst.msk [vmem:[%s3 + $0x318] sm:$0xff] %vm302, %v8754
  %9043 = vst.msk [vmem:[%s3 + $0x320] sm:$0xff] %vm302, %v8755
  %9044 = vst.msk [vmem:[%s3 + $0x328] sm:$0xff] %vm302, %v8756
  %9045 = vst.msk [vmem:[%s3 + $0x330] sm:$0xff] %vm302, %v8757
  %9046 = vst.msk [vmem:[%s3 + $0x338] sm:$0xff] %vm302, %v8758
  %9047 = vst.msk [vmem:[%s3 + $0x340] sm:$0xff] %vm302, %v8759
  %9048 = vst.msk [vmem:[%s3 + $0x348] sm:$0xff] %vm302, %v8760
  %9049 = vst.msk [vmem:[%s3 + $0x350] sm:$0xff] %vm302, %v8761
  %9050 = vst.msk [vmem:[%s3 + $0x358] sm:$0xff] %vm302, %v8762
  %9051 = vst.msk [vmem:[%s3 + $0x360] sm:$0xff] %vm302, %v8763
  %9052 = vst.msk [vmem:[%s3 + $0x368] sm:$0xff] %vm302, %v8764
  %9053 = vst.msk [vmem:[%s3 + $0x370] sm:$0xff] %vm302, %v8765
  %9054 = vst.msk [vmem:[%s3 + $0x378] sm:$0xff] %vm302, %v8766
  %9055 = vst.msk [vmem:[%s3 + $0x380] sm:$0xff] %vm302, %v8767
  %9056 = vst.msk [vmem:[%s3 + $0x388] sm:$0xff] %vm302, %v8768
  %9057 = vst.msk [vmem:[%s3 + $0x390] sm:$0xff] %vm302, %v8769
  %9058 = vst.msk [vmem:[%s3 + $0x398] sm:$0xff] %vm302, %v8770
  %9059 = vst.msk [vmem:[%s3 + $0x3a0] sm:$0xff] %vm302, %v8771
  %9060 = vst.msk [vmem:[%s3 + $0x3a8] sm:$0xff] %vm302, %v8772
  %9061 = vst.msk [vmem:[%s3 + $0x3b0] sm:$0xff] %vm302, %v8773
  %9062 = vst.msk [vmem:[%s3 + $0x3b8] sm:$0xff] %vm302, %v8774
  %9063 = vst.msk [vmem:[%s3 + $0x3c0] sm:$0xff] %vm302, %v8775
  %9064 = vst.msk [vmem:[%s3 + $0x3c8] sm:$0xff] %vm302, %v8776
  %9065 = vst.msk [vmem:[%s3 + $0x3d0] sm:$0xff] %vm302, %v8777
  %9066 = vst.msk [vmem:[%s3 + $0x3d8] sm:$0xff] %vm302, %v8778
  %9067 = vst.msk [vmem:[%s3 + $0x3e0] sm:$0xff] %vm302, %v8779
  %9068 = vst.msk [vmem:[%s3 + $0x3e8] sm:$0xff] %vm302, %v8780
  %9069 = vst.msk [vmem:[%s3 + $0x3f0] sm:$0xff] %vm302, %v8781
  %9070 = vst.msk [vmem:[%s3 + $0x3f8] sm:$0xff] %vm302, %v8782
  %9071 = vst.msk [vmem:[%s3 + $0x400] sm:$0xff] %vm302, %v8783
  %9072 = vst.msk [vmem:[%s3 + $0x408] sm:$0xff] %vm302, %v8784
  %9073 = vst.msk [vmem:[%s3 + $0x410] sm:$0xff] %vm302, %v8785
  %9074 = vst.msk [vmem:[%s3 + $0x418] sm:$0xff] %vm302, %v8786
  %9075 = vst.msk [vmem:[%s3 + $0x420] sm:$0xff] %vm302, %v8787
  %9076 = vst.msk [vmem:[%s3 + $0x428] sm:$0xff] %vm302, %v8788
  %9077 = vst.msk [vmem:[%s3 + $0x430] sm:$0xff] %vm302, %v8789
  %9078 = vst.msk [vmem:[%s3 + $0x438] sm:$0xff] %vm302, %v8790
  %9079 = vst.msk [vmem:[%s3 + $0x440] sm:$0xff] %vm302, %v8791
  %9080 = vst.msk [vmem:[%s3 + $0x448] sm:$0xff] %vm302, %v8792
  %9081 = vst.msk [vmem:[%s3 + $0x450] sm:$0xff] %vm302, %v8793
  %9082 = vst.msk [vmem:[%s3 + $0x458] sm:$0xff] %vm302, %v8794
  %9083 = vst.msk [vmem:[%s3 + $0x460] sm:$0xff] %vm302, %v8795
  %9084 = vst.msk [vmem:[%s3 + $0x468] sm:$0xff] %vm302, %v8796
  %9085 = vst.msk [vmem:[%s3 + $0x470] sm:$0xff] %vm302, %v8797
  %9086 = vst.msk [vmem:[%s3 + $0x478] sm:$0xff] %vm302, %v8798
  %9087 = vst.msk [vmem:[%s3 + $0x480] sm:$0xff] %vm302, %v8799
  %9088 = vst.msk [vmem:[%s3 + $0x488] sm:$0xff] %vm302, %v8800
  %9089 = vst.msk [vmem:[%s3 + $0x490] sm:$0xff] %vm302, %v8801
  %9090 = vst.msk [vmem:[%s3 + $0x498] sm:$0xff] %vm302, %v8802
  %9091 = vst.msk [vmem:[%s3 + $0x4a0] sm:$0xff] %vm302, %v8803
  %9092 = vst.msk [vmem:[%s3 + $0x4a8] sm:$0xff] %vm302, %v8804
  %9093 = vst.msk [vmem:[%s3 + $0x4b0] sm:$0xff] %vm302, %v8805
  %9094 = vst.msk [vmem:[%s3 + $0x4b8] sm:$0xff] %vm302, %v8806
  %9095 = vst.msk [vmem:[%s3 + $0x4c0] sm:$0xff] %vm302, %v8807
  %9096 = vst.msk [vmem:[%s3 + $0x4c8] sm:$0xff] %vm302, %v8808
  %9097 = vst.msk [vmem:[%s3 + $0x4d0] sm:$0xff] %vm302, %v8809
  %9098 = vst.msk [vmem:[%s3 + $0x4d8] sm:$0xff] %vm302, %v8810
  %9099 = vst.msk [vmem:[%s3 + $0x4e0] sm:$0xff] %vm302, %v8811
  %9100 = vst.msk [vmem:[%s3 + $0x4e8] sm:$0xff] %vm302, %v8812
  %9101 = vst.msk [vmem:[%s3 + $0x4f0] sm:$0xff] %vm302, %v8813
  %9102 = vst.msk [vmem:[%s3 + $0x4f8] sm:$0xff] %vm302, %v8814
  %9103 = vst.msk [vmem:[%s3 + $0x500] sm:$0xff] %vm302, %v8815
  %9104 = vst.msk [vmem:[%s3 + $0x508] sm:$0xff] %vm302, %v8816
  %9105 = vst.msk [vmem:[%s3 + $0x510] sm:$0xff] %vm302, %v8817
  %9106 = vst.msk [vmem:[%s3 + $0x518] sm:$0xff] %vm302, %v8818
  %9107 = vst.msk [vmem:[%s3 + $0x520] sm:$0xff] %vm302, %v8819
  %9108 = vst.msk [vmem:[%s3 + $0x528] sm:$0xff] %vm302, %v8820
  %9109 = vst.msk [vmem:[%s3 + $0x530] sm:$0xff] %vm302, %v8821
  %9110 = vst.msk [vmem:[%s3 + $0x538] sm:$0xff] %vm302, %v8822
  %9111 = vst.msk [vmem:[%s3 + $0x540] sm:$0xff] %vm302, %v8823
  %9112 = vst.msk [vmem:[%s3 + $0x548] sm:$0xff] %vm302, %v8824
  %9113 = vst.msk [vmem:[%s3 + $0x550] sm:$0xff] %vm302, %v8825
  %9114 = vst.msk [vmem:[%s3 + $0x558] sm:$0xff] %vm302, %v8826
  %9115 = vst.msk [vmem:[%s3 + $0x560] sm:$0xff] %vm302, %v8827
  %9116 = vst.msk [vmem:[%s3 + $0x568] sm:$0xff] %vm302, %v8828
  %9117 = vst.msk [vmem:[%s3 + $0x570] sm:$0xff] %vm302, %v8829
  %9118 = vst.msk [vmem:[%s3 + $0x578] sm:$0xff] %vm302, %v8830
  %9119 = vst.msk [vmem:[%s3 + $0x580] sm:$0xff] %vm302, %v8831
  %9120 = vst.msk [vmem:[%s3 + $0x588] sm:$0xff] %vm302, %v8832
  %9121 = vst.msk [vmem:[%s3 + $0x590] sm:$0xff] %vm302, %v8833
  %9122 = vst.msk [vmem:[%s3 + $0x598] sm:$0xff] %vm302, %v8834
  %9123 = vst.msk [vmem:[%s3 + $0x5a0] sm:$0xff] %vm302, %v8835
  %9124 = vst.msk [vmem:[%s3 + $0x5a8] sm:$0xff] %vm302, %v8836
  %9125 = vst.msk [vmem:[%s3 + $0x5b0] sm:$0xff] %vm302, %v8837
  %9126 = vst.msk [vmem:[%s3 + $0x5b8] sm:$0xff] %vm302, %v8838
  %9127 = vst.msk [vmem:[%s3 + $0x5c0] sm:$0xff] %vm302, %v8839
  %9128 = vst.msk [vmem:[%s3 + $0x5c8] sm:$0xff] %vm302, %v8840
  %9129 = vst.msk [vmem:[%s3 + $0x5d0] sm:$0xff] %vm302, %v8841
  %9130 = vst.msk [vmem:[%s3 + $0x5d8] sm:$0xff] %vm302, %v8842
  %9131 = vst.msk [vmem:[%s3 + $0x5e0] sm:$0xff] %vm302, %v8843
  %9132 = vst.msk [vmem:[%s3 + $0x5e8] sm:$0xff] %vm302, %v8844
  %9133 = vst.msk [vmem:[%s3 + $0x5f0] sm:$0xff] %vm302, %v8845
  %9134 = vst.msk [vmem:[%s3 + $0x5f8] sm:$0xff] %vm302, %v8846
  %9135 = vst.msk [vmem:[%s3 + $0x600] sm:$0xff] %vm302, %v8847
  %9136 = vst.msk [vmem:[%s3 + $0x608] sm:$0xff] %vm302, %v8848
  %9137 = vst.msk [vmem:[%s3 + $0x610] sm:$0xff] %vm302, %v8849
  %9138 = vst.msk [vmem:[%s3 + $0x618] sm:$0xff] %vm302, %v8850
  %9139 = vst.msk [vmem:[%s3 + $0x620] sm:$0xff] %vm302, %v8851
  %9140 = vst.msk [vmem:[%s3 + $0x628] sm:$0xff] %vm302, %v8852
  %9141 = vst.msk [vmem:[%s3 + $0x630] sm:$0xff] %vm302, %v8853
  %9142 = vst.msk [vmem:[%s3 + $0x638] sm:$0xff] %vm302, %v8854
  %9143 = vst.msk [vmem:[%s3 + $0x640] sm:$0xff] %vm302, %v8855
  %9144 = vst.msk [vmem:[%s3 + $0x648] sm:$0xff] %vm302, %v8856
  %9145 = vst.msk [vmem:[%s3 + $0x650] sm:$0xff] %vm302, %v8857
  %9146 = vst.msk [vmem:[%s3 + $0x658] sm:$0xff] %vm302, %v8858
  %9147 = vst.msk [vmem:[%s3 + $0x660] sm:$0xff] %vm302, %v8859
  %9148 = vst.msk [vmem:[%s3 + $0x668] sm:$0xff] %vm302, %v8860
  %9149 = vst.msk [vmem:[%s3 + $0x670] sm:$0xff] %vm302, %v8861
  %9150 = vst.msk [vmem:[%s3 + $0x678] sm:$0xff] %vm302, %v8862
  %9151 = vst.msk [vmem:[%s3 + $0x680] sm:$0xff] %vm302, %v8863
  %9152 = vst.msk [vmem:[%s3 + $0x688] sm:$0xff] %vm302, %v8864
  %9153 = vst.msk [vmem:[%s3 + $0x690] sm:$0xff] %vm302, %v8865
  %9154 = vst.msk [vmem:[%s3 + $0x698] sm:$0xff] %vm302, %v8866
  %9155 = vst.msk [vmem:[%s3 + $0x6a0] sm:$0xff] %vm302, %v8867
  %9156 = vst.msk [vmem:[%s3 + $0x6a8] sm:$0xff] %vm302, %v8868
  %9157 = vst.msk [vmem:[%s3 + $0x6b0] sm:$0xff] %vm302, %v8869
  %9158 = vst.msk [vmem:[%s3 + $0x6b8] sm:$0xff] %vm302, %v8870
  %9159 = vst.msk [vmem:[%s3 + $0x6c0] sm:$0xff] %vm302, %v8871
  %9160 = vst.msk [vmem:[%s3 + $0x6c8] sm:$0xff] %vm302, %v8872
  %9161 = vst.msk [vmem:[%s3 + $0x6d0] sm:$0xff] %vm302, %v8873
  %9162 = vst.msk [vmem:[%s3 + $0x6d8] sm:$0xff] %vm302, %v8874
  %9163 = vst.msk [vmem:[%s3 + $0x6e0] sm:$0xff] %vm302, %v8875
  %9164 = vst.msk [vmem:[%s3 + $0x6e8] sm:$0xff] %vm302, %v8876
  %9165 = vst.msk [vmem:[%s3 + $0x6f0] sm:$0xff] %vm302, %v8877
  %9166 = vst.msk [vmem:[%s3 + $0x6f8] sm:$0xff] %vm302, %v8878
  %9167 = vst.msk [vmem:[%s3 + $0x700] sm:$0xff] %vm302, %v8879
  %9168 = vst.msk [vmem:[%s3 + $0x708] sm:$0xff] %vm302, %v8880
  %9169 = vst.msk [vmem:[%s3 + $0x710] sm:$0xff] %vm302, %v8881
  %9170 = vst.msk [vmem:[%s3 + $0x718] sm:$0xff] %vm302, %v8882
  %9171 = vst.msk [vmem:[%s3 + $0x720] sm:$0xff] %vm302, %v8883
  %9172 = vst.msk [vmem:[%s3 + $0x728] sm:$0xff] %vm302, %v8884
  %9173 = vst.msk [vmem:[%s3 + $0x730] sm:$0xff] %vm302, %v8885
  %9174 = vst.msk [vmem:[%s3 + $0x738] sm:$0xff] %vm302, %v8886
  %9175 = vst.msk [vmem:[%s3 + $0x740] sm:$0xff] %vm302, %v8887
  %9176 = vst.msk [vmem:[%s3 + $0x748] sm:$0xff] %vm302, %v8888
  %9177 = vst.msk [vmem:[%s3 + $0x750] sm:$0xff] %vm302, %v8889
  %9178 = vst.msk [vmem:[%s3 + $0x758] sm:$0xff] %vm302, %v8890
  %9179 = vst.msk [vmem:[%s3 + $0x760] sm:$0xff] %vm302, %v8891
  %9180 = vst.msk [vmem:[%s3 + $0x768] sm:$0xff] %vm302, %v8892
  %9181 = vst.msk [vmem:[%s3 + $0x770] sm:$0xff] %vm302, %v8893
  %9182 = vst.msk [vmem:[%s3 + $0x778] sm:$0xff] %vm302, %v8894
  %9183 = vst.msk [vmem:[%s3 + $0x780] sm:$0xff] %vm302, %v8895
  %9184 = vst.msk [vmem:[%s3 + $0x788] sm:$0xff] %vm302, %v8896
  %9185 = vst.msk [vmem:[%s3 + $0x790] sm:$0xff] %vm302, %v8897
  %9186 = vst.msk [vmem:[%s3 + $0x798] sm:$0xff] %vm302, %v8898
  %9187 = vst.msk [vmem:[%s3 + $0x7a0] sm:$0xff] %vm302, %v8899
  %9188 = vst.msk [vmem:[%s3 + $0x7a8] sm:$0xff] %vm302, %v8900
  %9189 = vst.msk [vmem:[%s3 + $0x7b0] sm:$0xff] %vm302, %v8901
  %9190 = vst.msk [vmem:[%s3 + $0x7b8] sm:$0xff] %vm302, %v8902
  %9191 = vst.msk [vmem:[%s3 + $0x7c0] sm:$0xff] %vm302, %v8903
  %9192 = vst.msk [vmem:[%s3 + $0x7c8] sm:$0xff] %vm302, %v8904
  %9193 = vst.msk [vmem:[%s3 + $0x7d0] sm:$0xff] %vm302, %v8905
  %9194 = vst.msk [vmem:[%s3 + $0x7d8] sm:$0xff] %vm302, %v8906
  %9195 = vst.msk [vmem:[%s3 + $0x7e0] sm:$0xff] %vm302, %v8907
  %9196 = vst.msk [vmem:[%s3 + $0x7e8] sm:$0xff] %vm302, %v8908
  %9197 = vst.msk [vmem:[%s3 + $0x7f0] sm:$0xff] %vm302, %v8909
  %9198 = vst.msk [vmem:[%s3 + $0x7f8] sm:$0xff] %vm302, %v8910
  %9199 = vst.msk [vmem:[%s3 + $0x800] sm:$0xff] %vm302, %v8911
  %9200 = vst.msk [vmem:[%s3 + $0x808] sm:$0xff] %vm302, %v8912
  %9201 = vst.msk [vmem:[%s3 + $0x810] sm:$0xff] %vm302, %v8913
  %9202 = vst.msk [vmem:[%s3 + $0x818] sm:$0xff] %vm302, %v8914
  %9203 = vst.msk [vmem:[%s3 + $0x820] sm:$0xff] %vm302, %v8915
  %9204 = vst.msk [vmem:[%s3 + $0x828] sm:$0xff] %vm302, %v8916
  %9205 = vst.msk [vmem:[%s3 + $0x830] sm:$0xff] %vm302, %v8917
  %9206 = vst.msk [vmem:[%s3 + $0x838] sm:$0xff] %vm302, %v8918
  %9207 = vst.msk [vmem:[%s3 + $0x840] sm:$0xff] %vm302, %v8919
  %9208 = vst.msk [vmem:[%s3 + $0x848] sm:$0xff] %vm302, %v8920
  %9209 = vst.msk [vmem:[%s3 + $0x850] sm:$0xff] %vm302, %v8921
  %9210 = vst.msk [vmem:[%s3 + $0x858] sm:$0xff] %vm302, %v8922
  %9211 = vst.msk [vmem:[%s3 + $0x860] sm:$0xff] %vm302, %v8923
  %9212 = vst.msk [vmem:[%s3 + $0x868] sm:$0xff] %vm302, %v8924
  %9213 = vst.msk [vmem:[%s3 + $0x870] sm:$0xff] %vm302, %v8925
  %9214 = vst.msk [vmem:[%s3 + $0x878] sm:$0xff] %vm302, %v8926
  %9215 = vst.msk [vmem:[%s3 + $0x880] sm:$0xff] %vm302, %v8927
  %9216 = vst.msk [vmem:[%s3 + $0x888] sm:$0xff] %vm302, %v8928
  %9217 = vst.msk [vmem:[%s3 + $0x890] sm:$0xff] %vm302, %v8929
  %9218 = vst.msk [vmem:[%s3 + $0x898] sm:$0xff] %vm302, %v8930
  %9219 = vst.msk [vmem:[%s3 + $0x8a0] sm:$0xff] %vm302, %v8931
  %9220 = vst.msk [vmem:[%s3 + $0x8a8] sm:$0xff] %vm302, %v8932
  %9221 = vst.msk [vmem:[%s3 + $0x8b0] sm:$0xff] %vm302, %v8933
  %9222 = vst.msk [vmem:[%s3 + $0x8b8] sm:$0xff] %vm302, %v8934
  %9223 = vst.msk [vmem:[%s3 + $0x8c0] sm:$0xff] %vm302, %v8935
  %9224 = vst.msk [vmem:[%s3 + $0x8c8] sm:$0xff] %vm302, %v8936
  %9225 = vst.msk [vmem:[%s3 + $0x8d0] sm:$0xff] %vm302, %v8937
  %9226 = vst.msk [vmem:[%s3 + $0x8d8] sm:$0xff] %vm302, %v8938
  %9227 = vst.msk [vmem:[%s3 + $0x8e0] sm:$0xff] %vm302, %v8939
  %9228 = vst.msk [vmem:[%s3 + $0x8e8] sm:$0xff] %vm302, %v8940
  %9229 = vst.msk [vmem:[%s3 + $0x8f0] sm:$0xff] %vm302, %v8941
  %9230 = vst.msk [vmem:[%s3 + $0x8f8] sm:$0xff] %vm302, %v8942
  // Predicated region
  $region14: #{_batchnorm2d_pallas_2d.1} parent=0 // pred_check
    _
  $region15: #{_batchnorm2d_pallas_2d.1} parent=0 // pred_check_branch
    %9232 = sbr.rel (0) target = $region17
  $region16: #{_batchnorm2d_pallas_2d.1} parent=0 // pred_region
    _
  $region17: #{_batchnorm2d_pallas_2d.1} parent=0 // pred_fallthru
    _
  // Predicated region
  $region18: #{_batchnorm2d_pallas_2d.1} parent=0 // pred_check
    _
  $region19: #{_batchnorm2d_pallas_2d.1} parent=0 // pred_check_branch
    %9234 = sbr.rel (0) target = $region21
  $region20: #{_batchnorm2d_pallas_2d.1} parent=0 // pred_region
    _
  $region21: #{_batchnorm2d_pallas_2d.1} parent=0 // pred_fallthru
    _

</llo_original>
